<compile_context>
chip_gen: v7x
topology: tpu7x:2x2x1
jax: 0.10.0
libtpu: 0.0.40
codegen_flags: <defaults>
</compile_context>

<pallas_src>
import math

import jax
import jax.numpy as jnp
from jax.experimental import pallas as pl
from jax.experimental.pallas import tpu as pltpu


# ---------------------------------------------------------------------------
# Kernel
# ---------------------------------------------------------------------------
def _make_kernel(nr_branches: int, depth: int, matmul_dtype, matmul_precision):
    """Per-tile MLP in the transposed (features, rows) layout."""

    def kernel(*refs):
        xs = refs[:nr_branches]                 # each (1, TM) f32
        o_ref = refs[-1]                        # (1, TM) f32
        params = refs[nr_branches:-1]           # [W0^T, b0^T, ..., W_out col, b_out]

        # ---- layer 0: F VPU FMAs (no stack, no K=F MXU streaming pass) ------
        w0t = params[0][...].astype(jnp.float32)             # (Hd, F)
        b0 = params[1][...]                                   # (Hd, 1)
        acc = w0t[:, 0:1] * xs[0][...] + b0                   # bias fused in
        for f in range(1, nr_branches):
            acc = acc + w0t[:, f:f + 1] * xs[f][...]
        h = jnp.maximum(acc, 0.0)                             # (Hd, TM) f32

        # ---- hidden layers 1..depth-1: MXU, rows stay on lanes --------------
        for d in range(1, depth):
            wt = params[2 * d][...].astype(matmul_dtype)      # (Hd, Hd)
            b = params[2 * d + 1][...]                        # (Hd, 1)
            h = jnp.dot(wt, h.astype(matmul_dtype),
                        preferred_element_type=jnp.float32,
                        precision=matmul_precision) + b
            h = jnp.maximum(h, 0.0)

        # ---- output projection: VPU mul + sublane reduction (exact f32) -----
        w_out_col = params[-2][...]                           # (Hd, 1)
        b_out = params[-1][...]                               # (1, 1)
        out = jnp.sum(h * w_out_col, axis=0, keepdims=True) + b_out
        o_ref[...] = out.astype(o_ref.dtype)                  # lane-dense (1, TM)

    return kernel


# ---------------------------------------------------------------------------
# Wrapper
# ---------------------------------------------------------------------------
def _round_up(n: int, m: int) -> int:
    return ((n + m - 1) // m) * m


def simple_conv_output(branch_tensors, weights, biases, *,
                       tile_rows: int = 16384,
                       matmul_dtype=jnp.float32,
                       matmul_precision=jax.lax.Precision.HIGHEST):
    """
    branch_tensors : list of arrays, each (B, C, H, W)  [NCHW]
    weights        : [W_0 (F,Hd), W_1..W_{depth-1} (Hd,Hd), W_out (Hd,1)]
    biases         : [b_0 (1,Hd), ...,                      b_out (1,1)]
    returns        : squeeze of (B, C, H, W, 1) result (matches torch .squeeze())
    """
    nr_branches = len(branch_tensors)
    lead_shape = branch_tensors[0].shape
    n_rows = math.prod(lead_shape)
    depth = len(weights) - 1
    hidden_dim = weights[0].shape[1]

    # Flatten each branch to a lane-major (1, N) row -- NO interleaving stack
    # in HBM (roughly halves the bytes moved into the kernel).
    flats = [jnp.asarray(t, jnp.float32).reshape(1, n_rows)
             for t in branch_tensors]

    # Lane-align the row axis (at most 127 padded elements).  The large row
    # tiles themselves are handled raggedly by the grid (cdiv), so no
    # full-array pad copy is needed in the common case.
    n128 = _round_up(n_rows, 128)
    if n128 != n_rows:
        flats = [jnp.pad(f, ((0, 0), (0, n128 - n_rows))) for f in flats]

    tm = min(_round_up(tile_rows, 128), n128)
    grid = (pl.cdiv(n128, tm),)

    # Transposed params so the kernel computes h = ReLU(W^T @ h + b^T).
    params = []
    for d in range(depth):
        params.append(jnp.asarray(weights[d], jnp.float32).T)          # (Hd, fan_in)
        params.append(jnp.asarray(biases[d], jnp.float32).reshape(-1, 1))  # (Hd, 1)
    params.append(jnp.asarray(weights[-1], jnp.float32).reshape(hidden_dim, 1))  # (Hd, 1)
    params.append(jnp.asarray(biases[-1], jnp.float32).reshape(1, 1))            # (1, 1)

    kernel = _make_kernel(nr_branches, depth, matmul_dtype, matmul_precision)

    branch_specs = [pl.BlockSpec((1, tm), lambda i: (0, i))
                    for _ in range(nr_branches)]
    # Constant index_map -> Pallas keeps the (tiny) params resident in VMEM.
    param_specs = [pl.BlockSpec(p.shape, lambda i: (0, 0)) for p in params]

    flops = n128 * (2 * nr_branches * hidden_dim
                    + (depth - 1) * 2 * hidden_dim * hidden_dim
                    + 2 * hidden_dim)
    bytes_accessed = 4 * ((nr_branches + 1) * n128 + sum(p.size for p in params))

    out2d = pl.pallas_call(
        kernel,
        out_shape=jax.ShapeDtypeStruct((1, n128), jnp.float32),
        grid_spec=pltpu.PrefetchScalarGridSpec(
            num_scalar_prefetch=0,
            grid=grid,
            in_specs=branch_specs + param_specs,
            out_specs=pl.BlockSpec((1, tm), lambda i: (0, i)),
        ),
        compiler_params=pltpu.CompilerParams(
            dimension_semantics=("parallel",),
            # Keep scoped VMEM comfortably under the v7x 64 MiB physical cap.
            vmem_limit_bytes=48 * 1024 * 1024,
        ),
        cost_estimate=pl.CostEstimate(flops=flops, transcendentals=0,
                                      bytes_accessed=bytes_accessed),
    )(*flats, *params)

    out = out2d[0, :n_rows].reshape(lead_shape)
    # torch's x.squeeze(): the trailing size-1 feature dim is already gone
    # (kernel emits a (1, N) row); also drop any other size-1 dims to match.
    return jnp.squeeze(out)


# ---------------------------------------------------------------------------
# Deterministic parameter init (mimics nn.Linear uniform(-1/sqrt(fan_in), +))
# ---------------------------------------------------------------------------
def _init_linear(key, fan_in, fan_out):
    kw, kb = jax.random.split(key)
    bound = 1.0 / jnp.sqrt(jnp.float32(fan_in))
    w = jax.random.uniform(kw, (fan_in, fan_out), jnp.float32, -bound, bound)
    b = jax.random.uniform(kb, (1, fan_out), jnp.float32, -bound, bound)
    return w, b


def _reference_mlp(branch_tensors, weights, biases):
    x = jnp.stack(branch_tensors, axis=-1).astype(jnp.float32)
    for w, b in zip(weights[:-1], biases[:-1]):
        x = jnp.maximum(
            jnp.dot(x, w, precision=jax.lax.Precision.HIGHEST) + b[0], 0.0)
    x = jnp.dot(x, weights[-1], precision=jax.lax.Precision.HIGHEST) + biases[-1][0]
    return jnp.squeeze(x)


# ---------------------------------------------------------------------------
# Main
# ---------------------------------------------------------------------------
if __name__ == "__main__":
    # Config the PyTorch module reads from output_block_args['simple_conv']:
    DEPTH = 2          # number of hidden Linear layers
    HIDDEN_DIM = 32
    NR_BRANCHES = 4    # len(branch_tensors)

    B, C, H, W = 2, 4, 16, 16   # each branch tensor is NCHW

    key = jax.random.PRNGKey(0)
    keys = jax.random.split(key, NR_BRANCHES + DEPTH + 1)

    branch_tensors = [
        jax.random.normal(keys[i], (B, C, H, W), jnp.float32)
        for i in range(NR_BRANCHES)
    ]

    # layers: Linear(NR_BRANCHES, HIDDEN), (DEPTH-1) x Linear(HIDDEN, HIDDEN),
    # then output Linear(HIDDEN, 1)
    weights, biases = [], []
    fan_in = NR_BRANCHES
    for d in range(DEPTH):
        w, b = _init_linear(keys[NR_BRANCHES + d], fan_in, HIDDEN_DIM)
        weights.append(w)
        biases.append(b)
        fan_in = HIDDEN_DIM
    w_out, b_out = _init_linear(keys[-1], HIDDEN_DIM, 1)
    weights.append(w_out)
    biases.append(b_out)

    out = simple_conv_output(branch_tensors, weights, biases)
    out = jax.block_until_ready(out)

    ref = _reference_mlp(branch_tensors, weights, biases)
    assert out.shape == (B, C, H, W), out.shape
    assert jnp.allclose(out, ref, atol=1e-4, rtol=1e-4), "mismatch vs. reference"

    print("KERNEL_OK")
</pallas_src>

<mosaic_0001>
module attributes {stable_mosaic.version = 11 : i64} {
  func.func @kernel(%arg0: i32, %arg1: memref<1x2048xf32, #tpu.memory_space<vmem>>, %arg2: memref<1x2048xf32, #tpu.memory_space<vmem>>, %arg3: memref<1x2048xf32, #tpu.memory_space<vmem>>, %arg4: memref<1x2048xf32, #tpu.memory_space<vmem>>, %arg5: memref<32x4xf32, #tpu.memory_space<vmem>>, %arg6: memref<32x1xf32, #tpu.memory_space<vmem>>, %arg7: memref<32x32xf32, #tpu.memory_space<vmem>>, %arg8: memref<32x1xf32, #tpu.memory_space<vmem>>, %arg9: memref<32x1xf32, #tpu.memory_space<vmem>>, %arg10: memref<1x1xf32, #tpu.memory_space<vmem>>, %arg11: memref<1x2048xf32, #tpu.memory_space<vmem>>) attributes {dimension_semantics = [#tpu.dimension_semantics<parallel>], iteration_bounds = array<i64: 1>, scalar_prefetch = 0 : i64, scratch_operands = 0 : i64, tpu.core_type = #tpu.core_type<tc>, window_params = [{transform_indices = @transform_0, window_bounds = array<i64: 1, 2048>}, {transform_indices = @transform_1, window_bounds = array<i64: 1, 2048>}, {transform_indices = @transform_2, window_bounds = array<i64: 1, 2048>}, {transform_indices = @transform_3, window_bounds = array<i64: 1, 2048>}, {pipeline_mode = #tpu.pipeline_mode<synchronous>, transform_indices = @transform_4, window_bounds = array<i64: 32, 4>}, {pipeline_mode = #tpu.pipeline_mode<synchronous>, transform_indices = @transform_5, window_bounds = array<i64: 32, 1>}, {pipeline_mode = #tpu.pipeline_mode<synchronous>, transform_indices = @transform_6, window_bounds = array<i64: 32, 32>}, {pipeline_mode = #tpu.pipeline_mode<synchronous>, transform_indices = @transform_7, window_bounds = array<i64: 32, 1>}, {pipeline_mode = #tpu.pipeline_mode<synchronous>, transform_indices = @transform_8, window_bounds = array<i64: 32, 1>}, {pipeline_mode = #tpu.pipeline_mode<synchronous>, transform_indices = @transform_9, window_bounds = array<i64: 1, 1>}, {transform_indices = @transform_10, window_bounds = array<i64: 1, 2048>}]} {
    %c0 = arith.constant 0 : index
    %c0_0 = arith.constant 0 : index
    %0 = vector.load %arg5[%c0, %c0_0] : memref<32x4xf32, #tpu.memory_space<vmem>>, vector<32x4xf32>
    %c0_1 = arith.constant 0 : index
    %c0_2 = arith.constant 0 : index
    %1 = vector.load %arg6[%c0_1, %c0_2] : memref<32x1xf32, #tpu.memory_space<vmem>>, vector<32x1xf32>
    %2 = vector.extract_strided_slice %0 {offsets = [0, 0], sizes = [32, 1], strides = [1, 1]} : vector<32x4xf32> to vector<32x1xf32>
    %c0_3 = arith.constant 0 : index
    %c0_4 = arith.constant 0 : index
    %3 = vector.load %arg1[%c0_3, %c0_4] : memref<1x2048xf32, #tpu.memory_space<vmem>>, vector<1x2048xf32>
    %4 = vector.broadcast %2 : vector<32x1xf32> to vector<32x2048xf32>
    %5 = vector.broadcast %3 : vector<1x2048xf32> to vector<32x2048xf32>
    %6 = arith.mulf %4, %5 : vector<32x2048xf32>
    %7 = vector.broadcast %1 : vector<32x1xf32> to vector<32x2048xf32>
    %8 = arith.addf %6, %7 : vector<32x2048xf32>
    %9 = vector.extract_strided_slice %0 {offsets = [0, 1], sizes = [32, 1], strides = [1, 1]} : vector<32x4xf32> to vector<32x1xf32>
    %c0_5 = arith.constant 0 : index
    %c0_6 = arith.constant 0 : index
    %10 = vector.load %arg2[%c0_5, %c0_6] : memref<1x2048xf32, #tpu.memory_space<vmem>>, vector<1x2048xf32>
    %11 = vector.broadcast %9 : vector<32x1xf32> to vector<32x2048xf32>
    %12 = vector.broadcast %10 : vector<1x2048xf32> to vector<32x2048xf32>
    %13 = arith.mulf %11, %12 : vector<32x2048xf32>
    %14 = arith.addf %8, %13 : vector<32x2048xf32>
    %15 = vector.extract_strided_slice %0 {offsets = [0, 2], sizes = [32, 1], strides = [1, 1]} : vector<32x4xf32> to vector<32x1xf32>
    %c0_7 = arith.constant 0 : index
    %c0_8 = arith.constant 0 : index
    %16 = vector.load %arg3[%c0_7, %c0_8] : memref<1x2048xf32, #tpu.memory_space<vmem>>, vector<1x2048xf32>
    %17 = vector.broadcast %15 : vector<32x1xf32> to vector<32x2048xf32>
    %18 = vector.broadcast %16 : vector<1x2048xf32> to vector<32x2048xf32>
    %19 = arith.mulf %17, %18 : vector<32x2048xf32>
    %20 = arith.addf %14, %19 : vector<32x2048xf32>
    %21 = vector.extract_strided_slice %0 {offsets = [0, 3], sizes = [32, 1], strides = [1, 1]} : vector<32x4xf32> to vector<32x1xf32>
    %c0_9 = arith.constant 0 : index
    %c0_10 = arith.constant 0 : index
    %22 = vector.load %arg4[%c0_9, %c0_10] : memref<1x2048xf32, #tpu.memory_space<vmem>>, vector<1x2048xf32>
    %23 = vector.broadcast %21 : vector<32x1xf32> to vector<32x2048xf32>
    %24 = vector.broadcast %22 : vector<1x2048xf32> to vector<32x2048xf32>
    %25 = arith.mulf %23, %24 : vector<32x2048xf32>
    %26 = arith.addf %20, %25 : vector<32x2048xf32>
    %cst = arith.constant 0.000000e+00 : f32
    %27 = vector.broadcast %cst : f32 to vector<32x2048xf32>
    %28 = arith.maximumf %26, %27 : vector<32x2048xf32>
    %c0_11 = arith.constant 0 : index
    %c0_12 = arith.constant 0 : index
    %29 = vector.load %arg7[%c0_11, %c0_12] : memref<32x32xf32, #tpu.memory_space<vmem>>, vector<32x32xf32>
    %c0_13 = arith.constant 0 : index
    %c0_14 = arith.constant 0 : index
    %30 = vector.load %arg8[%c0_13, %c0_14] : memref<32x1xf32, #tpu.memory_space<vmem>>, vector<32x1xf32>
    %cst_15 = arith.constant dense<0.000000e+00> : vector<32x2048xf32>
    %31 = tpu.matmul %29, %28, %cst_15 {dimension_numbers = #tpu.dot_dimension_numbers<[1], [0], [0], [1], [0, 0, 1, 1], [], []>, precision = #tpu.contract_precision<fp32>} : vector<32x32xf32>, vector<32x2048xf32>, vector<32x2048xf32> -> vector<32x2048xf32>
    %32 = vector.broadcast %30 : vector<32x1xf32> to vector<32x2048xf32>
    %33 = arith.addf %31, %32 : vector<32x2048xf32>
    %cst_16 = arith.constant 0.000000e+00 : f32
    %34 = vector.broadcast %cst_16 : f32 to vector<32x2048xf32>
    %35 = arith.maximumf %33, %34 : vector<32x2048xf32>
    %c0_17 = arith.constant 0 : index
    %c0_18 = arith.constant 0 : index
    %36 = vector.load %arg9[%c0_17, %c0_18] : memref<32x1xf32, #tpu.memory_space<vmem>>, vector<32x1xf32>
    %c0_19 = arith.constant 0 : index
    %c0_20 = arith.constant 0 : index
    %37 = vector.load %arg10[%c0_19, %c0_20] : memref<1x1xf32, #tpu.memory_space<vmem>>, vector<1x1xf32>
    %38 = vector.broadcast %36 : vector<32x1xf32> to vector<32x2048xf32>
    %39 = arith.mulf %35, %38 : vector<32x2048xf32>
    %cst_21 = arith.constant dense<0.000000e+00> : vector<2048xf32>
    %40 = vector.multi_reduction <add>, %39, %cst_21 [0] : vector<32x2048xf32> to vector<2048xf32>
    %41 = vector.shape_cast %40 : vector<2048xf32> to vector<1x2048xf32>
    %42 = vector.broadcast %37 : vector<1x1xf32> to vector<1x2048xf32>
    %43 = arith.addf %41, %42 : vector<1x2048xf32>
    %c0_22 = arith.constant 0 : index
    %c0_23 = arith.constant 0 : index
    %44 = vector.load %arg11[%c0_22, %c0_23] : memref<1x2048xf32, #tpu.memory_space<vmem>>, vector<1x2048xf32>
    tpu.vector_store %arg11[%c0_22, %c0_23], %43 {strides = array<i32>} : memref<1x2048xf32, #tpu.memory_space<vmem>>, vector<1x2048xf32>,
    return
  }
  func.func @transform_0(%arg0: i32) -> (i32, i32) {
    %c0_i32 = arith.constant 0 : i32
    %c0_i32_0 = arith.constant 0 : i32
    return %c0_i32, %arg0 : i32, i32
  }
  func.func @transform_1(%arg0: i32) -> (i32, i32) {
    %c0_i32 = arith.constant 0 : i32
    %c0_i32_0 = arith.constant 0 : i32
    return %c0_i32, %arg0 : i32, i32
  }
  func.func @transform_2(%arg0: i32) -> (i32, i32) {
    %c0_i32 = arith.constant 0 : i32
    %c0_i32_0 = arith.constant 0 : i32
    return %c0_i32, %arg0 : i32, i32
  }
  func.func @transform_3(%arg0: i32) -> (i32, i32) {
    %c0_i32 = arith.constant 0 : i32
    %c0_i32_0 = arith.constant 0 : i32
    return %c0_i32, %arg0 : i32, i32
  }
  func.func @transform_4(%arg0: i32) -> (i32, i32) {
    %c0_i32 = arith.constant 0 : i32
    %c0_i32_0 = arith.constant 0 : i32
    %c0_i32_1 = arith.constant 0 : i32
    return %c0_i32, %c0_i32_0 : i32, i32
  }
  func.func @transform_5(%arg0: i32) -> (i32, i32) {
    %c0_i32 = arith.constant 0 : i32
    %c0_i32_0 = arith.constant 0 : i32
    %c0_i32_1 = arith.constant 0 : i32
    return %c0_i32, %c0_i32_0 : i32, i32
  }
  func.func @transform_6(%arg0: i32) -> (i32, i32) {
    %c0_i32 = arith.constant 0 : i32
    %c0_i32_0 = arith.constant 0 : i32
    %c0_i32_1 = arith.constant 0 : i32
    return %c0_i32, %c0_i32_0 : i32, i32
  }
  func.func @transform_7(%arg0: i32) -> (i32, i32) {
    %c0_i32 = arith.constant 0 : i32
    %c0_i32_0 = arith.constant 0 : i32
    %c0_i32_1 = arith.constant 0 : i32
    return %c0_i32, %c0_i32_0 : i32, i32
  }
  func.func @transform_8(%arg0: i32) -> (i32, i32) {
    %c0_i32 = arith.constant 0 : i32
    %c0_i32_0 = arith.constant 0 : i32
    %c0_i32_1 = arith.constant 0 : i32
    return %c0_i32, %c0_i32_0 : i32, i32
  }
  func.func @transform_9(%arg0: i32) -> (i32, i32) {
    %c0_i32 = arith.constant 0 : i32
    %c0_i32_0 = arith.constant 0 : i32
    %c0_i32_1 = arith.constant 0 : i32
    return %c0_i32, %c0_i32_0 : i32, i32
  }
  func.func @transform_10(%arg0: i32) -> (i32, i32) {
    %c0_i32 = arith.constant 0 : i32
    %c0_i32_0 = arith.constant 0 : i32
    return %c0_i32, %arg0 : i32, i32
  }
}

</mosaic_0001>

<llo_original>
// kernel: tpu_custom_call.1
$region0: #{tpu_custom_call.1}
  #allocation0 [shape = 'u32[]', space=smem, size = 0x4, offset = 0x4, fixed_abs, tag = 'smem constant byte address 0x4 - core index']
  #allocation1 [shape = 'u32[144,128]{1,0:T(1,128)}', space=vmem, size = 0x12000, scoped, tag = 'internal scratch']
  #allocation2 [shape = 'f32[1,1]{1,0:T(1,128)S(1)}', space=vmem, size = 0x200, scoped, tag = 'scoped memory for tpu_custom_call.1']
  %s0 = inlined_call_operand.vmem [shape: f32[1,2048], index: 0, kind: input, shape index: {}]
  %s1 = inlined_call_operand.vmem [shape: f32[1,2048], index: 1, kind: input, shape index: {}]
  %s2 = inlined_call_operand.vmem [shape: f32[1,2048], index: 2, kind: input, shape index: {}]
  %s3 = inlined_call_operand.vmem [shape: f32[1,2048], index: 3, kind: input, shape index: {}]
  %s4 = inlined_call_operand.vmem [shape: f32[32,4], index: 4, kind: input, shape index: {}]
  %s5 = inlined_call_operand.vmem [shape: f32[32,1], index: 5, kind: input, shape index: {}]
  %s6 = inlined_call_operand.vmem [shape: f32[32,32], index: 6, kind: input, shape index: {}]
  %s7 = inlined_call_operand.vmem [shape: f32[32,1], index: 7, kind: input, shape index: {}]
  %s8 = inlined_call_operand.vmem [shape: f32[32,1], index: 8, kind: input, shape index: {}]
  %s9 = inlined_call_operand.<no memory space> [shape: f32[1,1], index: 9, kind: input, shape index: {}]
  %s10 = inlined_call_operand.hbm [shape: f32[1,2048], index: 10, kind: output, shape index: {}]
  %s11 = sld [smem:[#allocation0]]
  $region50: #{tpu_custom_call.1} parent=0
    _
  %s13 = ssub.s32 1, %s11
  %s14 = scalar_select 0, %s13, %s11
  %v15 = vstv %s9
  %16 = vst [vmem:[#allocation2] sm:$0x1] %v15
  $region1: #{tpu_custom_call.1} parent=0
    #allocation3 [shape = 'u8[8192]{0}', space=vmem, size = 0x2000, scoped, tag = 'output window, operand 0, single buffered']
    #allocation4 [shape = 's32[1]{0}', space=sflag, size = 0x4, scoped, tag = 'scoped memory for tpu_custom_call.1']
    %17 = vsyncpa [#allocation4], 0
    // Predicated region
    $region2: #{tpu_custom_call.1} parent=1 // pred_check
      _
    $region3: #{tpu_custom_call.1} parent=1 // pred_check_branch
      %19 = sbr.rel (0) target = $region5
    $region4: #{tpu_custom_call.1} parent=1 // pred_region
      _
    $region5: #{tpu_custom_call.1} parent=1 // pred_fallthru
      _
    // Predicated region
    $region6: #{tpu_custom_call.1} parent=1 // pred_check
      _
    $region7: #{tpu_custom_call.1} parent=1 // pred_check_branch
      %21 = sbr.rel (0) target = $region9
    $region8: #{tpu_custom_call.1} parent=1 // pred_region
      _
    $region9: #{tpu_custom_call.1} parent=1 // pred_fallthru
      _
    // Predicated region
    $region10: #{tpu_custom_call.1} parent=1 // pred_check
      _
    $region11: #{tpu_custom_call.1} parent=1 // pred_check_branch
      %23 = sbr.rel (0) target = $region13
    $region12: #{tpu_custom_call.1} parent=1 // pred_region
      _
    $region13: #{tpu_custom_call.1} parent=1 // pred_fallthru
      _
    // Predicated region
    $region14: #{tpu_custom_call.1} parent=1 // pred_check
      _
    $region15: #{tpu_custom_call.1} parent=1 // pred_check_branch
      %25 = sbr.rel (0) target = $region17
    $region16: #{tpu_custom_call.1} parent=1 // pred_region
      _
    $region17: #{tpu_custom_call.1} parent=1 // pred_fallthru
      _
    // Predicated region
    $region18: #{tpu_custom_call.1} parent=1 // pred_check
      _
    $region19: #{tpu_custom_call.1} parent=1 // pred_check_branch
      %27 = sbr.rel (0) target = $region21
    $region20: #{tpu_custom_call.1} parent=1 // pred_region
      _
    $region21: #{tpu_custom_call.1} parent=1 // pred_fallthru
      _
    // Predicated region
    $region22: #{tpu_custom_call.1} parent=1 // pred_check
      _
    $region23: #{tpu_custom_call.1} parent=1 // pred_check_branch
      %29 = sbr.rel (0) target = $region25
    $region24: #{tpu_custom_call.1} parent=1 // pred_region
      _
    $region25: #{tpu_custom_call.1} parent=1 // pred_fallthru
      _
    // Predicated region
    $region26: #{tpu_custom_call.1} parent=1 // pred_check
      _
    $region27: #{tpu_custom_call.1} parent=1 // pred_check_branch
      %31 = sbr.rel (0) target = $region29
    $region28: #{tpu_custom_call.1} parent=1 // pred_region
      _
    $region29: #{tpu_custom_call.1} parent=1 // pred_fallthru
      _
    // Predicated region
    $region30: #{tpu_custom_call.1} parent=1 // pred_check
      _
    $region31: #{tpu_custom_call.1} parent=1 // pred_check_branch
      %33 = sbr.rel (0) target = $region33
    $region32: #{tpu_custom_call.1} parent=1 // pred_region
      _
    $region33: #{tpu_custom_call.1} parent=1 // pred_fallthru
      _
    // Predicated region
    $region34: #{tpu_custom_call.1} parent=1 // pred_check
      _
    $region35: #{tpu_custom_call.1} parent=1 // pred_check_branch
      %35 = sbr.rel (0) target = $region37
    $region36: #{tpu_custom_call.1} parent=1 // pred_region
      _
    $region37: #{tpu_custom_call.1} parent=1 // pred_fallthru
      _
    // Predicated region
    $region38: #{tpu_custom_call.1} parent=1 // pred_check
      _
    $region39: #{tpu_custom_call.1} parent=1 // pred_check_branch
      %37 = sbr.rel (0) target = $region41
    $region40: #{tpu_custom_call.1} parent=1 // pred_region
      _
    $region41: #{tpu_custom_call.1} parent=1 // pred_fallthru
      _
    %v38 = vld [vmem:[%s4] sm:$0xff]
    %v39 = vld [vmem:[%s4 + $0x8] sm:$0xff]
    %v40 = vld [vmem:[%s4 + $0x10] sm:$0xff]
    %v41 = vld [vmem:[%s4 + $0x18] sm:$0xff]
    %v42 = vld [vmem:[%s5] sm:$0xff]
    %v43 = vld [vmem:[%s5 + $0x8] sm:$0xff]
    %v44 = vld [vmem:[%s5 + $0x10] sm:$0xff]
    %v45 = vld [vmem:[%s5 + $0x18] sm:$0xff]
    %v46 = vld [vmem:[%s0] sm:$0xff]
    %v47 = vld [vmem:[%s0 + $0x8] sm:$0xff]
    %49 = vset.pattern.permute.xlu0 0
    %50 = vperm.xlu0 %49, %v38
    %v51 = vpop.permute.xlu0 %50
    %54 = vset.pattern.permute.xlu0 0
    %55 = vperm.xlu0 %54, %v39
    %v56 = vpop.permute.xlu0 %55
    %59 = vset.pattern.permute.xlu0 0
    %60 = vperm.xlu0 %59, %v40
    %v61 = vpop.permute.xlu0 %60
    %64 = vset.pattern.permute.xlu0 0
    %65 = vperm.xlu0 %64, %v41
    %v66 = vpop.permute.xlu0 %65
    %v70 = vlaneseq
    %v71 = vshrl.u32 %v70, 7
    %v72 = vsub.s32 0, %v71
    %v73 = vrot.slane %v46, %v72
    %v74 = vlaneseq
    %v75 = vshrl.u32 %v74, 7
    %v76 = vsub.s32 1, %v75
    %v77 = vrot.slane %v46, %v76
    %v78 = vlaneseq
    %v79 = vshrl.u32 %v78, 7
    %v80 = vsub.s32 2, %v79
    %v81 = vrot.slane %v46, %v80
    %v82 = vlaneseq
    %v83 = vshrl.u32 %v82, 7
    %v84 = vsub.s32 3, %v83
    %v85 = vrot.slane %v46, %v84
    %v86 = vlaneseq
    %v87 = vshrl.u32 %v86, 7
    %v88 = vsub.s32 4, %v87
    %v89 = vrot.slane %v46, %v88
    %v90 = vlaneseq
    %v91 = vshrl.u32 %v90, 7
    %v92 = vsub.s32 5, %v91
    %v93 = vrot.slane %v46, %v92
    %v94 = vlaneseq
    %v95 = vshrl.u32 %v94, 7
    %v96 = vsub.s32 6, %v95
    %v97 = vrot.slane %v46, %v96
    %v98 = vlaneseq
    %v99 = vshrl.u32 %v98, 7
    %v100 = vsub.s32 7, %v99
    %v101 = vrot.slane %v46, %v100
    %v102 = vlaneseq
    %v103 = vshrl.u32 %v102, 7
    %v104 = vsub.s32 0, %v103
    %v105 = vrot.slane %v47, %v104
    %v106 = vlaneseq
    %v107 = vshrl.u32 %v106, 7
    %v108 = vsub.s32 1, %v107
    %v109 = vrot.slane %v47, %v108
    %v110 = vlaneseq
    %v111 = vshrl.u32 %v110, 7
    %v112 = vsub.s32 2, %v111
    %v113 = vrot.slane %v47, %v112
    %v114 = vlaneseq
    %v115 = vshrl.u32 %v114, 7
    %v116 = vsub.s32 3, %v115
    %v117 = vrot.slane %v47, %v116
    %v118 = vlaneseq
    %v119 = vshrl.u32 %v118, 7
    %v120 = vsub.s32 4, %v119
    %v121 = vrot.slane %v47, %v120
    %v122 = vlaneseq
    %v123 = vshrl.u32 %v122, 7
    %v124 = vsub.s32 5, %v123
    %v125 = vrot.slane %v47, %v124
    %v126 = vlaneseq
    %v127 = vshrl.u32 %v126, 7
    %v128 = vsub.s32 6, %v127
    %v129 = vrot.slane %v47, %v128
    %v130 = vlaneseq
    %v131 = vshrl.u32 %v130, 7
    %v132 = vsub.s32 7, %v131
    %v133 = vrot.slane %v47, %v132
    %v150 = vmul.f32 %v51, %v73
    %v151 = vmul.f32 %v51, %v77
    %v152 = vmul.f32 %v51, %v81
    %v153 = vmul.f32 %v51, %v85
    %v154 = vmul.f32 %v51, %v89
    %v155 = vmul.f32 %v51, %v93
    %v156 = vmul.f32 %v51, %v97
    %v157 = vmul.f32 %v51, %v101
    %v158 = vmul.f32 %v51, %v105
    %v159 = vmul.f32 %v51, %v109
    %v160 = vmul.f32 %v51, %v113
    %v161 = vmul.f32 %v51, %v117
    %v162 = vmul.f32 %v51, %v121
    %v163 = vmul.f32 %v51, %v125
    %v164 = vmul.f32 %v51, %v129
    %v165 = vmul.f32 %v51, %v133
    %v166 = vmul.f32 %v56, %v73
    %v167 = vmul.f32 %v56, %v77
    %v168 = vmul.f32 %v56, %v81
    %v169 = vmul.f32 %v56, %v85
    %v170 = vmul.f32 %v56, %v89
    %v171 = vmul.f32 %v56, %v93
    %v172 = vmul.f32 %v56, %v97
    %v173 = vmul.f32 %v56, %v101
    %v174 = vmul.f32 %v56, %v105
    %v175 = vmul.f32 %v56, %v109
    %v176 = vmul.f32 %v56, %v113
    %v177 = vmul.f32 %v56, %v117
    %v178 = vmul.f32 %v56, %v121
    %v179 = vmul.f32 %v56, %v125
    %v180 = vmul.f32 %v56, %v129
    %v181 = vmul.f32 %v56, %v133
    %v182 = vmul.f32 %v61, %v73
    %v183 = vmul.f32 %v61, %v77
    %v184 = vmul.f32 %v61, %v81
    %v185 = vmul.f32 %v61, %v85
    %v186 = vmul.f32 %v61, %v89
    %v187 = vmul.f32 %v61, %v93
    %v188 = vmul.f32 %v61, %v97
    %v189 = vmul.f32 %v61, %v101
    %v190 = vmul.f32 %v61, %v105
    %v191 = vmul.f32 %v61, %v109
    %v192 = vmul.f32 %v61, %v113
    %v193 = vmul.f32 %v61, %v117
    %v194 = vmul.f32 %v61, %v121
    %v195 = vmul.f32 %v61, %v125
    %v196 = vmul.f32 %v61, %v129
    %v197 = vmul.f32 %v61, %v133
    %v198 = vmul.f32 %v66, %v73
    %v199 = vmul.f32 %v66, %v77
    %v200 = vmul.f32 %v66, %v81
    %v201 = vmul.f32 %v66, %v85
    %v202 = vmul.f32 %v66, %v89
    %v203 = vmul.f32 %v66, %v93
    %v204 = vmul.f32 %v66, %v97
    %v205 = vmul.f32 %v66, %v101
    %v206 = vmul.f32 %v66, %v105
    %v207 = vmul.f32 %v66, %v109
    %v208 = vmul.f32 %v66, %v113
    %v209 = vmul.f32 %v66, %v117
    %v210 = vmul.f32 %v66, %v121
    %v211 = vmul.f32 %v66, %v125
    %v212 = vmul.f32 %v66, %v129
    %v213 = vmul.f32 %v66, %v133
    %215 = vset.pattern.permute.xlu0 0
    %216 = vperm.xlu0 %215, %v42
    %v217 = vpop.permute.xlu0 %216
    %220 = vset.pattern.permute.xlu0 0
    %221 = vperm.xlu0 %220, %v43
    %v222 = vpop.permute.xlu0 %221
    %225 = vset.pattern.permute.xlu0 0
    %226 = vperm.xlu0 %225, %v44
    %v227 = vpop.permute.xlu0 %226
    %230 = vset.pattern.permute.xlu0 0
    %231 = vperm.xlu0 %230, %v45
    %v232 = vpop.permute.xlu0 %231
    %v234 = vadd.f32 %v150, %v217
    %v235 = vadd.f32 %v151, %v217
    %v236 = vadd.f32 %v152, %v217
    %v237 = vadd.f32 %v153, %v217
    %v238 = vadd.f32 %v154, %v217
    %v239 = vadd.f32 %v155, %v217
    %v240 = vadd.f32 %v156, %v217
    %v241 = vadd.f32 %v157, %v217
    %v242 = vadd.f32 %v158, %v217
    %v243 = vadd.f32 %v159, %v217
    %v244 = vadd.f32 %v160, %v217
    %v245 = vadd.f32 %v161, %v217
    %v246 = vadd.f32 %v162, %v217
    %v247 = vadd.f32 %v163, %v217
    %v248 = vadd.f32 %v164, %v217
    %v249 = vadd.f32 %v165, %v217
    %v250 = vadd.f32 %v166, %v222
    %v251 = vadd.f32 %v167, %v222
    %v252 = vadd.f32 %v168, %v222
    %v253 = vadd.f32 %v169, %v222
    %v254 = vadd.f32 %v170, %v222
    %v255 = vadd.f32 %v171, %v222
    %v256 = vadd.f32 %v172, %v222
    %v257 = vadd.f32 %v173, %v222
    %v258 = vadd.f32 %v174, %v222
    %v259 = vadd.f32 %v175, %v222
    %v260 = vadd.f32 %v176, %v222
    %v261 = vadd.f32 %v177, %v222
    %v262 = vadd.f32 %v178, %v222
    %v263 = vadd.f32 %v179, %v222
    %v264 = vadd.f32 %v180, %v222
    %v265 = vadd.f32 %v181, %v222
    %v266 = vadd.f32 %v182, %v227
    %v267 = vadd.f32 %v183, %v227
    %v268 = vadd.f32 %v184, %v227
    %v269 = vadd.f32 %v185, %v227
    %v270 = vadd.f32 %v186, %v227
    %v271 = vadd.f32 %v187, %v227
    %v272 = vadd.f32 %v188, %v227
    %v273 = vadd.f32 %v189, %v227
    %v274 = vadd.f32 %v190, %v227
    %v275 = vadd.f32 %v191, %v227
    %v276 = vadd.f32 %v192, %v227
    %v277 = vadd.f32 %v193, %v227
    %v278 = vadd.f32 %v194, %v227
    %v279 = vadd.f32 %v195, %v227
    %v280 = vadd.f32 %v196, %v227
    %v281 = vadd.f32 %v197, %v227
    %v282 = vadd.f32 %v198, %v232
    %v283 = vadd.f32 %v199, %v232
    %v284 = vadd.f32 %v200, %v232
    %v285 = vadd.f32 %v201, %v232
    %v286 = vadd.f32 %v202, %v232
    %v287 = vadd.f32 %v203, %v232
    %v288 = vadd.f32 %v204, %v232
    %v289 = vadd.f32 %v205, %v232
    %v290 = vadd.f32 %v206, %v232
    %v291 = vadd.f32 %v207, %v232
    %v292 = vadd.f32 %v208, %v232
    %v293 = vadd.f32 %v209, %v232
    %v294 = vadd.f32 %v210, %v232
    %v295 = vadd.f32 %v211, %v232
    %v296 = vadd.f32 %v212, %v232
    %v297 = vadd.f32 %v213, %v232
    %v298 = vld [vmem:[%s1] sm:$0xff]
    %v299 = vld [vmem:[%s1 + $0x8] sm:$0xff]
    %300 = vset.pattern.permute.xlu0 1
    %301 = vperm.xlu0 %300, %v38
    %v302 = vpop.permute.xlu0 %301
    %304 = vset.pattern.permute.xlu0 1
    %305 = vperm.xlu0 %304, %v39
    %v306 = vpop.permute.xlu0 %305
    %308 = vset.pattern.permute.xlu0 1
    %309 = vperm.xlu0 %308, %v40
    %v310 = vpop.permute.xlu0 %309
    %312 = vset.pattern.permute.xlu0 1
    %313 = vperm.xlu0 %312, %v41
    %v314 = vpop.permute.xlu0 %313
    %v318 = vlaneseq
    %v319 = vshrl.u32 %v318, 7
    %v320 = vsub.s32 0, %v319
    %v321 = vrot.slane %v298, %v320
    %v322 = vlaneseq
    %v323 = vshrl.u32 %v322, 7
    %v324 = vsub.s32 1, %v323
    %v325 = vrot.slane %v298, %v324
    %v326 = vlaneseq
    %v327 = vshrl.u32 %v326, 7
    %v328 = vsub.s32 2, %v327
    %v329 = vrot.slane %v298, %v328
    %v330 = vlaneseq
    %v331 = vshrl.u32 %v330, 7
    %v332 = vsub.s32 3, %v331
    %v333 = vrot.slane %v298, %v332
    %v334 = vlaneseq
    %v335 = vshrl.u32 %v334, 7
    %v336 = vsub.s32 4, %v335
    %v337 = vrot.slane %v298, %v336
    %v338 = vlaneseq
    %v339 = vshrl.u32 %v338, 7
    %v340 = vsub.s32 5, %v339
    %v341 = vrot.slane %v298, %v340
    %v342 = vlaneseq
    %v343 = vshrl.u32 %v342, 7
    %v344 = vsub.s32 6, %v343
    %v345 = vrot.slane %v298, %v344
    %v346 = vlaneseq
    %v347 = vshrl.u32 %v346, 7
    %v348 = vsub.s32 7, %v347
    %v349 = vrot.slane %v298, %v348
    %v350 = vlaneseq
    %v351 = vshrl.u32 %v350, 7
    %v352 = vsub.s32 0, %v351
    %v353 = vrot.slane %v299, %v352
    %v354 = vlaneseq
    %v355 = vshrl.u32 %v354, 7
    %v356 = vsub.s32 1, %v355
    %v357 = vrot.slane %v299, %v356
    %v358 = vlaneseq
    %v359 = vshrl.u32 %v358, 7
    %v360 = vsub.s32 2, %v359
    %v361 = vrot.slane %v299, %v360
    %v362 = vlaneseq
    %v363 = vshrl.u32 %v362, 7
    %v364 = vsub.s32 3, %v363
    %v365 = vrot.slane %v299, %v364
    %v366 = vlaneseq
    %v367 = vshrl.u32 %v366, 7
    %v368 = vsub.s32 4, %v367
    %v369 = vrot.slane %v299, %v368
    %v370 = vlaneseq
    %v371 = vshrl.u32 %v370, 7
    %v372 = vsub.s32 5, %v371
    %v373 = vrot.slane %v299, %v372
    %v374 = vlaneseq
    %v375 = vshrl.u32 %v374, 7
    %v376 = vsub.s32 6, %v375
    %v377 = vrot.slane %v299, %v376
    %v378 = vlaneseq
    %v379 = vshrl.u32 %v378, 7
    %v380 = vsub.s32 7, %v379
    %v381 = vrot.slane %v299, %v380
    %v398 = vmul.f32 %v302, %v321
    %v399 = vmul.f32 %v302, %v325
    %v400 = vmul.f32 %v302, %v329
    %v401 = vmul.f32 %v302, %v333
    %v402 = vmul.f32 %v302, %v337
    %v403 = vmul.f32 %v302, %v341
    %v404 = vmul.f32 %v302, %v345
    %v405 = vmul.f32 %v302, %v349
    %v406 = vmul.f32 %v302, %v353
    %v407 = vmul.f32 %v302, %v357
    %v408 = vmul.f32 %v302, %v361
    %v409 = vmul.f32 %v302, %v365
    %v410 = vmul.f32 %v302, %v369
    %v411 = vmul.f32 %v302, %v373
    %v412 = vmul.f32 %v302, %v377
    %v413 = vmul.f32 %v302, %v381
    %v414 = vmul.f32 %v306, %v321
    %v415 = vmul.f32 %v306, %v325
    %v416 = vmul.f32 %v306, %v329
    %v417 = vmul.f32 %v306, %v333
    %v418 = vmul.f32 %v306, %v337
    %v419 = vmul.f32 %v306, %v341
    %v420 = vmul.f32 %v306, %v345
    %v421 = vmul.f32 %v306, %v349
    %v422 = vmul.f32 %v306, %v353
    %v423 = vmul.f32 %v306, %v357
    %v424 = vmul.f32 %v306, %v361
    %v425 = vmul.f32 %v306, %v365
    %v426 = vmul.f32 %v306, %v369
    %v427 = vmul.f32 %v306, %v373
    %v428 = vmul.f32 %v306, %v377
    %v429 = vmul.f32 %v306, %v381
    %v430 = vmul.f32 %v310, %v321
    %v431 = vmul.f32 %v310, %v325
    %v432 = vmul.f32 %v310, %v329
    %v433 = vmul.f32 %v310, %v333
    %v434 = vmul.f32 %v310, %v337
    %v435 = vmul.f32 %v310, %v341
    %v436 = vmul.f32 %v310, %v345
    %v437 = vmul.f32 %v310, %v349
    %v438 = vmul.f32 %v310, %v353
    %v439 = vmul.f32 %v310, %v357
    %v440 = vmul.f32 %v310, %v361
    %v441 = vmul.f32 %v310, %v365
    %v442 = vmul.f32 %v310, %v369
    %v443 = vmul.f32 %v310, %v373
    %v444 = vmul.f32 %v310, %v377
    %v445 = vmul.f32 %v310, %v381
    %v446 = vmul.f32 %v314, %v321
    %v447 = vmul.f32 %v314, %v325
    %v448 = vmul.f32 %v314, %v329
    %v449 = vmul.f32 %v314, %v333
    %v450 = vmul.f32 %v314, %v337
    %v451 = vmul.f32 %v314, %v341
    %v452 = vmul.f32 %v314, %v345
    %v453 = vmul.f32 %v314, %v349
    %v454 = vmul.f32 %v314, %v353
    %v455 = vmul.f32 %v314, %v357
    %v456 = vmul.f32 %v314, %v361
    %v457 = vmul.f32 %v314, %v365
    %v458 = vmul.f32 %v314, %v369
    %v459 = vmul.f32 %v314, %v373
    %v460 = vmul.f32 %v314, %v377
    %v461 = vmul.f32 %v314, %v381
    %v462 = vadd.f32 %v234, %v398
    %v463 = vadd.f32 %v235, %v399
    %v464 = vadd.f32 %v236, %v400
    %v465 = vadd.f32 %v237, %v401
    %v466 = vadd.f32 %v238, %v402
    %v467 = vadd.f32 %v239, %v403
    %v468 = vadd.f32 %v240, %v404
    %v469 = vadd.f32 %v241, %v405
    %v470 = vadd.f32 %v242, %v406
    %v471 = vadd.f32 %v243, %v407
    %v472 = vadd.f32 %v244, %v408
    %v473 = vadd.f32 %v245, %v409
    %v474 = vadd.f32 %v246, %v410
    %v475 = vadd.f32 %v247, %v411
    %v476 = vadd.f32 %v248, %v412
    %v477 = vadd.f32 %v249, %v413
    %v478 = vadd.f32 %v250, %v414
    %v479 = vadd.f32 %v251, %v415
    %v480 = vadd.f32 %v252, %v416
    %v481 = vadd.f32 %v253, %v417
    %v482 = vadd.f32 %v254, %v418
    %v483 = vadd.f32 %v255, %v419
    %v484 = vadd.f32 %v256, %v420
    %v485 = vadd.f32 %v257, %v421
    %v486 = vadd.f32 %v258, %v422
    %v487 = vadd.f32 %v259, %v423
    %v488 = vadd.f32 %v260, %v424
    %v489 = vadd.f32 %v261, %v425
    %v490 = vadd.f32 %v262, %v426
    %v491 = vadd.f32 %v263, %v427
    %v492 = vadd.f32 %v264, %v428
    %v493 = vadd.f32 %v265, %v429
    %v494 = vadd.f32 %v266, %v430
    %v495 = vadd.f32 %v267, %v431
    %v496 = vadd.f32 %v268, %v432
    %v497 = vadd.f32 %v269, %v433
    %v498 = vadd.f32 %v270, %v434
    %v499 = vadd.f32 %v271, %v435
    %v500 = vadd.f32 %v272, %v436
    %v501 = vadd.f32 %v273, %v437
    %v502 = vadd.f32 %v274, %v438
    %v503 = vadd.f32 %v275, %v439
    %v504 = vadd.f32 %v276, %v440
    %v505 = vadd.f32 %v277, %v441
    %v506 = vadd.f32 %v278, %v442
    %v507 = vadd.f32 %v279, %v443
    %v508 = vadd.f32 %v280, %v444
    %v509 = vadd.f32 %v281, %v445
    %v510 = vadd.f32 %v282, %v446
    %v511 = vadd.f32 %v283, %v447
    %v512 = vadd.f32 %v284, %v448
    %v513 = vadd.f32 %v285, %v449
    %v514 = vadd.f32 %v286, %v450
    %v515 = vadd.f32 %v287, %v451
    %v516 = vadd.f32 %v288, %v452
    %v517 = vadd.f32 %v289, %v453
    %v518 = vadd.f32 %v290, %v454
    %v519 = vadd.f32 %v291, %v455
    %v520 = vadd.f32 %v292, %v456
    %v521 = vadd.f32 %v293, %v457
    %v522 = vadd.f32 %v294, %v458
    %v523 = vadd.f32 %v295, %v459
    %v524 = vadd.f32 %v296, %v460
    %v525 = vadd.f32 %v297, %v461
    %v526 = vld [vmem:[%s2] sm:$0xff]
    %v527 = vld [vmem:[%s2 + $0x8] sm:$0xff]
    %528 = vset.pattern.permute.xlu0 2
    %529 = vperm.xlu0 %528, %v38
    %v530 = vpop.permute.xlu0 %529
    %532 = vset.pattern.permute.xlu0 2
    %533 = vperm.xlu0 %532, %v39
    %v534 = vpop.permute.xlu0 %533
    %536 = vset.pattern.permute.xlu0 2
    %537 = vperm.xlu0 %536, %v40
    %v538 = vpop.permute.xlu0 %537
    %540 = vset.pattern.permute.xlu0 2
    %541 = vperm.xlu0 %540, %v41
    %v542 = vpop.permute.xlu0 %541
    %v546 = vlaneseq
    %v547 = vshrl.u32 %v546, 7
    %v548 = vsub.s32 0, %v547
    %v549 = vrot.slane %v526, %v548
    %v550 = vlaneseq
    %v551 = vshrl.u32 %v550, 7
    %v552 = vsub.s32 1, %v551
    %v553 = vrot.slane %v526, %v552
    %v554 = vlaneseq
    %v555 = vshrl.u32 %v554, 7
    %v556 = vsub.s32 2, %v555
    %v557 = vrot.slane %v526, %v556
    %v558 = vlaneseq
    %v559 = vshrl.u32 %v558, 7
    %v560 = vsub.s32 3, %v559
    %v561 = vrot.slane %v526, %v560
    %v562 = vlaneseq
    %v563 = vshrl.u32 %v562, 7
    %v564 = vsub.s32 4, %v563
    %v565 = vrot.slane %v526, %v564
    %v566 = vlaneseq
    %v567 = vshrl.u32 %v566, 7
    %v568 = vsub.s32 5, %v567
    %v569 = vrot.slane %v526, %v568
    %v570 = vlaneseq
    %v571 = vshrl.u32 %v570, 7
    %v572 = vsub.s32 6, %v571
    %v573 = vrot.slane %v526, %v572
    %v574 = vlaneseq
    %v575 = vshrl.u32 %v574, 7
    %v576 = vsub.s32 7, %v575
    %v577 = vrot.slane %v526, %v576
    %v578 = vlaneseq
    %v579 = vshrl.u32 %v578, 7
    %v580 = vsub.s32 0, %v579
    %v581 = vrot.slane %v527, %v580
    %v582 = vlaneseq
    %v583 = vshrl.u32 %v582, 7
    %v584 = vsub.s32 1, %v583
    %v585 = vrot.slane %v527, %v584
    %v586 = vlaneseq
    %v587 = vshrl.u32 %v586, 7
    %v588 = vsub.s32 2, %v587
    %v589 = vrot.slane %v527, %v588
    %v590 = vlaneseq
    %v591 = vshrl.u32 %v590, 7
    %v592 = vsub.s32 3, %v591
    %v593 = vrot.slane %v527, %v592
    %v594 = vlaneseq
    %v595 = vshrl.u32 %v594, 7
    %v596 = vsub.s32 4, %v595
    %v597 = vrot.slane %v527, %v596
    %v598 = vlaneseq
    %v599 = vshrl.u32 %v598, 7
    %v600 = vsub.s32 5, %v599
    %v601 = vrot.slane %v527, %v600
    %v602 = vlaneseq
    %v603 = vshrl.u32 %v602, 7
    %v604 = vsub.s32 6, %v603
    %v605 = vrot.slane %v527, %v604
    %v606 = vlaneseq
    %v607 = vshrl.u32 %v606, 7
    %v608 = vsub.s32 7, %v607
    %v609 = vrot.slane %v527, %v608
    %v626 = vmul.f32 %v530, %v549
    %v627 = vmul.f32 %v530, %v553
    %v628 = vmul.f32 %v530, %v557
    %v629 = vmul.f32 %v530, %v561
    %v630 = vmul.f32 %v530, %v565
    %v631 = vmul.f32 %v530, %v569
    %v632 = vmul.f32 %v530, %v573
    %v633 = vmul.f32 %v530, %v577
    %v634 = vmul.f32 %v530, %v581
    %v635 = vmul.f32 %v530, %v585
    %v636 = vmul.f32 %v530, %v589
    %v637 = vmul.f32 %v530, %v593
    %v638 = vmul.f32 %v530, %v597
    %v639 = vmul.f32 %v530, %v601
    %v640 = vmul.f32 %v530, %v605
    %v641 = vmul.f32 %v530, %v609
    %v642 = vmul.f32 %v534, %v549
    %v643 = vmul.f32 %v534, %v553
    %v644 = vmul.f32 %v534, %v557
    %v645 = vmul.f32 %v534, %v561
    %v646 = vmul.f32 %v534, %v565
    %v647 = vmul.f32 %v534, %v569
    %v648 = vmul.f32 %v534, %v573
    %v649 = vmul.f32 %v534, %v577
    %v650 = vmul.f32 %v534, %v581
    %v651 = vmul.f32 %v534, %v585
    %v652 = vmul.f32 %v534, %v589
    %v653 = vmul.f32 %v534, %v593
    %v654 = vmul.f32 %v534, %v597
    %v655 = vmul.f32 %v534, %v601
    %v656 = vmul.f32 %v534, %v605
    %v657 = vmul.f32 %v534, %v609
    %v658 = vmul.f32 %v538, %v549
    %v659 = vmul.f32 %v538, %v553
    %v660 = vmul.f32 %v538, %v557
    %v661 = vmul.f32 %v538, %v561
    %v662 = vmul.f32 %v538, %v565
    %v663 = vmul.f32 %v538, %v569
    %v664 = vmul.f32 %v538, %v573
    %v665 = vmul.f32 %v538, %v577
    %v666 = vmul.f32 %v538, %v581
    %v667 = vmul.f32 %v538, %v585
    %v668 = vmul.f32 %v538, %v589
    %v669 = vmul.f32 %v538, %v593
    %v670 = vmul.f32 %v538, %v597
    %v671 = vmul.f32 %v538, %v601
    %v672 = vmul.f32 %v538, %v605
    %v673 = vmul.f32 %v538, %v609
    %v674 = vmul.f32 %v542, %v549
    %v675 = vmul.f32 %v542, %v553
    %v676 = vmul.f32 %v542, %v557
    %v677 = vmul.f32 %v542, %v561
    %v678 = vmul.f32 %v542, %v565
    %v679 = vmul.f32 %v542, %v569
    %v680 = vmul.f32 %v542, %v573
    %v681 = vmul.f32 %v542, %v577
    %v682 = vmul.f32 %v542, %v581
    %v683 = vmul.f32 %v542, %v585
    %v684 = vmul.f32 %v542, %v589
    %v685 = vmul.f32 %v542, %v593
    %v686 = vmul.f32 %v542, %v597
    %v687 = vmul.f32 %v542, %v601
    %v688 = vmul.f32 %v542, %v605
    %v689 = vmul.f32 %v542, %v609
    %v690 = vadd.f32 %v462, %v626
    %v691 = vadd.f32 %v463, %v627
    %v692 = vadd.f32 %v464, %v628
    %v693 = vadd.f32 %v465, %v629
    %v694 = vadd.f32 %v466, %v630
    %v695 = vadd.f32 %v467, %v631
    %v696 = vadd.f32 %v468, %v632
    %v697 = vadd.f32 %v469, %v633
    %v698 = vadd.f32 %v470, %v634
    %v699 = vadd.f32 %v471, %v635
    %v700 = vadd.f32 %v472, %v636
    %v701 = vadd.f32 %v473, %v637
    %v702 = vadd.f32 %v474, %v638
    %v703 = vadd.f32 %v475, %v639
    %v704 = vadd.f32 %v476, %v640
    %v705 = vadd.f32 %v477, %v641
    %v706 = vadd.f32 %v478, %v642
    %v707 = vadd.f32 %v479, %v643
    %v708 = vadd.f32 %v480, %v644
    %v709 = vadd.f32 %v481, %v645
    %v710 = vadd.f32 %v482, %v646
    %v711 = vadd.f32 %v483, %v647
    %v712 = vadd.f32 %v484, %v648
    %v713 = vadd.f32 %v485, %v649
    %v714 = vadd.f32 %v486, %v650
    %v715 = vadd.f32 %v487, %v651
    %v716 = vadd.f32 %v488, %v652
    %v717 = vadd.f32 %v489, %v653
    %v718 = vadd.f32 %v490, %v654
    %v719 = vadd.f32 %v491, %v655
    %v720 = vadd.f32 %v492, %v656
    %v721 = vadd.f32 %v493, %v657
    %v722 = vadd.f32 %v494, %v658
    %v723 = vadd.f32 %v495, %v659
    %v724 = vadd.f32 %v496, %v660
    %v725 = vadd.f32 %v497, %v661
    %v726 = vadd.f32 %v498, %v662
    %v727 = vadd.f32 %v499, %v663
    %v728 = vadd.f32 %v500, %v664
    %v729 = vadd.f32 %v501, %v665
    %v730 = vadd.f32 %v502, %v666
    %v731 = vadd.f32 %v503, %v667
    %v732 = vadd.f32 %v504, %v668
    %v733 = vadd.f32 %v505, %v669
    %v734 = vadd.f32 %v506, %v670
    %v735 = vadd.f32 %v507, %v671
    %v736 = vadd.f32 %v508, %v672
    %v737 = vadd.f32 %v509, %v673
    %v738 = vadd.f32 %v510, %v674
    %v739 = vadd.f32 %v511, %v675
    %v740 = vadd.f32 %v512, %v676
    %v741 = vadd.f32 %v513, %v677
    %v742 = vadd.f32 %v514, %v678
    %v743 = vadd.f32 %v515, %v679
    %v744 = vadd.f32 %v516, %v680
    %v745 = vadd.f32 %v517, %v681
    %v746 = vadd.f32 %v518, %v682
    %v747 = vadd.f32 %v519, %v683
    %v748 = vadd.f32 %v520, %v684
    %v749 = vadd.f32 %v521, %v685
    %v750 = vadd.f32 %v522, %v686
    %v751 = vadd.f32 %v523, %v687
    %v752 = vadd.f32 %v524, %v688
    %v753 = vadd.f32 %v525, %v689
    %v754 = vld [vmem:[%s3] sm:$0xff]
    %v755 = vld [vmem:[%s3 + $0x8] sm:$0xff]
    %756 = vset.pattern.permute.xlu0 3
    %757 = vperm.xlu0 %756, %v38
    %v758 = vpop.permute.xlu0 %757
    %760 = vset.pattern.permute.xlu0 3
    %761 = vperm.xlu0 %760, %v39
    %v762 = vpop.permute.xlu0 %761
    %764 = vset.pattern.permute.xlu0 3
    %765 = vperm.xlu0 %764, %v40
    %v766 = vpop.permute.xlu0 %765
    %768 = vset.pattern.permute.xlu0 3
    %769 = vperm.xlu0 %768, %v41
    %v770 = vpop.permute.xlu0 %769
    %v774 = vlaneseq
    %v775 = vshrl.u32 %v774, 7
    %v776 = vsub.s32 0, %v775
    %v777 = vrot.slane %v754, %v776
    %v778 = vlaneseq
    %v779 = vshrl.u32 %v778, 7
    %v780 = vsub.s32 1, %v779
    %v781 = vrot.slane %v754, %v780
    %v782 = vlaneseq
    %v783 = vshrl.u32 %v782, 7
    %v784 = vsub.s32 2, %v783
    %v785 = vrot.slane %v754, %v784
    %v786 = vlaneseq
    %v787 = vshrl.u32 %v786, 7
    %v788 = vsub.s32 3, %v787
    %v789 = vrot.slane %v754, %v788
    %v790 = vlaneseq
    %v791 = vshrl.u32 %v790, 7
    %v792 = vsub.s32 4, %v791
    %v793 = vrot.slane %v754, %v792
    %v794 = vlaneseq
    %v795 = vshrl.u32 %v794, 7
    %v796 = vsub.s32 5, %v795
    %v797 = vrot.slane %v754, %v796
    %v798 = vlaneseq
    %v799 = vshrl.u32 %v798, 7
    %v800 = vsub.s32 6, %v799
    %v801 = vrot.slane %v754, %v800
    %v802 = vlaneseq
    %v803 = vshrl.u32 %v802, 7
    %v804 = vsub.s32 7, %v803
    %v805 = vrot.slane %v754, %v804
    %v806 = vlaneseq
    %v807 = vshrl.u32 %v806, 7
    %v808 = vsub.s32 0, %v807
    %v809 = vrot.slane %v755, %v808
    %v810 = vlaneseq
    %v811 = vshrl.u32 %v810, 7
    %v812 = vsub.s32 1, %v811
    %v813 = vrot.slane %v755, %v812
    %v814 = vlaneseq
    %v815 = vshrl.u32 %v814, 7
    %v816 = vsub.s32 2, %v815
    %v817 = vrot.slane %v755, %v816
    %v818 = vlaneseq
    %v819 = vshrl.u32 %v818, 7
    %v820 = vsub.s32 3, %v819
    %v821 = vrot.slane %v755, %v820
    %v822 = vlaneseq
    %v823 = vshrl.u32 %v822, 7
    %v824 = vsub.s32 4, %v823
    %v825 = vrot.slane %v755, %v824
    %v826 = vlaneseq
    %v827 = vshrl.u32 %v826, 7
    %v828 = vsub.s32 5, %v827
    %v829 = vrot.slane %v755, %v828
    %v830 = vlaneseq
    %v831 = vshrl.u32 %v830, 7
    %v832 = vsub.s32 6, %v831
    %v833 = vrot.slane %v755, %v832
    %v834 = vlaneseq
    %v835 = vshrl.u32 %v834, 7
    %v836 = vsub.s32 7, %v835
    %v837 = vrot.slane %v755, %v836
    %v854 = vmul.f32 %v758, %v777
    %v855 = vmul.f32 %v758, %v781
    %v856 = vmul.f32 %v758, %v785
    %v857 = vmul.f32 %v758, %v789
    %v858 = vmul.f32 %v758, %v793
    %v859 = vmul.f32 %v758, %v797
    %v860 = vmul.f32 %v758, %v801
    %v861 = vmul.f32 %v758, %v805
    %v862 = vmul.f32 %v758, %v809
    %v863 = vmul.f32 %v758, %v813
    %v864 = vmul.f32 %v758, %v817
    %v865 = vmul.f32 %v758, %v821
    %v866 = vmul.f32 %v758, %v825
    %v867 = vmul.f32 %v758, %v829
    %v868 = vmul.f32 %v758, %v833
    %v869 = vmul.f32 %v758, %v837
    %v870 = vmul.f32 %v762, %v777
    %v871 = vmul.f32 %v762, %v781
    %v872 = vmul.f32 %v762, %v785
    %v873 = vmul.f32 %v762, %v789
    %v874 = vmul.f32 %v762, %v793
    %v875 = vmul.f32 %v762, %v797
    %v876 = vmul.f32 %v762, %v801
    %v877 = vmul.f32 %v762, %v805
    %v878 = vmul.f32 %v762, %v809
    %v879 = vmul.f32 %v762, %v813
    %v880 = vmul.f32 %v762, %v817
    %v881 = vmul.f32 %v762, %v821
    %v882 = vmul.f32 %v762, %v825
    %v883 = vmul.f32 %v762, %v829
    %v884 = vmul.f32 %v762, %v833
    %v885 = vmul.f32 %v762, %v837
    %v886 = vmul.f32 %v766, %v777
    %v887 = vmul.f32 %v766, %v781
    %v888 = vmul.f32 %v766, %v785
    %v889 = vmul.f32 %v766, %v789
    %v890 = vmul.f32 %v766, %v793
    %v891 = vmul.f32 %v766, %v797
    %v892 = vmul.f32 %v766, %v801
    %v893 = vmul.f32 %v766, %v805
    %v894 = vmul.f32 %v766, %v809
    %v895 = vmul.f32 %v766, %v813
    %v896 = vmul.f32 %v766, %v817
    %v897 = vmul.f32 %v766, %v821
    %v898 = vmul.f32 %v766, %v825
    %v899 = vmul.f32 %v766, %v829
    %v900 = vmul.f32 %v766, %v833
    %v901 = vmul.f32 %v766, %v837
    %v902 = vmul.f32 %v770, %v777
    %v903 = vmul.f32 %v770, %v781
    %v904 = vmul.f32 %v770, %v785
    %v905 = vmul.f32 %v770, %v789
    %v906 = vmul.f32 %v770, %v793
    %v907 = vmul.f32 %v770, %v797
    %v908 = vmul.f32 %v770, %v801
    %v909 = vmul.f32 %v770, %v805
    %v910 = vmul.f32 %v770, %v809
    %v911 = vmul.f32 %v770, %v813
    %v912 = vmul.f32 %v770, %v817
    %v913 = vmul.f32 %v770, %v821
    %v914 = vmul.f32 %v770, %v825
    %v915 = vmul.f32 %v770, %v829
    %v916 = vmul.f32 %v770, %v833
    %v917 = vmul.f32 %v770, %v837
    %v918 = vadd.f32 %v690, %v854
    %v919 = vadd.f32 %v691, %v855
    %v920 = vadd.f32 %v692, %v856
    %v921 = vadd.f32 %v693, %v857
    %v922 = vadd.f32 %v694, %v858
    %v923 = vadd.f32 %v695, %v859
    %v924 = vadd.f32 %v696, %v860
    %v925 = vadd.f32 %v697, %v861
    %v926 = vadd.f32 %v698, %v862
    %v927 = vadd.f32 %v699, %v863
    %v928 = vadd.f32 %v700, %v864
    %v929 = vadd.f32 %v701, %v865
    %v930 = vadd.f32 %v702, %v866
    %v931 = vadd.f32 %v703, %v867
    %v932 = vadd.f32 %v704, %v868
    %v933 = vadd.f32 %v705, %v869
    %v934 = vadd.f32 %v706, %v870
    %v935 = vadd.f32 %v707, %v871
    %v936 = vadd.f32 %v708, %v872
    %v937 = vadd.f32 %v709, %v873
    %v938 = vadd.f32 %v710, %v874
    %v939 = vadd.f32 %v711, %v875
    %v940 = vadd.f32 %v712, %v876
    %v941 = vadd.f32 %v713, %v877
    %v942 = vadd.f32 %v714, %v878
    %v943 = vadd.f32 %v715, %v879
    %v944 = vadd.f32 %v716, %v880
    %v945 = vadd.f32 %v717, %v881
    %v946 = vadd.f32 %v718, %v882
    %v947 = vadd.f32 %v719, %v883
    %v948 = vadd.f32 %v720, %v884
    %v949 = vadd.f32 %v721, %v885
    %v950 = vadd.f32 %v722, %v886
    %v951 = vadd.f32 %v723, %v887
    %v952 = vadd.f32 %v724, %v888
    %v953 = vadd.f32 %v725, %v889
    %v954 = vadd.f32 %v726, %v890
    %v955 = vadd.f32 %v727, %v891
    %v956 = vadd.f32 %v728, %v892
    %v957 = vadd.f32 %v729, %v893
    %v958 = vadd.f32 %v730, %v894
    %v959 = vadd.f32 %v731, %v895
    %v960 = vadd.f32 %v732, %v896
    %v961 = vadd.f32 %v733, %v897
    %v962 = vadd.f32 %v734, %v898
    %v963 = vadd.f32 %v735, %v899
    %v964 = vadd.f32 %v736, %v900
    %v965 = vadd.f32 %v737, %v901
    %v966 = vadd.f32 %v738, %v902
    %v967 = vadd.f32 %v739, %v903
    %v968 = vadd.f32 %v740, %v904
    %v969 = vadd.f32 %v741, %v905
    %v970 = vadd.f32 %v742, %v906
    %v971 = vadd.f32 %v743, %v907
    %v972 = vadd.f32 %v744, %v908
    %v973 = vadd.f32 %v745, %v909
    %v974 = vadd.f32 %v746, %v910
    %v975 = vadd.f32 %v747, %v911
    %v976 = vadd.f32 %v748, %v912
    %v977 = vadd.f32 %v749, %v913
    %v978 = vadd.f32 %v750, %v914
    %v979 = vadd.f32 %v751, %v915
    %v980 = vadd.f32 %v752, %v916
    %v981 = vadd.f32 %v753, %v917
    %v982 = vmax.f32 %v918, 0.0
    %v983 = vmax.f32 %v919, 0.0
    %v984 = vmax.f32 %v920, 0.0
    %v985 = vmax.f32 %v921, 0.0
    %v986 = vmax.f32 %v922, 0.0
    %v987 = vmax.f32 %v923, 0.0
    %v988 = vmax.f32 %v924, 0.0
    %v989 = vmax.f32 %v925, 0.0
    %v990 = vmax.f32 %v926, 0.0
    %v991 = vmax.f32 %v927, 0.0
    %v992 = vmax.f32 %v928, 0.0
    %v993 = vmax.f32 %v929, 0.0
    %v994 = vmax.f32 %v930, 0.0
    %v995 = vmax.f32 %v931, 0.0
    %v996 = vmax.f32 %v932, 0.0
    %v997 = vmax.f32 %v933, 0.0
    %v998 = vmax.f32 %v934, 0.0
    %v999 = vmax.f32 %v935, 0.0
    %v1000 = vmax.f32 %v936, 0.0
    %v1001 = vmax.f32 %v937, 0.0
    %v1002 = vmax.f32 %v938, 0.0
    %v1003 = vmax.f32 %v939, 0.0
    %v1004 = vmax.f32 %v940, 0.0
    %v1005 = vmax.f32 %v941, 0.0
    %v1006 = vmax.f32 %v942, 0.0
    %v1007 = vmax.f32 %v943, 0.0
    %v1008 = vmax.f32 %v944, 0.0
    %v1009 = vmax.f32 %v945, 0.0
    %v1010 = vmax.f32 %v946, 0.0
    %v1011 = vmax.f32 %v947, 0.0
    %v1012 = vmax.f32 %v948, 0.0
    %v1013 = vmax.f32 %v949, 0.0
    %v1014 = vmax.f32 %v950, 0.0
    %v1015 = vmax.f32 %v951, 0.0
    %v1016 = vmax.f32 %v952, 0.0
    %v1017 = vmax.f32 %v953, 0.0
    %v1018 = vmax.f32 %v954, 0.0
    %v1019 = vmax.f32 %v955, 0.0
    %v1020 = vmax.f32 %v956, 0.0
    %v1021 = vmax.f32 %v957, 0.0
    %v1022 = vmax.f32 %v958, 0.0
    %v1023 = vmax.f32 %v959, 0.0
    %v1024 = vmax.f32 %v960, 0.0
    %v1025 = vmax.f32 %v961, 0.0
    %v1026 = vmax.f32 %v962, 0.0
    %v1027 = vmax.f32 %v963, 0.0
    %v1028 = vmax.f32 %v964, 0.0
    %v1029 = vmax.f32 %v965, 0.0
    %v1030 = vmax.f32 %v966, 0.0
    %v1031 = vmax.f32 %v967, 0.0
    %v1032 = vmax.f32 %v968, 0.0
    %v1033 = vmax.f32 %v969, 0.0
    %v1034 = vmax.f32 %v970, 0.0
    %v1035 = vmax.f32 %v971, 0.0
    %v1036 = vmax.f32 %v972, 0.0
    %v1037 = vmax.f32 %v973, 0.0
    %v1038 = vmax.f32 %v974, 0.0
    %v1039 = vmax.f32 %v975, 0.0
    %v1040 = vmax.f32 %v976, 0.0
    %v1041 = vmax.f32 %v977, 0.0
    %v1042 = vmax.f32 %v978, 0.0
    %v1043 = vmax.f32 %v979, 0.0
    %v1044 = vmax.f32 %v980, 0.0
    %v1045 = vmax.f32 %v981, 0.0
    %v1046 = vld [vmem:[%s6] sm:$0xff]
    %v1047 = vld [vmem:[%s6 + $0x8] sm:$0xff]
    %v1048 = vld [vmem:[%s6 + $0x10] sm:$0xff]
    %v1049 = vld [vmem:[%s6 + $0x18] sm:$0xff]
    %v1050 = vld [vmem:[%s7] sm:$0xff]
    %v1051 = vld [vmem:[%s7 + $0x8] sm:$0xff]
    %v1052 = vld [vmem:[%s7 + $0x10] sm:$0xff]
    %v1053 = vld [vmem:[%s7 + $0x18] sm:$0xff]
    %1055 = vset.pattern.permute.xlu0 0
    %1056 = vperm.xlu0 %1055, %v1050
    %v1057 = vpop.permute.xlu0 %1056
    %1060 = vset.pattern.permute.xlu0 0
    %1061 = vperm.xlu0 %1060, %v1051
    %v1062 = vpop.permute.xlu0 %1061
    %1065 = vset.pattern.permute.xlu0 0
    %1066 = vperm.xlu0 %1065, %v1052
    %v1067 = vpop.permute.xlu0 %1066
    %1070 = vset.pattern.permute.xlu0 0
    %1071 = vperm.xlu0 %1070, %v1053
    %v1072 = vpop.permute.xlu0 %1071
    %vm1074 = vcmask 261120
    %v1076 = vsel %vm1074, %v1046, 0
    %v1079 = vsel %vm1074, %v1047, 0
    %v1082 = vsel %vm1074, %v1048, 0
    %v1085 = vsel %vm1074, %v1049, 0
    %v1087 = vand.u32 %v983, 4294901760
    %1088 = vmatprep.subr.mxu0 %v1087
    %v1089 = vand.u32 %v982, 4294901760
    %1090 = vmatpush1.msra.mxu0 %v1089
    %v1091 = vand.u32 %v999, 4294901760
    %1092 = vmatprep.subr.mxu0 %v1091
    %v1093 = vand.u32 %v998, 4294901760
    %1094 = vmatpush1.msra.mxu0 %v1093
    %v1095 = vand.u32 %v1015, 4294901760
    %1096 = vmatprep.subr.mxu0 %v1095
    %v1097 = vand.u32 %v1014, 4294901760
    %1098 = vmatpush1.msra.mxu0 %v1097
    %v1099 = vand.u32 %v1031, 4294901760
    %1100 = vmatprep.subr.mxu0 %v1099
    %v1101 = vand.u32 %v1030, 4294901760
    %1102 = vmatpush1.msra.mxu0 %v1101
    %1103 = vmatprep.subr.mxu0 0.0
    %1104 = vmatpush1.msra.mxu0 0.0
    %1105 = vmatprep.subr.mxu0 0.0
    %1106 = vmatpush1.msra.mxu0 0.0
    %1107 = vmatprep.subr.mxu0 0.0
    %1108 = vmatpush1.msra.mxu0 0.0
    %1109 = vmatprep.subr.mxu0 0.0
    %1110 = vmatpush1.msra.mxu0 0.0
    %1111 = vmatprep.subr.mxu0 0.0
    %1112 = vmatpush1.msra.mxu0 0.0
    %1113 = vmatprep.subr.mxu0 0.0
    %1114 = vmatpush1.msra.mxu0 0.0
    %1115 = vmatprep.subr.mxu0 0.0
    %1116 = vmatpush1.msra.mxu0 0.0
    %1117 = vmatprep.subr.mxu0 0.0
    %1118 = vmatpush1.msra.mxu0 0.0
    %1119 = vmatprep.subr.mxu0 0.0
    %1120 = vmatpush1.msra.mxu0 0.0
    %1121 = vmatprep.subr.mxu0 0.0
    %1122 = vmatpush1.msra.mxu0 0.0
    %1123 = vmatprep.subr.mxu0 0.0
    %1124 = vmatpush1.msra.mxu0 0.0
    %1125 = vmatprep.subr.mxu0 0.0
    %1126 = vmatpush1.msra.mxu0 0.0
    %1127 = vmatprep.subr.mxu0 0.0
    %1128 = vmatpush1.msra.mxu0 0.0
    %1129 = vmatprep.subr.mxu0 0.0
    %1130 = vmatpush1.msra.mxu0 0.0
    %1131 = vmatprep.subr.mxu0 0.0
    %1132 = vmatpush1.msra.mxu0 0.0
    %1133 = vmatprep.subr.mxu0 0.0
    %1134 = vmatpush1.msra.mxu0 0.0
    %1135 = vmatprep.subr.mxu0 0.0
    %1136 = vmatpush1.msra.mxu0 0.0
    %1137 = vmatprep.subr.mxu0 0.0
    %1138 = vmatpush1.msra.mxu0 0.0
    %1139 = vmatprep.subr.mxu0 0.0
    %1140 = vmatpush1.msra.mxu0 0.0
    %1141 = vmatprep.subr.mxu0 0.0
    %1142 = vmatpush1.msra.mxu0 0.0
    %1143 = vmatprep.subr.mxu0 0.0
    %1144 = vmatpush1.msra.mxu0 0.0
    %1145 = vmatprep.subr.mxu0 0.0
    %1146 = vmatpush1.msra.mxu0 0.0
    %1147 = vmatprep.subr.mxu0 0.0
    %1148 = vmatpush1.msra.mxu0 0.0
    %1149 = vmatprep.subr.mxu0 0.0
    %1150 = vmatpush1.msra.mxu0 0.0
    %1151 = vmatprep.subr.mxu0 0.0
    %1152 = vmatpush1.msra.mxu0 0.0
    %1153 = vmatprep.subr.mxu0 0.0
    %1154 = vmatpush1.msra.mxu0 0.0
    %1155 = vmatprep.subr.mxu0 0.0
    %1156 = vmatpush1.msra.mxu0 0.0
    %1157 = vmatprep.subr.mxu0 0.0
    %1158 = vmatpush1.msra.mxu0 0.0
    %1159 = vmatprep.mubr.f32.mxu0 0.0
    %v1160 = vand.u32 %v1076, 4294901760
    %v1161 = vsub.f32 %v1076, %v1160
    %v1162 = vand.u32 %v1161, 4294901760
    %v1163 = vsub.f32 %v1161, %v1162
    %v1164 = vand.u32 %v1163, 4294901760
    %1165 = vmatmul.mubr.f32.gmra.mrb[0].mxu0 %v1164
    %v1166 = vpop.f32.mrb[0].mxu0
    %v1167 = vadd.f32 %v1057, %v1166
    %v1168 = vpop.f32.mrb[0].mxu0
    %v1169 = vadd.f32 %v1057, %v1168
    %1170 = vmatprep.mubr.f32.mxu0 0.0
    %v1171 = vand.u32 %v1079, 4294901760
    %v1172 = vsub.f32 %v1079, %v1171
    %v1173 = vand.u32 %v1172, 4294901760
    %v1174 = vsub.f32 %v1172, %v1173
    %v1175 = vand.u32 %v1174, 4294901760
    %1176 = vmatmul.mubr.f32.gmra.mrb[0].mxu0 %v1175
    %v1177 = vpop.f32.mrb[0].mxu0
    %v1178 = vadd.f32 %v1062, %v1177
    %v1179 = vpop.f32.mrb[0].mxu0
    %v1180 = vadd.f32 %v1062, %v1179
    %1181 = vmatprep.mubr.f32.mxu0 0.0
    %v1182 = vand.u32 %v1082, 4294901760
    %v1183 = vsub.f32 %v1082, %v1182
    %v1184 = vand.u32 %v1183, 4294901760
    %v1185 = vsub.f32 %v1183, %v1184
    %v1186 = vand.u32 %v1185, 4294901760
    %1187 = vmatmul.mubr.f32.gmra.mrb[0].mxu0 %v1186
    %v1188 = vpop.f32.mrb[0].mxu0
    %v1189 = vadd.f32 %v1067, %v1188
    %v1190 = vpop.f32.mrb[0].mxu0
    %v1191 = vadd.f32 %v1067, %v1190
    %1192 = vmatprep.mubr.f32.mxu0 0.0
    %v1193 = vand.u32 %v1085, 4294901760
    %v1194 = vsub.f32 %v1085, %v1193
    %v1195 = vand.u32 %v1194, 4294901760
    %v1196 = vsub.f32 %v1194, %v1195
    %v1197 = vand.u32 %v1196, 4294901760
    %1198 = vmatmul.mubr.f32.gmra.mrb[0].mxu0 %v1197
    %v1199 = vpop.f32.mrb[0].mxu0
    %v1200 = vadd.f32 %v1072, %v1199
    %v1201 = vpop.f32.mrb[0].mxu0
    %v1202 = vadd.f32 %v1072, %v1201
    %1203 = vdwg.mxu0
    %v1204 = vand.u32 %v983, 4294901760
    %v1205 = vsub.f32 %v983, %v1204
    %v1206 = vand.u32 %v1205, 4294901760
    %v1207 = vsub.f32 %v1205, %v1206
    %v1208 = vand.u32 %v1207, 4294901760
    %1209 = vmatprep.subr.mxu0 %v1208
    %v1210 = vand.u32 %v982, 4294901760
    %v1211 = vsub.f32 %v982, %v1210
    %v1212 = vand.u32 %v1211, 4294901760
    %v1213 = vsub.f32 %v1211, %v1212
    %v1214 = vand.u32 %v1213, 4294901760
    %1215 = vmatpush1.msra.mxu0 %v1214
    %v1216 = vand.u32 %v999, 4294901760
    %v1217 = vsub.f32 %v999, %v1216
    %v1218 = vand.u32 %v1217, 4294901760
    %v1219 = vsub.f32 %v1217, %v1218
    %v1220 = vand.u32 %v1219, 4294901760
    %1221 = vmatprep.subr.mxu0 %v1220
    %v1222 = vand.u32 %v998, 4294901760
    %v1223 = vsub.f32 %v998, %v1222
    %v1224 = vand.u32 %v1223, 4294901760
    %v1225 = vsub.f32 %v1223, %v1224
    %v1226 = vand.u32 %v1225, 4294901760
    %1227 = vmatpush1.msra.mxu0 %v1226
    %v1228 = vand.u32 %v1015, 4294901760
    %v1229 = vsub.f32 %v1015, %v1228
    %v1230 = vand.u32 %v1229, 4294901760
    %v1231 = vsub.f32 %v1229, %v1230
    %v1232 = vand.u32 %v1231, 4294901760
    %1233 = vmatprep.subr.mxu0 %v1232
    %v1234 = vand.u32 %v1014, 4294901760
    %v1235 = vsub.f32 %v1014, %v1234
    %v1236 = vand.u32 %v1235, 4294901760
    %v1237 = vsub.f32 %v1235, %v1236
    %v1238 = vand.u32 %v1237, 4294901760
    %1239 = vmatpush1.msra.mxu0 %v1238
    %v1240 = vand.u32 %v1031, 4294901760
    %v1241 = vsub.f32 %v1031, %v1240
    %v1242 = vand.u32 %v1241, 4294901760
    %v1243 = vsub.f32 %v1241, %v1242
    %v1244 = vand.u32 %v1243, 4294901760
    %1245 = vmatprep.subr.mxu0 %v1244
    %v1246 = vand.u32 %v1030, 4294901760
    %v1247 = vsub.f32 %v1030, %v1246
    %v1248 = vand.u32 %v1247, 4294901760
    %v1249 = vsub.f32 %v1247, %v1248
    %v1250 = vand.u32 %v1249, 4294901760
    %1251 = vmatpush1.msra.mxu0 %v1250
    %1252 = vmatprep.subr.mxu0 0.0
    %1253 = vmatpush1.msra.mxu0 0.0
    %1254 = vmatprep.subr.mxu0 0.0
    %1255 = vmatpush1.msra.mxu0 0.0
    %1256 = vmatprep.subr.mxu0 0.0
    %1257 = vmatpush1.msra.mxu0 0.0
    %1258 = vmatprep.subr.mxu0 0.0
    %1259 = vmatpush1.msra.mxu0 0.0
    %1260 = vmatprep.subr.mxu0 0.0
    %1261 = vmatpush1.msra.mxu0 0.0
    %1262 = vmatprep.subr.mxu0 0.0
    %1263 = vmatpush1.msra.mxu0 0.0
    %1264 = vmatprep.subr.mxu0 0.0
    %1265 = vmatpush1.msra.mxu0 0.0
    %1266 = vmatprep.subr.mxu0 0.0
    %1267 = vmatpush1.msra.mxu0 0.0
    %1268 = vmatprep.subr.mxu0 0.0
    %1269 = vmatpush1.msra.mxu0 0.0
    %1270 = vmatprep.subr.mxu0 0.0
    %1271 = vmatpush1.msra.mxu0 0.0
    %1272 = vmatprep.subr.mxu0 0.0
    %1273 = vmatpush1.msra.mxu0 0.0
    %1274 = vmatprep.subr.mxu0 0.0
    %1275 = vmatpush1.msra.mxu0 0.0
    %1276 = vmatprep.subr.mxu0 0.0
    %1277 = vmatpush1.msra.mxu0 0.0
    %1278 = vmatprep.subr.mxu0 0.0
    %1279 = vmatpush1.msra.mxu0 0.0
    %1280 = vmatprep.subr.mxu0 0.0
    %1281 = vmatpush1.msra.mxu0 0.0
    %1282 = vmatprep.subr.mxu0 0.0
    %1283 = vmatpush1.msra.mxu0 0.0
    %1284 = vmatprep.subr.mxu0 0.0
    %1285 = vmatpush1.msra.mxu0 0.0
    %1286 = vmatprep.subr.mxu0 0.0
    %1287 = vmatpush1.msra.mxu0 0.0
    %1288 = vmatprep.subr.mxu0 0.0
    %1289 = vmatpush1.msra.mxu0 0.0
    %1290 = vmatprep.subr.mxu0 0.0
    %1291 = vmatpush1.msra.mxu0 0.0
    %1292 = vmatprep.subr.mxu0 0.0
    %1293 = vmatpush1.msra.mxu0 0.0
    %1294 = vmatprep.subr.mxu0 0.0
    %1295 = vmatpush1.msra.mxu0 0.0
    %1296 = vmatprep.subr.mxu0 0.0
    %1297 = vmatpush1.msra.mxu0 0.0
    %1298 = vmatprep.subr.mxu0 0.0
    %1299 = vmatpush1.msra.mxu0 0.0
    %1300 = vmatprep.subr.mxu0 0.0
    %1301 = vmatpush1.msra.mxu0 0.0
    %1302 = vmatprep.subr.mxu0 0.0
    %1303 = vmatpush1.msra.mxu0 0.0
    %1304 = vmatprep.subr.mxu0 0.0
    %1305 = vmatpush1.msra.mxu0 0.0
    %1306 = vmatprep.subr.mxu0 0.0
    %1307 = vmatpush1.msra.mxu0 0.0
    %1308 = vmatprep.mubr.f32.mxu0 0.0
    %v1309 = vand.u32 %v1076, 4294901760
    %1310 = vmatmul.mubr.f32.gmra.mrb[0].mxu0 %v1309
    %v1311 = vpop.f32.mrb[0].mxu0
    %v1312 = vadd.f32 %v1167, %v1311
    %v1313 = vpop.f32.mrb[0].mxu0
    %v1314 = vadd.f32 %v1169, %v1313
    %1315 = vmatprep.mubr.f32.mxu0 0.0
    %v1316 = vand.u32 %v1079, 4294901760
    %1317 = vmatmul.mubr.f32.gmra.mrb[0].mxu0 %v1316
    %v1318 = vpop.f32.mrb[0].mxu0
    %v1319 = vadd.f32 %v1178, %v1318
    %v1320 = vpop.f32.mrb[0].mxu0
    %v1321 = vadd.f32 %v1180, %v1320
    %1322 = vmatprep.mubr.f32.mxu0 0.0
    %v1323 = vand.u32 %v1082, 4294901760
    %1324 = vmatmul.mubr.f32.gmra.mrb[0].mxu0 %v1323
    %v1325 = vpop.f32.mrb[0].mxu0
    %v1326 = vadd.f32 %v1189, %v1325
    %v1327 = vpop.f32.mrb[0].mxu0
    %v1328 = vadd.f32 %v1191, %v1327
    %1329 = vmatprep.mubr.f32.mxu0 0.0
    %v1330 = vand.u32 %v1085, 4294901760
    %1331 = vmatmul.mubr.f32.gmra.mrb[0].mxu0 %v1330
    %v1332 = vpop.f32.mrb[0].mxu0
    %v1333 = vadd.f32 %v1200, %v1332
    %v1334 = vpop.f32.mrb[0].mxu0
    %v1335 = vadd.f32 %v1202, %v1334
    %1336 = vdwg.mxu0
    %v1337 = vand.u32 %v983, 4294901760
    %v1338 = vsub.f32 %v983, %v1337
    %1339 = vmatprep.subr.mxu0 %v1338
    %v1340 = vand.u32 %v982, 4294901760
    %v1341 = vsub.f32 %v982, %v1340
    %1342 = vmatpush1.msra.mxu0 %v1341
    %v1343 = vand.u32 %v999, 4294901760
    %v1344 = vsub.f32 %v999, %v1343
    %1345 = vmatprep.subr.mxu0 %v1344
    %v1346 = vand.u32 %v998, 4294901760
    %v1347 = vsub.f32 %v998, %v1346
    %1348 = vmatpush1.msra.mxu0 %v1347
    %v1349 = vand.u32 %v1015, 4294901760
    %v1350 = vsub.f32 %v1015, %v1349
    %1351 = vmatprep.subr.mxu0 %v1350
    %v1352 = vand.u32 %v1014, 4294901760
    %v1353 = vsub.f32 %v1014, %v1352
    %1354 = vmatpush1.msra.mxu0 %v1353
    %v1355 = vand.u32 %v1031, 4294901760
    %v1356 = vsub.f32 %v1031, %v1355
    %1357 = vmatprep.subr.mxu0 %v1356
    %v1358 = vand.u32 %v1030, 4294901760
    %v1359 = vsub.f32 %v1030, %v1358
    %1360 = vmatpush1.msra.mxu0 %v1359
    %1361 = vmatprep.subr.mxu0 0.0
    %1362 = vmatpush1.msra.mxu0 0.0
    %1363 = vmatprep.subr.mxu0 0.0
    %1364 = vmatpush1.msra.mxu0 0.0
    %1365 = vmatprep.subr.mxu0 0.0
    %1366 = vmatpush1.msra.mxu0 0.0
    %1367 = vmatprep.subr.mxu0 0.0
    %1368 = vmatpush1.msra.mxu0 0.0
    %1369 = vmatprep.subr.mxu0 0.0
    %1370 = vmatpush1.msra.mxu0 0.0
    %1371 = vmatprep.subr.mxu0 0.0
    %1372 = vmatpush1.msra.mxu0 0.0
    %1373 = vmatprep.subr.mxu0 0.0
    %1374 = vmatpush1.msra.mxu0 0.0
    %1375 = vmatprep.subr.mxu0 0.0
    %1376 = vmatpush1.msra.mxu0 0.0
    %1377 = vmatprep.subr.mxu0 0.0
    %1378 = vmatpush1.msra.mxu0 0.0
    %1379 = vmatprep.subr.mxu0 0.0
    %1380 = vmatpush1.msra.mxu0 0.0
    %1381 = vmatprep.subr.mxu0 0.0
    %1382 = vmatpush1.msra.mxu0 0.0
    %1383 = vmatprep.subr.mxu0 0.0
    %1384 = vmatpush1.msra.mxu0 0.0
    %1385 = vmatprep.subr.mxu0 0.0
    %1386 = vmatpush1.msra.mxu0 0.0
    %1387 = vmatprep.subr.mxu0 0.0
    %1388 = vmatpush1.msra.mxu0 0.0
    %1389 = vmatprep.subr.mxu0 0.0
    %1390 = vmatpush1.msra.mxu0 0.0
    %1391 = vmatprep.subr.mxu0 0.0
    %1392 = vmatpush1.msra.mxu0 0.0
    %1393 = vmatprep.subr.mxu0 0.0
    %1394 = vmatpush1.msra.mxu0 0.0
    %1395 = vmatprep.subr.mxu0 0.0
    %1396 = vmatpush1.msra.mxu0 0.0
    %1397 = vmatprep.subr.mxu0 0.0
    %1398 = vmatpush1.msra.mxu0 0.0
    %1399 = vmatprep.subr.mxu0 0.0
    %1400 = vmatpush1.msra.mxu0 0.0
    %1401 = vmatprep.subr.mxu0 0.0
    %1402 = vmatpush1.msra.mxu0 0.0
    %1403 = vmatprep.subr.mxu0 0.0
    %1404 = vmatpush1.msra.mxu0 0.0
    %1405 = vmatprep.subr.mxu0 0.0
    %1406 = vmatpush1.msra.mxu0 0.0
    %1407 = vmatprep.subr.mxu0 0.0
    %1408 = vmatpush1.msra.mxu0 0.0
    %1409 = vmatprep.subr.mxu0 0.0
    %1410 = vmatpush1.msra.mxu0 0.0
    %1411 = vmatprep.subr.mxu0 0.0
    %1412 = vmatpush1.msra.mxu0 0.0
    %1413 = vmatprep.subr.mxu0 0.0
    %1414 = vmatpush1.msra.mxu0 0.0
    %1415 = vmatprep.subr.mxu0 0.0
    %1416 = vmatpush1.msra.mxu0 0.0
    %1417 = vmatprep.mubr.f32.mxu0 0.0
    %v1418 = vand.u32 %v1076, 4294901760
    %v1419 = vsub.f32 %v1076, %v1418
    %1420 = vmatmul.mubr.f32.gmra.mrb[0].mxu0 %v1419
    %v1421 = vpop.f32.mrb[0].mxu0
    %v1422 = vadd.f32 %v1312, %v1421
    %v1423 = vpop.f32.mrb[0].mxu0
    %v1424 = vadd.f32 %v1314, %v1423
    %1425 = vmatprep.mubr.f32.mxu0 0.0
    %v1426 = vand.u32 %v1079, 4294901760
    %v1427 = vsub.f32 %v1079, %v1426
    %1428 = vmatmul.mubr.f32.gmra.mrb[0].mxu0 %v1427
    %v1429 = vpop.f32.mrb[0].mxu0
    %v1430 = vadd.f32 %v1319, %v1429
    %v1431 = vpop.f32.mrb[0].mxu0
    %v1432 = vadd.f32 %v1321, %v1431
    %1433 = vmatprep.mubr.f32.mxu0 0.0
    %v1434 = vand.u32 %v1082, 4294901760
    %v1435 = vsub.f32 %v1082, %v1434
    %1436 = vmatmul.mubr.f32.gmra.mrb[0].mxu0 %v1435
    %v1437 = vpop.f32.mrb[0].mxu0
    %v1438 = vadd.f32 %v1326, %v1437
    %v1439 = vpop.f32.mrb[0].mxu0
    %v1440 = vadd.f32 %v1328, %v1439
    %1441 = vmatprep.mubr.f32.mxu0 0.0
    %v1442 = vand.u32 %v1085, 4294901760
    %v1443 = vsub.f32 %v1085, %v1442
    %1444 = vmatmul.mubr.f32.gmra.mrb[0].mxu0 %v1443
    %v1445 = vpop.f32.mrb[0].mxu0
    %v1446 = vadd.f32 %v1333, %v1445
    %v1447 = vpop.f32.mrb[0].mxu0
    %v1448 = vadd.f32 %v1335, %v1447
    %1449 = vdwg.mxu0
    %v1450 = vand.u32 %v983, 4294901760
    %1451 = vmatprep.subr.mxu0 %v1450
    %v1452 = vand.u32 %v982, 4294901760
    %1453 = vmatpush1.msra.mxu0 %v1452
    %v1454 = vand.u32 %v999, 4294901760
    %1455 = vmatprep.subr.mxu0 %v1454
    %v1456 = vand.u32 %v998, 4294901760
    %1457 = vmatpush1.msra.mxu0 %v1456
    %v1458 = vand.u32 %v1015, 4294901760
    %1459 = vmatprep.subr.mxu0 %v1458
    %v1460 = vand.u32 %v1014, 4294901760
    %1461 = vmatpush1.msra.mxu0 %v1460
    %v1462 = vand.u32 %v1031, 4294901760
    %1463 = vmatprep.subr.mxu0 %v1462
    %v1464 = vand.u32 %v1030, 4294901760
    %1465 = vmatpush1.msra.mxu0 %v1464
    %1466 = vmatprep.subr.mxu0 0.0
    %1467 = vmatpush1.msra.mxu0 0.0
    %1468 = vmatprep.subr.mxu0 0.0
    %1469 = vmatpush1.msra.mxu0 0.0
    %1470 = vmatprep.subr.mxu0 0.0
    %1471 = vmatpush1.msra.mxu0 0.0
    %1472 = vmatprep.subr.mxu0 0.0
    %1473 = vmatpush1.msra.mxu0 0.0
    %1474 = vmatprep.subr.mxu0 0.0
    %1475 = vmatpush1.msra.mxu0 0.0
    %1476 = vmatprep.subr.mxu0 0.0
    %1477 = vmatpush1.msra.mxu0 0.0
    %1478 = vmatprep.subr.mxu0 0.0
    %1479 = vmatpush1.msra.mxu0 0.0
    %1480 = vmatprep.subr.mxu0 0.0
    %1481 = vmatpush1.msra.mxu0 0.0
    %1482 = vmatprep.subr.mxu0 0.0
    %1483 = vmatpush1.msra.mxu0 0.0
    %1484 = vmatprep.subr.mxu0 0.0
    %1485 = vmatpush1.msra.mxu0 0.0
    %1486 = vmatprep.subr.mxu0 0.0
    %1487 = vmatpush1.msra.mxu0 0.0
    %1488 = vmatprep.subr.mxu0 0.0
    %1489 = vmatpush1.msra.mxu0 0.0
    %1490 = vmatprep.subr.mxu0 0.0
    %1491 = vmatpush1.msra.mxu0 0.0
    %1492 = vmatprep.subr.mxu0 0.0
    %1493 = vmatpush1.msra.mxu0 0.0
    %1494 = vmatprep.subr.mxu0 0.0
    %1495 = vmatpush1.msra.mxu0 0.0
    %1496 = vmatprep.subr.mxu0 0.0
    %1497 = vmatpush1.msra.mxu0 0.0
    %1498 = vmatprep.subr.mxu0 0.0
    %1499 = vmatpush1.msra.mxu0 0.0
    %1500 = vmatprep.subr.mxu0 0.0
    %1501 = vmatpush1.msra.mxu0 0.0
    %1502 = vmatprep.subr.mxu0 0.0
    %1503 = vmatpush1.msra.mxu0 0.0
    %1504 = vmatprep.subr.mxu0 0.0
    %1505 = vmatpush1.msra.mxu0 0.0
    %1506 = vmatprep.subr.mxu0 0.0
    %1507 = vmatpush1.msra.mxu0 0.0
    %1508 = vmatprep.subr.mxu0 0.0
    %1509 = vmatpush1.msra.mxu0 0.0
    %1510 = vmatprep.subr.mxu0 0.0
    %1511 = vmatpush1.msra.mxu0 0.0
    %1512 = vmatprep.subr.mxu0 0.0
    %1513 = vmatpush1.msra.mxu0 0.0
    %1514 = vmatprep.subr.mxu0 0.0
    %1515 = vmatpush1.msra.mxu0 0.0
    %1516 = vmatprep.subr.mxu0 0.0
    %1517 = vmatpush1.msra.mxu0 0.0
    %1518 = vmatprep.subr.mxu0 0.0
    %1519 = vmatpush1.msra.mxu0 0.0
    %1520 = vmatprep.subr.mxu0 0.0
    %1521 = vmatpush1.msra.mxu0 0.0
    %1522 = vmatprep.mubr.f32.mxu0 0.0
    %v1523 = vand.u32 %v1076, 4294901760
    %v1524 = vsub.f32 %v1076, %v1523
    %v1525 = vand.u32 %v1524, 4294901760
    %1526 = vmatmul.mubr.f32.gmra.mrb[0].mxu0 %v1525
    %v1527 = vpop.f32.mrb[0].mxu0
    %v1528 = vadd.f32 %v1422, %v1527
    %v1529 = vpop.f32.mrb[0].mxu0
    %v1530 = vadd.f32 %v1424, %v1529
    %1531 = vmatprep.mubr.f32.mxu0 0.0
    %v1532 = vand.u32 %v1079, 4294901760
    %v1533 = vsub.f32 %v1079, %v1532
    %v1534 = vand.u32 %v1533, 4294901760
    %1535 = vmatmul.mubr.f32.gmra.mrb[0].mxu0 %v1534
    %v1536 = vpop.f32.mrb[0].mxu0
    %v1537 = vadd.f32 %v1430, %v1536
    %v1538 = vpop.f32.mrb[0].mxu0
    %v1539 = vadd.f32 %v1432, %v1538
    %1540 = vmatprep.mubr.f32.mxu0 0.0
    %v1541 = vand.u32 %v1082, 4294901760
    %v1542 = vsub.f32 %v1082, %v1541
    %v1543 = vand.u32 %v1542, 4294901760
    %1544 = vmatmul.mubr.f32.gmra.mrb[0].mxu0 %v1543
    %v1545 = vpop.f32.mrb[0].mxu0
    %v1546 = vadd.f32 %v1438, %v1545
    %v1547 = vpop.f32.mrb[0].mxu0
    %v1548 = vadd.f32 %v1440, %v1547
    %1549 = vmatprep.mubr.f32.mxu0 0.0
    %v1550 = vand.u32 %v1085, 4294901760
    %v1551 = vsub.f32 %v1085, %v1550
    %v1552 = vand.u32 %v1551, 4294901760
    %1553 = vmatmul.mubr.f32.gmra.mrb[0].mxu0 %v1552
    %v1554 = vpop.f32.mrb[0].mxu0
    %v1555 = vadd.f32 %v1446, %v1554
    %v1556 = vpop.f32.mrb[0].mxu0
    %v1557 = vadd.f32 %v1448, %v1556
    %1558 = vdwg.mxu0
    %v1559 = vand.u32 %v983, 4294901760
    %v1560 = vsub.f32 %v983, %v1559
    %v1561 = vand.u32 %v1560, 4294901760
    %1562 = vmatprep.subr.mxu0 %v1561
    %v1563 = vand.u32 %v982, 4294901760
    %v1564 = vsub.f32 %v982, %v1563
    %v1565 = vand.u32 %v1564, 4294901760
    %1566 = vmatpush1.msra.mxu0 %v1565
    %v1567 = vand.u32 %v999, 4294901760
    %v1568 = vsub.f32 %v999, %v1567
    %v1569 = vand.u32 %v1568, 4294901760
    %1570 = vmatprep.subr.mxu0 %v1569
    %v1571 = vand.u32 %v998, 4294901760
    %v1572 = vsub.f32 %v998, %v1571
    %v1573 = vand.u32 %v1572, 4294901760
    %1574 = vmatpush1.msra.mxu0 %v1573
    %v1575 = vand.u32 %v1015, 4294901760
    %v1576 = vsub.f32 %v1015, %v1575
    %v1577 = vand.u32 %v1576, 4294901760
    %1578 = vmatprep.subr.mxu0 %v1577
    %v1579 = vand.u32 %v1014, 4294901760
    %v1580 = vsub.f32 %v1014, %v1579
    %v1581 = vand.u32 %v1580, 4294901760
    %1582 = vmatpush1.msra.mxu0 %v1581
    %v1583 = vand.u32 %v1031, 4294901760
    %v1584 = vsub.f32 %v1031, %v1583
    %v1585 = vand.u32 %v1584, 4294901760
    %1586 = vmatprep.subr.mxu0 %v1585
    %v1587 = vand.u32 %v1030, 4294901760
    %v1588 = vsub.f32 %v1030, %v1587
    %v1589 = vand.u32 %v1588, 4294901760
    %1590 = vmatpush1.msra.mxu0 %v1589
    %1591 = vmatprep.subr.mxu0 0.0
    %1592 = vmatpush1.msra.mxu0 0.0
    %1593 = vmatprep.subr.mxu0 0.0
    %1594 = vmatpush1.msra.mxu0 0.0
    %1595 = vmatprep.subr.mxu0 0.0
    %1596 = vmatpush1.msra.mxu0 0.0
    %1597 = vmatprep.subr.mxu0 0.0
    %1598 = vmatpush1.msra.mxu0 0.0
    %1599 = vmatprep.subr.mxu0 0.0
    %1600 = vmatpush1.msra.mxu0 0.0
    %1601 = vmatprep.subr.mxu0 0.0
    %1602 = vmatpush1.msra.mxu0 0.0
    %1603 = vmatprep.subr.mxu0 0.0
    %1604 = vmatpush1.msra.mxu0 0.0
    %1605 = vmatprep.subr.mxu0 0.0
    %1606 = vmatpush1.msra.mxu0 0.0
    %1607 = vmatprep.subr.mxu0 0.0
    %1608 = vmatpush1.msra.mxu0 0.0
    %1609 = vmatprep.subr.mxu0 0.0
    %1610 = vmatpush1.msra.mxu0 0.0
    %1611 = vmatprep.subr.mxu0 0.0
    %1612 = vmatpush1.msra.mxu0 0.0
    %1613 = vmatprep.subr.mxu0 0.0
    %1614 = vmatpush1.msra.mxu0 0.0
    %1615 = vmatprep.subr.mxu0 0.0
    %1616 = vmatpush1.msra.mxu0 0.0
    %1617 = vmatprep.subr.mxu0 0.0
    %1618 = vmatpush1.msra.mxu0 0.0
    %1619 = vmatprep.subr.mxu0 0.0
    %1620 = vmatpush1.msra.mxu0 0.0
    %1621 = vmatprep.subr.mxu0 0.0
    %1622 = vmatpush1.msra.mxu0 0.0
    %1623 = vmatprep.subr.mxu0 0.0
    %1624 = vmatpush1.msra.mxu0 0.0
    %1625 = vmatprep.subr.mxu0 0.0
    %1626 = vmatpush1.msra.mxu0 0.0
    %1627 = vmatprep.subr.mxu0 0.0
    %1628 = vmatpush1.msra.mxu0 0.0
    %1629 = vmatprep.subr.mxu0 0.0
    %1630 = vmatpush1.msra.mxu0 0.0
    %1631 = vmatprep.subr.mxu0 0.0
    %1632 = vmatpush1.msra.mxu0 0.0
    %1633 = vmatprep.subr.mxu0 0.0
    %1634 = vmatpush1.msra.mxu0 0.0
    %1635 = vmatprep.subr.mxu0 0.0
    %1636 = vmatpush1.msra.mxu0 0.0
    %1637 = vmatprep.subr.mxu0 0.0
    %1638 = vmatpush1.msra.mxu0 0.0
    %1639 = vmatprep.subr.mxu0 0.0
    %1640 = vmatpush1.msra.mxu0 0.0
    %1641 = vmatprep.subr.mxu0 0.0
    %1642 = vmatpush1.msra.mxu0 0.0
    %1643 = vmatprep.subr.mxu0 0.0
    %1644 = vmatpush1.msra.mxu0 0.0
    %1645 = vmatprep.subr.mxu0 0.0
    %1646 = vmatpush1.msra.mxu0 0.0
    %1647 = vmatprep.mubr.f32.mxu0 0.0
    %v1648 = vand.u32 %v1076, 4294901760
    %1649 = vmatmul.mubr.f32.gmra.mrb[0].mxu0 %v1648
    %v1650 = vpop.f32.mrb[0].mxu0
    %v1651 = vadd.f32 %v1528, %v1650
    %v1652 = vpop.f32.mrb[0].mxu0
    %v1653 = vadd.f32 %v1530, %v1652
    %1654 = vmatprep.mubr.f32.mxu0 0.0
    %v1655 = vand.u32 %v1079, 4294901760
    %1656 = vmatmul.mubr.f32.gmra.mrb[0].mxu0 %v1655
    %v1657 = vpop.f32.mrb[0].mxu0
    %v1658 = vadd.f32 %v1537, %v1657
    %v1659 = vpop.f32.mrb[0].mxu0
    %v1660 = vadd.f32 %v1539, %v1659
    %1661 = vmatprep.mubr.f32.mxu0 0.0
    %v1662 = vand.u32 %v1082, 4294901760
    %1663 = vmatmul.mubr.f32.gmra.mrb[0].mxu0 %v1662
    %v1664 = vpop.f32.mrb[0].mxu0
    %v1665 = vadd.f32 %v1546, %v1664
    %v1666 = vpop.f32.mrb[0].mxu0
    %v1667 = vadd.f32 %v1548, %v1666
    %1668 = vmatprep.mubr.f32.mxu0 0.0
    %v1669 = vand.u32 %v1085, 4294901760
    %1670 = vmatmul.mubr.f32.gmra.mrb[0].mxu0 %v1669
    %v1671 = vpop.f32.mrb[0].mxu0
    %v1672 = vadd.f32 %v1555, %v1671
    %v1673 = vpop.f32.mrb[0].mxu0
    %v1674 = vadd.f32 %v1557, %v1673
    %1675 = vdwg.mxu0
    %v1676 = vand.u32 %v983, 4294901760
    %1677 = vmatprep.subr.mxu0 %v1676
    %v1678 = vand.u32 %v982, 4294901760
    %1679 = vmatpush1.msra.mxu0 %v1678
    %v1680 = vand.u32 %v999, 4294901760
    %1681 = vmatprep.subr.mxu0 %v1680
    %v1682 = vand.u32 %v998, 4294901760
    %1683 = vmatpush1.msra.mxu0 %v1682
    %v1684 = vand.u32 %v1015, 4294901760
    %1685 = vmatprep.subr.mxu0 %v1684
    %v1686 = vand.u32 %v1014, 4294901760
    %1687 = vmatpush1.msra.mxu0 %v1686
    %v1688 = vand.u32 %v1031, 4294901760
    %1689 = vmatprep.subr.mxu0 %v1688
    %v1690 = vand.u32 %v1030, 4294901760
    %1691 = vmatpush1.msra.mxu0 %v1690
    %1692 = vmatprep.subr.mxu0 0.0
    %1693 = vmatpush1.msra.mxu0 0.0
    %1694 = vmatprep.subr.mxu0 0.0
    %1695 = vmatpush1.msra.mxu0 0.0
    %1696 = vmatprep.subr.mxu0 0.0
    %1697 = vmatpush1.msra.mxu0 0.0
    %1698 = vmatprep.subr.mxu0 0.0
    %1699 = vmatpush1.msra.mxu0 0.0
    %1700 = vmatprep.subr.mxu0 0.0
    %1701 = vmatpush1.msra.mxu0 0.0
    %1702 = vmatprep.subr.mxu0 0.0
    %1703 = vmatpush1.msra.mxu0 0.0
    %1704 = vmatprep.subr.mxu0 0.0
    %1705 = vmatpush1.msra.mxu0 0.0
    %1706 = vmatprep.subr.mxu0 0.0
    %1707 = vmatpush1.msra.mxu0 0.0
    %1708 = vmatprep.subr.mxu0 0.0
    %1709 = vmatpush1.msra.mxu0 0.0
    %1710 = vmatprep.subr.mxu0 0.0
    %1711 = vmatpush1.msra.mxu0 0.0
    %1712 = vmatprep.subr.mxu0 0.0
    %1713 = vmatpush1.msra.mxu0 0.0
    %1714 = vmatprep.subr.mxu0 0.0
    %1715 = vmatpush1.msra.mxu0 0.0
    %1716 = vmatprep.subr.mxu0 0.0
    %1717 = vmatpush1.msra.mxu0 0.0
    %1718 = vmatprep.subr.mxu0 0.0
    %1719 = vmatpush1.msra.mxu0 0.0
    %1720 = vmatprep.subr.mxu0 0.0
    %1721 = vmatpush1.msra.mxu0 0.0
    %1722 = vmatprep.subr.mxu0 0.0
    %1723 = vmatpush1.msra.mxu0 0.0
    %1724 = vmatprep.subr.mxu0 0.0
    %1725 = vmatpush1.msra.mxu0 0.0
    %1726 = vmatprep.subr.mxu0 0.0
    %1727 = vmatpush1.msra.mxu0 0.0
    %1728 = vmatprep.subr.mxu0 0.0
    %1729 = vmatpush1.msra.mxu0 0.0
    %1730 = vmatprep.subr.mxu0 0.0
    %1731 = vmatpush1.msra.mxu0 0.0
    %1732 = vmatprep.subr.mxu0 0.0
    %1733 = vmatpush1.msra.mxu0 0.0
    %1734 = vmatprep.subr.mxu0 0.0
    %1735 = vmatpush1.msra.mxu0 0.0
    %1736 = vmatprep.subr.mxu0 0.0
    %1737 = vmatpush1.msra.mxu0 0.0
    %1738 = vmatprep.subr.mxu0 0.0
    %1739 = vmatpush1.msra.mxu0 0.0
    %1740 = vmatprep.subr.mxu0 0.0
    %1741 = vmatpush1.msra.mxu0 0.0
    %1742 = vmatprep.subr.mxu0 0.0
    %1743 = vmatpush1.msra.mxu0 0.0
    %1744 = vmatprep.subr.mxu0 0.0
    %1745 = vmatpush1.msra.mxu0 0.0
    %1746 = vmatprep.subr.mxu0 0.0
    %1747 = vmatpush1.msra.mxu0 0.0
    %1748 = vmatprep.mubr.f32.mxu0 0.0
    %v1749 = vand.u32 %v1076, 4294901760
    %1750 = vmatmul.mubr.f32.gmra.mrb[0].mxu0 %v1749
    %v1751 = vpop.f32.mrb[0].mxu0
    %v1752 = vadd.f32 %v1651, %v1751
    %v1753 = vpop.f32.mrb[0].mxu0
    %v1754 = vadd.f32 %v1653, %v1753
    %1755 = vmatprep.mubr.f32.mxu0 0.0
    %v1756 = vand.u32 %v1079, 4294901760
    %1757 = vmatmul.mubr.f32.gmra.mrb[0].mxu0 %v1756
    %v1758 = vpop.f32.mrb[0].mxu0
    %v1759 = vadd.f32 %v1658, %v1758
    %v1760 = vpop.f32.mrb[0].mxu0
    %v1761 = vadd.f32 %v1660, %v1760
    %1762 = vmatprep.mubr.f32.mxu0 0.0
    %v1763 = vand.u32 %v1082, 4294901760
    %1764 = vmatmul.mubr.f32.gmra.mrb[0].mxu0 %v1763
    %v1765 = vpop.f32.mrb[0].mxu0
    %v1766 = vadd.f32 %v1665, %v1765
    %v1767 = vpop.f32.mrb[0].mxu0
    %v1768 = vadd.f32 %v1667, %v1767
    %1769 = vmatprep.mubr.f32.mxu0 0.0
    %v1770 = vand.u32 %v1085, 4294901760
    %1771 = vmatmul.mubr.f32.gmra.mrb[0].mxu0 %v1770
    %v1772 = vpop.f32.mrb[0].mxu0
    %v1773 = vadd.f32 %v1672, %v1772
    %v1774 = vpop.f32.mrb[0].mxu0
    %v1775 = vadd.f32 %v1674, %v1774
    %1776 = vdwg.mxu0
    %v1777 = vand.u32 %v985, 4294901760
    %1778 = vmatprep.subr.mxu0 %v1777
    %v1779 = vand.u32 %v984, 4294901760
    %1780 = vmatpush1.msra.mxu0 %v1779
    %v1781 = vand.u32 %v1001, 4294901760
    %1782 = vmatprep.subr.mxu0 %v1781
    %v1783 = vand.u32 %v1000, 4294901760
    %1784 = vmatpush1.msra.mxu0 %v1783
    %v1785 = vand.u32 %v1017, 4294901760
    %1786 = vmatprep.subr.mxu0 %v1785
    %v1787 = vand.u32 %v1016, 4294901760
    %1788 = vmatpush1.msra.mxu0 %v1787
    %v1789 = vand.u32 %v1033, 4294901760
    %1790 = vmatprep.subr.mxu0 %v1789
    %v1791 = vand.u32 %v1032, 4294901760
    %1792 = vmatpush1.msra.mxu0 %v1791
    %1793 = vmatprep.subr.mxu0 0.0
    %1794 = vmatpush1.msra.mxu0 0.0
    %1795 = vmatprep.subr.mxu0 0.0
    %1796 = vmatpush1.msra.mxu0 0.0
    %1797 = vmatprep.subr.mxu0 0.0
    %1798 = vmatpush1.msra.mxu0 0.0
    %1799 = vmatprep.subr.mxu0 0.0
    %1800 = vmatpush1.msra.mxu0 0.0
    %1801 = vmatprep.subr.mxu0 0.0
    %1802 = vmatpush1.msra.mxu0 0.0
    %1803 = vmatprep.subr.mxu0 0.0
    %1804 = vmatpush1.msra.mxu0 0.0
    %1805 = vmatprep.subr.mxu0 0.0
    %1806 = vmatpush1.msra.mxu0 0.0
    %1807 = vmatprep.subr.mxu0 0.0
    %1808 = vmatpush1.msra.mxu0 0.0
    %1809 = vmatprep.subr.mxu0 0.0
    %1810 = vmatpush1.msra.mxu0 0.0
    %1811 = vmatprep.subr.mxu0 0.0
    %1812 = vmatpush1.msra.mxu0 0.0
    %1813 = vmatprep.subr.mxu0 0.0
    %1814 = vmatpush1.msra.mxu0 0.0
    %1815 = vmatprep.subr.mxu0 0.0
    %1816 = vmatpush1.msra.mxu0 0.0
    %1817 = vmatprep.subr.mxu0 0.0
    %1818 = vmatpush1.msra.mxu0 0.0
    %1819 = vmatprep.subr.mxu0 0.0
    %1820 = vmatpush1.msra.mxu0 0.0
    %1821 = vmatprep.subr.mxu0 0.0
    %1822 = vmatpush1.msra.mxu0 0.0
    %1823 = vmatprep.subr.mxu0 0.0
    %1824 = vmatpush1.msra.mxu0 0.0
    %1825 = vmatprep.subr.mxu0 0.0
    %1826 = vmatpush1.msra.mxu0 0.0
    %1827 = vmatprep.subr.mxu0 0.0
    %1828 = vmatpush1.msra.mxu0 0.0
    %1829 = vmatprep.subr.mxu0 0.0
    %1830 = vmatpush1.msra.mxu0 0.0
    %1831 = vmatprep.subr.mxu0 0.0
    %1832 = vmatpush1.msra.mxu0 0.0
    %1833 = vmatprep.subr.mxu0 0.0
    %1834 = vmatpush1.msra.mxu0 0.0
    %1835 = vmatprep.subr.mxu0 0.0
    %1836 = vmatpush1.msra.mxu0 0.0
    %1837 = vmatprep.subr.mxu0 0.0
    %1838 = vmatpush1.msra.mxu0 0.0
    %1839 = vmatprep.subr.mxu0 0.0
    %1840 = vmatpush1.msra.mxu0 0.0
    %1841 = vmatprep.subr.mxu0 0.0
    %1842 = vmatpush1.msra.mxu0 0.0
    %1843 = vmatprep.subr.mxu0 0.0
    %1844 = vmatpush1.msra.mxu0 0.0
    %1845 = vmatprep.subr.mxu0 0.0
    %1846 = vmatpush1.msra.mxu0 0.0
    %1847 = vmatprep.subr.mxu0 0.0
    %1848 = vmatpush1.msra.mxu0 0.0
    %1849 = vmatprep.mubr.f32.mxu0 0.0
    %v1850 = vand.u32 %v1076, 4294901760
    %v1851 = vsub.f32 %v1076, %v1850
    %v1852 = vand.u32 %v1851, 4294901760
    %v1853 = vsub.f32 %v1851, %v1852
    %v1854 = vand.u32 %v1853, 4294901760
    %1855 = vmatmul.mubr.f32.gmra.mrb[0].mxu0 %v1854
    %v1856 = vpop.f32.mrb[0].mxu0
    %v1857 = vadd.f32 %v1057, %v1856
    %v1858 = vpop.f32.mrb[0].mxu0
    %v1859 = vadd.f32 %v1057, %v1858
    %1860 = vmatprep.mubr.f32.mxu0 0.0
    %v1861 = vand.u32 %v1079, 4294901760
    %v1862 = vsub.f32 %v1079, %v1861
    %v1863 = vand.u32 %v1862, 4294901760
    %v1864 = vsub.f32 %v1862, %v1863
    %v1865 = vand.u32 %v1864, 4294901760
    %1866 = vmatmul.mubr.f32.gmra.mrb[0].mxu0 %v1865
    %v1867 = vpop.f32.mrb[0].mxu0
    %v1868 = vadd.f32 %v1062, %v1867
    %v1869 = vpop.f32.mrb[0].mxu0
    %v1870 = vadd.f32 %v1062, %v1869
    %1871 = vmatprep.mubr.f32.mxu0 0.0
    %v1872 = vand.u32 %v1082, 4294901760
    %v1873 = vsub.f32 %v1082, %v1872
    %v1874 = vand.u32 %v1873, 4294901760
    %v1875 = vsub.f32 %v1873, %v1874
    %v1876 = vand.u32 %v1875, 4294901760
    %1877 = vmatmul.mubr.f32.gmra.mrb[0].mxu0 %v1876
    %v1878 = vpop.f32.mrb[0].mxu0
    %v1879 = vadd.f32 %v1067, %v1878
    %v1880 = vpop.f32.mrb[0].mxu0
    %v1881 = vadd.f32 %v1067, %v1880
    %1882 = vmatprep.mubr.f32.mxu0 0.0
    %v1883 = vand.u32 %v1085, 4294901760
    %v1884 = vsub.f32 %v1085, %v1883
    %v1885 = vand.u32 %v1884, 4294901760
    %v1886 = vsub.f32 %v1884, %v1885
    %v1887 = vand.u32 %v1886, 4294901760
    %1888 = vmatmul.mubr.f32.gmra.mrb[0].mxu0 %v1887
    %v1889 = vpop.f32.mrb[0].mxu0
    %v1890 = vadd.f32 %v1072, %v1889
    %v1891 = vpop.f32.mrb[0].mxu0
    %v1892 = vadd.f32 %v1072, %v1891
    %1893 = vdwg.mxu0
    %v1894 = vand.u32 %v985, 4294901760
    %v1895 = vsub.f32 %v985, %v1894
    %v1896 = vand.u32 %v1895, 4294901760
    %v1897 = vsub.f32 %v1895, %v1896
    %v1898 = vand.u32 %v1897, 4294901760
    %1899 = vmatprep.subr.mxu0 %v1898
    %v1900 = vand.u32 %v984, 4294901760
    %v1901 = vsub.f32 %v984, %v1900
    %v1902 = vand.u32 %v1901, 4294901760
    %v1903 = vsub.f32 %v1901, %v1902
    %v1904 = vand.u32 %v1903, 4294901760
    %1905 = vmatpush1.msra.mxu0 %v1904
    %v1906 = vand.u32 %v1001, 4294901760
    %v1907 = vsub.f32 %v1001, %v1906
    %v1908 = vand.u32 %v1907, 4294901760
    %v1909 = vsub.f32 %v1907, %v1908
    %v1910 = vand.u32 %v1909, 4294901760
    %1911 = vmatprep.subr.mxu0 %v1910
    %v1912 = vand.u32 %v1000, 4294901760
    %v1913 = vsub.f32 %v1000, %v1912
    %v1914 = vand.u32 %v1913, 4294901760
    %v1915 = vsub.f32 %v1913, %v1914
    %v1916 = vand.u32 %v1915, 4294901760
    %1917 = vmatpush1.msra.mxu0 %v1916
    %v1918 = vand.u32 %v1017, 4294901760
    %v1919 = vsub.f32 %v1017, %v1918
    %v1920 = vand.u32 %v1919, 4294901760
    %v1921 = vsub.f32 %v1919, %v1920
    %v1922 = vand.u32 %v1921, 4294901760
    %1923 = vmatprep.subr.mxu0 %v1922
    %v1924 = vand.u32 %v1016, 4294901760
    %v1925 = vsub.f32 %v1016, %v1924
    %v1926 = vand.u32 %v1925, 4294901760
    %v1927 = vsub.f32 %v1925, %v1926
    %v1928 = vand.u32 %v1927, 4294901760
    %1929 = vmatpush1.msra.mxu0 %v1928
    %v1930 = vand.u32 %v1033, 4294901760
    %v1931 = vsub.f32 %v1033, %v1930
    %v1932 = vand.u32 %v1931, 4294901760
    %v1933 = vsub.f32 %v1931, %v1932
    %v1934 = vand.u32 %v1933, 4294901760
    %1935 = vmatprep.subr.mxu0 %v1934
    %v1936 = vand.u32 %v1032, 4294901760
    %v1937 = vsub.f32 %v1032, %v1936
    %v1938 = vand.u32 %v1937, 4294901760
    %v1939 = vsub.f32 %v1937, %v1938
    %v1940 = vand.u32 %v1939, 4294901760
    %1941 = vmatpush1.msra.mxu0 %v1940
    %1942 = vmatprep.subr.mxu0 0.0
    %1943 = vmatpush1.msra.mxu0 0.0
    %1944 = vmatprep.subr.mxu0 0.0
    %1945 = vmatpush1.msra.mxu0 0.0
    %1946 = vmatprep.subr.mxu0 0.0
    %1947 = vmatpush1.msra.mxu0 0.0
    %1948 = vmatprep.subr.mxu0 0.0
    %1949 = vmatpush1.msra.mxu0 0.0
    %1950 = vmatprep.subr.mxu0 0.0
    %1951 = vmatpush1.msra.mxu0 0.0
    %1952 = vmatprep.subr.mxu0 0.0
    %1953 = vmatpush1.msra.mxu0 0.0
    %1954 = vmatprep.subr.mxu0 0.0
    %1955 = vmatpush1.msra.mxu0 0.0
    %1956 = vmatprep.subr.mxu0 0.0
    %1957 = vmatpush1.msra.mxu0 0.0
    %1958 = vmatprep.subr.mxu0 0.0
    %1959 = vmatpush1.msra.mxu0 0.0
    %1960 = vmatprep.subr.mxu0 0.0
    %1961 = vmatpush1.msra.mxu0 0.0
    %1962 = vmatprep.subr.mxu0 0.0
    %1963 = vmatpush1.msra.mxu0 0.0
    %1964 = vmatprep.subr.mxu0 0.0
    %1965 = vmatpush1.msra.mxu0 0.0
    %1966 = vmatprep.subr.mxu0 0.0
    %1967 = vmatpush1.msra.mxu0 0.0
    %1968 = vmatprep.subr.mxu0 0.0
    %1969 = vmatpush1.msra.mxu0 0.0
    %1970 = vmatprep.subr.mxu0 0.0
    %1971 = vmatpush1.msra.mxu0 0.0
    %1972 = vmatprep.subr.mxu0 0.0
    %1973 = vmatpush1.msra.mxu0 0.0
    %1974 = vmatprep.subr.mxu0 0.0
    %1975 = vmatpush1.msra.mxu0 0.0
    %1976 = vmatprep.subr.mxu0 0.0
    %1977 = vmatpush1.msra.mxu0 0.0
    %1978 = vmatprep.subr.mxu0 0.0
    %1979 = vmatpush1.msra.mxu0 0.0
    %1980 = vmatprep.subr.mxu0 0.0
    %1981 = vmatpush1.msra.mxu0 0.0
    %1982 = vmatprep.subr.mxu0 0.0
    %1983 = vmatpush1.msra.mxu0 0.0
    %1984 = vmatprep.subr.mxu0 0.0
    %1985 = vmatpush1.msra.mxu0 0.0
    %1986 = vmatprep.subr.mxu0 0.0
    %1987 = vmatpush1.msra.mxu0 0.0
    %1988 = vmatprep.subr.mxu0 0.0
    %1989 = vmatpush1.msra.mxu0 0.0
    %1990 = vmatprep.subr.mxu0 0.0
    %1991 = vmatpush1.msra.mxu0 0.0
    %1992 = vmatprep.subr.mxu0 0.0
    %1993 = vmatpush1.msra.mxu0 0.0
    %1994 = vmatprep.subr.mxu0 0.0
    %1995 = vmatpush1.msra.mxu0 0.0
    %1996 = vmatprep.subr.mxu0 0.0
    %1997 = vmatpush1.msra.mxu0 0.0
    %1998 = vmatprep.mubr.f32.mxu0 0.0
    %v1999 = vand.u32 %v1076, 4294901760
    %2000 = vmatmul.mubr.f32.gmra.mrb[0].mxu0 %v1999
    %v2001 = vpop.f32.mrb[0].mxu0
    %v2002 = vadd.f32 %v1857, %v2001
    %v2003 = vpop.f32.mrb[0].mxu0
    %v2004 = vadd.f32 %v1859, %v2003
    %2005 = vmatprep.mubr.f32.mxu0 0.0
    %v2006 = vand.u32 %v1079, 4294901760
    %2007 = vmatmul.mubr.f32.gmra.mrb[0].mxu0 %v2006
    %v2008 = vpop.f32.mrb[0].mxu0
    %v2009 = vadd.f32 %v1868, %v2008
    %v2010 = vpop.f32.mrb[0].mxu0
    %v2011 = vadd.f32 %v1870, %v2010
    %2012 = vmatprep.mubr.f32.mxu0 0.0
    %v2013 = vand.u32 %v1082, 4294901760
    %2014 = vmatmul.mubr.f32.gmra.mrb[0].mxu0 %v2013
    %v2015 = vpop.f32.mrb[0].mxu0
    %v2016 = vadd.f32 %v1879, %v2015
    %v2017 = vpop.f32.mrb[0].mxu0
    %v2018 = vadd.f32 %v1881, %v2017
    %2019 = vmatprep.mubr.f32.mxu0 0.0
    %v2020 = vand.u32 %v1085, 4294901760
    %2021 = vmatmul.mubr.f32.gmra.mrb[0].mxu0 %v2020
    %v2022 = vpop.f32.mrb[0].mxu0
    %v2023 = vadd.f32 %v1890, %v2022
    %v2024 = vpop.f32.mrb[0].mxu0
    %v2025 = vadd.f32 %v1892, %v2024
    %2026 = vdwg.mxu0
    %v2027 = vand.u32 %v985, 4294901760
    %v2028 = vsub.f32 %v985, %v2027
    %2029 = vmatprep.subr.mxu0 %v2028
    %v2030 = vand.u32 %v984, 4294901760
    %v2031 = vsub.f32 %v984, %v2030
    %2032 = vmatpush1.msra.mxu0 %v2031
    %v2033 = vand.u32 %v1001, 4294901760
    %v2034 = vsub.f32 %v1001, %v2033
    %2035 = vmatprep.subr.mxu0 %v2034
    %v2036 = vand.u32 %v1000, 4294901760
    %v2037 = vsub.f32 %v1000, %v2036
    %2038 = vmatpush1.msra.mxu0 %v2037
    %v2039 = vand.u32 %v1017, 4294901760
    %v2040 = vsub.f32 %v1017, %v2039
    %2041 = vmatprep.subr.mxu0 %v2040
    %v2042 = vand.u32 %v1016, 4294901760
    %v2043 = vsub.f32 %v1016, %v2042
    %2044 = vmatpush1.msra.mxu0 %v2043
    %v2045 = vand.u32 %v1033, 4294901760
    %v2046 = vsub.f32 %v1033, %v2045
    %2047 = vmatprep.subr.mxu0 %v2046
    %v2048 = vand.u32 %v1032, 4294901760
    %v2049 = vsub.f32 %v1032, %v2048
    %2050 = vmatpush1.msra.mxu0 %v2049
    %2051 = vmatprep.subr.mxu0 0.0
    %2052 = vmatpush1.msra.mxu0 0.0
    %2053 = vmatprep.subr.mxu0 0.0
    %2054 = vmatpush1.msra.mxu0 0.0
    %2055 = vmatprep.subr.mxu0 0.0
    %2056 = vmatpush1.msra.mxu0 0.0
    %2057 = vmatprep.subr.mxu0 0.0
    %2058 = vmatpush1.msra.mxu0 0.0
    %2059 = vmatprep.subr.mxu0 0.0
    %2060 = vmatpush1.msra.mxu0 0.0
    %2061 = vmatprep.subr.mxu0 0.0
    %2062 = vmatpush1.msra.mxu0 0.0
    %2063 = vmatprep.subr.mxu0 0.0
    %2064 = vmatpush1.msra.mxu0 0.0
    %2065 = vmatprep.subr.mxu0 0.0
    %2066 = vmatpush1.msra.mxu0 0.0
    %2067 = vmatprep.subr.mxu0 0.0
    %2068 = vmatpush1.msra.mxu0 0.0
    %2069 = vmatprep.subr.mxu0 0.0
    %2070 = vmatpush1.msra.mxu0 0.0
    %2071 = vmatprep.subr.mxu0 0.0
    %2072 = vmatpush1.msra.mxu0 0.0
    %2073 = vmatprep.subr.mxu0 0.0
    %2074 = vmatpush1.msra.mxu0 0.0
    %2075 = vmatprep.subr.mxu0 0.0
    %2076 = vmatpush1.msra.mxu0 0.0
    %2077 = vmatprep.subr.mxu0 0.0
    %2078 = vmatpush1.msra.mxu0 0.0
    %2079 = vmatprep.subr.mxu0 0.0
    %2080 = vmatpush1.msra.mxu0 0.0
    %2081 = vmatprep.subr.mxu0 0.0
    %2082 = vmatpush1.msra.mxu0 0.0
    %2083 = vmatprep.subr.mxu0 0.0
    %2084 = vmatpush1.msra.mxu0 0.0
    %2085 = vmatprep.subr.mxu0 0.0
    %2086 = vmatpush1.msra.mxu0 0.0
    %2087 = vmatprep.subr.mxu0 0.0
    %2088 = vmatpush1.msra.mxu0 0.0
    %2089 = vmatprep.subr.mxu0 0.0
    %2090 = vmatpush1.msra.mxu0 0.0
    %2091 = vmatprep.subr.mxu0 0.0
    %2092 = vmatpush1.msra.mxu0 0.0
    %2093 = vmatprep.subr.mxu0 0.0
    %2094 = vmatpush1.msra.mxu0 0.0
    %2095 = vmatprep.subr.mxu0 0.0
    %2096 = vmatpush1.msra.mxu0 0.0
    %2097 = vmatprep.subr.mxu0 0.0
    %2098 = vmatpush1.msra.mxu0 0.0
    %2099 = vmatprep.subr.mxu0 0.0
    %2100 = vmatpush1.msra.mxu0 0.0
    %2101 = vmatprep.subr.mxu0 0.0
    %2102 = vmatpush1.msra.mxu0 0.0
    %2103 = vmatprep.subr.mxu0 0.0
    %2104 = vmatpush1.msra.mxu0 0.0
    %2105 = vmatprep.subr.mxu0 0.0
    %2106 = vmatpush1.msra.mxu0 0.0
    %2107 = vmatprep.mubr.f32.mxu0 0.0
    %v2108 = vand.u32 %v1076, 4294901760
    %v2109 = vsub.f32 %v1076, %v2108
    %2110 = vmatmul.mubr.f32.gmra.mrb[0].mxu0 %v2109
    %v2111 = vpop.f32.mrb[0].mxu0
    %v2112 = vadd.f32 %v2002, %v2111
    %v2113 = vpop.f32.mrb[0].mxu0
    %v2114 = vadd.f32 %v2004, %v2113
    %2115 = vmatprep.mubr.f32.mxu0 0.0
    %v2116 = vand.u32 %v1079, 4294901760
    %v2117 = vsub.f32 %v1079, %v2116
    %2118 = vmatmul.mubr.f32.gmra.mrb[0].mxu0 %v2117
    %v2119 = vpop.f32.mrb[0].mxu0
    %v2120 = vadd.f32 %v2009, %v2119
    %v2121 = vpop.f32.mrb[0].mxu0
    %v2122 = vadd.f32 %v2011, %v2121
    %2123 = vmatprep.mubr.f32.mxu0 0.0
    %v2124 = vand.u32 %v1082, 4294901760
    %v2125 = vsub.f32 %v1082, %v2124
    %2126 = vmatmul.mubr.f32.gmra.mrb[0].mxu0 %v2125
    %v2127 = vpop.f32.mrb[0].mxu0
    %v2128 = vadd.f32 %v2016, %v2127
    %v2129 = vpop.f32.mrb[0].mxu0
    %v2130 = vadd.f32 %v2018, %v2129
    %2131 = vmatprep.mubr.f32.mxu0 0.0
    %v2132 = vand.u32 %v1085, 4294901760
    %v2133 = vsub.f32 %v1085, %v2132
    %2134 = vmatmul.mubr.f32.gmra.mrb[0].mxu0 %v2133
    %v2135 = vpop.f32.mrb[0].mxu0
    %v2136 = vadd.f32 %v2023, %v2135
    %v2137 = vpop.f32.mrb[0].mxu0
    %v2138 = vadd.f32 %v2025, %v2137
    %2139 = vdwg.mxu0
    %v2140 = vand.u32 %v985, 4294901760
    %2141 = vmatprep.subr.mxu0 %v2140
    %v2142 = vand.u32 %v984, 4294901760
    %2143 = vmatpush1.msra.mxu0 %v2142
    %v2144 = vand.u32 %v1001, 4294901760
    %2145 = vmatprep.subr.mxu0 %v2144
    %v2146 = vand.u32 %v1000, 4294901760
    %2147 = vmatpush1.msra.mxu0 %v2146
    %v2148 = vand.u32 %v1017, 4294901760
    %2149 = vmatprep.subr.mxu0 %v2148
    %v2150 = vand.u32 %v1016, 4294901760
    %2151 = vmatpush1.msra.mxu0 %v2150
    %v2152 = vand.u32 %v1033, 4294901760
    %2153 = vmatprep.subr.mxu0 %v2152
    %v2154 = vand.u32 %v1032, 4294901760
    %2155 = vmatpush1.msra.mxu0 %v2154
    %2156 = vmatprep.subr.mxu0 0.0
    %2157 = vmatpush1.msra.mxu0 0.0
    %2158 = vmatprep.subr.mxu0 0.0
    %2159 = vmatpush1.msra.mxu0 0.0
    %2160 = vmatprep.subr.mxu0 0.0
    %2161 = vmatpush1.msra.mxu0 0.0
    %2162 = vmatprep.subr.mxu0 0.0
    %2163 = vmatpush1.msra.mxu0 0.0
    %2164 = vmatprep.subr.mxu0 0.0
    %2165 = vmatpush1.msra.mxu0 0.0
    %2166 = vmatprep.subr.mxu0 0.0
    %2167 = vmatpush1.msra.mxu0 0.0
    %2168 = vmatprep.subr.mxu0 0.0
    %2169 = vmatpush1.msra.mxu0 0.0
    %2170 = vmatprep.subr.mxu0 0.0
    %2171 = vmatpush1.msra.mxu0 0.0
    %2172 = vmatprep.subr.mxu0 0.0
    %2173 = vmatpush1.msra.mxu0 0.0
    %2174 = vmatprep.subr.mxu0 0.0
    %2175 = vmatpush1.msra.mxu0 0.0
    %2176 = vmatprep.subr.mxu0 0.0
    %2177 = vmatpush1.msra.mxu0 0.0
    %2178 = vmatprep.subr.mxu0 0.0
    %2179 = vmatpush1.msra.mxu0 0.0
    %2180 = vmatprep.subr.mxu0 0.0
    %2181 = vmatpush1.msra.mxu0 0.0
    %2182 = vmatprep.subr.mxu0 0.0
    %2183 = vmatpush1.msra.mxu0 0.0
    %2184 = vmatprep.subr.mxu0 0.0
    %2185 = vmatpush1.msra.mxu0 0.0
    %2186 = vmatprep.subr.mxu0 0.0
    %2187 = vmatpush1.msra.mxu0 0.0
    %2188 = vmatprep.subr.mxu0 0.0
    %2189 = vmatpush1.msra.mxu0 0.0
    %2190 = vmatprep.subr.mxu0 0.0
    %2191 = vmatpush1.msra.mxu0 0.0
    %2192 = vmatprep.subr.mxu0 0.0
    %2193 = vmatpush1.msra.mxu0 0.0
    %2194 = vmatprep.subr.mxu0 0.0
    %2195 = vmatpush1.msra.mxu0 0.0
    %2196 = vmatprep.subr.mxu0 0.0
    %2197 = vmatpush1.msra.mxu0 0.0
    %2198 = vmatprep.subr.mxu0 0.0
    %2199 = vmatpush1.msra.mxu0 0.0
    %2200 = vmatprep.subr.mxu0 0.0
    %2201 = vmatpush1.msra.mxu0 0.0
    %2202 = vmatprep.subr.mxu0 0.0
    %2203 = vmatpush1.msra.mxu0 0.0
    %2204 = vmatprep.subr.mxu0 0.0
    %2205 = vmatpush1.msra.mxu0 0.0
    %2206 = vmatprep.subr.mxu0 0.0
    %2207 = vmatpush1.msra.mxu0 0.0
    %2208 = vmatprep.subr.mxu0 0.0
    %2209 = vmatpush1.msra.mxu0 0.0
    %2210 = vmatprep.subr.mxu0 0.0
    %2211 = vmatpush1.msra.mxu0 0.0
    %2212 = vmatprep.mubr.f32.mxu0 0.0
    %v2213 = vand.u32 %v1076, 4294901760
    %v2214 = vsub.f32 %v1076, %v2213
    %v2215 = vand.u32 %v2214, 4294901760
    %2216 = vmatmul.mubr.f32.gmra.mrb[0].mxu0 %v2215
    %v2217 = vpop.f32.mrb[0].mxu0
    %v2218 = vadd.f32 %v2112, %v2217
    %v2219 = vpop.f32.mrb[0].mxu0
    %v2220 = vadd.f32 %v2114, %v2219
    %2221 = vmatprep.mubr.f32.mxu0 0.0
    %v2222 = vand.u32 %v1079, 4294901760
    %v2223 = vsub.f32 %v1079, %v2222
    %v2224 = vand.u32 %v2223, 4294901760
    %2225 = vmatmul.mubr.f32.gmra.mrb[0].mxu0 %v2224
    %v2226 = vpop.f32.mrb[0].mxu0
    %v2227 = vadd.f32 %v2120, %v2226
    %v2228 = vpop.f32.mrb[0].mxu0
    %v2229 = vadd.f32 %v2122, %v2228
    %2230 = vmatprep.mubr.f32.mxu0 0.0
    %v2231 = vand.u32 %v1082, 4294901760
    %v2232 = vsub.f32 %v1082, %v2231
    %v2233 = vand.u32 %v2232, 4294901760
    %2234 = vmatmul.mubr.f32.gmra.mrb[0].mxu0 %v2233
    %v2235 = vpop.f32.mrb[0].mxu0
    %v2236 = vadd.f32 %v2128, %v2235
    %v2237 = vpop.f32.mrb[0].mxu0
    %v2238 = vadd.f32 %v2130, %v2237
    %2239 = vmatprep.mubr.f32.mxu0 0.0
    %v2240 = vand.u32 %v1085, 4294901760
    %v2241 = vsub.f32 %v1085, %v2240
    %v2242 = vand.u32 %v2241, 4294901760
    %2243 = vmatmul.mubr.f32.gmra.mrb[0].mxu0 %v2242
    %v2244 = vpop.f32.mrb[0].mxu0
    %v2245 = vadd.f32 %v2136, %v2244
    %v2246 = vpop.f32.mrb[0].mxu0
    %v2247 = vadd.f32 %v2138, %v2246
    %2248 = vdwg.mxu0
    %v2249 = vand.u32 %v985, 4294901760
    %v2250 = vsub.f32 %v985, %v2249
    %v2251 = vand.u32 %v2250, 4294901760
    %2252 = vmatprep.subr.mxu0 %v2251
    %v2253 = vand.u32 %v984, 4294901760
    %v2254 = vsub.f32 %v984, %v2253
    %v2255 = vand.u32 %v2254, 4294901760
    %2256 = vmatpush1.msra.mxu0 %v2255
    %v2257 = vand.u32 %v1001, 4294901760
    %v2258 = vsub.f32 %v1001, %v2257
    %v2259 = vand.u32 %v2258, 4294901760
    %2260 = vmatprep.subr.mxu0 %v2259
    %v2261 = vand.u32 %v1000, 4294901760
    %v2262 = vsub.f32 %v1000, %v2261
    %v2263 = vand.u32 %v2262, 4294901760
    %2264 = vmatpush1.msra.mxu0 %v2263
    %v2265 = vand.u32 %v1017, 4294901760
    %v2266 = vsub.f32 %v1017, %v2265
    %v2267 = vand.u32 %v2266, 4294901760
    %2268 = vmatprep.subr.mxu0 %v2267
    %v2269 = vand.u32 %v1016, 4294901760
    %v2270 = vsub.f32 %v1016, %v2269
    %v2271 = vand.u32 %v2270, 4294901760
    %2272 = vmatpush1.msra.mxu0 %v2271
    %v2273 = vand.u32 %v1033, 4294901760
    %v2274 = vsub.f32 %v1033, %v2273
    %v2275 = vand.u32 %v2274, 4294901760
    %2276 = vmatprep.subr.mxu0 %v2275
    %v2277 = vand.u32 %v1032, 4294901760
    %v2278 = vsub.f32 %v1032, %v2277
    %v2279 = vand.u32 %v2278, 4294901760
    %2280 = vmatpush1.msra.mxu0 %v2279
    %2281 = vmatprep.subr.mxu0 0.0
    %2282 = vmatpush1.msra.mxu0 0.0
    %2283 = vmatprep.subr.mxu0 0.0
    %2284 = vmatpush1.msra.mxu0 0.0
    %2285 = vmatprep.subr.mxu0 0.0
    %2286 = vmatpush1.msra.mxu0 0.0
    %2287 = vmatprep.subr.mxu0 0.0
    %2288 = vmatpush1.msra.mxu0 0.0
    %2289 = vmatprep.subr.mxu0 0.0
    %2290 = vmatpush1.msra.mxu0 0.0
    %2291 = vmatprep.subr.mxu0 0.0
    %2292 = vmatpush1.msra.mxu0 0.0
    %2293 = vmatprep.subr.mxu0 0.0
    %2294 = vmatpush1.msra.mxu0 0.0
    %2295 = vmatprep.subr.mxu0 0.0
    %2296 = vmatpush1.msra.mxu0 0.0
    %2297 = vmatprep.subr.mxu0 0.0
    %2298 = vmatpush1.msra.mxu0 0.0
    %2299 = vmatprep.subr.mxu0 0.0
    %2300 = vmatpush1.msra.mxu0 0.0
    %2301 = vmatprep.subr.mxu0 0.0
    %2302 = vmatpush1.msra.mxu0 0.0
    %2303 = vmatprep.subr.mxu0 0.0
    %2304 = vmatpush1.msra.mxu0 0.0
    %2305 = vmatprep.subr.mxu0 0.0
    %2306 = vmatpush1.msra.mxu0 0.0
    %2307 = vmatprep.subr.mxu0 0.0
    %2308 = vmatpush1.msra.mxu0 0.0
    %2309 = vmatprep.subr.mxu0 0.0
    %2310 = vmatpush1.msra.mxu0 0.0
    %2311 = vmatprep.subr.mxu0 0.0
    %2312 = vmatpush1.msra.mxu0 0.0
    %2313 = vmatprep.subr.mxu0 0.0
    %2314 = vmatpush1.msra.mxu0 0.0
    %2315 = vmatprep.subr.mxu0 0.0
    %2316 = vmatpush1.msra.mxu0 0.0
    %2317 = vmatprep.subr.mxu0 0.0
    %2318 = vmatpush1.msra.mxu0 0.0
    %2319 = vmatprep.subr.mxu0 0.0
    %2320 = vmatpush1.msra.mxu0 0.0
    %2321 = vmatprep.subr.mxu0 0.0
    %2322 = vmatpush1.msra.mxu0 0.0
    %2323 = vmatprep.subr.mxu0 0.0
    %2324 = vmatpush1.msra.mxu0 0.0
    %2325 = vmatprep.subr.mxu0 0.0
    %2326 = vmatpush1.msra.mxu0 0.0
    %2327 = vmatprep.subr.mxu0 0.0
    %2328 = vmatpush1.msra.mxu0 0.0
    %2329 = vmatprep.subr.mxu0 0.0
    %2330 = vmatpush1.msra.mxu0 0.0
    %2331 = vmatprep.subr.mxu0 0.0
    %2332 = vmatpush1.msra.mxu0 0.0
    %2333 = vmatprep.subr.mxu0 0.0
    %2334 = vmatpush1.msra.mxu0 0.0
    %2335 = vmatprep.subr.mxu0 0.0
    %2336 = vmatpush1.msra.mxu0 0.0
    %2337 = vmatprep.mubr.f32.mxu0 0.0
    %v2338 = vand.u32 %v1076, 4294901760
    %2339 = vmatmul.mubr.f32.gmra.mrb[0].mxu0 %v2338
    %v2340 = vpop.f32.mrb[0].mxu0
    %v2341 = vadd.f32 %v2218, %v2340
    %v2342 = vpop.f32.mrb[0].mxu0
    %v2343 = vadd.f32 %v2220, %v2342
    %2344 = vmatprep.mubr.f32.mxu0 0.0
    %v2345 = vand.u32 %v1079, 4294901760
    %2346 = vmatmul.mubr.f32.gmra.mrb[0].mxu0 %v2345
    %v2347 = vpop.f32.mrb[0].mxu0
    %v2348 = vadd.f32 %v2227, %v2347
    %v2349 = vpop.f32.mrb[0].mxu0
    %v2350 = vadd.f32 %v2229, %v2349
    %2351 = vmatprep.mubr.f32.mxu0 0.0
    %v2352 = vand.u32 %v1082, 4294901760
    %2353 = vmatmul.mubr.f32.gmra.mrb[0].mxu0 %v2352
    %v2354 = vpop.f32.mrb[0].mxu0
    %v2355 = vadd.f32 %v2236, %v2354
    %v2356 = vpop.f32.mrb[0].mxu0
    %v2357 = vadd.f32 %v2238, %v2356
    %2358 = vmatprep.mubr.f32.mxu0 0.0
    %v2359 = vand.u32 %v1085, 4294901760
    %2360 = vmatmul.mubr.f32.gmra.mrb[0].mxu0 %v2359
    %v2361 = vpop.f32.mrb[0].mxu0
    %v2362 = vadd.f32 %v2245, %v2361
    %v2363 = vpop.f32.mrb[0].mxu0
    %v2364 = vadd.f32 %v2247, %v2363
    %2365 = vdwg.mxu0
    %v2366 = vand.u32 %v985, 4294901760
    %2367 = vmatprep.subr.mxu0 %v2366
    %v2368 = vand.u32 %v984, 4294901760
    %2369 = vmatpush1.msra.mxu0 %v2368
    %v2370 = vand.u32 %v1001, 4294901760
    %2371 = vmatprep.subr.mxu0 %v2370
    %v2372 = vand.u32 %v1000, 4294901760
    %2373 = vmatpush1.msra.mxu0 %v2372
    %v2374 = vand.u32 %v1017, 4294901760
    %2375 = vmatprep.subr.mxu0 %v2374
    %v2376 = vand.u32 %v1016, 4294901760
    %2377 = vmatpush1.msra.mxu0 %v2376
    %v2378 = vand.u32 %v1033, 4294901760
    %2379 = vmatprep.subr.mxu0 %v2378
    %v2380 = vand.u32 %v1032, 4294901760
    %2381 = vmatpush1.msra.mxu0 %v2380
    %2382 = vmatprep.subr.mxu0 0.0
    %2383 = vmatpush1.msra.mxu0 0.0
    %2384 = vmatprep.subr.mxu0 0.0
    %2385 = vmatpush1.msra.mxu0 0.0
    %2386 = vmatprep.subr.mxu0 0.0
    %2387 = vmatpush1.msra.mxu0 0.0
    %2388 = vmatprep.subr.mxu0 0.0
    %2389 = vmatpush1.msra.mxu0 0.0
    %2390 = vmatprep.subr.mxu0 0.0
    %2391 = vmatpush1.msra.mxu0 0.0
    %2392 = vmatprep.subr.mxu0 0.0
    %2393 = vmatpush1.msra.mxu0 0.0
    %2394 = vmatprep.subr.mxu0 0.0
    %2395 = vmatpush1.msra.mxu0 0.0
    %2396 = vmatprep.subr.mxu0 0.0
    %2397 = vmatpush1.msra.mxu0 0.0
    %2398 = vmatprep.subr.mxu0 0.0
    %2399 = vmatpush1.msra.mxu0 0.0
    %2400 = vmatprep.subr.mxu0 0.0
    %2401 = vmatpush1.msra.mxu0 0.0
    %2402 = vmatprep.subr.mxu0 0.0
    %2403 = vmatpush1.msra.mxu0 0.0
    %2404 = vmatprep.subr.mxu0 0.0
    %2405 = vmatpush1.msra.mxu0 0.0
    %2406 = vmatprep.subr.mxu0 0.0
    %2407 = vmatpush1.msra.mxu0 0.0
    %2408 = vmatprep.subr.mxu0 0.0
    %2409 = vmatpush1.msra.mxu0 0.0
    %2410 = vmatprep.subr.mxu0 0.0
    %2411 = vmatpush1.msra.mxu0 0.0
    %2412 = vmatprep.subr.mxu0 0.0
    %2413 = vmatpush1.msra.mxu0 0.0
    %2414 = vmatprep.subr.mxu0 0.0
    %2415 = vmatpush1.msra.mxu0 0.0
    %2416 = vmatprep.subr.mxu0 0.0
    %2417 = vmatpush1.msra.mxu0 0.0
    %2418 = vmatprep.subr.mxu0 0.0
    %2419 = vmatpush1.msra.mxu0 0.0
    %2420 = vmatprep.subr.mxu0 0.0
    %2421 = vmatpush1.msra.mxu0 0.0
    %2422 = vmatprep.subr.mxu0 0.0
    %2423 = vmatpush1.msra.mxu0 0.0
    %2424 = vmatprep.subr.mxu0 0.0
    %2425 = vmatpush1.msra.mxu0 0.0
    %2426 = vmatprep.subr.mxu0 0.0
    %2427 = vmatpush1.msra.mxu0 0.0
    %2428 = vmatprep.subr.mxu0 0.0
    %2429 = vmatpush1.msra.mxu0 0.0
    %2430 = vmatprep.subr.mxu0 0.0
    %2431 = vmatpush1.msra.mxu0 0.0
    %2432 = vmatprep.subr.mxu0 0.0
    %2433 = vmatpush1.msra.mxu0 0.0
    %2434 = vmatprep.subr.mxu0 0.0
    %2435 = vmatpush1.msra.mxu0 0.0
    %2436 = vmatprep.subr.mxu0 0.0
    %2437 = vmatpush1.msra.mxu0 0.0
    %2438 = vmatprep.mubr.f32.mxu0 0.0
    %v2439 = vand.u32 %v1076, 4294901760
    %2440 = vmatmul.mubr.f32.gmra.mrb[0].mxu0 %v2439
    %v2441 = vpop.f32.mrb[0].mxu0
    %v2442 = vadd.f32 %v2341, %v2441
    %v2443 = vpop.f32.mrb[0].mxu0
    %v2444 = vadd.f32 %v2343, %v2443
    %2445 = vmatprep.mubr.f32.mxu0 0.0
    %v2446 = vand.u32 %v1079, 4294901760
    %2447 = vmatmul.mubr.f32.gmra.mrb[0].mxu0 %v2446
    %v2448 = vpop.f32.mrb[0].mxu0
    %v2449 = vadd.f32 %v2348, %v2448
    %v2450 = vpop.f32.mrb[0].mxu0
    %v2451 = vadd.f32 %v2350, %v2450
    %2452 = vmatprep.mubr.f32.mxu0 0.0
    %v2453 = vand.u32 %v1082, 4294901760
    %2454 = vmatmul.mubr.f32.gmra.mrb[0].mxu0 %v2453
    %v2455 = vpop.f32.mrb[0].mxu0
    %v2456 = vadd.f32 %v2355, %v2455
    %v2457 = vpop.f32.mrb[0].mxu0
    %v2458 = vadd.f32 %v2357, %v2457
    %2459 = vmatprep.mubr.f32.mxu0 0.0
    %v2460 = vand.u32 %v1085, 4294901760
    %2461 = vmatmul.mubr.f32.gmra.mrb[0].mxu0 %v2460
    %v2462 = vpop.f32.mrb[0].mxu0
    %v2463 = vadd.f32 %v2362, %v2462
    %v2464 = vpop.f32.mrb[0].mxu0
    %v2465 = vadd.f32 %v2364, %v2464
    %2466 = vdwg.mxu0
    %v2467 = vand.u32 %v987, 4294901760
    %2468 = vmatprep.subr.mxu0 %v2467
    %v2469 = vand.u32 %v986, 4294901760
    %2470 = vmatpush1.msra.mxu0 %v2469
    %v2471 = vand.u32 %v1003, 4294901760
    %2472 = vmatprep.subr.mxu0 %v2471
    %v2473 = vand.u32 %v1002, 4294901760
    %2474 = vmatpush1.msra.mxu0 %v2473
    %v2475 = vand.u32 %v1019, 4294901760
    %2476 = vmatprep.subr.mxu0 %v2475
    %v2477 = vand.u32 %v1018, 4294901760
    %2478 = vmatpush1.msra.mxu0 %v2477
    %v2479 = vand.u32 %v1035, 4294901760
    %2480 = vmatprep.subr.mxu0 %v2479
    %v2481 = vand.u32 %v1034, 4294901760
    %2482 = vmatpush1.msra.mxu0 %v2481
    %2483 = vmatprep.subr.mxu0 0.0
    %2484 = vmatpush1.msra.mxu0 0.0
    %2485 = vmatprep.subr.mxu0 0.0
    %2486 = vmatpush1.msra.mxu0 0.0
    %2487 = vmatprep.subr.mxu0 0.0
    %2488 = vmatpush1.msra.mxu0 0.0
    %2489 = vmatprep.subr.mxu0 0.0
    %2490 = vmatpush1.msra.mxu0 0.0
    %2491 = vmatprep.subr.mxu0 0.0
    %2492 = vmatpush1.msra.mxu0 0.0
    %2493 = vmatprep.subr.mxu0 0.0
    %2494 = vmatpush1.msra.mxu0 0.0
    %2495 = vmatprep.subr.mxu0 0.0
    %2496 = vmatpush1.msra.mxu0 0.0
    %2497 = vmatprep.subr.mxu0 0.0
    %2498 = vmatpush1.msra.mxu0 0.0
    %2499 = vmatprep.subr.mxu0 0.0
    %2500 = vmatpush1.msra.mxu0 0.0
    %2501 = vmatprep.subr.mxu0 0.0
    %2502 = vmatpush1.msra.mxu0 0.0
    %2503 = vmatprep.subr.mxu0 0.0
    %2504 = vmatpush1.msra.mxu0 0.0
    %2505 = vmatprep.subr.mxu0 0.0
    %2506 = vmatpush1.msra.mxu0 0.0
    %2507 = vmatprep.subr.mxu0 0.0
    %2508 = vmatpush1.msra.mxu0 0.0
    %2509 = vmatprep.subr.mxu0 0.0
    %2510 = vmatpush1.msra.mxu0 0.0
    %2511 = vmatprep.subr.mxu0 0.0
    %2512 = vmatpush1.msra.mxu0 0.0
    %2513 = vmatprep.subr.mxu0 0.0
    %2514 = vmatpush1.msra.mxu0 0.0
    %2515 = vmatprep.subr.mxu0 0.0
    %2516 = vmatpush1.msra.mxu0 0.0
    %2517 = vmatprep.subr.mxu0 0.0
    %2518 = vmatpush1.msra.mxu0 0.0
    %2519 = vmatprep.subr.mxu0 0.0
    %2520 = vmatpush1.msra.mxu0 0.0
    %2521 = vmatprep.subr.mxu0 0.0
    %2522 = vmatpush1.msra.mxu0 0.0
    %2523 = vmatprep.subr.mxu0 0.0
    %2524 = vmatpush1.msra.mxu0 0.0
    %2525 = vmatprep.subr.mxu0 0.0
    %2526 = vmatpush1.msra.mxu0 0.0
    %2527 = vmatprep.subr.mxu0 0.0
    %2528 = vmatpush1.msra.mxu0 0.0
    %2529 = vmatprep.subr.mxu0 0.0
    %2530 = vmatpush1.msra.mxu0 0.0
    %2531 = vmatprep.subr.mxu0 0.0
    %2532 = vmatpush1.msra.mxu0 0.0
    %2533 = vmatprep.subr.mxu0 0.0
    %2534 = vmatpush1.msra.mxu0 0.0
    %2535 = vmatprep.subr.mxu0 0.0
    %2536 = vmatpush1.msra.mxu0 0.0
    %2537 = vmatprep.subr.mxu0 0.0
    %2538 = vmatpush1.msra.mxu0 0.0
    %2539 = vmatprep.mubr.f32.mxu0 0.0
    %v2540 = vand.u32 %v1076, 4294901760
    %v2541 = vsub.f32 %v1076, %v2540
    %v2542 = vand.u32 %v2541, 4294901760
    %v2543 = vsub.f32 %v2541, %v2542
    %v2544 = vand.u32 %v2543, 4294901760
    %2545 = vmatmul.mubr.f32.gmra.mrb[0].mxu0 %v2544
    %v2546 = vpop.f32.mrb[0].mxu0
    %v2547 = vadd.f32 %v1057, %v2546
    %v2548 = vpop.f32.mrb[0].mxu0
    %v2549 = vadd.f32 %v1057, %v2548
    %2550 = vmatprep.mubr.f32.mxu0 0.0
    %v2551 = vand.u32 %v1079, 4294901760
    %v2552 = vsub.f32 %v1079, %v2551
    %v2553 = vand.u32 %v2552, 4294901760
    %v2554 = vsub.f32 %v2552, %v2553
    %v2555 = vand.u32 %v2554, 4294901760
    %2556 = vmatmul.mubr.f32.gmra.mrb[0].mxu0 %v2555
    %v2557 = vpop.f32.mrb[0].mxu0
    %v2558 = vadd.f32 %v1062, %v2557
    %v2559 = vpop.f32.mrb[0].mxu0
    %v2560 = vadd.f32 %v1062, %v2559
    %2561 = vmatprep.mubr.f32.mxu0 0.0
    %v2562 = vand.u32 %v1082, 4294901760
    %v2563 = vsub.f32 %v1082, %v2562
    %v2564 = vand.u32 %v2563, 4294901760
    %v2565 = vsub.f32 %v2563, %v2564
    %v2566 = vand.u32 %v2565, 4294901760
    %2567 = vmatmul.mubr.f32.gmra.mrb[0].mxu0 %v2566
    %v2568 = vpop.f32.mrb[0].mxu0
    %v2569 = vadd.f32 %v1067, %v2568
    %v2570 = vpop.f32.mrb[0].mxu0
    %v2571 = vadd.f32 %v1067, %v2570
    %2572 = vmatprep.mubr.f32.mxu0 0.0
    %v2573 = vand.u32 %v1085, 4294901760
    %v2574 = vsub.f32 %v1085, %v2573
    %v2575 = vand.u32 %v2574, 4294901760
    %v2576 = vsub.f32 %v2574, %v2575
    %v2577 = vand.u32 %v2576, 4294901760
    %2578 = vmatmul.mubr.f32.gmra.mrb[0].mxu0 %v2577
    %v2579 = vpop.f32.mrb[0].mxu0
    %v2580 = vadd.f32 %v1072, %v2579
    %v2581 = vpop.f32.mrb[0].mxu0
    %v2582 = vadd.f32 %v1072, %v2581
    %2583 = vdwg.mxu0
    %v2584 = vand.u32 %v987, 4294901760
    %v2585 = vsub.f32 %v987, %v2584
    %v2586 = vand.u32 %v2585, 4294901760
    %v2587 = vsub.f32 %v2585, %v2586
    %v2588 = vand.u32 %v2587, 4294901760
    %2589 = vmatprep.subr.mxu0 %v2588
    %v2590 = vand.u32 %v986, 4294901760
    %v2591 = vsub.f32 %v986, %v2590
    %v2592 = vand.u32 %v2591, 4294901760
    %v2593 = vsub.f32 %v2591, %v2592
    %v2594 = vand.u32 %v2593, 4294901760
    %2595 = vmatpush1.msra.mxu0 %v2594
    %v2596 = vand.u32 %v1003, 4294901760
    %v2597 = vsub.f32 %v1003, %v2596
    %v2598 = vand.u32 %v2597, 4294901760
    %v2599 = vsub.f32 %v2597, %v2598
    %v2600 = vand.u32 %v2599, 4294901760
    %2601 = vmatprep.subr.mxu0 %v2600
    %v2602 = vand.u32 %v1002, 4294901760
    %v2603 = vsub.f32 %v1002, %v2602
    %v2604 = vand.u32 %v2603, 4294901760
    %v2605 = vsub.f32 %v2603, %v2604
    %v2606 = vand.u32 %v2605, 4294901760
    %2607 = vmatpush1.msra.mxu0 %v2606
    %v2608 = vand.u32 %v1019, 4294901760
    %v2609 = vsub.f32 %v1019, %v2608
    %v2610 = vand.u32 %v2609, 4294901760
    %v2611 = vsub.f32 %v2609, %v2610
    %v2612 = vand.u32 %v2611, 4294901760
    %2613 = vmatprep.subr.mxu0 %v2612
    %v2614 = vand.u32 %v1018, 4294901760
    %v2615 = vsub.f32 %v1018, %v2614
    %v2616 = vand.u32 %v2615, 4294901760
    %v2617 = vsub.f32 %v2615, %v2616
    %v2618 = vand.u32 %v2617, 4294901760
    %2619 = vmatpush1.msra.mxu0 %v2618
    %v2620 = vand.u32 %v1035, 4294901760
    %v2621 = vsub.f32 %v1035, %v2620
    %v2622 = vand.u32 %v2621, 4294901760
    %v2623 = vsub.f32 %v2621, %v2622
    %v2624 = vand.u32 %v2623, 4294901760
    %2625 = vmatprep.subr.mxu0 %v2624
    %v2626 = vand.u32 %v1034, 4294901760
    %v2627 = vsub.f32 %v1034, %v2626
    %v2628 = vand.u32 %v2627, 4294901760
    %v2629 = vsub.f32 %v2627, %v2628
    %v2630 = vand.u32 %v2629, 4294901760
    %2631 = vmatpush1.msra.mxu0 %v2630
    %2632 = vmatprep.subr.mxu0 0.0
    %2633 = vmatpush1.msra.mxu0 0.0
    %2634 = vmatprep.subr.mxu0 0.0
    %2635 = vmatpush1.msra.mxu0 0.0
    %2636 = vmatprep.subr.mxu0 0.0
    %2637 = vmatpush1.msra.mxu0 0.0
    %2638 = vmatprep.subr.mxu0 0.0
    %2639 = vmatpush1.msra.mxu0 0.0
    %2640 = vmatprep.subr.mxu0 0.0
    %2641 = vmatpush1.msra.mxu0 0.0
    %2642 = vmatprep.subr.mxu0 0.0
    %2643 = vmatpush1.msra.mxu0 0.0
    %2644 = vmatprep.subr.mxu0 0.0
    %2645 = vmatpush1.msra.mxu0 0.0
    %2646 = vmatprep.subr.mxu0 0.0
    %2647 = vmatpush1.msra.mxu0 0.0
    %2648 = vmatprep.subr.mxu0 0.0
    %2649 = vmatpush1.msra.mxu0 0.0
    %2650 = vmatprep.subr.mxu0 0.0
    %2651 = vmatpush1.msra.mxu0 0.0
    %2652 = vmatprep.subr.mxu0 0.0
    %2653 = vmatpush1.msra.mxu0 0.0
    %2654 = vmatprep.subr.mxu0 0.0
    %2655 = vmatpush1.msra.mxu0 0.0
    %2656 = vmatprep.subr.mxu0 0.0
    %2657 = vmatpush1.msra.mxu0 0.0
    %2658 = vmatprep.subr.mxu0 0.0
    %2659 = vmatpush1.msra.mxu0 0.0
    %2660 = vmatprep.subr.mxu0 0.0
    %2661 = vmatpush1.msra.mxu0 0.0
    %2662 = vmatprep.subr.mxu0 0.0
    %2663 = vmatpush1.msra.mxu0 0.0
    %2664 = vmatprep.subr.mxu0 0.0
    %2665 = vmatpush1.msra.mxu0 0.0
    %2666 = vmatprep.subr.mxu0 0.0
    %2667 = vmatpush1.msra.mxu0 0.0
    %2668 = vmatprep.subr.mxu0 0.0
    %2669 = vmatpush1.msra.mxu0 0.0
    %2670 = vmatprep.subr.mxu0 0.0
    %2671 = vmatpush1.msra.mxu0 0.0
    %2672 = vmatprep.subr.mxu0 0.0
    %2673 = vmatpush1.msra.mxu0 0.0
    %2674 = vmatprep.subr.mxu0 0.0
    %2675 = vmatpush1.msra.mxu0 0.0
    %2676 = vmatprep.subr.mxu0 0.0
    %2677 = vmatpush1.msra.mxu0 0.0
    %2678 = vmatprep.subr.mxu0 0.0
    %2679 = vmatpush1.msra.mxu0 0.0
    %2680 = vmatprep.subr.mxu0 0.0
    %2681 = vmatpush1.msra.mxu0 0.0
    %2682 = vmatprep.subr.mxu0 0.0
    %2683 = vmatpush1.msra.mxu0 0.0
    %2684 = vmatprep.subr.mxu0 0.0
    %2685 = vmatpush1.msra.mxu0 0.0
    %2686 = vmatprep.subr.mxu0 0.0
    %2687 = vmatpush1.msra.mxu0 0.0
    %2688 = vmatprep.mubr.f32.mxu0 0.0
    %v2689 = vand.u32 %v1076, 4294901760
    %2690 = vmatmul.mubr.f32.gmra.mrb[0].mxu0 %v2689
    %v2691 = vpop.f32.mrb[0].mxu0
    %v2692 = vadd.f32 %v2547, %v2691
    %v2693 = vpop.f32.mrb[0].mxu0
    %v2694 = vadd.f32 %v2549, %v2693
    %2695 = vmatprep.mubr.f32.mxu0 0.0
    %v2696 = vand.u32 %v1079, 4294901760
    %2697 = vmatmul.mubr.f32.gmra.mrb[0].mxu0 %v2696
    %v2698 = vpop.f32.mrb[0].mxu0
    %v2699 = vadd.f32 %v2558, %v2698
    %v2700 = vpop.f32.mrb[0].mxu0
    %v2701 = vadd.f32 %v2560, %v2700
    %2702 = vmatprep.mubr.f32.mxu0 0.0
    %v2703 = vand.u32 %v1082, 4294901760
    %2704 = vmatmul.mubr.f32.gmra.mrb[0].mxu0 %v2703
    %v2705 = vpop.f32.mrb[0].mxu0
    %v2706 = vadd.f32 %v2569, %v2705
    %v2707 = vpop.f32.mrb[0].mxu0
    %v2708 = vadd.f32 %v2571, %v2707
    %2709 = vmatprep.mubr.f32.mxu0 0.0
    %v2710 = vand.u32 %v1085, 4294901760
    %2711 = vmatmul.mubr.f32.gmra.mrb[0].mxu0 %v2710
    %v2712 = vpop.f32.mrb[0].mxu0
    %v2713 = vadd.f32 %v2580, %v2712
    %v2714 = vpop.f32.mrb[0].mxu0
    %v2715 = vadd.f32 %v2582, %v2714
    %2716 = vdwg.mxu0
    %v2717 = vand.u32 %v987, 4294901760
    %v2718 = vsub.f32 %v987, %v2717
    %2719 = vmatprep.subr.mxu0 %v2718
    %v2720 = vand.u32 %v986, 4294901760
    %v2721 = vsub.f32 %v986, %v2720
    %2722 = vmatpush1.msra.mxu0 %v2721
    %v2723 = vand.u32 %v1003, 4294901760
    %v2724 = vsub.f32 %v1003, %v2723
    %2725 = vmatprep.subr.mxu0 %v2724
    %v2726 = vand.u32 %v1002, 4294901760
    %v2727 = vsub.f32 %v1002, %v2726
    %2728 = vmatpush1.msra.mxu0 %v2727
    %v2729 = vand.u32 %v1019, 4294901760
    %v2730 = vsub.f32 %v1019, %v2729
    %2731 = vmatprep.subr.mxu0 %v2730
    %v2732 = vand.u32 %v1018, 4294901760
    %v2733 = vsub.f32 %v1018, %v2732
    %2734 = vmatpush1.msra.mxu0 %v2733
    %v2735 = vand.u32 %v1035, 4294901760
    %v2736 = vsub.f32 %v1035, %v2735
    %2737 = vmatprep.subr.mxu0 %v2736
    %v2738 = vand.u32 %v1034, 4294901760
    %v2739 = vsub.f32 %v1034, %v2738
    %2740 = vmatpush1.msra.mxu0 %v2739
    %2741 = vmatprep.subr.mxu0 0.0
    %2742 = vmatpush1.msra.mxu0 0.0
    %2743 = vmatprep.subr.mxu0 0.0
    %2744 = vmatpush1.msra.mxu0 0.0
    %2745 = vmatprep.subr.mxu0 0.0
    %2746 = vmatpush1.msra.mxu0 0.0
    %2747 = vmatprep.subr.mxu0 0.0
    %2748 = vmatpush1.msra.mxu0 0.0
    %2749 = vmatprep.subr.mxu0 0.0
    %2750 = vmatpush1.msra.mxu0 0.0
    %2751 = vmatprep.subr.mxu0 0.0
    %2752 = vmatpush1.msra.mxu0 0.0
    %2753 = vmatprep.subr.mxu0 0.0
    %2754 = vmatpush1.msra.mxu0 0.0
    %2755 = vmatprep.subr.mxu0 0.0
    %2756 = vmatpush1.msra.mxu0 0.0
    %2757 = vmatprep.subr.mxu0 0.0
    %2758 = vmatpush1.msra.mxu0 0.0
    %2759 = vmatprep.subr.mxu0 0.0
    %2760 = vmatpush1.msra.mxu0 0.0
    %2761 = vmatprep.subr.mxu0 0.0
    %2762 = vmatpush1.msra.mxu0 0.0
    %2763 = vmatprep.subr.mxu0 0.0
    %2764 = vmatpush1.msra.mxu0 0.0
    %2765 = vmatprep.subr.mxu0 0.0
    %2766 = vmatpush1.msra.mxu0 0.0
    %2767 = vmatprep.subr.mxu0 0.0
    %2768 = vmatpush1.msra.mxu0 0.0
    %2769 = vmatprep.subr.mxu0 0.0
    %2770 = vmatpush1.msra.mxu0 0.0
    %2771 = vmatprep.subr.mxu0 0.0
    %2772 = vmatpush1.msra.mxu0 0.0
    %2773 = vmatprep.subr.mxu0 0.0
    %2774 = vmatpush1.msra.mxu0 0.0
    %2775 = vmatprep.subr.mxu0 0.0
    %2776 = vmatpush1.msra.mxu0 0.0
    %2777 = vmatprep.subr.mxu0 0.0
    %2778 = vmatpush1.msra.mxu0 0.0
    %2779 = vmatprep.subr.mxu0 0.0
    %2780 = vmatpush1.msra.mxu0 0.0
    %2781 = vmatprep.subr.mxu0 0.0
    %2782 = vmatpush1.msra.mxu0 0.0
    %2783 = vmatprep.subr.mxu0 0.0
    %2784 = vmatpush1.msra.mxu0 0.0
    %2785 = vmatprep.subr.mxu0 0.0
    %2786 = vmatpush1.msra.mxu0 0.0
    %2787 = vmatprep.subr.mxu0 0.0
    %2788 = vmatpush1.msra.mxu0 0.0
    %2789 = vmatprep.subr.mxu0 0.0
    %2790 = vmatpush1.msra.mxu0 0.0
    %2791 = vmatprep.subr.mxu0 0.0
    %2792 = vmatpush1.msra.mxu0 0.0
    %2793 = vmatprep.subr.mxu0 0.0
    %2794 = vmatpush1.msra.mxu0 0.0
    %2795 = vmatprep.subr.mxu0 0.0
    %2796 = vmatpush1.msra.mxu0 0.0
    %2797 = vmatprep.mubr.f32.mxu0 0.0
    %v2798 = vand.u32 %v1076, 4294901760
    %v2799 = vsub.f32 %v1076, %v2798
    %2800 = vmatmul.mubr.f32.gmra.mrb[0].mxu0 %v2799
    %v2801 = vpop.f32.mrb[0].mxu0
    %v2802 = vadd.f32 %v2692, %v2801
    %v2803 = vpop.f32.mrb[0].mxu0
    %v2804 = vadd.f32 %v2694, %v2803
    %2805 = vmatprep.mubr.f32.mxu0 0.0
    %v2806 = vand.u32 %v1079, 4294901760
    %v2807 = vsub.f32 %v1079, %v2806
    %2808 = vmatmul.mubr.f32.gmra.mrb[0].mxu0 %v2807
    %v2809 = vpop.f32.mrb[0].mxu0
    %v2810 = vadd.f32 %v2699, %v2809
    %v2811 = vpop.f32.mrb[0].mxu0
    %v2812 = vadd.f32 %v2701, %v2811
    %2813 = vmatprep.mubr.f32.mxu0 0.0
    %v2814 = vand.u32 %v1082, 4294901760
    %v2815 = vsub.f32 %v1082, %v2814
    %2816 = vmatmul.mubr.f32.gmra.mrb[0].mxu0 %v2815
    %v2817 = vpop.f32.mrb[0].mxu0
    %v2818 = vadd.f32 %v2706, %v2817
    %v2819 = vpop.f32.mrb[0].mxu0
    %v2820 = vadd.f32 %v2708, %v2819
    %2821 = vmatprep.mubr.f32.mxu0 0.0
    %v2822 = vand.u32 %v1085, 4294901760
    %v2823 = vsub.f32 %v1085, %v2822
    %2824 = vmatmul.mubr.f32.gmra.mrb[0].mxu0 %v2823
    %v2825 = vpop.f32.mrb[0].mxu0
    %v2826 = vadd.f32 %v2713, %v2825
    %v2827 = vpop.f32.mrb[0].mxu0
    %v2828 = vadd.f32 %v2715, %v2827
    %2829 = vdwg.mxu0
    %v2830 = vand.u32 %v987, 4294901760
    %2831 = vmatprep.subr.mxu0 %v2830
    %v2832 = vand.u32 %v986, 4294901760
    %2833 = vmatpush1.msra.mxu0 %v2832
    %v2834 = vand.u32 %v1003, 4294901760
    %2835 = vmatprep.subr.mxu0 %v2834
    %v2836 = vand.u32 %v1002, 4294901760
    %2837 = vmatpush1.msra.mxu0 %v2836
    %v2838 = vand.u32 %v1019, 4294901760
    %2839 = vmatprep.subr.mxu0 %v2838
    %v2840 = vand.u32 %v1018, 4294901760
    %2841 = vmatpush1.msra.mxu0 %v2840
    %v2842 = vand.u32 %v1035, 4294901760
    %2843 = vmatprep.subr.mxu0 %v2842
    %v2844 = vand.u32 %v1034, 4294901760
    %2845 = vmatpush1.msra.mxu0 %v2844
    %2846 = vmatprep.subr.mxu0 0.0
    %2847 = vmatpush1.msra.mxu0 0.0
    %2848 = vmatprep.subr.mxu0 0.0
    %2849 = vmatpush1.msra.mxu0 0.0
    %2850 = vmatprep.subr.mxu0 0.0
    %2851 = vmatpush1.msra.mxu0 0.0
    %2852 = vmatprep.subr.mxu0 0.0
    %2853 = vmatpush1.msra.mxu0 0.0
    %2854 = vmatprep.subr.mxu0 0.0
    %2855 = vmatpush1.msra.mxu0 0.0
    %2856 = vmatprep.subr.mxu0 0.0
    %2857 = vmatpush1.msra.mxu0 0.0
    %2858 = vmatprep.subr.mxu0 0.0
    %2859 = vmatpush1.msra.mxu0 0.0
    %2860 = vmatprep.subr.mxu0 0.0
    %2861 = vmatpush1.msra.mxu0 0.0
    %2862 = vmatprep.subr.mxu0 0.0
    %2863 = vmatpush1.msra.mxu0 0.0
    %2864 = vmatprep.subr.mxu0 0.0
    %2865 = vmatpush1.msra.mxu0 0.0
    %2866 = vmatprep.subr.mxu0 0.0
    %2867 = vmatpush1.msra.mxu0 0.0
    %2868 = vmatprep.subr.mxu0 0.0
    %2869 = vmatpush1.msra.mxu0 0.0
    %2870 = vmatprep.subr.mxu0 0.0
    %2871 = vmatpush1.msra.mxu0 0.0
    %2872 = vmatprep.subr.mxu0 0.0
    %2873 = vmatpush1.msra.mxu0 0.0
    %2874 = vmatprep.subr.mxu0 0.0
    %2875 = vmatpush1.msra.mxu0 0.0
    %2876 = vmatprep.subr.mxu0 0.0
    %2877 = vmatpush1.msra.mxu0 0.0
    %2878 = vmatprep.subr.mxu0 0.0
    %2879 = vmatpush1.msra.mxu0 0.0
    %2880 = vmatprep.subr.mxu0 0.0
    %2881 = vmatpush1.msra.mxu0 0.0
    %2882 = vmatprep.subr.mxu0 0.0
    %2883 = vmatpush1.msra.mxu0 0.0
    %2884 = vmatprep.subr.mxu0 0.0
    %2885 = vmatpush1.msra.mxu0 0.0
    %2886 = vmatprep.subr.mxu0 0.0
    %2887 = vmatpush1.msra.mxu0 0.0
    %2888 = vmatprep.subr.mxu0 0.0
    %2889 = vmatpush1.msra.mxu0 0.0
    %2890 = vmatprep.subr.mxu0 0.0
    %2891 = vmatpush1.msra.mxu0 0.0
    %2892 = vmatprep.subr.mxu0 0.0
    %2893 = vmatpush1.msra.mxu0 0.0
    %2894 = vmatprep.subr.mxu0 0.0
    %2895 = vmatpush1.msra.mxu0 0.0
    %2896 = vmatprep.subr.mxu0 0.0
    %2897 = vmatpush1.msra.mxu0 0.0
    %2898 = vmatprep.subr.mxu0 0.0
    %2899 = vmatpush1.msra.mxu0 0.0
    %2900 = vmatprep.subr.mxu0 0.0
    %2901 = vmatpush1.msra.mxu0 0.0
    %2902 = vmatprep.mubr.f32.mxu0 0.0
    %v2903 = vand.u32 %v1076, 4294901760
    %v2904 = vsub.f32 %v1076, %v2903
    %v2905 = vand.u32 %v2904, 4294901760
    %2906 = vmatmul.mubr.f32.gmra.mrb[0].mxu0 %v2905
    %v2907 = vpop.f32.mrb[0].mxu0
    %v2908 = vadd.f32 %v2802, %v2907
    %v2909 = vpop.f32.mrb[0].mxu0
    %v2910 = vadd.f32 %v2804, %v2909
    %2911 = vmatprep.mubr.f32.mxu0 0.0
    %v2912 = vand.u32 %v1079, 4294901760
    %v2913 = vsub.f32 %v1079, %v2912
    %v2914 = vand.u32 %v2913, 4294901760
    %2915 = vmatmul.mubr.f32.gmra.mrb[0].mxu0 %v2914
    %v2916 = vpop.f32.mrb[0].mxu0
    %v2917 = vadd.f32 %v2810, %v2916
    %v2918 = vpop.f32.mrb[0].mxu0
    %v2919 = vadd.f32 %v2812, %v2918
    %2920 = vmatprep.mubr.f32.mxu0 0.0
    %v2921 = vand.u32 %v1082, 4294901760
    %v2922 = vsub.f32 %v1082, %v2921
    %v2923 = vand.u32 %v2922, 4294901760
    %2924 = vmatmul.mubr.f32.gmra.mrb[0].mxu0 %v2923
    %v2925 = vpop.f32.mrb[0].mxu0
    %v2926 = vadd.f32 %v2818, %v2925
    %v2927 = vpop.f32.mrb[0].mxu0
    %v2928 = vadd.f32 %v2820, %v2927
    %2929 = vmatprep.mubr.f32.mxu0 0.0
    %v2930 = vand.u32 %v1085, 4294901760
    %v2931 = vsub.f32 %v1085, %v2930
    %v2932 = vand.u32 %v2931, 4294901760
    %2933 = vmatmul.mubr.f32.gmra.mrb[0].mxu0 %v2932
    %v2934 = vpop.f32.mrb[0].mxu0
    %v2935 = vadd.f32 %v2826, %v2934
    %v2936 = vpop.f32.mrb[0].mxu0
    %v2937 = vadd.f32 %v2828, %v2936
    %2938 = vdwg.mxu0
    %v2939 = vand.u32 %v987, 4294901760
    %v2940 = vsub.f32 %v987, %v2939
    %v2941 = vand.u32 %v2940, 4294901760
    %2942 = vmatprep.subr.mxu0 %v2941
    %v2943 = vand.u32 %v986, 4294901760
    %v2944 = vsub.f32 %v986, %v2943
    %v2945 = vand.u32 %v2944, 4294901760
    %2946 = vmatpush1.msra.mxu0 %v2945
    %v2947 = vand.u32 %v1003, 4294901760
    %v2948 = vsub.f32 %v1003, %v2947
    %v2949 = vand.u32 %v2948, 4294901760
    %2950 = vmatprep.subr.mxu0 %v2949
    %v2951 = vand.u32 %v1002, 4294901760
    %v2952 = vsub.f32 %v1002, %v2951
    %v2953 = vand.u32 %v2952, 4294901760
    %2954 = vmatpush1.msra.mxu0 %v2953
    %v2955 = vand.u32 %v1019, 4294901760
    %v2956 = vsub.f32 %v1019, %v2955
    %v2957 = vand.u32 %v2956, 4294901760
    %2958 = vmatprep.subr.mxu0 %v2957
    %v2959 = vand.u32 %v1018, 4294901760
    %v2960 = vsub.f32 %v1018, %v2959
    %v2961 = vand.u32 %v2960, 4294901760
    %2962 = vmatpush1.msra.mxu0 %v2961
    %v2963 = vand.u32 %v1035, 4294901760
    %v2964 = vsub.f32 %v1035, %v2963
    %v2965 = vand.u32 %v2964, 4294901760
    %2966 = vmatprep.subr.mxu0 %v2965
    %v2967 = vand.u32 %v1034, 4294901760
    %v2968 = vsub.f32 %v1034, %v2967
    %v2969 = vand.u32 %v2968, 4294901760
    %2970 = vmatpush1.msra.mxu0 %v2969
    %2971 = vmatprep.subr.mxu0 0.0
    %2972 = vmatpush1.msra.mxu0 0.0
    %2973 = vmatprep.subr.mxu0 0.0
    %2974 = vmatpush1.msra.mxu0 0.0
    %2975 = vmatprep.subr.mxu0 0.0
    %2976 = vmatpush1.msra.mxu0 0.0
    %2977 = vmatprep.subr.mxu0 0.0
    %2978 = vmatpush1.msra.mxu0 0.0
    %2979 = vmatprep.subr.mxu0 0.0
    %2980 = vmatpush1.msra.mxu0 0.0
    %2981 = vmatprep.subr.mxu0 0.0
    %2982 = vmatpush1.msra.mxu0 0.0
    %2983 = vmatprep.subr.mxu0 0.0
    %2984 = vmatpush1.msra.mxu0 0.0
    %2985 = vmatprep.subr.mxu0 0.0
    %2986 = vmatpush1.msra.mxu0 0.0
    %2987 = vmatprep.subr.mxu0 0.0
    %2988 = vmatpush1.msra.mxu0 0.0
    %2989 = vmatprep.subr.mxu0 0.0
    %2990 = vmatpush1.msra.mxu0 0.0
    %2991 = vmatprep.subr.mxu0 0.0
    %2992 = vmatpush1.msra.mxu0 0.0
    %2993 = vmatprep.subr.mxu0 0.0
    %2994 = vmatpush1.msra.mxu0 0.0
    %2995 = vmatprep.subr.mxu0 0.0
    %2996 = vmatpush1.msra.mxu0 0.0
    %2997 = vmatprep.subr.mxu0 0.0
    %2998 = vmatpush1.msra.mxu0 0.0
    %2999 = vmatprep.subr.mxu0 0.0
    %3000 = vmatpush1.msra.mxu0 0.0
    %3001 = vmatprep.subr.mxu0 0.0
    %3002 = vmatpush1.msra.mxu0 0.0
    %3003 = vmatprep.subr.mxu0 0.0
    %3004 = vmatpush1.msra.mxu0 0.0
    %3005 = vmatprep.subr.mxu0 0.0
    %3006 = vmatpush1.msra.mxu0 0.0
    %3007 = vmatprep.subr.mxu0 0.0
    %3008 = vmatpush1.msra.mxu0 0.0
    %3009 = vmatprep.subr.mxu0 0.0
    %3010 = vmatpush1.msra.mxu0 0.0
    %3011 = vmatprep.subr.mxu0 0.0
    %3012 = vmatpush1.msra.mxu0 0.0
    %3013 = vmatprep.subr.mxu0 0.0
    %3014 = vmatpush1.msra.mxu0 0.0
    %3015 = vmatprep.subr.mxu0 0.0
    %3016 = vmatpush1.msra.mxu0 0.0
    %3017 = vmatprep.subr.mxu0 0.0
    %3018 = vmatpush1.msra.mxu0 0.0
    %3019 = vmatprep.subr.mxu0 0.0
    %3020 = vmatpush1.msra.mxu0 0.0
    %3021 = vmatprep.subr.mxu0 0.0
    %3022 = vmatpush1.msra.mxu0 0.0
    %3023 = vmatprep.subr.mxu0 0.0
    %3024 = vmatpush1.msra.mxu0 0.0
    %3025 = vmatprep.subr.mxu0 0.0
    %3026 = vmatpush1.msra.mxu0 0.0
    %3027 = vmatprep.mubr.f32.mxu0 0.0
    %v3028 = vand.u32 %v1076, 4294901760
    %3029 = vmatmul.mubr.f32.gmra.mrb[0].mxu0 %v3028
    %v3030 = vpop.f32.mrb[0].mxu0
    %v3031 = vadd.f32 %v2908, %v3030
    %v3032 = vpop.f32.mrb[0].mxu0
    %v3033 = vadd.f32 %v2910, %v3032
    %3034 = vmatprep.mubr.f32.mxu0 0.0
    %v3035 = vand.u32 %v1079, 4294901760
    %3036 = vmatmul.mubr.f32.gmra.mrb[0].mxu0 %v3035
    %v3037 = vpop.f32.mrb[0].mxu0
    %v3038 = vadd.f32 %v2917, %v3037
    %v3039 = vpop.f32.mrb[0].mxu0
    %v3040 = vadd.f32 %v2919, %v3039
    %3041 = vmatprep.mubr.f32.mxu0 0.0
    %v3042 = vand.u32 %v1082, 4294901760
    %3043 = vmatmul.mubr.f32.gmra.mrb[0].mxu0 %v3042
    %v3044 = vpop.f32.mrb[0].mxu0
    %v3045 = vadd.f32 %v2926, %v3044
    %v3046 = vpop.f32.mrb[0].mxu0
    %v3047 = vadd.f32 %v2928, %v3046
    %3048 = vmatprep.mubr.f32.mxu0 0.0
    %v3049 = vand.u32 %v1085, 4294901760
    %3050 = vmatmul.mubr.f32.gmra.mrb[0].mxu0 %v3049
    %v3051 = vpop.f32.mrb[0].mxu0
    %v3052 = vadd.f32 %v2935, %v3051
    %v3053 = vpop.f32.mrb[0].mxu0
    %v3054 = vadd.f32 %v2937, %v3053
    %3055 = vdwg.mxu0
    %v3056 = vand.u32 %v987, 4294901760
    %3057 = vmatprep.subr.mxu0 %v3056
    %v3058 = vand.u32 %v986, 4294901760
    %3059 = vmatpush1.msra.mxu0 %v3058
    %v3060 = vand.u32 %v1003, 4294901760
    %3061 = vmatprep.subr.mxu0 %v3060
    %v3062 = vand.u32 %v1002, 4294901760
    %3063 = vmatpush1.msra.mxu0 %v3062
    %v3064 = vand.u32 %v1019, 4294901760
    %3065 = vmatprep.subr.mxu0 %v3064
    %v3066 = vand.u32 %v1018, 4294901760
    %3067 = vmatpush1.msra.mxu0 %v3066
    %v3068 = vand.u32 %v1035, 4294901760
    %3069 = vmatprep.subr.mxu0 %v3068
    %v3070 = vand.u32 %v1034, 4294901760
    %3071 = vmatpush1.msra.mxu0 %v3070
    %3072 = vmatprep.subr.mxu0 0.0
    %3073 = vmatpush1.msra.mxu0 0.0
    %3074 = vmatprep.subr.mxu0 0.0
    %3075 = vmatpush1.msra.mxu0 0.0
    %3076 = vmatprep.subr.mxu0 0.0
    %3077 = vmatpush1.msra.mxu0 0.0
    %3078 = vmatprep.subr.mxu0 0.0
    %3079 = vmatpush1.msra.mxu0 0.0
    %3080 = vmatprep.subr.mxu0 0.0
    %3081 = vmatpush1.msra.mxu0 0.0
    %3082 = vmatprep.subr.mxu0 0.0
    %3083 = vmatpush1.msra.mxu0 0.0
    %3084 = vmatprep.subr.mxu0 0.0
    %3085 = vmatpush1.msra.mxu0 0.0
    %3086 = vmatprep.subr.mxu0 0.0
    %3087 = vmatpush1.msra.mxu0 0.0
    %3088 = vmatprep.subr.mxu0 0.0
    %3089 = vmatpush1.msra.mxu0 0.0
    %3090 = vmatprep.subr.mxu0 0.0
    %3091 = vmatpush1.msra.mxu0 0.0
    %3092 = vmatprep.subr.mxu0 0.0
    %3093 = vmatpush1.msra.mxu0 0.0
    %3094 = vmatprep.subr.mxu0 0.0
    %3095 = vmatpush1.msra.mxu0 0.0
    %3096 = vmatprep.subr.mxu0 0.0
    %3097 = vmatpush1.msra.mxu0 0.0
    %3098 = vmatprep.subr.mxu0 0.0
    %3099 = vmatpush1.msra.mxu0 0.0
    %3100 = vmatprep.subr.mxu0 0.0
    %3101 = vmatpush1.msra.mxu0 0.0
    %3102 = vmatprep.subr.mxu0 0.0
    %3103 = vmatpush1.msra.mxu0 0.0
    %3104 = vmatprep.subr.mxu0 0.0
    %3105 = vmatpush1.msra.mxu0 0.0
    %3106 = vmatprep.subr.mxu0 0.0
    %3107 = vmatpush1.msra.mxu0 0.0
    %3108 = vmatprep.subr.mxu0 0.0
    %3109 = vmatpush1.msra.mxu0 0.0
    %3110 = vmatprep.subr.mxu0 0.0
    %3111 = vmatpush1.msra.mxu0 0.0
    %3112 = vmatprep.subr.mxu0 0.0
    %3113 = vmatpush1.msra.mxu0 0.0
    %3114 = vmatprep.subr.mxu0 0.0
    %3115 = vmatpush1.msra.mxu0 0.0
    %3116 = vmatprep.subr.mxu0 0.0
    %3117 = vmatpush1.msra.mxu0 0.0
    %3118 = vmatprep.subr.mxu0 0.0
    %3119 = vmatpush1.msra.mxu0 0.0
    %3120 = vmatprep.subr.mxu0 0.0
    %3121 = vmatpush1.msra.mxu0 0.0
    %3122 = vmatprep.subr.mxu0 0.0
    %3123 = vmatpush1.msra.mxu0 0.0
    %3124 = vmatprep.subr.mxu0 0.0
    %3125 = vmatpush1.msra.mxu0 0.0
    %3126 = vmatprep.subr.mxu0 0.0
    %3127 = vmatpush1.msra.mxu0 0.0
    %3128 = vmatprep.mubr.f32.mxu0 0.0
    %v3129 = vand.u32 %v1076, 4294901760
    %3130 = vmatmul.mubr.f32.gmra.mrb[0].mxu0 %v3129
    %v3131 = vpop.f32.mrb[0].mxu0
    %v3132 = vadd.f32 %v3031, %v3131
    %v3133 = vpop.f32.mrb[0].mxu0
    %v3134 = vadd.f32 %v3033, %v3133
    %3135 = vmatprep.mubr.f32.mxu0 0.0
    %v3136 = vand.u32 %v1079, 4294901760
    %3137 = vmatmul.mubr.f32.gmra.mrb[0].mxu0 %v3136
    %v3138 = vpop.f32.mrb[0].mxu0
    %v3139 = vadd.f32 %v3038, %v3138
    %v3140 = vpop.f32.mrb[0].mxu0
    %v3141 = vadd.f32 %v3040, %v3140
    %3142 = vmatprep.mubr.f32.mxu0 0.0
    %v3143 = vand.u32 %v1082, 4294901760
    %3144 = vmatmul.mubr.f32.gmra.mrb[0].mxu0 %v3143
    %v3145 = vpop.f32.mrb[0].mxu0
    %v3146 = vadd.f32 %v3045, %v3145
    %v3147 = vpop.f32.mrb[0].mxu0
    %v3148 = vadd.f32 %v3047, %v3147
    %3149 = vmatprep.mubr.f32.mxu0 0.0
    %v3150 = vand.u32 %v1085, 4294901760
    %3151 = vmatmul.mubr.f32.gmra.mrb[0].mxu0 %v3150
    %v3152 = vpop.f32.mrb[0].mxu0
    %v3153 = vadd.f32 %v3052, %v3152
    %v3154 = vpop.f32.mrb[0].mxu0
    %v3155 = vadd.f32 %v3054, %v3154
    %3156 = vdwg.mxu0
    %v3157 = vand.u32 %v989, 4294901760
    %3158 = vmatprep.subr.mxu0 %v3157
    %v3159 = vand.u32 %v988, 4294901760
    %3160 = vmatpush1.msra.mxu0 %v3159
    %v3161 = vand.u32 %v1005, 4294901760
    %3162 = vmatprep.subr.mxu0 %v3161
    %v3163 = vand.u32 %v1004, 4294901760
    %3164 = vmatpush1.msra.mxu0 %v3163
    %v3165 = vand.u32 %v1021, 4294901760
    %3166 = vmatprep.subr.mxu0 %v3165
    %v3167 = vand.u32 %v1020, 4294901760
    %3168 = vmatpush1.msra.mxu0 %v3167
    %v3169 = vand.u32 %v1037, 4294901760
    %3170 = vmatprep.subr.mxu0 %v3169
    %v3171 = vand.u32 %v1036, 4294901760
    %3172 = vmatpush1.msra.mxu0 %v3171
    %3173 = vmatprep.subr.mxu0 0.0
    %3174 = vmatpush1.msra.mxu0 0.0
    %3175 = vmatprep.subr.mxu0 0.0
    %3176 = vmatpush1.msra.mxu0 0.0
    %3177 = vmatprep.subr.mxu0 0.0
    %3178 = vmatpush1.msra.mxu0 0.0
    %3179 = vmatprep.subr.mxu0 0.0
    %3180 = vmatpush1.msra.mxu0 0.0
    %3181 = vmatprep.subr.mxu0 0.0
    %3182 = vmatpush1.msra.mxu0 0.0
    %3183 = vmatprep.subr.mxu0 0.0
    %3184 = vmatpush1.msra.mxu0 0.0
    %3185 = vmatprep.subr.mxu0 0.0
    %3186 = vmatpush1.msra.mxu0 0.0
    %3187 = vmatprep.subr.mxu0 0.0
    %3188 = vmatpush1.msra.mxu0 0.0
    %3189 = vmatprep.subr.mxu0 0.0
    %3190 = vmatpush1.msra.mxu0 0.0
    %3191 = vmatprep.subr.mxu0 0.0
    %3192 = vmatpush1.msra.mxu0 0.0
    %3193 = vmatprep.subr.mxu0 0.0
    %3194 = vmatpush1.msra.mxu0 0.0
    %3195 = vmatprep.subr.mxu0 0.0
    %3196 = vmatpush1.msra.mxu0 0.0
    %3197 = vmatprep.subr.mxu0 0.0
    %3198 = vmatpush1.msra.mxu0 0.0
    %3199 = vmatprep.subr.mxu0 0.0
    %3200 = vmatpush1.msra.mxu0 0.0
    %3201 = vmatprep.subr.mxu0 0.0
    %3202 = vmatpush1.msra.mxu0 0.0
    %3203 = vmatprep.subr.mxu0 0.0
    %3204 = vmatpush1.msra.mxu0 0.0
    %3205 = vmatprep.subr.mxu0 0.0
    %3206 = vmatpush1.msra.mxu0 0.0
    %3207 = vmatprep.subr.mxu0 0.0
    %3208 = vmatpush1.msra.mxu0 0.0
    %3209 = vmatprep.subr.mxu0 0.0
    %3210 = vmatpush1.msra.mxu0 0.0
    %3211 = vmatprep.subr.mxu0 0.0
    %3212 = vmatpush1.msra.mxu0 0.0
    %3213 = vmatprep.subr.mxu0 0.0
    %3214 = vmatpush1.msra.mxu0 0.0
    %3215 = vmatprep.subr.mxu0 0.0
    %3216 = vmatpush1.msra.mxu0 0.0
    %3217 = vmatprep.subr.mxu0 0.0
    %3218 = vmatpush1.msra.mxu0 0.0
    %3219 = vmatprep.subr.mxu0 0.0
    %3220 = vmatpush1.msra.mxu0 0.0
    %3221 = vmatprep.subr.mxu0 0.0
    %3222 = vmatpush1.msra.mxu0 0.0
    %3223 = vmatprep.subr.mxu0 0.0
    %3224 = vmatpush1.msra.mxu0 0.0
    %3225 = vmatprep.subr.mxu0 0.0
    %3226 = vmatpush1.msra.mxu0 0.0
    %3227 = vmatprep.subr.mxu0 0.0
    %3228 = vmatpush1.msra.mxu0 0.0
    %3229 = vmatprep.mubr.f32.mxu0 0.0
    %v3230 = vand.u32 %v1076, 4294901760
    %v3231 = vsub.f32 %v1076, %v3230
    %v3232 = vand.u32 %v3231, 4294901760
    %v3233 = vsub.f32 %v3231, %v3232
    %v3234 = vand.u32 %v3233, 4294901760
    %3235 = vmatmul.mubr.f32.gmra.mrb[0].mxu0 %v3234
    %v3236 = vpop.f32.mrb[0].mxu0
    %v3237 = vadd.f32 %v1057, %v3236
    %v3238 = vpop.f32.mrb[0].mxu0
    %v3239 = vadd.f32 %v1057, %v3238
    %3240 = vmatprep.mubr.f32.mxu0 0.0
    %v3241 = vand.u32 %v1079, 4294901760
    %v3242 = vsub.f32 %v1079, %v3241
    %v3243 = vand.u32 %v3242, 4294901760
    %v3244 = vsub.f32 %v3242, %v3243
    %v3245 = vand.u32 %v3244, 4294901760
    %3246 = vmatmul.mubr.f32.gmra.mrb[0].mxu0 %v3245
    %v3247 = vpop.f32.mrb[0].mxu0
    %v3248 = vadd.f32 %v1062, %v3247
    %v3249 = vpop.f32.mrb[0].mxu0
    %v3250 = vadd.f32 %v1062, %v3249
    %3251 = vmatprep.mubr.f32.mxu0 0.0
    %v3252 = vand.u32 %v1082, 4294901760
    %v3253 = vsub.f32 %v1082, %v3252
    %v3254 = vand.u32 %v3253, 4294901760
    %v3255 = vsub.f32 %v3253, %v3254
    %v3256 = vand.u32 %v3255, 4294901760
    %3257 = vmatmul.mubr.f32.gmra.mrb[0].mxu0 %v3256
    %v3258 = vpop.f32.mrb[0].mxu0
    %v3259 = vadd.f32 %v1067, %v3258
    %v3260 = vpop.f32.mrb[0].mxu0
    %v3261 = vadd.f32 %v1067, %v3260
    %3262 = vmatprep.mubr.f32.mxu0 0.0
    %v3263 = vand.u32 %v1085, 4294901760
    %v3264 = vsub.f32 %v1085, %v3263
    %v3265 = vand.u32 %v3264, 4294901760
    %v3266 = vsub.f32 %v3264, %v3265
    %v3267 = vand.u32 %v3266, 4294901760
    %3268 = vmatmul.mubr.f32.gmra.mrb[0].mxu0 %v3267
    %v3269 = vpop.f32.mrb[0].mxu0
    %v3270 = vadd.f32 %v1072, %v3269
    %v3271 = vpop.f32.mrb[0].mxu0
    %v3272 = vadd.f32 %v1072, %v3271
    %3273 = vdwg.mxu0
    %v3274 = vand.u32 %v989, 4294901760
    %v3275 = vsub.f32 %v989, %v3274
    %v3276 = vand.u32 %v3275, 4294901760
    %v3277 = vsub.f32 %v3275, %v3276
    %v3278 = vand.u32 %v3277, 4294901760
    %3279 = vmatprep.subr.mxu0 %v3278
    %v3280 = vand.u32 %v988, 4294901760
    %v3281 = vsub.f32 %v988, %v3280
    %v3282 = vand.u32 %v3281, 4294901760
    %v3283 = vsub.f32 %v3281, %v3282
    %v3284 = vand.u32 %v3283, 4294901760
    %3285 = vmatpush1.msra.mxu0 %v3284
    %v3286 = vand.u32 %v1005, 4294901760
    %v3287 = vsub.f32 %v1005, %v3286
    %v3288 = vand.u32 %v3287, 4294901760
    %v3289 = vsub.f32 %v3287, %v3288
    %v3290 = vand.u32 %v3289, 4294901760
    %3291 = vmatprep.subr.mxu0 %v3290
    %v3292 = vand.u32 %v1004, 4294901760
    %v3293 = vsub.f32 %v1004, %v3292
    %v3294 = vand.u32 %v3293, 4294901760
    %v3295 = vsub.f32 %v3293, %v3294
    %v3296 = vand.u32 %v3295, 4294901760
    %3297 = vmatpush1.msra.mxu0 %v3296
    %v3298 = vand.u32 %v1021, 4294901760
    %v3299 = vsub.f32 %v1021, %v3298
    %v3300 = vand.u32 %v3299, 4294901760
    %v3301 = vsub.f32 %v3299, %v3300
    %v3302 = vand.u32 %v3301, 4294901760
    %3303 = vmatprep.subr.mxu0 %v3302
    %v3304 = vand.u32 %v1020, 4294901760
    %v3305 = vsub.f32 %v1020, %v3304
    %v3306 = vand.u32 %v3305, 4294901760
    %v3307 = vsub.f32 %v3305, %v3306
    %v3308 = vand.u32 %v3307, 4294901760
    %3309 = vmatpush1.msra.mxu0 %v3308
    %v3310 = vand.u32 %v1037, 4294901760
    %v3311 = vsub.f32 %v1037, %v3310
    %v3312 = vand.u32 %v3311, 4294901760
    %v3313 = vsub.f32 %v3311, %v3312
    %v3314 = vand.u32 %v3313, 4294901760
    %3315 = vmatprep.subr.mxu0 %v3314
    %v3316 = vand.u32 %v1036, 4294901760
    %v3317 = vsub.f32 %v1036, %v3316
    %v3318 = vand.u32 %v3317, 4294901760
    %v3319 = vsub.f32 %v3317, %v3318
    %v3320 = vand.u32 %v3319, 4294901760
    %3321 = vmatpush1.msra.mxu0 %v3320
    %3322 = vmatprep.subr.mxu0 0.0
    %3323 = vmatpush1.msra.mxu0 0.0
    %3324 = vmatprep.subr.mxu0 0.0
    %3325 = vmatpush1.msra.mxu0 0.0
    %3326 = vmatprep.subr.mxu0 0.0
    %3327 = vmatpush1.msra.mxu0 0.0
    %3328 = vmatprep.subr.mxu0 0.0
    %3329 = vmatpush1.msra.mxu0 0.0
    %3330 = vmatprep.subr.mxu0 0.0
    %3331 = vmatpush1.msra.mxu0 0.0
    %3332 = vmatprep.subr.mxu0 0.0
    %3333 = vmatpush1.msra.mxu0 0.0
    %3334 = vmatprep.subr.mxu0 0.0
    %3335 = vmatpush1.msra.mxu0 0.0
    %3336 = vmatprep.subr.mxu0 0.0
    %3337 = vmatpush1.msra.mxu0 0.0
    %3338 = vmatprep.subr.mxu0 0.0
    %3339 = vmatpush1.msra.mxu0 0.0
    %3340 = vmatprep.subr.mxu0 0.0
    %3341 = vmatpush1.msra.mxu0 0.0
    %3342 = vmatprep.subr.mxu0 0.0
    %3343 = vmatpush1.msra.mxu0 0.0
    %3344 = vmatprep.subr.mxu0 0.0
    %3345 = vmatpush1.msra.mxu0 0.0
    %3346 = vmatprep.subr.mxu0 0.0
    %3347 = vmatpush1.msra.mxu0 0.0
    %3348 = vmatprep.subr.mxu0 0.0
    %3349 = vmatpush1.msra.mxu0 0.0
    %3350 = vmatprep.subr.mxu0 0.0
    %3351 = vmatpush1.msra.mxu0 0.0
    %3352 = vmatprep.subr.mxu0 0.0
    %3353 = vmatpush1.msra.mxu0 0.0
    %3354 = vmatprep.subr.mxu0 0.0
    %3355 = vmatpush1.msra.mxu0 0.0
    %3356 = vmatprep.subr.mxu0 0.0
    %3357 = vmatpush1.msra.mxu0 0.0
    %3358 = vmatprep.subr.mxu0 0.0
    %3359 = vmatpush1.msra.mxu0 0.0
    %3360 = vmatprep.subr.mxu0 0.0
    %3361 = vmatpush1.msra.mxu0 0.0
    %3362 = vmatprep.subr.mxu0 0.0
    %3363 = vmatpush1.msra.mxu0 0.0
    %3364 = vmatprep.subr.mxu0 0.0
    %3365 = vmatpush1.msra.mxu0 0.0
    %3366 = vmatprep.subr.mxu0 0.0
    %3367 = vmatpush1.msra.mxu0 0.0
    %3368 = vmatprep.subr.mxu0 0.0
    %3369 = vmatpush1.msra.mxu0 0.0
    %3370 = vmatprep.subr.mxu0 0.0
    %3371 = vmatpush1.msra.mxu0 0.0
    %3372 = vmatprep.subr.mxu0 0.0
    %3373 = vmatpush1.msra.mxu0 0.0
    %3374 = vmatprep.subr.mxu0 0.0
    %3375 = vmatpush1.msra.mxu0 0.0
    %3376 = vmatprep.subr.mxu0 0.0
    %3377 = vmatpush1.msra.mxu0 0.0
    %3378 = vmatprep.mubr.f32.mxu0 0.0
    %v3379 = vand.u32 %v1076, 4294901760
    %3380 = vmatmul.mubr.f32.gmra.mrb[0].mxu0 %v3379
    %v3381 = vpop.f32.mrb[0].mxu0
    %v3382 = vadd.f32 %v3237, %v3381
    %v3383 = vpop.f32.mrb[0].mxu0
    %v3384 = vadd.f32 %v3239, %v3383
    %3385 = vmatprep.mubr.f32.mxu0 0.0
    %v3386 = vand.u32 %v1079, 4294901760
    %3387 = vmatmul.mubr.f32.gmra.mrb[0].mxu0 %v3386
    %v3388 = vpop.f32.mrb[0].mxu0
    %v3389 = vadd.f32 %v3248, %v3388
    %v3390 = vpop.f32.mrb[0].mxu0
    %v3391 = vadd.f32 %v3250, %v3390
    %3392 = vmatprep.mubr.f32.mxu0 0.0
    %v3393 = vand.u32 %v1082, 4294901760
    %3394 = vmatmul.mubr.f32.gmra.mrb[0].mxu0 %v3393
    %v3395 = vpop.f32.mrb[0].mxu0
    %v3396 = vadd.f32 %v3259, %v3395
    %v3397 = vpop.f32.mrb[0].mxu0
    %v3398 = vadd.f32 %v3261, %v3397
    %3399 = vmatprep.mubr.f32.mxu0 0.0
    %v3400 = vand.u32 %v1085, 4294901760
    %3401 = vmatmul.mubr.f32.gmra.mrb[0].mxu0 %v3400
    %v3402 = vpop.f32.mrb[0].mxu0
    %v3403 = vadd.f32 %v3270, %v3402
    %v3404 = vpop.f32.mrb[0].mxu0
    %v3405 = vadd.f32 %v3272, %v3404
    %3406 = vdwg.mxu0
    %v3407 = vand.u32 %v989, 4294901760
    %v3408 = vsub.f32 %v989, %v3407
    %3409 = vmatprep.subr.mxu0 %v3408
    %v3410 = vand.u32 %v988, 4294901760
    %v3411 = vsub.f32 %v988, %v3410
    %3412 = vmatpush1.msra.mxu0 %v3411
    %v3413 = vand.u32 %v1005, 4294901760
    %v3414 = vsub.f32 %v1005, %v3413
    %3415 = vmatprep.subr.mxu0 %v3414
    %v3416 = vand.u32 %v1004, 4294901760
    %v3417 = vsub.f32 %v1004, %v3416
    %3418 = vmatpush1.msra.mxu0 %v3417
    %v3419 = vand.u32 %v1021, 4294901760
    %v3420 = vsub.f32 %v1021, %v3419
    %3421 = vmatprep.subr.mxu0 %v3420
    %v3422 = vand.u32 %v1020, 4294901760
    %v3423 = vsub.f32 %v1020, %v3422
    %3424 = vmatpush1.msra.mxu0 %v3423
    %v3425 = vand.u32 %v1037, 4294901760
    %v3426 = vsub.f32 %v1037, %v3425
    %3427 = vmatprep.subr.mxu0 %v3426
    %v3428 = vand.u32 %v1036, 4294901760
    %v3429 = vsub.f32 %v1036, %v3428
    %3430 = vmatpush1.msra.mxu0 %v3429
    %3431 = vmatprep.subr.mxu0 0.0
    %3432 = vmatpush1.msra.mxu0 0.0
    %3433 = vmatprep.subr.mxu0 0.0
    %3434 = vmatpush1.msra.mxu0 0.0
    %3435 = vmatprep.subr.mxu0 0.0
    %3436 = vmatpush1.msra.mxu0 0.0
    %3437 = vmatprep.subr.mxu0 0.0
    %3438 = vmatpush1.msra.mxu0 0.0
    %3439 = vmatprep.subr.mxu0 0.0
    %3440 = vmatpush1.msra.mxu0 0.0
    %3441 = vmatprep.subr.mxu0 0.0
    %3442 = vmatpush1.msra.mxu0 0.0
    %3443 = vmatprep.subr.mxu0 0.0
    %3444 = vmatpush1.msra.mxu0 0.0
    %3445 = vmatprep.subr.mxu0 0.0
    %3446 = vmatpush1.msra.mxu0 0.0
    %3447 = vmatprep.subr.mxu0 0.0
    %3448 = vmatpush1.msra.mxu0 0.0
    %3449 = vmatprep.subr.mxu0 0.0
    %3450 = vmatpush1.msra.mxu0 0.0
    %3451 = vmatprep.subr.mxu0 0.0
    %3452 = vmatpush1.msra.mxu0 0.0
    %3453 = vmatprep.subr.mxu0 0.0
    %3454 = vmatpush1.msra.mxu0 0.0
    %3455 = vmatprep.subr.mxu0 0.0
    %3456 = vmatpush1.msra.mxu0 0.0
    %3457 = vmatprep.subr.mxu0 0.0
    %3458 = vmatpush1.msra.mxu0 0.0
    %3459 = vmatprep.subr.mxu0 0.0
    %3460 = vmatpush1.msra.mxu0 0.0
    %3461 = vmatprep.subr.mxu0 0.0
    %3462 = vmatpush1.msra.mxu0 0.0
    %3463 = vmatprep.subr.mxu0 0.0
    %3464 = vmatpush1.msra.mxu0 0.0
    %3465 = vmatprep.subr.mxu0 0.0
    %3466 = vmatpush1.msra.mxu0 0.0
    %3467 = vmatprep.subr.mxu0 0.0
    %3468 = vmatpush1.msra.mxu0 0.0
    %3469 = vmatprep.subr.mxu0 0.0
    %3470 = vmatpush1.msra.mxu0 0.0
    %3471 = vmatprep.subr.mxu0 0.0
    %3472 = vmatpush1.msra.mxu0 0.0
    %3473 = vmatprep.subr.mxu0 0.0
    %3474 = vmatpush1.msra.mxu0 0.0
    %3475 = vmatprep.subr.mxu0 0.0
    %3476 = vmatpush1.msra.mxu0 0.0
    %3477 = vmatprep.subr.mxu0 0.0
    %3478 = vmatpush1.msra.mxu0 0.0
    %3479 = vmatprep.subr.mxu0 0.0
    %3480 = vmatpush1.msra.mxu0 0.0
    %3481 = vmatprep.subr.mxu0 0.0
    %3482 = vmatpush1.msra.mxu0 0.0
    %3483 = vmatprep.subr.mxu0 0.0
    %3484 = vmatpush1.msra.mxu0 0.0
    %3485 = vmatprep.subr.mxu0 0.0
    %3486 = vmatpush1.msra.mxu0 0.0
    %3487 = vmatprep.mubr.f32.mxu0 0.0
    %v3488 = vand.u32 %v1076, 4294901760
    %v3489 = vsub.f32 %v1076, %v3488
    %3490 = vmatmul.mubr.f32.gmra.mrb[0].mxu0 %v3489
    %v3491 = vpop.f32.mrb[0].mxu0
    %v3492 = vadd.f32 %v3382, %v3491
    %v3493 = vpop.f32.mrb[0].mxu0
    %v3494 = vadd.f32 %v3384, %v3493
    %3495 = vmatprep.mubr.f32.mxu0 0.0
    %v3496 = vand.u32 %v1079, 4294901760
    %v3497 = vsub.f32 %v1079, %v3496
    %3498 = vmatmul.mubr.f32.gmra.mrb[0].mxu0 %v3497
    %v3499 = vpop.f32.mrb[0].mxu0
    %v3500 = vadd.f32 %v3389, %v3499
    %v3501 = vpop.f32.mrb[0].mxu0
    %v3502 = vadd.f32 %v3391, %v3501
    %3503 = vmatprep.mubr.f32.mxu0 0.0
    %v3504 = vand.u32 %v1082, 4294901760
    %v3505 = vsub.f32 %v1082, %v3504
    %3506 = vmatmul.mubr.f32.gmra.mrb[0].mxu0 %v3505
    %v3507 = vpop.f32.mrb[0].mxu0
    %v3508 = vadd.f32 %v3396, %v3507
    %v3509 = vpop.f32.mrb[0].mxu0
    %v3510 = vadd.f32 %v3398, %v3509
    %3511 = vmatprep.mubr.f32.mxu0 0.0
    %v3512 = vand.u32 %v1085, 4294901760
    %v3513 = vsub.f32 %v1085, %v3512
    %3514 = vmatmul.mubr.f32.gmra.mrb[0].mxu0 %v3513
    %v3515 = vpop.f32.mrb[0].mxu0
    %v3516 = vadd.f32 %v3403, %v3515
    %v3517 = vpop.f32.mrb[0].mxu0
    %v3518 = vadd.f32 %v3405, %v3517
    %3519 = vdwg.mxu0
    %v3520 = vand.u32 %v989, 4294901760
    %3521 = vmatprep.subr.mxu0 %v3520
    %v3522 = vand.u32 %v988, 4294901760
    %3523 = vmatpush1.msra.mxu0 %v3522
    %v3524 = vand.u32 %v1005, 4294901760
    %3525 = vmatprep.subr.mxu0 %v3524
    %v3526 = vand.u32 %v1004, 4294901760
    %3527 = vmatpush1.msra.mxu0 %v3526
    %v3528 = vand.u32 %v1021, 4294901760
    %3529 = vmatprep.subr.mxu0 %v3528
    %v3530 = vand.u32 %v1020, 4294901760
    %3531 = vmatpush1.msra.mxu0 %v3530
    %v3532 = vand.u32 %v1037, 4294901760
    %3533 = vmatprep.subr.mxu0 %v3532
    %v3534 = vand.u32 %v1036, 4294901760
    %3535 = vmatpush1.msra.mxu0 %v3534
    %3536 = vmatprep.subr.mxu0 0.0
    %3537 = vmatpush1.msra.mxu0 0.0
    %3538 = vmatprep.subr.mxu0 0.0
    %3539 = vmatpush1.msra.mxu0 0.0
    %3540 = vmatprep.subr.mxu0 0.0
    %3541 = vmatpush1.msra.mxu0 0.0
    %3542 = vmatprep.subr.mxu0 0.0
    %3543 = vmatpush1.msra.mxu0 0.0
    %3544 = vmatprep.subr.mxu0 0.0
    %3545 = vmatpush1.msra.mxu0 0.0
    %3546 = vmatprep.subr.mxu0 0.0
    %3547 = vmatpush1.msra.mxu0 0.0
    %3548 = vmatprep.subr.mxu0 0.0
    %3549 = vmatpush1.msra.mxu0 0.0
    %3550 = vmatprep.subr.mxu0 0.0
    %3551 = vmatpush1.msra.mxu0 0.0
    %3552 = vmatprep.subr.mxu0 0.0
    %3553 = vmatpush1.msra.mxu0 0.0
    %3554 = vmatprep.subr.mxu0 0.0
    %3555 = vmatpush1.msra.mxu0 0.0
    %3556 = vmatprep.subr.mxu0 0.0
    %3557 = vmatpush1.msra.mxu0 0.0
    %3558 = vmatprep.subr.mxu0 0.0
    %3559 = vmatpush1.msra.mxu0 0.0
    %3560 = vmatprep.subr.mxu0 0.0
    %3561 = vmatpush1.msra.mxu0 0.0
    %3562 = vmatprep.subr.mxu0 0.0
    %3563 = vmatpush1.msra.mxu0 0.0
    %3564 = vmatprep.subr.mxu0 0.0
    %3565 = vmatpush1.msra.mxu0 0.0
    %3566 = vmatprep.subr.mxu0 0.0
    %3567 = vmatpush1.msra.mxu0 0.0
    %3568 = vmatprep.subr.mxu0 0.0
    %3569 = vmatpush1.msra.mxu0 0.0
    %3570 = vmatprep.subr.mxu0 0.0
    %3571 = vmatpush1.msra.mxu0 0.0
    %3572 = vmatprep.subr.mxu0 0.0
    %3573 = vmatpush1.msra.mxu0 0.0
    %3574 = vmatprep.subr.mxu0 0.0
    %3575 = vmatpush1.msra.mxu0 0.0
    %3576 = vmatprep.subr.mxu0 0.0
    %3577 = vmatpush1.msra.mxu0 0.0
    %3578 = vmatprep.subr.mxu0 0.0
    %3579 = vmatpush1.msra.mxu0 0.0
    %3580 = vmatprep.subr.mxu0 0.0
    %3581 = vmatpush1.msra.mxu0 0.0
    %3582 = vmatprep.subr.mxu0 0.0
    %3583 = vmatpush1.msra.mxu0 0.0
    %3584 = vmatprep.subr.mxu0 0.0
    %3585 = vmatpush1.msra.mxu0 0.0
    %3586 = vmatprep.subr.mxu0 0.0
    %3587 = vmatpush1.msra.mxu0 0.0
    %3588 = vmatprep.subr.mxu0 0.0
    %3589 = vmatpush1.msra.mxu0 0.0
    %3590 = vmatprep.subr.mxu0 0.0
    %3591 = vmatpush1.msra.mxu0 0.0
    %3592 = vmatprep.mubr.f32.mxu0 0.0
    %v3593 = vand.u32 %v1076, 4294901760
    %v3594 = vsub.f32 %v1076, %v3593
    %v3595 = vand.u32 %v3594, 4294901760
    %3596 = vmatmul.mubr.f32.gmra.mrb[0].mxu0 %v3595
    %v3597 = vpop.f32.mrb[0].mxu0
    %v3598 = vadd.f32 %v3492, %v3597
    %v3599 = vpop.f32.mrb[0].mxu0
    %v3600 = vadd.f32 %v3494, %v3599
    %3601 = vmatprep.mubr.f32.mxu0 0.0
    %v3602 = vand.u32 %v1079, 4294901760
    %v3603 = vsub.f32 %v1079, %v3602
    %v3604 = vand.u32 %v3603, 4294901760
    %3605 = vmatmul.mubr.f32.gmra.mrb[0].mxu0 %v3604
    %v3606 = vpop.f32.mrb[0].mxu0
    %v3607 = vadd.f32 %v3500, %v3606
    %v3608 = vpop.f32.mrb[0].mxu0
    %v3609 = vadd.f32 %v3502, %v3608
    %3610 = vmatprep.mubr.f32.mxu0 0.0
    %v3611 = vand.u32 %v1082, 4294901760
    %v3612 = vsub.f32 %v1082, %v3611
    %v3613 = vand.u32 %v3612, 4294901760
    %3614 = vmatmul.mubr.f32.gmra.mrb[0].mxu0 %v3613
    %v3615 = vpop.f32.mrb[0].mxu0
    %v3616 = vadd.f32 %v3508, %v3615
    %v3617 = vpop.f32.mrb[0].mxu0
    %v3618 = vadd.f32 %v3510, %v3617
    %3619 = vmatprep.mubr.f32.mxu0 0.0
    %v3620 = vand.u32 %v1085, 4294901760
    %v3621 = vsub.f32 %v1085, %v3620
    %v3622 = vand.u32 %v3621, 4294901760
    %3623 = vmatmul.mubr.f32.gmra.mrb[0].mxu0 %v3622
    %v3624 = vpop.f32.mrb[0].mxu0
    %v3625 = vadd.f32 %v3516, %v3624
    %v3626 = vpop.f32.mrb[0].mxu0
    %v3627 = vadd.f32 %v3518, %v3626
    %3628 = vdwg.mxu0
    %v3629 = vand.u32 %v989, 4294901760
    %v3630 = vsub.f32 %v989, %v3629
    %v3631 = vand.u32 %v3630, 4294901760
    %3632 = vmatprep.subr.mxu0 %v3631
    %v3633 = vand.u32 %v988, 4294901760
    %v3634 = vsub.f32 %v988, %v3633
    %v3635 = vand.u32 %v3634, 4294901760
    %3636 = vmatpush1.msra.mxu0 %v3635
    %v3637 = vand.u32 %v1005, 4294901760
    %v3638 = vsub.f32 %v1005, %v3637
    %v3639 = vand.u32 %v3638, 4294901760
    %3640 = vmatprep.subr.mxu0 %v3639
    %v3641 = vand.u32 %v1004, 4294901760
    %v3642 = vsub.f32 %v1004, %v3641
    %v3643 = vand.u32 %v3642, 4294901760
    %3644 = vmatpush1.msra.mxu0 %v3643
    %v3645 = vand.u32 %v1021, 4294901760
    %v3646 = vsub.f32 %v1021, %v3645
    %v3647 = vand.u32 %v3646, 4294901760
    %3648 = vmatprep.subr.mxu0 %v3647
    %v3649 = vand.u32 %v1020, 4294901760
    %v3650 = vsub.f32 %v1020, %v3649
    %v3651 = vand.u32 %v3650, 4294901760
    %3652 = vmatpush1.msra.mxu0 %v3651
    %v3653 = vand.u32 %v1037, 4294901760
    %v3654 = vsub.f32 %v1037, %v3653
    %v3655 = vand.u32 %v3654, 4294901760
    %3656 = vmatprep.subr.mxu0 %v3655
    %v3657 = vand.u32 %v1036, 4294901760
    %v3658 = vsub.f32 %v1036, %v3657
    %v3659 = vand.u32 %v3658, 4294901760
    %3660 = vmatpush1.msra.mxu0 %v3659
    %3661 = vmatprep.subr.mxu0 0.0
    %3662 = vmatpush1.msra.mxu0 0.0
    %3663 = vmatprep.subr.mxu0 0.0
    %3664 = vmatpush1.msra.mxu0 0.0
    %3665 = vmatprep.subr.mxu0 0.0
    %3666 = vmatpush1.msra.mxu0 0.0
    %3667 = vmatprep.subr.mxu0 0.0
    %3668 = vmatpush1.msra.mxu0 0.0
    %3669 = vmatprep.subr.mxu0 0.0
    %3670 = vmatpush1.msra.mxu0 0.0
    %3671 = vmatprep.subr.mxu0 0.0
    %3672 = vmatpush1.msra.mxu0 0.0
    %3673 = vmatprep.subr.mxu0 0.0
    %3674 = vmatpush1.msra.mxu0 0.0
    %3675 = vmatprep.subr.mxu0 0.0
    %3676 = vmatpush1.msra.mxu0 0.0
    %3677 = vmatprep.subr.mxu0 0.0
    %3678 = vmatpush1.msra.mxu0 0.0
    %3679 = vmatprep.subr.mxu0 0.0
    %3680 = vmatpush1.msra.mxu0 0.0
    %3681 = vmatprep.subr.mxu0 0.0
    %3682 = vmatpush1.msra.mxu0 0.0
    %3683 = vmatprep.subr.mxu0 0.0
    %3684 = vmatpush1.msra.mxu0 0.0
    %3685 = vmatprep.subr.mxu0 0.0
    %3686 = vmatpush1.msra.mxu0 0.0
    %3687 = vmatprep.subr.mxu0 0.0
    %3688 = vmatpush1.msra.mxu0 0.0
    %3689 = vmatprep.subr.mxu0 0.0
    %3690 = vmatpush1.msra.mxu0 0.0
    %3691 = vmatprep.subr.mxu0 0.0
    %3692 = vmatpush1.msra.mxu0 0.0
    %3693 = vmatprep.subr.mxu0 0.0
    %3694 = vmatpush1.msra.mxu0 0.0
    %3695 = vmatprep.subr.mxu0 0.0
    %3696 = vmatpush1.msra.mxu0 0.0
    %3697 = vmatprep.subr.mxu0 0.0
    %3698 = vmatpush1.msra.mxu0 0.0
    %3699 = vmatprep.subr.mxu0 0.0
    %3700 = vmatpush1.msra.mxu0 0.0
    %3701 = vmatprep.subr.mxu0 0.0
    %3702 = vmatpush1.msra.mxu0 0.0
    %3703 = vmatprep.subr.mxu0 0.0
    %3704 = vmatpush1.msra.mxu0 0.0
    %3705 = vmatprep.subr.mxu0 0.0
    %3706 = vmatpush1.msra.mxu0 0.0
    %3707 = vmatprep.subr.mxu0 0.0
    %3708 = vmatpush1.msra.mxu0 0.0
    %3709 = vmatprep.subr.mxu0 0.0
    %3710 = vmatpush1.msra.mxu0 0.0
    %3711 = vmatprep.subr.mxu0 0.0
    %3712 = vmatpush1.msra.mxu0 0.0
    %3713 = vmatprep.subr.mxu0 0.0
    %3714 = vmatpush1.msra.mxu0 0.0
    %3715 = vmatprep.subr.mxu0 0.0
    %3716 = vmatpush1.msra.mxu0 0.0
    %3717 = vmatprep.mubr.f32.mxu0 0.0
    %v3718 = vand.u32 %v1076, 4294901760
    %3719 = vmatmul.mubr.f32.gmra.mrb[0].mxu0 %v3718
    %v3720 = vpop.f32.mrb[0].mxu0
    %v3721 = vadd.f32 %v3598, %v3720
    %v3722 = vpop.f32.mrb[0].mxu0
    %v3723 = vadd.f32 %v3600, %v3722
    %3724 = vmatprep.mubr.f32.mxu0 0.0
    %v3725 = vand.u32 %v1079, 4294901760
    %3726 = vmatmul.mubr.f32.gmra.mrb[0].mxu0 %v3725
    %v3727 = vpop.f32.mrb[0].mxu0
    %v3728 = vadd.f32 %v3607, %v3727
    %v3729 = vpop.f32.mrb[0].mxu0
    %v3730 = vadd.f32 %v3609, %v3729
    %3731 = vmatprep.mubr.f32.mxu0 0.0
    %v3732 = vand.u32 %v1082, 4294901760
    %3733 = vmatmul.mubr.f32.gmra.mrb[0].mxu0 %v3732
    %v3734 = vpop.f32.mrb[0].mxu0
    %v3735 = vadd.f32 %v3616, %v3734
    %v3736 = vpop.f32.mrb[0].mxu0
    %v3737 = vadd.f32 %v3618, %v3736
    %3738 = vmatprep.mubr.f32.mxu0 0.0
    %v3739 = vand.u32 %v1085, 4294901760
    %3740 = vmatmul.mubr.f32.gmra.mrb[0].mxu0 %v3739
    %v3741 = vpop.f32.mrb[0].mxu0
    %v3742 = vadd.f32 %v3625, %v3741
    %v3743 = vpop.f32.mrb[0].mxu0
    %v3744 = vadd.f32 %v3627, %v3743
    %3745 = vdwg.mxu0
    %v3746 = vand.u32 %v989, 4294901760
    %3747 = vmatprep.subr.mxu0 %v3746
    %v3748 = vand.u32 %v988, 4294901760
    %3749 = vmatpush1.msra.mxu0 %v3748
    %v3750 = vand.u32 %v1005, 4294901760
    %3751 = vmatprep.subr.mxu0 %v3750
    %v3752 = vand.u32 %v1004, 4294901760
    %3753 = vmatpush1.msra.mxu0 %v3752
    %v3754 = vand.u32 %v1021, 4294901760
    %3755 = vmatprep.subr.mxu0 %v3754
    %v3756 = vand.u32 %v1020, 4294901760
    %3757 = vmatpush1.msra.mxu0 %v3756
    %v3758 = vand.u32 %v1037, 4294901760
    %3759 = vmatprep.subr.mxu0 %v3758
    %v3760 = vand.u32 %v1036, 4294901760
    %3761 = vmatpush1.msra.mxu0 %v3760
    %3762 = vmatprep.subr.mxu0 0.0
    %3763 = vmatpush1.msra.mxu0 0.0
    %3764 = vmatprep.subr.mxu0 0.0
    %3765 = vmatpush1.msra.mxu0 0.0
    %3766 = vmatprep.subr.mxu0 0.0
    %3767 = vmatpush1.msra.mxu0 0.0
    %3768 = vmatprep.subr.mxu0 0.0
    %3769 = vmatpush1.msra.mxu0 0.0
    %3770 = vmatprep.subr.mxu0 0.0
    %3771 = vmatpush1.msra.mxu0 0.0
    %3772 = vmatprep.subr.mxu0 0.0
    %3773 = vmatpush1.msra.mxu0 0.0
    %3774 = vmatprep.subr.mxu0 0.0
    %3775 = vmatpush1.msra.mxu0 0.0
    %3776 = vmatprep.subr.mxu0 0.0
    %3777 = vmatpush1.msra.mxu0 0.0
    %3778 = vmatprep.subr.mxu0 0.0
    %3779 = vmatpush1.msra.mxu0 0.0
    %3780 = vmatprep.subr.mxu0 0.0
    %3781 = vmatpush1.msra.mxu0 0.0
    %3782 = vmatprep.subr.mxu0 0.0
    %3783 = vmatpush1.msra.mxu0 0.0
    %3784 = vmatprep.subr.mxu0 0.0
    %3785 = vmatpush1.msra.mxu0 0.0
    %3786 = vmatprep.subr.mxu0 0.0
    %3787 = vmatpush1.msra.mxu0 0.0
    %3788 = vmatprep.subr.mxu0 0.0
    %3789 = vmatpush1.msra.mxu0 0.0
    %3790 = vmatprep.subr.mxu0 0.0
    %3791 = vmatpush1.msra.mxu0 0.0
    %3792 = vmatprep.subr.mxu0 0.0
    %3793 = vmatpush1.msra.mxu0 0.0
    %3794 = vmatprep.subr.mxu0 0.0
    %3795 = vmatpush1.msra.mxu0 0.0
    %3796 = vmatprep.subr.mxu0 0.0
    %3797 = vmatpush1.msra.mxu0 0.0
    %3798 = vmatprep.subr.mxu0 0.0
    %3799 = vmatpush1.msra.mxu0 0.0
    %3800 = vmatprep.subr.mxu0 0.0
    %3801 = vmatpush1.msra.mxu0 0.0
    %3802 = vmatprep.subr.mxu0 0.0
    %3803 = vmatpush1.msra.mxu0 0.0
    %3804 = vmatprep.subr.mxu0 0.0
    %3805 = vmatpush1.msra.mxu0 0.0
    %3806 = vmatprep.subr.mxu0 0.0
    %3807 = vmatpush1.msra.mxu0 0.0
    %3808 = vmatprep.subr.mxu0 0.0
    %3809 = vmatpush1.msra.mxu0 0.0
    %3810 = vmatprep.subr.mxu0 0.0
    %3811 = vmatpush1.msra.mxu0 0.0
    %3812 = vmatprep.subr.mxu0 0.0
    %3813 = vmatpush1.msra.mxu0 0.0
    %3814 = vmatprep.subr.mxu0 0.0
    %3815 = vmatpush1.msra.mxu0 0.0
    %3816 = vmatprep.subr.mxu0 0.0
    %3817 = vmatpush1.msra.mxu0 0.0
    %3818 = vmatprep.mubr.f32.mxu0 0.0
    %v3819 = vand.u32 %v1076, 4294901760
    %3820 = vmatmul.mubr.f32.gmra.mrb[0].mxu0 %v3819
    %v3821 = vpop.f32.mrb[0].mxu0
    %v3822 = vadd.f32 %v3721, %v3821
    %v3823 = vpop.f32.mrb[0].mxu0
    %v3824 = vadd.f32 %v3723, %v3823
    %3825 = vmatprep.mubr.f32.mxu0 0.0
    %v3826 = vand.u32 %v1079, 4294901760
    %3827 = vmatmul.mubr.f32.gmra.mrb[0].mxu0 %v3826
    %v3828 = vpop.f32.mrb[0].mxu0
    %v3829 = vadd.f32 %v3728, %v3828
    %v3830 = vpop.f32.mrb[0].mxu0
    %v3831 = vadd.f32 %v3730, %v3830
    %3832 = vmatprep.mubr.f32.mxu0 0.0
    %v3833 = vand.u32 %v1082, 4294901760
    %3834 = vmatmul.mubr.f32.gmra.mrb[0].mxu0 %v3833
    %v3835 = vpop.f32.mrb[0].mxu0
    %v3836 = vadd.f32 %v3735, %v3835
    %v3837 = vpop.f32.mrb[0].mxu0
    %v3838 = vadd.f32 %v3737, %v3837
    %3839 = vmatprep.mubr.f32.mxu0 0.0
    %v3840 = vand.u32 %v1085, 4294901760
    %3841 = vmatmul.mubr.f32.gmra.mrb[0].mxu0 %v3840
    %v3842 = vpop.f32.mrb[0].mxu0
    %v3843 = vadd.f32 %v3742, %v3842
    %v3844 = vpop.f32.mrb[0].mxu0
    %v3845 = vadd.f32 %v3744, %v3844
    %3846 = vdwg.mxu0
    %v3847 = vand.u32 %v991, 4294901760
    %3848 = vmatprep.subr.mxu0 %v3847
    %v3849 = vand.u32 %v990, 4294901760
    %3850 = vmatpush1.msra.mxu0 %v3849
    %v3851 = vand.u32 %v1007, 4294901760
    %3852 = vmatprep.subr.mxu0 %v3851
    %v3853 = vand.u32 %v1006, 4294901760
    %3854 = vmatpush1.msra.mxu0 %v3853
    %v3855 = vand.u32 %v1023, 4294901760
    %3856 = vmatprep.subr.mxu0 %v3855
    %v3857 = vand.u32 %v1022, 4294901760
    %3858 = vmatpush1.msra.mxu0 %v3857
    %v3859 = vand.u32 %v1039, 4294901760
    %3860 = vmatprep.subr.mxu0 %v3859
    %v3861 = vand.u32 %v1038, 4294901760
    %3862 = vmatpush1.msra.mxu0 %v3861
    %3863 = vmatprep.subr.mxu0 0.0
    %3864 = vmatpush1.msra.mxu0 0.0
    %3865 = vmatprep.subr.mxu0 0.0
    %3866 = vmatpush1.msra.mxu0 0.0
    %3867 = vmatprep.subr.mxu0 0.0
    %3868 = vmatpush1.msra.mxu0 0.0
    %3869 = vmatprep.subr.mxu0 0.0
    %3870 = vmatpush1.msra.mxu0 0.0
    %3871 = vmatprep.subr.mxu0 0.0
    %3872 = vmatpush1.msra.mxu0 0.0
    %3873 = vmatprep.subr.mxu0 0.0
    %3874 = vmatpush1.msra.mxu0 0.0
    %3875 = vmatprep.subr.mxu0 0.0
    %3876 = vmatpush1.msra.mxu0 0.0
    %3877 = vmatprep.subr.mxu0 0.0
    %3878 = vmatpush1.msra.mxu0 0.0
    %3879 = vmatprep.subr.mxu0 0.0
    %3880 = vmatpush1.msra.mxu0 0.0
    %3881 = vmatprep.subr.mxu0 0.0
    %3882 = vmatpush1.msra.mxu0 0.0
    %3883 = vmatprep.subr.mxu0 0.0
    %3884 = vmatpush1.msra.mxu0 0.0
    %3885 = vmatprep.subr.mxu0 0.0
    %3886 = vmatpush1.msra.mxu0 0.0
    %3887 = vmatprep.subr.mxu0 0.0
    %3888 = vmatpush1.msra.mxu0 0.0
    %3889 = vmatprep.subr.mxu0 0.0
    %3890 = vmatpush1.msra.mxu0 0.0
    %3891 = vmatprep.subr.mxu0 0.0
    %3892 = vmatpush1.msra.mxu0 0.0
    %3893 = vmatprep.subr.mxu0 0.0
    %3894 = vmatpush1.msra.mxu0 0.0
    %3895 = vmatprep.subr.mxu0 0.0
    %3896 = vmatpush1.msra.mxu0 0.0
    %3897 = vmatprep.subr.mxu0 0.0
    %3898 = vmatpush1.msra.mxu0 0.0
    %3899 = vmatprep.subr.mxu0 0.0
    %3900 = vmatpush1.msra.mxu0 0.0
    %3901 = vmatprep.subr.mxu0 0.0
    %3902 = vmatpush1.msra.mxu0 0.0
    %3903 = vmatprep.subr.mxu0 0.0
    %3904 = vmatpush1.msra.mxu0 0.0
    %3905 = vmatprep.subr.mxu0 0.0
    %3906 = vmatpush1.msra.mxu0 0.0
    %3907 = vmatprep.subr.mxu0 0.0
    %3908 = vmatpush1.msra.mxu0 0.0
    %3909 = vmatprep.subr.mxu0 0.0
    %3910 = vmatpush1.msra.mxu0 0.0
    %3911 = vmatprep.subr.mxu0 0.0
    %3912 = vmatpush1.msra.mxu0 0.0
    %3913 = vmatprep.subr.mxu0 0.0
    %3914 = vmatpush1.msra.mxu0 0.0
    %3915 = vmatprep.subr.mxu0 0.0
    %3916 = vmatpush1.msra.mxu0 0.0
    %3917 = vmatprep.subr.mxu0 0.0
    %3918 = vmatpush1.msra.mxu0 0.0
    %3919 = vmatprep.mubr.f32.mxu0 0.0
    %v3920 = vand.u32 %v1076, 4294901760
    %v3921 = vsub.f32 %v1076, %v3920
    %v3922 = vand.u32 %v3921, 4294901760
    %v3923 = vsub.f32 %v3921, %v3922
    %v3924 = vand.u32 %v3923, 4294901760
    %3925 = vmatmul.mubr.f32.gmra.mrb[0].mxu0 %v3924
    %v3926 = vpop.f32.mrb[0].mxu0
    %v3927 = vadd.f32 %v1057, %v3926
    %v3928 = vpop.f32.mrb[0].mxu0
    %v3929 = vadd.f32 %v1057, %v3928
    %3930 = vmatprep.mubr.f32.mxu0 0.0
    %v3931 = vand.u32 %v1079, 4294901760
    %v3932 = vsub.f32 %v1079, %v3931
    %v3933 = vand.u32 %v3932, 4294901760
    %v3934 = vsub.f32 %v3932, %v3933
    %v3935 = vand.u32 %v3934, 4294901760
    %3936 = vmatmul.mubr.f32.gmra.mrb[0].mxu0 %v3935
    %v3937 = vpop.f32.mrb[0].mxu0
    %v3938 = vadd.f32 %v1062, %v3937
    %v3939 = vpop.f32.mrb[0].mxu0
    %v3940 = vadd.f32 %v1062, %v3939
    %3941 = vmatprep.mubr.f32.mxu0 0.0
    %v3942 = vand.u32 %v1082, 4294901760
    %v3943 = vsub.f32 %v1082, %v3942
    %v3944 = vand.u32 %v3943, 4294901760
    %v3945 = vsub.f32 %v3943, %v3944
    %v3946 = vand.u32 %v3945, 4294901760
    %3947 = vmatmul.mubr.f32.gmra.mrb[0].mxu0 %v3946
    %v3948 = vpop.f32.mrb[0].mxu0
    %v3949 = vadd.f32 %v1067, %v3948
    %v3950 = vpop.f32.mrb[0].mxu0
    %v3951 = vadd.f32 %v1067, %v3950
    %3952 = vmatprep.mubr.f32.mxu0 0.0
    %v3953 = vand.u32 %v1085, 4294901760
    %v3954 = vsub.f32 %v1085, %v3953
    %v3955 = vand.u32 %v3954, 4294901760
    %v3956 = vsub.f32 %v3954, %v3955
    %v3957 = vand.u32 %v3956, 4294901760
    %3958 = vmatmul.mubr.f32.gmra.mrb[0].mxu0 %v3957
    %v3959 = vpop.f32.mrb[0].mxu0
    %v3960 = vadd.f32 %v1072, %v3959
    %v3961 = vpop.f32.mrb[0].mxu0
    %v3962 = vadd.f32 %v1072, %v3961
    %3963 = vdwg.mxu0
    %v3964 = vand.u32 %v991, 4294901760
    %v3965 = vsub.f32 %v991, %v3964
    %v3966 = vand.u32 %v3965, 4294901760
    %v3967 = vsub.f32 %v3965, %v3966
    %v3968 = vand.u32 %v3967, 4294901760
    %3969 = vmatprep.subr.mxu0 %v3968
    %v3970 = vand.u32 %v990, 4294901760
    %v3971 = vsub.f32 %v990, %v3970
    %v3972 = vand.u32 %v3971, 4294901760
    %v3973 = vsub.f32 %v3971, %v3972
    %v3974 = vand.u32 %v3973, 4294901760
    %3975 = vmatpush1.msra.mxu0 %v3974
    %v3976 = vand.u32 %v1007, 4294901760
    %v3977 = vsub.f32 %v1007, %v3976
    %v3978 = vand.u32 %v3977, 4294901760
    %v3979 = vsub.f32 %v3977, %v3978
    %v3980 = vand.u32 %v3979, 4294901760
    %3981 = vmatprep.subr.mxu0 %v3980
    %v3982 = vand.u32 %v1006, 4294901760
    %v3983 = vsub.f32 %v1006, %v3982
    %v3984 = vand.u32 %v3983, 4294901760
    %v3985 = vsub.f32 %v3983, %v3984
    %v3986 = vand.u32 %v3985, 4294901760
    %3987 = vmatpush1.msra.mxu0 %v3986
    %v3988 = vand.u32 %v1023, 4294901760
    %v3989 = vsub.f32 %v1023, %v3988
    %v3990 = vand.u32 %v3989, 4294901760
    %v3991 = vsub.f32 %v3989, %v3990
    %v3992 = vand.u32 %v3991, 4294901760
    %3993 = vmatprep.subr.mxu0 %v3992
    %v3994 = vand.u32 %v1022, 4294901760
    %v3995 = vsub.f32 %v1022, %v3994
    %v3996 = vand.u32 %v3995, 4294901760
    %v3997 = vsub.f32 %v3995, %v3996
    %v3998 = vand.u32 %v3997, 4294901760
    %3999 = vmatpush1.msra.mxu0 %v3998
    %v4000 = vand.u32 %v1039, 4294901760
    %v4001 = vsub.f32 %v1039, %v4000
    %v4002 = vand.u32 %v4001, 4294901760
    %v4003 = vsub.f32 %v4001, %v4002
    %v4004 = vand.u32 %v4003, 4294901760
    %4005 = vmatprep.subr.mxu0 %v4004
    %v4006 = vand.u32 %v1038, 4294901760
    %v4007 = vsub.f32 %v1038, %v4006
    %v4008 = vand.u32 %v4007, 4294901760
    %v4009 = vsub.f32 %v4007, %v4008
    %v4010 = vand.u32 %v4009, 4294901760
    %4011 = vmatpush1.msra.mxu0 %v4010
    %4012 = vmatprep.subr.mxu0 0.0
    %4013 = vmatpush1.msra.mxu0 0.0
    %4014 = vmatprep.subr.mxu0 0.0
    %4015 = vmatpush1.msra.mxu0 0.0
    %4016 = vmatprep.subr.mxu0 0.0
    %4017 = vmatpush1.msra.mxu0 0.0
    %4018 = vmatprep.subr.mxu0 0.0
    %4019 = vmatpush1.msra.mxu0 0.0
    %4020 = vmatprep.subr.mxu0 0.0
    %4021 = vmatpush1.msra.mxu0 0.0
    %4022 = vmatprep.subr.mxu0 0.0
    %4023 = vmatpush1.msra.mxu0 0.0
    %4024 = vmatprep.subr.mxu0 0.0
    %4025 = vmatpush1.msra.mxu0 0.0
    %4026 = vmatprep.subr.mxu0 0.0
    %4027 = vmatpush1.msra.mxu0 0.0
    %4028 = vmatprep.subr.mxu0 0.0
    %4029 = vmatpush1.msra.mxu0 0.0
    %4030 = vmatprep.subr.mxu0 0.0
    %4031 = vmatpush1.msra.mxu0 0.0
    %4032 = vmatprep.subr.mxu0 0.0
    %4033 = vmatpush1.msra.mxu0 0.0
    %4034 = vmatprep.subr.mxu0 0.0
    %4035 = vmatpush1.msra.mxu0 0.0
    %4036 = vmatprep.subr.mxu0 0.0
    %4037 = vmatpush1.msra.mxu0 0.0
    %4038 = vmatprep.subr.mxu0 0.0
    %4039 = vmatpush1.msra.mxu0 0.0
    %4040 = vmatprep.subr.mxu0 0.0
    %4041 = vmatpush1.msra.mxu0 0.0
    %4042 = vmatprep.subr.mxu0 0.0
    %4043 = vmatpush1.msra.mxu0 0.0
    %4044 = vmatprep.subr.mxu0 0.0
    %4045 = vmatpush1.msra.mxu0 0.0
    %4046 = vmatprep.subr.mxu0 0.0
    %4047 = vmatpush1.msra.mxu0 0.0
    %4048 = vmatprep.subr.mxu0 0.0
    %4049 = vmatpush1.msra.mxu0 0.0
    %4050 = vmatprep.subr.mxu0 0.0
    %4051 = vmatpush1.msra.mxu0 0.0
    %4052 = vmatprep.subr.mxu0 0.0
    %4053 = vmatpush1.msra.mxu0 0.0
    %4054 = vmatprep.subr.mxu0 0.0
    %4055 = vmatpush1.msra.mxu0 0.0
    %4056 = vmatprep.subr.mxu0 0.0
    %4057 = vmatpush1.msra.mxu0 0.0
    %4058 = vmatprep.subr.mxu0 0.0
    %4059 = vmatpush1.msra.mxu0 0.0
    %4060 = vmatprep.subr.mxu0 0.0
    %4061 = vmatpush1.msra.mxu0 0.0
    %4062 = vmatprep.subr.mxu0 0.0
    %4063 = vmatpush1.msra.mxu0 0.0
    %4064 = vmatprep.subr.mxu0 0.0
    %4065 = vmatpush1.msra.mxu0 0.0
    %4066 = vmatprep.subr.mxu0 0.0
    %4067 = vmatpush1.msra.mxu0 0.0
    %4068 = vmatprep.mubr.f32.mxu0 0.0
    %v4069 = vand.u32 %v1076, 4294901760
    %4070 = vmatmul.mubr.f32.gmra.mrb[0].mxu0 %v4069
    %v4071 = vpop.f32.mrb[0].mxu0
    %v4072 = vadd.f32 %v3927, %v4071
    %v4073 = vpop.f32.mrb[0].mxu0
    %v4074 = vadd.f32 %v3929, %v4073
    %4075 = vmatprep.mubr.f32.mxu0 0.0
    %v4076 = vand.u32 %v1079, 4294901760
    %4077 = vmatmul.mubr.f32.gmra.mrb[0].mxu0 %v4076
    %v4078 = vpop.f32.mrb[0].mxu0
    %v4079 = vadd.f32 %v3938, %v4078
    %v4080 = vpop.f32.mrb[0].mxu0
    %v4081 = vadd.f32 %v3940, %v4080
    %4082 = vmatprep.mubr.f32.mxu0 0.0
    %v4083 = vand.u32 %v1082, 4294901760
    %4084 = vmatmul.mubr.f32.gmra.mrb[0].mxu0 %v4083
    %v4085 = vpop.f32.mrb[0].mxu0
    %v4086 = vadd.f32 %v3949, %v4085
    %v4087 = vpop.f32.mrb[0].mxu0
    %v4088 = vadd.f32 %v3951, %v4087
    %4089 = vmatprep.mubr.f32.mxu0 0.0
    %v4090 = vand.u32 %v1085, 4294901760
    %4091 = vmatmul.mubr.f32.gmra.mrb[0].mxu0 %v4090
    %v4092 = vpop.f32.mrb[0].mxu0
    %v4093 = vadd.f32 %v3960, %v4092
    %v4094 = vpop.f32.mrb[0].mxu0
    %v4095 = vadd.f32 %v3962, %v4094
    %4096 = vdwg.mxu0
    %v4097 = vand.u32 %v991, 4294901760
    %v4098 = vsub.f32 %v991, %v4097
    %4099 = vmatprep.subr.mxu0 %v4098
    %v4100 = vand.u32 %v990, 4294901760
    %v4101 = vsub.f32 %v990, %v4100
    %4102 = vmatpush1.msra.mxu0 %v4101
    %v4103 = vand.u32 %v1007, 4294901760
    %v4104 = vsub.f32 %v1007, %v4103
    %4105 = vmatprep.subr.mxu0 %v4104
    %v4106 = vand.u32 %v1006, 4294901760
    %v4107 = vsub.f32 %v1006, %v4106
    %4108 = vmatpush1.msra.mxu0 %v4107
    %v4109 = vand.u32 %v1023, 4294901760
    %v4110 = vsub.f32 %v1023, %v4109
    %4111 = vmatprep.subr.mxu0 %v4110
    %v4112 = vand.u32 %v1022, 4294901760
    %v4113 = vsub.f32 %v1022, %v4112
    %4114 = vmatpush1.msra.mxu0 %v4113
    %v4115 = vand.u32 %v1039, 4294901760
    %v4116 = vsub.f32 %v1039, %v4115
    %4117 = vmatprep.subr.mxu0 %v4116
    %v4118 = vand.u32 %v1038, 4294901760
    %v4119 = vsub.f32 %v1038, %v4118
    %4120 = vmatpush1.msra.mxu0 %v4119
    %4121 = vmatprep.subr.mxu0 0.0
    %4122 = vmatpush1.msra.mxu0 0.0
    %4123 = vmatprep.subr.mxu0 0.0
    %4124 = vmatpush1.msra.mxu0 0.0
    %4125 = vmatprep.subr.mxu0 0.0
    %4126 = vmatpush1.msra.mxu0 0.0
    %4127 = vmatprep.subr.mxu0 0.0
    %4128 = vmatpush1.msra.mxu0 0.0
    %4129 = vmatprep.subr.mxu0 0.0
    %4130 = vmatpush1.msra.mxu0 0.0
    %4131 = vmatprep.subr.mxu0 0.0
    %4132 = vmatpush1.msra.mxu0 0.0
    %4133 = vmatprep.subr.mxu0 0.0
    %4134 = vmatpush1.msra.mxu0 0.0
    %4135 = vmatprep.subr.mxu0 0.0
    %4136 = vmatpush1.msra.mxu0 0.0
    %4137 = vmatprep.subr.mxu0 0.0
    %4138 = vmatpush1.msra.mxu0 0.0
    %4139 = vmatprep.subr.mxu0 0.0
    %4140 = vmatpush1.msra.mxu0 0.0
    %4141 = vmatprep.subr.mxu0 0.0
    %4142 = vmatpush1.msra.mxu0 0.0
    %4143 = vmatprep.subr.mxu0 0.0
    %4144 = vmatpush1.msra.mxu0 0.0
    %4145 = vmatprep.subr.mxu0 0.0
    %4146 = vmatpush1.msra.mxu0 0.0
    %4147 = vmatprep.subr.mxu0 0.0
    %4148 = vmatpush1.msra.mxu0 0.0
    %4149 = vmatprep.subr.mxu0 0.0
    %4150 = vmatpush1.msra.mxu0 0.0
    %4151 = vmatprep.subr.mxu0 0.0
    %4152 = vmatpush1.msra.mxu0 0.0
    %4153 = vmatprep.subr.mxu0 0.0
    %4154 = vmatpush1.msra.mxu0 0.0
    %4155 = vmatprep.subr.mxu0 0.0
    %4156 = vmatpush1.msra.mxu0 0.0
    %4157 = vmatprep.subr.mxu0 0.0
    %4158 = vmatpush1.msra.mxu0 0.0
    %4159 = vmatprep.subr.mxu0 0.0
    %4160 = vmatpush1.msra.mxu0 0.0
    %4161 = vmatprep.subr.mxu0 0.0
    %4162 = vmatpush1.msra.mxu0 0.0
    %4163 = vmatprep.subr.mxu0 0.0
    %4164 = vmatpush1.msra.mxu0 0.0
    %4165 = vmatprep.subr.mxu0 0.0
    %4166 = vmatpush1.msra.mxu0 0.0
    %4167 = vmatprep.subr.mxu0 0.0
    %4168 = vmatpush1.msra.mxu0 0.0
    %4169 = vmatprep.subr.mxu0 0.0
    %4170 = vmatpush1.msra.mxu0 0.0
    %4171 = vmatprep.subr.mxu0 0.0
    %4172 = vmatpush1.msra.mxu0 0.0
    %4173 = vmatprep.subr.mxu0 0.0
    %4174 = vmatpush1.msra.mxu0 0.0
    %4175 = vmatprep.subr.mxu0 0.0
    %4176 = vmatpush1.msra.mxu0 0.0
    %4177 = vmatprep.mubr.f32.mxu0 0.0
    %v4178 = vand.u32 %v1076, 4294901760
    %v4179 = vsub.f32 %v1076, %v4178
    %4180 = vmatmul.mubr.f32.gmra.mrb[0].mxu0 %v4179
    %v4181 = vpop.f32.mrb[0].mxu0
    %v4182 = vadd.f32 %v4072, %v4181
    %v4183 = vpop.f32.mrb[0].mxu0
    %v4184 = vadd.f32 %v4074, %v4183
    %4185 = vmatprep.mubr.f32.mxu0 0.0
    %v4186 = vand.u32 %v1079, 4294901760
    %v4187 = vsub.f32 %v1079, %v4186
    %4188 = vmatmul.mubr.f32.gmra.mrb[0].mxu0 %v4187
    %v4189 = vpop.f32.mrb[0].mxu0
    %v4190 = vadd.f32 %v4079, %v4189
    %v4191 = vpop.f32.mrb[0].mxu0
    %v4192 = vadd.f32 %v4081, %v4191
    %4193 = vmatprep.mubr.f32.mxu0 0.0
    %v4194 = vand.u32 %v1082, 4294901760
    %v4195 = vsub.f32 %v1082, %v4194
    %4196 = vmatmul.mubr.f32.gmra.mrb[0].mxu0 %v4195
    %v4197 = vpop.f32.mrb[0].mxu0
    %v4198 = vadd.f32 %v4086, %v4197
    %v4199 = vpop.f32.mrb[0].mxu0
    %v4200 = vadd.f32 %v4088, %v4199
    %4201 = vmatprep.mubr.f32.mxu0 0.0
    %v4202 = vand.u32 %v1085, 4294901760
    %v4203 = vsub.f32 %v1085, %v4202
    %4204 = vmatmul.mubr.f32.gmra.mrb[0].mxu0 %v4203
    %v4205 = vpop.f32.mrb[0].mxu0
    %v4206 = vadd.f32 %v4093, %v4205
    %v4207 = vpop.f32.mrb[0].mxu0
    %v4208 = vadd.f32 %v4095, %v4207
    %4209 = vdwg.mxu0
    %v4210 = vand.u32 %v991, 4294901760
    %4211 = vmatprep.subr.mxu0 %v4210
    %v4212 = vand.u32 %v990, 4294901760
    %4213 = vmatpush1.msra.mxu0 %v4212
    %v4214 = vand.u32 %v1007, 4294901760
    %4215 = vmatprep.subr.mxu0 %v4214
    %v4216 = vand.u32 %v1006, 4294901760
    %4217 = vmatpush1.msra.mxu0 %v4216
    %v4218 = vand.u32 %v1023, 4294901760
    %4219 = vmatprep.subr.mxu0 %v4218
    %v4220 = vand.u32 %v1022, 4294901760
    %4221 = vmatpush1.msra.mxu0 %v4220
    %v4222 = vand.u32 %v1039, 4294901760
    %4223 = vmatprep.subr.mxu0 %v4222
    %v4224 = vand.u32 %v1038, 4294901760
    %4225 = vmatpush1.msra.mxu0 %v4224
    %4226 = vmatprep.subr.mxu0 0.0
    %4227 = vmatpush1.msra.mxu0 0.0
    %4228 = vmatprep.subr.mxu0 0.0
    %4229 = vmatpush1.msra.mxu0 0.0
    %4230 = vmatprep.subr.mxu0 0.0
    %4231 = vmatpush1.msra.mxu0 0.0
    %4232 = vmatprep.subr.mxu0 0.0
    %4233 = vmatpush1.msra.mxu0 0.0
    %4234 = vmatprep.subr.mxu0 0.0
    %4235 = vmatpush1.msra.mxu0 0.0
    %4236 = vmatprep.subr.mxu0 0.0
    %4237 = vmatpush1.msra.mxu0 0.0
    %4238 = vmatprep.subr.mxu0 0.0
    %4239 = vmatpush1.msra.mxu0 0.0
    %4240 = vmatprep.subr.mxu0 0.0
    %4241 = vmatpush1.msra.mxu0 0.0
    %4242 = vmatprep.subr.mxu0 0.0
    %4243 = vmatpush1.msra.mxu0 0.0
    %4244 = vmatprep.subr.mxu0 0.0
    %4245 = vmatpush1.msra.mxu0 0.0
    %4246 = vmatprep.subr.mxu0 0.0
    %4247 = vmatpush1.msra.mxu0 0.0
    %4248 = vmatprep.subr.mxu0 0.0
    %4249 = vmatpush1.msra.mxu0 0.0
    %4250 = vmatprep.subr.mxu0 0.0
    %4251 = vmatpush1.msra.mxu0 0.0
    %4252 = vmatprep.subr.mxu0 0.0
    %4253 = vmatpush1.msra.mxu0 0.0
    %4254 = vmatprep.subr.mxu0 0.0
    %4255 = vmatpush1.msra.mxu0 0.0
    %4256 = vmatprep.subr.mxu0 0.0
    %4257 = vmatpush1.msra.mxu0 0.0
    %4258 = vmatprep.subr.mxu0 0.0
    %4259 = vmatpush1.msra.mxu0 0.0
    %4260 = vmatprep.subr.mxu0 0.0
    %4261 = vmatpush1.msra.mxu0 0.0
    %4262 = vmatprep.subr.mxu0 0.0
    %4263 = vmatpush1.msra.mxu0 0.0
    %4264 = vmatprep.subr.mxu0 0.0
    %4265 = vmatpush1.msra.mxu0 0.0
    %4266 = vmatprep.subr.mxu0 0.0
    %4267 = vmatpush1.msra.mxu0 0.0
    %4268 = vmatprep.subr.mxu0 0.0
    %4269 = vmatpush1.msra.mxu0 0.0
    %4270 = vmatprep.subr.mxu0 0.0
    %4271 = vmatpush1.msra.mxu0 0.0
    %4272 = vmatprep.subr.mxu0 0.0
    %4273 = vmatpush1.msra.mxu0 0.0
    %4274 = vmatprep.subr.mxu0 0.0
    %4275 = vmatpush1.msra.mxu0 0.0
    %4276 = vmatprep.subr.mxu0 0.0
    %4277 = vmatpush1.msra.mxu0 0.0
    %4278 = vmatprep.subr.mxu0 0.0
    %4279 = vmatpush1.msra.mxu0 0.0
    %4280 = vmatprep.subr.mxu0 0.0
    %4281 = vmatpush1.msra.mxu0 0.0
    %4282 = vmatprep.mubr.f32.mxu0 0.0
    %v4283 = vand.u32 %v1076, 4294901760
    %v4284 = vsub.f32 %v1076, %v4283
    %v4285 = vand.u32 %v4284, 4294901760
    %4286 = vmatmul.mubr.f32.gmra.mrb[0].mxu0 %v4285
    %v4287 = vpop.f32.mrb[0].mxu0
    %v4288 = vadd.f32 %v4182, %v4287
    %v4289 = vpop.f32.mrb[0].mxu0
    %v4290 = vadd.f32 %v4184, %v4289
    %4291 = vmatprep.mubr.f32.mxu0 0.0
    %v4292 = vand.u32 %v1079, 4294901760
    %v4293 = vsub.f32 %v1079, %v4292
    %v4294 = vand.u32 %v4293, 4294901760
    %4295 = vmatmul.mubr.f32.gmra.mrb[0].mxu0 %v4294
    %v4296 = vpop.f32.mrb[0].mxu0
    %v4297 = vadd.f32 %v4190, %v4296
    %v4298 = vpop.f32.mrb[0].mxu0
    %v4299 = vadd.f32 %v4192, %v4298
    %4300 = vmatprep.mubr.f32.mxu0 0.0
    %v4301 = vand.u32 %v1082, 4294901760
    %v4302 = vsub.f32 %v1082, %v4301
    %v4303 = vand.u32 %v4302, 4294901760
    %4304 = vmatmul.mubr.f32.gmra.mrb[0].mxu0 %v4303
    %v4305 = vpop.f32.mrb[0].mxu0
    %v4306 = vadd.f32 %v4198, %v4305
    %v4307 = vpop.f32.mrb[0].mxu0
    %v4308 = vadd.f32 %v4200, %v4307
    %4309 = vmatprep.mubr.f32.mxu0 0.0
    %v4310 = vand.u32 %v1085, 4294901760
    %v4311 = vsub.f32 %v1085, %v4310
    %v4312 = vand.u32 %v4311, 4294901760
    %4313 = vmatmul.mubr.f32.gmra.mrb[0].mxu0 %v4312
    %v4314 = vpop.f32.mrb[0].mxu0
    %v4315 = vadd.f32 %v4206, %v4314
    %v4316 = vpop.f32.mrb[0].mxu0
    %v4317 = vadd.f32 %v4208, %v4316
    %4318 = vdwg.mxu0
    %v4319 = vand.u32 %v991, 4294901760
    %v4320 = vsub.f32 %v991, %v4319
    %v4321 = vand.u32 %v4320, 4294901760
    %4322 = vmatprep.subr.mxu0 %v4321
    %v4323 = vand.u32 %v990, 4294901760
    %v4324 = vsub.f32 %v990, %v4323
    %v4325 = vand.u32 %v4324, 4294901760
    %4326 = vmatpush1.msra.mxu0 %v4325
    %v4327 = vand.u32 %v1007, 4294901760
    %v4328 = vsub.f32 %v1007, %v4327
    %v4329 = vand.u32 %v4328, 4294901760
    %4330 = vmatprep.subr.mxu0 %v4329
    %v4331 = vand.u32 %v1006, 4294901760
    %v4332 = vsub.f32 %v1006, %v4331
    %v4333 = vand.u32 %v4332, 4294901760
    %4334 = vmatpush1.msra.mxu0 %v4333
    %v4335 = vand.u32 %v1023, 4294901760
    %v4336 = vsub.f32 %v1023, %v4335
    %v4337 = vand.u32 %v4336, 4294901760
    %4338 = vmatprep.subr.mxu0 %v4337
    %v4339 = vand.u32 %v1022, 4294901760
    %v4340 = vsub.f32 %v1022, %v4339
    %v4341 = vand.u32 %v4340, 4294901760
    %4342 = vmatpush1.msra.mxu0 %v4341
    %v4343 = vand.u32 %v1039, 4294901760
    %v4344 = vsub.f32 %v1039, %v4343
    %v4345 = vand.u32 %v4344, 4294901760
    %4346 = vmatprep.subr.mxu0 %v4345
    %v4347 = vand.u32 %v1038, 4294901760
    %v4348 = vsub.f32 %v1038, %v4347
    %v4349 = vand.u32 %v4348, 4294901760
    %4350 = vmatpush1.msra.mxu0 %v4349
    %4351 = vmatprep.subr.mxu0 0.0
    %4352 = vmatpush1.msra.mxu0 0.0
    %4353 = vmatprep.subr.mxu0 0.0
    %4354 = vmatpush1.msra.mxu0 0.0
    %4355 = vmatprep.subr.mxu0 0.0
    %4356 = vmatpush1.msra.mxu0 0.0
    %4357 = vmatprep.subr.mxu0 0.0
    %4358 = vmatpush1.msra.mxu0 0.0
    %4359 = vmatprep.subr.mxu0 0.0
    %4360 = vmatpush1.msra.mxu0 0.0
    %4361 = vmatprep.subr.mxu0 0.0
    %4362 = vmatpush1.msra.mxu0 0.0
    %4363 = vmatprep.subr.mxu0 0.0
    %4364 = vmatpush1.msra.mxu0 0.0
    %4365 = vmatprep.subr.mxu0 0.0
    %4366 = vmatpush1.msra.mxu0 0.0
    %4367 = vmatprep.subr.mxu0 0.0
    %4368 = vmatpush1.msra.mxu0 0.0
    %4369 = vmatprep.subr.mxu0 0.0
    %4370 = vmatpush1.msra.mxu0 0.0
    %4371 = vmatprep.subr.mxu0 0.0
    %4372 = vmatpush1.msra.mxu0 0.0
    %4373 = vmatprep.subr.mxu0 0.0
    %4374 = vmatpush1.msra.mxu0 0.0
    %4375 = vmatprep.subr.mxu0 0.0
    %4376 = vmatpush1.msra.mxu0 0.0
    %4377 = vmatprep.subr.mxu0 0.0
    %4378 = vmatpush1.msra.mxu0 0.0
    %4379 = vmatprep.subr.mxu0 0.0
    %4380 = vmatpush1.msra.mxu0 0.0
    %4381 = vmatprep.subr.mxu0 0.0
    %4382 = vmatpush1.msra.mxu0 0.0
    %4383 = vmatprep.subr.mxu0 0.0
    %4384 = vmatpush1.msra.mxu0 0.0
    %4385 = vmatprep.subr.mxu0 0.0
    %4386 = vmatpush1.msra.mxu0 0.0
    %4387 = vmatprep.subr.mxu0 0.0
    %4388 = vmatpush1.msra.mxu0 0.0
    %4389 = vmatprep.subr.mxu0 0.0
    %4390 = vmatpush1.msra.mxu0 0.0
    %4391 = vmatprep.subr.mxu0 0.0
    %4392 = vmatpush1.msra.mxu0 0.0
    %4393 = vmatprep.subr.mxu0 0.0
    %4394 = vmatpush1.msra.mxu0 0.0
    %4395 = vmatprep.subr.mxu0 0.0
    %4396 = vmatpush1.msra.mxu0 0.0
    %4397 = vmatprep.subr.mxu0 0.0
    %4398 = vmatpush1.msra.mxu0 0.0
    %4399 = vmatprep.subr.mxu0 0.0
    %4400 = vmatpush1.msra.mxu0 0.0
    %4401 = vmatprep.subr.mxu0 0.0
    %4402 = vmatpush1.msra.mxu0 0.0
    %4403 = vmatprep.subr.mxu0 0.0
    %4404 = vmatpush1.msra.mxu0 0.0
    %4405 = vmatprep.subr.mxu0 0.0
    %4406 = vmatpush1.msra.mxu0 0.0
    %4407 = vmatprep.mubr.f32.mxu0 0.0
    %v4408 = vand.u32 %v1076, 4294901760
    %4409 = vmatmul.mubr.f32.gmra.mrb[0].mxu0 %v4408
    %v4410 = vpop.f32.mrb[0].mxu0
    %v4411 = vadd.f32 %v4288, %v4410
    %v4412 = vpop.f32.mrb[0].mxu0
    %v4413 = vadd.f32 %v4290, %v4412
    %4414 = vmatprep.mubr.f32.mxu0 0.0
    %v4415 = vand.u32 %v1079, 4294901760
    %4416 = vmatmul.mubr.f32.gmra.mrb[0].mxu0 %v4415
    %v4417 = vpop.f32.mrb[0].mxu0
    %v4418 = vadd.f32 %v4297, %v4417
    %v4419 = vpop.f32.mrb[0].mxu0
    %v4420 = vadd.f32 %v4299, %v4419
    %4421 = vmatprep.mubr.f32.mxu0 0.0
    %v4422 = vand.u32 %v1082, 4294901760
    %4423 = vmatmul.mubr.f32.gmra.mrb[0].mxu0 %v4422
    %v4424 = vpop.f32.mrb[0].mxu0
    %v4425 = vadd.f32 %v4306, %v4424
    %v4426 = vpop.f32.mrb[0].mxu0
    %v4427 = vadd.f32 %v4308, %v4426
    %4428 = vmatprep.mubr.f32.mxu0 0.0
    %v4429 = vand.u32 %v1085, 4294901760
    %4430 = vmatmul.mubr.f32.gmra.mrb[0].mxu0 %v4429
    %v4431 = vpop.f32.mrb[0].mxu0
    %v4432 = vadd.f32 %v4315, %v4431
    %v4433 = vpop.f32.mrb[0].mxu0
    %v4434 = vadd.f32 %v4317, %v4433
    %4435 = vdwg.mxu0
    %v4436 = vand.u32 %v991, 4294901760
    %4437 = vmatprep.subr.mxu0 %v4436
    %v4438 = vand.u32 %v990, 4294901760
    %4439 = vmatpush1.msra.mxu0 %v4438
    %v4440 = vand.u32 %v1007, 4294901760
    %4441 = vmatprep.subr.mxu0 %v4440
    %v4442 = vand.u32 %v1006, 4294901760
    %4443 = vmatpush1.msra.mxu0 %v4442
    %v4444 = vand.u32 %v1023, 4294901760
    %4445 = vmatprep.subr.mxu0 %v4444
    %v4446 = vand.u32 %v1022, 4294901760
    %4447 = vmatpush1.msra.mxu0 %v4446
    %v4448 = vand.u32 %v1039, 4294901760
    %4449 = vmatprep.subr.mxu0 %v4448
    %v4450 = vand.u32 %v1038, 4294901760
    %4451 = vmatpush1.msra.mxu0 %v4450
    %4452 = vmatprep.subr.mxu0 0.0
    %4453 = vmatpush1.msra.mxu0 0.0
    %4454 = vmatprep.subr.mxu0 0.0
    %4455 = vmatpush1.msra.mxu0 0.0
    %4456 = vmatprep.subr.mxu0 0.0
    %4457 = vmatpush1.msra.mxu0 0.0
    %4458 = vmatprep.subr.mxu0 0.0
    %4459 = vmatpush1.msra.mxu0 0.0
    %4460 = vmatprep.subr.mxu0 0.0
    %4461 = vmatpush1.msra.mxu0 0.0
    %4462 = vmatprep.subr.mxu0 0.0
    %4463 = vmatpush1.msra.mxu0 0.0
    %4464 = vmatprep.subr.mxu0 0.0
    %4465 = vmatpush1.msra.mxu0 0.0
    %4466 = vmatprep.subr.mxu0 0.0
    %4467 = vmatpush1.msra.mxu0 0.0
    %4468 = vmatprep.subr.mxu0 0.0
    %4469 = vmatpush1.msra.mxu0 0.0
    %4470 = vmatprep.subr.mxu0 0.0
    %4471 = vmatpush1.msra.mxu0 0.0
    %4472 = vmatprep.subr.mxu0 0.0
    %4473 = vmatpush1.msra.mxu0 0.0
    %4474 = vmatprep.subr.mxu0 0.0
    %4475 = vmatpush1.msra.mxu0 0.0
    %4476 = vmatprep.subr.mxu0 0.0
    %4477 = vmatpush1.msra.mxu0 0.0
    %4478 = vmatprep.subr.mxu0 0.0
    %4479 = vmatpush1.msra.mxu0 0.0
    %4480 = vmatprep.subr.mxu0 0.0
    %4481 = vmatpush1.msra.mxu0 0.0
    %4482 = vmatprep.subr.mxu0 0.0
    %4483 = vmatpush1.msra.mxu0 0.0
    %4484 = vmatprep.subr.mxu0 0.0
    %4485 = vmatpush1.msra.mxu0 0.0
    %4486 = vmatprep.subr.mxu0 0.0
    %4487 = vmatpush1.msra.mxu0 0.0
    %4488 = vmatprep.subr.mxu0 0.0
    %4489 = vmatpush1.msra.mxu0 0.0
    %4490 = vmatprep.subr.mxu0 0.0
    %4491 = vmatpush1.msra.mxu0 0.0
    %4492 = vmatprep.subr.mxu0 0.0
    %4493 = vmatpush1.msra.mxu0 0.0
    %4494 = vmatprep.subr.mxu0 0.0
    %4495 = vmatpush1.msra.mxu0 0.0
    %4496 = vmatprep.subr.mxu0 0.0
    %4497 = vmatpush1.msra.mxu0 0.0
    %4498 = vmatprep.subr.mxu0 0.0
    %4499 = vmatpush1.msra.mxu0 0.0
    %4500 = vmatprep.subr.mxu0 0.0
    %4501 = vmatpush1.msra.mxu0 0.0
    %4502 = vmatprep.subr.mxu0 0.0
    %4503 = vmatpush1.msra.mxu0 0.0
    %4504 = vmatprep.subr.mxu0 0.0
    %4505 = vmatpush1.msra.mxu0 0.0
    %4506 = vmatprep.subr.mxu0 0.0
    %4507 = vmatpush1.msra.mxu0 0.0
    %4508 = vmatprep.mubr.f32.mxu0 0.0
    %v4509 = vand.u32 %v1076, 4294901760
    %4510 = vmatmul.mubr.f32.gmra.mrb[0].mxu0 %v4509
    %v4511 = vpop.f32.mrb[0].mxu0
    %v4512 = vadd.f32 %v4411, %v4511
    %v4513 = vpop.f32.mrb[0].mxu0
    %v4514 = vadd.f32 %v4413, %v4513
    %4515 = vmatprep.mubr.f32.mxu0 0.0
    %v4516 = vand.u32 %v1079, 4294901760
    %4517 = vmatmul.mubr.f32.gmra.mrb[0].mxu0 %v4516
    %v4518 = vpop.f32.mrb[0].mxu0
    %v4519 = vadd.f32 %v4418, %v4518
    %v4520 = vpop.f32.mrb[0].mxu0
    %v4521 = vadd.f32 %v4420, %v4520
    %4522 = vmatprep.mubr.f32.mxu0 0.0
    %v4523 = vand.u32 %v1082, 4294901760
    %4524 = vmatmul.mubr.f32.gmra.mrb[0].mxu0 %v4523
    %v4525 = vpop.f32.mrb[0].mxu0
    %v4526 = vadd.f32 %v4425, %v4525
    %v4527 = vpop.f32.mrb[0].mxu0
    %v4528 = vadd.f32 %v4427, %v4527
    %4529 = vmatprep.mubr.f32.mxu0 0.0
    %v4530 = vand.u32 %v1085, 4294901760
    %4531 = vmatmul.mubr.f32.gmra.mrb[0].mxu0 %v4530
    %v4532 = vpop.f32.mrb[0].mxu0
    %v4533 = vadd.f32 %v4432, %v4532
    %v4534 = vpop.f32.mrb[0].mxu0
    %v4535 = vadd.f32 %v4434, %v4534
    %4536 = vdwg.mxu0
    %v4537 = vand.u32 %v993, 4294901760
    %4538 = vmatprep.subr.mxu0 %v4537
    %v4539 = vand.u32 %v992, 4294901760
    %4540 = vmatpush1.msra.mxu0 %v4539
    %v4541 = vand.u32 %v1009, 4294901760
    %4542 = vmatprep.subr.mxu0 %v4541
    %v4543 = vand.u32 %v1008, 4294901760
    %4544 = vmatpush1.msra.mxu0 %v4543
    %v4545 = vand.u32 %v1025, 4294901760
    %4546 = vmatprep.subr.mxu0 %v4545
    %v4547 = vand.u32 %v1024, 4294901760
    %4548 = vmatpush1.msra.mxu0 %v4547
    %v4549 = vand.u32 %v1041, 4294901760
    %4550 = vmatprep.subr.mxu0 %v4549
    %v4551 = vand.u32 %v1040, 4294901760
    %4552 = vmatpush1.msra.mxu0 %v4551
    %4553 = vmatprep.subr.mxu0 0.0
    %4554 = vmatpush1.msra.mxu0 0.0
    %4555 = vmatprep.subr.mxu0 0.0
    %4556 = vmatpush1.msra.mxu0 0.0
    %4557 = vmatprep.subr.mxu0 0.0
    %4558 = vmatpush1.msra.mxu0 0.0
    %4559 = vmatprep.subr.mxu0 0.0
    %4560 = vmatpush1.msra.mxu0 0.0
    %4561 = vmatprep.subr.mxu0 0.0
    %4562 = vmatpush1.msra.mxu0 0.0
    %4563 = vmatprep.subr.mxu0 0.0
    %4564 = vmatpush1.msra.mxu0 0.0
    %4565 = vmatprep.subr.mxu0 0.0
    %4566 = vmatpush1.msra.mxu0 0.0
    %4567 = vmatprep.subr.mxu0 0.0
    %4568 = vmatpush1.msra.mxu0 0.0
    %4569 = vmatprep.subr.mxu0 0.0
    %4570 = vmatpush1.msra.mxu0 0.0
    %4571 = vmatprep.subr.mxu0 0.0
    %4572 = vmatpush1.msra.mxu0 0.0
    %4573 = vmatprep.subr.mxu0 0.0
    %4574 = vmatpush1.msra.mxu0 0.0
    %4575 = vmatprep.subr.mxu0 0.0
    %4576 = vmatpush1.msra.mxu0 0.0
    %4577 = vmatprep.subr.mxu0 0.0
    %4578 = vmatpush1.msra.mxu0 0.0
    %4579 = vmatprep.subr.mxu0 0.0
    %4580 = vmatpush1.msra.mxu0 0.0
    %4581 = vmatprep.subr.mxu0 0.0
    %4582 = vmatpush1.msra.mxu0 0.0
    %4583 = vmatprep.subr.mxu0 0.0
    %4584 = vmatpush1.msra.mxu0 0.0
    %4585 = vmatprep.subr.mxu0 0.0
    %4586 = vmatpush1.msra.mxu0 0.0
    %4587 = vmatprep.subr.mxu0 0.0
    %4588 = vmatpush1.msra.mxu0 0.0
    %4589 = vmatprep.subr.mxu0 0.0
    %4590 = vmatpush1.msra.mxu0 0.0
    %4591 = vmatprep.subr.mxu0 0.0
    %4592 = vmatpush1.msra.mxu0 0.0
    %4593 = vmatprep.subr.mxu0 0.0
    %4594 = vmatpush1.msra.mxu0 0.0
    %4595 = vmatprep.subr.mxu0 0.0
    %4596 = vmatpush1.msra.mxu0 0.0
    %4597 = vmatprep.subr.mxu0 0.0
    %4598 = vmatpush1.msra.mxu0 0.0
    %4599 = vmatprep.subr.mxu0 0.0
    %4600 = vmatpush1.msra.mxu0 0.0
    %4601 = vmatprep.subr.mxu0 0.0
    %4602 = vmatpush1.msra.mxu0 0.0
    %4603 = vmatprep.subr.mxu0 0.0
    %4604 = vmatpush1.msra.mxu0 0.0
    %4605 = vmatprep.subr.mxu0 0.0
    %4606 = vmatpush1.msra.mxu0 0.0
    %4607 = vmatprep.subr.mxu0 0.0
    %4608 = vmatpush1.msra.mxu0 0.0
    %4609 = vmatprep.mubr.f32.mxu0 0.0
    %v4610 = vand.u32 %v1076, 4294901760
    %v4611 = vsub.f32 %v1076, %v4610
    %v4612 = vand.u32 %v4611, 4294901760
    %v4613 = vsub.f32 %v4611, %v4612
    %v4614 = vand.u32 %v4613, 4294901760
    %4615 = vmatmul.mubr.f32.gmra.mrb[0].mxu0 %v4614
    %v4616 = vpop.f32.mrb[0].mxu0
    %v4617 = vadd.f32 %v1057, %v4616
    %v4618 = vpop.f32.mrb[0].mxu0
    %v4619 = vadd.f32 %v1057, %v4618
    %4620 = vmatprep.mubr.f32.mxu0 0.0
    %v4621 = vand.u32 %v1079, 4294901760
    %v4622 = vsub.f32 %v1079, %v4621
    %v4623 = vand.u32 %v4622, 4294901760
    %v4624 = vsub.f32 %v4622, %v4623
    %v4625 = vand.u32 %v4624, 4294901760
    %4626 = vmatmul.mubr.f32.gmra.mrb[0].mxu0 %v4625
    %v4627 = vpop.f32.mrb[0].mxu0
    %v4628 = vadd.f32 %v1062, %v4627
    %v4629 = vpop.f32.mrb[0].mxu0
    %v4630 = vadd.f32 %v1062, %v4629
    %4631 = vmatprep.mubr.f32.mxu0 0.0
    %v4632 = vand.u32 %v1082, 4294901760
    %v4633 = vsub.f32 %v1082, %v4632
    %v4634 = vand.u32 %v4633, 4294901760
    %v4635 = vsub.f32 %v4633, %v4634
    %v4636 = vand.u32 %v4635, 4294901760
    %4637 = vmatmul.mubr.f32.gmra.mrb[0].mxu0 %v4636
    %v4638 = vpop.f32.mrb[0].mxu0
    %v4639 = vadd.f32 %v1067, %v4638
    %v4640 = vpop.f32.mrb[0].mxu0
    %v4641 = vadd.f32 %v1067, %v4640
    %4642 = vmatprep.mubr.f32.mxu0 0.0
    %v4643 = vand.u32 %v1085, 4294901760
    %v4644 = vsub.f32 %v1085, %v4643
    %v4645 = vand.u32 %v4644, 4294901760
    %v4646 = vsub.f32 %v4644, %v4645
    %v4647 = vand.u32 %v4646, 4294901760
    %4648 = vmatmul.mubr.f32.gmra.mrb[0].mxu0 %v4647
    %v4649 = vpop.f32.mrb[0].mxu0
    %v4650 = vadd.f32 %v1072, %v4649
    %v4651 = vpop.f32.mrb[0].mxu0
    %v4652 = vadd.f32 %v1072, %v4651
    %4653 = vdwg.mxu0
    %v4654 = vand.u32 %v993, 4294901760
    %v4655 = vsub.f32 %v993, %v4654
    %v4656 = vand.u32 %v4655, 4294901760
    %v4657 = vsub.f32 %v4655, %v4656
    %v4658 = vand.u32 %v4657, 4294901760
    %4659 = vmatprep.subr.mxu0 %v4658
    %v4660 = vand.u32 %v992, 4294901760
    %v4661 = vsub.f32 %v992, %v4660
    %v4662 = vand.u32 %v4661, 4294901760
    %v4663 = vsub.f32 %v4661, %v4662
    %v4664 = vand.u32 %v4663, 4294901760
    %4665 = vmatpush1.msra.mxu0 %v4664
    %v4666 = vand.u32 %v1009, 4294901760
    %v4667 = vsub.f32 %v1009, %v4666
    %v4668 = vand.u32 %v4667, 4294901760
    %v4669 = vsub.f32 %v4667, %v4668
    %v4670 = vand.u32 %v4669, 4294901760
    %4671 = vmatprep.subr.mxu0 %v4670
    %v4672 = vand.u32 %v1008, 4294901760
    %v4673 = vsub.f32 %v1008, %v4672
    %v4674 = vand.u32 %v4673, 4294901760
    %v4675 = vsub.f32 %v4673, %v4674
    %v4676 = vand.u32 %v4675, 4294901760
    %4677 = vmatpush1.msra.mxu0 %v4676
    %v4678 = vand.u32 %v1025, 4294901760
    %v4679 = vsub.f32 %v1025, %v4678
    %v4680 = vand.u32 %v4679, 4294901760
    %v4681 = vsub.f32 %v4679, %v4680
    %v4682 = vand.u32 %v4681, 4294901760
    %4683 = vmatprep.subr.mxu0 %v4682
    %v4684 = vand.u32 %v1024, 4294901760
    %v4685 = vsub.f32 %v1024, %v4684
    %v4686 = vand.u32 %v4685, 4294901760
    %v4687 = vsub.f32 %v4685, %v4686
    %v4688 = vand.u32 %v4687, 4294901760
    %4689 = vmatpush1.msra.mxu0 %v4688
    %v4690 = vand.u32 %v1041, 4294901760
    %v4691 = vsub.f32 %v1041, %v4690
    %v4692 = vand.u32 %v4691, 4294901760
    %v4693 = vsub.f32 %v4691, %v4692
    %v4694 = vand.u32 %v4693, 4294901760
    %4695 = vmatprep.subr.mxu0 %v4694
    %v4696 = vand.u32 %v1040, 4294901760
    %v4697 = vsub.f32 %v1040, %v4696
    %v4698 = vand.u32 %v4697, 4294901760
    %v4699 = vsub.f32 %v4697, %v4698
    %v4700 = vand.u32 %v4699, 4294901760
    %4701 = vmatpush1.msra.mxu0 %v4700
    %4702 = vmatprep.subr.mxu0 0.0
    %4703 = vmatpush1.msra.mxu0 0.0
    %4704 = vmatprep.subr.mxu0 0.0
    %4705 = vmatpush1.msra.mxu0 0.0
    %4706 = vmatprep.subr.mxu0 0.0
    %4707 = vmatpush1.msra.mxu0 0.0
    %4708 = vmatprep.subr.mxu0 0.0
    %4709 = vmatpush1.msra.mxu0 0.0
    %4710 = vmatprep.subr.mxu0 0.0
    %4711 = vmatpush1.msra.mxu0 0.0
    %4712 = vmatprep.subr.mxu0 0.0
    %4713 = vmatpush1.msra.mxu0 0.0
    %4714 = vmatprep.subr.mxu0 0.0
    %4715 = vmatpush1.msra.mxu0 0.0
    %4716 = vmatprep.subr.mxu0 0.0
    %4717 = vmatpush1.msra.mxu0 0.0
    %4718 = vmatprep.subr.mxu0 0.0
    %4719 = vmatpush1.msra.mxu0 0.0
    %4720 = vmatprep.subr.mxu0 0.0
    %4721 = vmatpush1.msra.mxu0 0.0
    %4722 = vmatprep.subr.mxu0 0.0
    %4723 = vmatpush1.msra.mxu0 0.0
    %4724 = vmatprep.subr.mxu0 0.0
    %4725 = vmatpush1.msra.mxu0 0.0
    %4726 = vmatprep.subr.mxu0 0.0
    %4727 = vmatpush1.msra.mxu0 0.0
    %4728 = vmatprep.subr.mxu0 0.0
    %4729 = vmatpush1.msra.mxu0 0.0
    %4730 = vmatprep.subr.mxu0 0.0
    %4731 = vmatpush1.msra.mxu0 0.0
    %4732 = vmatprep.subr.mxu0 0.0
    %4733 = vmatpush1.msra.mxu0 0.0
    %4734 = vmatprep.subr.mxu0 0.0
    %4735 = vmatpush1.msra.mxu0 0.0
    %4736 = vmatprep.subr.mxu0 0.0
    %4737 = vmatpush1.msra.mxu0 0.0
    %4738 = vmatprep.subr.mxu0 0.0
    %4739 = vmatpush1.msra.mxu0 0.0
    %4740 = vmatprep.subr.mxu0 0.0
    %4741 = vmatpush1.msra.mxu0 0.0
    %4742 = vmatprep.subr.mxu0 0.0
    %4743 = vmatpush1.msra.mxu0 0.0
    %4744 = vmatprep.subr.mxu0 0.0
    %4745 = vmatpush1.msra.mxu0 0.0
    %4746 = vmatprep.subr.mxu0 0.0
    %4747 = vmatpush1.msra.mxu0 0.0
    %4748 = vmatprep.subr.mxu0 0.0
    %4749 = vmatpush1.msra.mxu0 0.0
    %4750 = vmatprep.subr.mxu0 0.0
    %4751 = vmatpush1.msra.mxu0 0.0
    %4752 = vmatprep.subr.mxu0 0.0
    %4753 = vmatpush1.msra.mxu0 0.0
    %4754 = vmatprep.subr.mxu0 0.0
    %4755 = vmatpush1.msra.mxu0 0.0
    %4756 = vmatprep.subr.mxu0 0.0
    %4757 = vmatpush1.msra.mxu0 0.0
    %4758 = vmatprep.mubr.f32.mxu0 0.0
    %v4759 = vand.u32 %v1076, 4294901760
    %4760 = vmatmul.mubr.f32.gmra.mrb[0].mxu0 %v4759
    %v4761 = vpop.f32.mrb[0].mxu0
    %v4762 = vadd.f32 %v4617, %v4761
    %v4763 = vpop.f32.mrb[0].mxu0
    %v4764 = vadd.f32 %v4619, %v4763
    %4765 = vmatprep.mubr.f32.mxu0 0.0
    %v4766 = vand.u32 %v1079, 4294901760
    %4767 = vmatmul.mubr.f32.gmra.mrb[0].mxu0 %v4766
    %v4768 = vpop.f32.mrb[0].mxu0
    %v4769 = vadd.f32 %v4628, %v4768
    %v4770 = vpop.f32.mrb[0].mxu0
    %v4771 = vadd.f32 %v4630, %v4770
    %4772 = vmatprep.mubr.f32.mxu0 0.0
    %v4773 = vand.u32 %v1082, 4294901760
    %4774 = vmatmul.mubr.f32.gmra.mrb[0].mxu0 %v4773
    %v4775 = vpop.f32.mrb[0].mxu0
    %v4776 = vadd.f32 %v4639, %v4775
    %v4777 = vpop.f32.mrb[0].mxu0
    %v4778 = vadd.f32 %v4641, %v4777
    %4779 = vmatprep.mubr.f32.mxu0 0.0
    %v4780 = vand.u32 %v1085, 4294901760
    %4781 = vmatmul.mubr.f32.gmra.mrb[0].mxu0 %v4780
    %v4782 = vpop.f32.mrb[0].mxu0
    %v4783 = vadd.f32 %v4650, %v4782
    %v4784 = vpop.f32.mrb[0].mxu0
    %v4785 = vadd.f32 %v4652, %v4784
    %4786 = vdwg.mxu0
    %v4787 = vand.u32 %v993, 4294901760
    %v4788 = vsub.f32 %v993, %v4787
    %4789 = vmatprep.subr.mxu0 %v4788
    %v4790 = vand.u32 %v992, 4294901760
    %v4791 = vsub.f32 %v992, %v4790
    %4792 = vmatpush1.msra.mxu0 %v4791
    %v4793 = vand.u32 %v1009, 4294901760
    %v4794 = vsub.f32 %v1009, %v4793
    %4795 = vmatprep.subr.mxu0 %v4794
    %v4796 = vand.u32 %v1008, 4294901760
    %v4797 = vsub.f32 %v1008, %v4796
    %4798 = vmatpush1.msra.mxu0 %v4797
    %v4799 = vand.u32 %v1025, 4294901760
    %v4800 = vsub.f32 %v1025, %v4799
    %4801 = vmatprep.subr.mxu0 %v4800
    %v4802 = vand.u32 %v1024, 4294901760
    %v4803 = vsub.f32 %v1024, %v4802
    %4804 = vmatpush1.msra.mxu0 %v4803
    %v4805 = vand.u32 %v1041, 4294901760
    %v4806 = vsub.f32 %v1041, %v4805
    %4807 = vmatprep.subr.mxu0 %v4806
    %v4808 = vand.u32 %v1040, 4294901760
    %v4809 = vsub.f32 %v1040, %v4808
    %4810 = vmatpush1.msra.mxu0 %v4809
    %4811 = vmatprep.subr.mxu0 0.0
    %4812 = vmatpush1.msra.mxu0 0.0
    %4813 = vmatprep.subr.mxu0 0.0
    %4814 = vmatpush1.msra.mxu0 0.0
    %4815 = vmatprep.subr.mxu0 0.0
    %4816 = vmatpush1.msra.mxu0 0.0
    %4817 = vmatprep.subr.mxu0 0.0
    %4818 = vmatpush1.msra.mxu0 0.0
    %4819 = vmatprep.subr.mxu0 0.0
    %4820 = vmatpush1.msra.mxu0 0.0
    %4821 = vmatprep.subr.mxu0 0.0
    %4822 = vmatpush1.msra.mxu0 0.0
    %4823 = vmatprep.subr.mxu0 0.0
    %4824 = vmatpush1.msra.mxu0 0.0
    %4825 = vmatprep.subr.mxu0 0.0
    %4826 = vmatpush1.msra.mxu0 0.0
    %4827 = vmatprep.subr.mxu0 0.0
    %4828 = vmatpush1.msra.mxu0 0.0
    %4829 = vmatprep.subr.mxu0 0.0
    %4830 = vmatpush1.msra.mxu0 0.0
    %4831 = vmatprep.subr.mxu0 0.0
    %4832 = vmatpush1.msra.mxu0 0.0
    %4833 = vmatprep.subr.mxu0 0.0
    %4834 = vmatpush1.msra.mxu0 0.0
    %4835 = vmatprep.subr.mxu0 0.0
    %4836 = vmatpush1.msra.mxu0 0.0
    %4837 = vmatprep.subr.mxu0 0.0
    %4838 = vmatpush1.msra.mxu0 0.0
    %4839 = vmatprep.subr.mxu0 0.0
    %4840 = vmatpush1.msra.mxu0 0.0
    %4841 = vmatprep.subr.mxu0 0.0
    %4842 = vmatpush1.msra.mxu0 0.0
    %4843 = vmatprep.subr.mxu0 0.0
    %4844 = vmatpush1.msra.mxu0 0.0
    %4845 = vmatprep.subr.mxu0 0.0
    %4846 = vmatpush1.msra.mxu0 0.0
    %4847 = vmatprep.subr.mxu0 0.0
    %4848 = vmatpush1.msra.mxu0 0.0
    %4849 = vmatprep.subr.mxu0 0.0
    %4850 = vmatpush1.msra.mxu0 0.0
    %4851 = vmatprep.subr.mxu0 0.0
    %4852 = vmatpush1.msra.mxu0 0.0
    %4853 = vmatprep.subr.mxu0 0.0
    %4854 = vmatpush1.msra.mxu0 0.0
    %4855 = vmatprep.subr.mxu0 0.0
    %4856 = vmatpush1.msra.mxu0 0.0
    %4857 = vmatprep.subr.mxu0 0.0
    %4858 = vmatpush1.msra.mxu0 0.0
    %4859 = vmatprep.subr.mxu0 0.0
    %4860 = vmatpush1.msra.mxu0 0.0
    %4861 = vmatprep.subr.mxu0 0.0
    %4862 = vmatpush1.msra.mxu0 0.0
    %4863 = vmatprep.subr.mxu0 0.0
    %4864 = vmatpush1.msra.mxu0 0.0
    %4865 = vmatprep.subr.mxu0 0.0
    %4866 = vmatpush1.msra.mxu0 0.0
    %4867 = vmatprep.mubr.f32.mxu0 0.0
    %v4868 = vand.u32 %v1076, 4294901760
    %v4869 = vsub.f32 %v1076, %v4868
    %4870 = vmatmul.mubr.f32.gmra.mrb[0].mxu0 %v4869
    %v4871 = vpop.f32.mrb[0].mxu0
    %v4872 = vadd.f32 %v4762, %v4871
    %v4873 = vpop.f32.mrb[0].mxu0
    %v4874 = vadd.f32 %v4764, %v4873
    %4875 = vmatprep.mubr.f32.mxu0 0.0
    %v4876 = vand.u32 %v1079, 4294901760
    %v4877 = vsub.f32 %v1079, %v4876
    %4878 = vmatmul.mubr.f32.gmra.mrb[0].mxu0 %v4877
    %v4879 = vpop.f32.mrb[0].mxu0
    %v4880 = vadd.f32 %v4769, %v4879
    %v4881 = vpop.f32.mrb[0].mxu0
    %v4882 = vadd.f32 %v4771, %v4881
    %4883 = vmatprep.mubr.f32.mxu0 0.0
    %v4884 = vand.u32 %v1082, 4294901760
    %v4885 = vsub.f32 %v1082, %v4884
    %4886 = vmatmul.mubr.f32.gmra.mrb[0].mxu0 %v4885
    %v4887 = vpop.f32.mrb[0].mxu0
    %v4888 = vadd.f32 %v4776, %v4887
    %v4889 = vpop.f32.mrb[0].mxu0
    %v4890 = vadd.f32 %v4778, %v4889
    %4891 = vmatprep.mubr.f32.mxu0 0.0
    %v4892 = vand.u32 %v1085, 4294901760
    %v4893 = vsub.f32 %v1085, %v4892
    %4894 = vmatmul.mubr.f32.gmra.mrb[0].mxu0 %v4893
    %v4895 = vpop.f32.mrb[0].mxu0
    %v4896 = vadd.f32 %v4783, %v4895
    %v4897 = vpop.f32.mrb[0].mxu0
    %v4898 = vadd.f32 %v4785, %v4897
    %4899 = vdwg.mxu0
    %v4900 = vand.u32 %v993, 4294901760
    %4901 = vmatprep.subr.mxu0 %v4900
    %v4902 = vand.u32 %v992, 4294901760
    %4903 = vmatpush1.msra.mxu0 %v4902
    %v4904 = vand.u32 %v1009, 4294901760
    %4905 = vmatprep.subr.mxu0 %v4904
    %v4906 = vand.u32 %v1008, 4294901760
    %4907 = vmatpush1.msra.mxu0 %v4906
    %v4908 = vand.u32 %v1025, 4294901760
    %4909 = vmatprep.subr.mxu0 %v4908
    %v4910 = vand.u32 %v1024, 4294901760
    %4911 = vmatpush1.msra.mxu0 %v4910
    %v4912 = vand.u32 %v1041, 4294901760
    %4913 = vmatprep.subr.mxu0 %v4912
    %v4914 = vand.u32 %v1040, 4294901760
    %4915 = vmatpush1.msra.mxu0 %v4914
    %4916 = vmatprep.subr.mxu0 0.0
    %4917 = vmatpush1.msra.mxu0 0.0
    %4918 = vmatprep.subr.mxu0 0.0
    %4919 = vmatpush1.msra.mxu0 0.0
    %4920 = vmatprep.subr.mxu0 0.0
    %4921 = vmatpush1.msra.mxu0 0.0
    %4922 = vmatprep.subr.mxu0 0.0
    %4923 = vmatpush1.msra.mxu0 0.0
    %4924 = vmatprep.subr.mxu0 0.0
    %4925 = vmatpush1.msra.mxu0 0.0
    %4926 = vmatprep.subr.mxu0 0.0
    %4927 = vmatpush1.msra.mxu0 0.0
    %4928 = vmatprep.subr.mxu0 0.0
    %4929 = vmatpush1.msra.mxu0 0.0
    %4930 = vmatprep.subr.mxu0 0.0
    %4931 = vmatpush1.msra.mxu0 0.0
    %4932 = vmatprep.subr.mxu0 0.0
    %4933 = vmatpush1.msra.mxu0 0.0
    %4934 = vmatprep.subr.mxu0 0.0
    %4935 = vmatpush1.msra.mxu0 0.0
    %4936 = vmatprep.subr.mxu0 0.0
    %4937 = vmatpush1.msra.mxu0 0.0
    %4938 = vmatprep.subr.mxu0 0.0
    %4939 = vmatpush1.msra.mxu0 0.0
    %4940 = vmatprep.subr.mxu0 0.0
    %4941 = vmatpush1.msra.mxu0 0.0
    %4942 = vmatprep.subr.mxu0 0.0
    %4943 = vmatpush1.msra.mxu0 0.0
    %4944 = vmatprep.subr.mxu0 0.0
    %4945 = vmatpush1.msra.mxu0 0.0
    %4946 = vmatprep.subr.mxu0 0.0
    %4947 = vmatpush1.msra.mxu0 0.0
    %4948 = vmatprep.subr.mxu0 0.0
    %4949 = vmatpush1.msra.mxu0 0.0
    %4950 = vmatprep.subr.mxu0 0.0
    %4951 = vmatpush1.msra.mxu0 0.0
    %4952 = vmatprep.subr.mxu0 0.0
    %4953 = vmatpush1.msra.mxu0 0.0
    %4954 = vmatprep.subr.mxu0 0.0
    %4955 = vmatpush1.msra.mxu0 0.0
    %4956 = vmatprep.subr.mxu0 0.0
    %4957 = vmatpush1.msra.mxu0 0.0
    %4958 = vmatprep.subr.mxu0 0.0
    %4959 = vmatpush1.msra.mxu0 0.0
    %4960 = vmatprep.subr.mxu0 0.0
    %4961 = vmatpush1.msra.mxu0 0.0
    %4962 = vmatprep.subr.mxu0 0.0
    %4963 = vmatpush1.msra.mxu0 0.0
    %4964 = vmatprep.subr.mxu0 0.0
    %4965 = vmatpush1.msra.mxu0 0.0
    %4966 = vmatprep.subr.mxu0 0.0
    %4967 = vmatpush1.msra.mxu0 0.0
    %4968 = vmatprep.subr.mxu0 0.0
    %4969 = vmatpush1.msra.mxu0 0.0
    %4970 = vmatprep.subr.mxu0 0.0
    %4971 = vmatpush1.msra.mxu0 0.0
    %4972 = vmatprep.mubr.f32.mxu0 0.0
    %v4973 = vand.u32 %v1076, 4294901760
    %v4974 = vsub.f32 %v1076, %v4973
    %v4975 = vand.u32 %v4974, 4294901760
    %4976 = vmatmul.mubr.f32.gmra.mrb[0].mxu0 %v4975
    %v4977 = vpop.f32.mrb[0].mxu0
    %v4978 = vadd.f32 %v4872, %v4977
    %v4979 = vpop.f32.mrb[0].mxu0
    %v4980 = vadd.f32 %v4874, %v4979
    %4981 = vmatprep.mubr.f32.mxu0 0.0
    %v4982 = vand.u32 %v1079, 4294901760
    %v4983 = vsub.f32 %v1079, %v4982
    %v4984 = vand.u32 %v4983, 4294901760
    %4985 = vmatmul.mubr.f32.gmra.mrb[0].mxu0 %v4984
    %v4986 = vpop.f32.mrb[0].mxu0
    %v4987 = vadd.f32 %v4880, %v4986
    %v4988 = vpop.f32.mrb[0].mxu0
    %v4989 = vadd.f32 %v4882, %v4988
    %4990 = vmatprep.mubr.f32.mxu0 0.0
    %v4991 = vand.u32 %v1082, 4294901760
    %v4992 = vsub.f32 %v1082, %v4991
    %v4993 = vand.u32 %v4992, 4294901760
    %4994 = vmatmul.mubr.f32.gmra.mrb[0].mxu0 %v4993
    %v4995 = vpop.f32.mrb[0].mxu0
    %v4996 = vadd.f32 %v4888, %v4995
    %v4997 = vpop.f32.mrb[0].mxu0
    %v4998 = vadd.f32 %v4890, %v4997
    %4999 = vmatprep.mubr.f32.mxu0 0.0
    %v5000 = vand.u32 %v1085, 4294901760
    %v5001 = vsub.f32 %v1085, %v5000
    %v5002 = vand.u32 %v5001, 4294901760
    %5003 = vmatmul.mubr.f32.gmra.mrb[0].mxu0 %v5002
    %v5004 = vpop.f32.mrb[0].mxu0
    %v5005 = vadd.f32 %v4896, %v5004
    %v5006 = vpop.f32.mrb[0].mxu0
    %v5007 = vadd.f32 %v4898, %v5006
    %5008 = vdwg.mxu0
    %v5009 = vand.u32 %v993, 4294901760
    %v5010 = vsub.f32 %v993, %v5009
    %v5011 = vand.u32 %v5010, 4294901760
    %5012 = vmatprep.subr.mxu0 %v5011
    %v5013 = vand.u32 %v992, 4294901760
    %v5014 = vsub.f32 %v992, %v5013
    %v5015 = vand.u32 %v5014, 4294901760
    %5016 = vmatpush1.msra.mxu0 %v5015
    %v5017 = vand.u32 %v1009, 4294901760
    %v5018 = vsub.f32 %v1009, %v5017
    %v5019 = vand.u32 %v5018, 4294901760
    %5020 = vmatprep.subr.mxu0 %v5019
    %v5021 = vand.u32 %v1008, 4294901760
    %v5022 = vsub.f32 %v1008, %v5021
    %v5023 = vand.u32 %v5022, 4294901760
    %5024 = vmatpush1.msra.mxu0 %v5023
    %v5025 = vand.u32 %v1025, 4294901760
    %v5026 = vsub.f32 %v1025, %v5025
    %v5027 = vand.u32 %v5026, 4294901760
    %5028 = vmatprep.subr.mxu0 %v5027
    %v5029 = vand.u32 %v1024, 4294901760
    %v5030 = vsub.f32 %v1024, %v5029
    %v5031 = vand.u32 %v5030, 4294901760
    %5032 = vmatpush1.msra.mxu0 %v5031
    %v5033 = vand.u32 %v1041, 4294901760
    %v5034 = vsub.f32 %v1041, %v5033
    %v5035 = vand.u32 %v5034, 4294901760
    %5036 = vmatprep.subr.mxu0 %v5035
    %v5037 = vand.u32 %v1040, 4294901760
    %v5038 = vsub.f32 %v1040, %v5037
    %v5039 = vand.u32 %v5038, 4294901760
    %5040 = vmatpush1.msra.mxu0 %v5039
    %5041 = vmatprep.subr.mxu0 0.0
    %5042 = vmatpush1.msra.mxu0 0.0
    %5043 = vmatprep.subr.mxu0 0.0
    %5044 = vmatpush1.msra.mxu0 0.0
    %5045 = vmatprep.subr.mxu0 0.0
    %5046 = vmatpush1.msra.mxu0 0.0
    %5047 = vmatprep.subr.mxu0 0.0
    %5048 = vmatpush1.msra.mxu0 0.0
    %5049 = vmatprep.subr.mxu0 0.0
    %5050 = vmatpush1.msra.mxu0 0.0
    %5051 = vmatprep.subr.mxu0 0.0
    %5052 = vmatpush1.msra.mxu0 0.0
    %5053 = vmatprep.subr.mxu0 0.0
    %5054 = vmatpush1.msra.mxu0 0.0
    %5055 = vmatprep.subr.mxu0 0.0
    %5056 = vmatpush1.msra.mxu0 0.0
    %5057 = vmatprep.subr.mxu0 0.0
    %5058 = vmatpush1.msra.mxu0 0.0
    %5059 = vmatprep.subr.mxu0 0.0
    %5060 = vmatpush1.msra.mxu0 0.0
    %5061 = vmatprep.subr.mxu0 0.0
    %5062 = vmatpush1.msra.mxu0 0.0
    %5063 = vmatprep.subr.mxu0 0.0
    %5064 = vmatpush1.msra.mxu0 0.0
    %5065 = vmatprep.subr.mxu0 0.0
    %5066 = vmatpush1.msra.mxu0 0.0
    %5067 = vmatprep.subr.mxu0 0.0
    %5068 = vmatpush1.msra.mxu0 0.0
    %5069 = vmatprep.subr.mxu0 0.0
    %5070 = vmatpush1.msra.mxu0 0.0
    %5071 = vmatprep.subr.mxu0 0.0
    %5072 = vmatpush1.msra.mxu0 0.0
    %5073 = vmatprep.subr.mxu0 0.0
    %5074 = vmatpush1.msra.mxu0 0.0
    %5075 = vmatprep.subr.mxu0 0.0
    %5076 = vmatpush1.msra.mxu0 0.0
    %5077 = vmatprep.subr.mxu0 0.0
    %5078 = vmatpush1.msra.mxu0 0.0
    %5079 = vmatprep.subr.mxu0 0.0
    %5080 = vmatpush1.msra.mxu0 0.0
    %5081 = vmatprep.subr.mxu0 0.0
    %5082 = vmatpush1.msra.mxu0 0.0
    %5083 = vmatprep.subr.mxu0 0.0
    %5084 = vmatpush1.msra.mxu0 0.0
    %5085 = vmatprep.subr.mxu0 0.0
    %5086 = vmatpush1.msra.mxu0 0.0
    %5087 = vmatprep.subr.mxu0 0.0
    %5088 = vmatpush1.msra.mxu0 0.0
    %5089 = vmatprep.subr.mxu0 0.0
    %5090 = vmatpush1.msra.mxu0 0.0
    %5091 = vmatprep.subr.mxu0 0.0
    %5092 = vmatpush1.msra.mxu0 0.0
    %5093 = vmatprep.subr.mxu0 0.0
    %5094 = vmatpush1.msra.mxu0 0.0
    %5095 = vmatprep.subr.mxu0 0.0
    %5096 = vmatpush1.msra.mxu0 0.0
    %5097 = vmatprep.mubr.f32.mxu0 0.0
    %v5098 = vand.u32 %v1076, 4294901760
    %5099 = vmatmul.mubr.f32.gmra.mrb[0].mxu0 %v5098
    %v5100 = vpop.f32.mrb[0].mxu0
    %v5101 = vadd.f32 %v4978, %v5100
    %v5102 = vpop.f32.mrb[0].mxu0
    %v5103 = vadd.f32 %v4980, %v5102
    %5104 = vmatprep.mubr.f32.mxu0 0.0
    %v5105 = vand.u32 %v1079, 4294901760
    %5106 = vmatmul.mubr.f32.gmra.mrb[0].mxu0 %v5105
    %v5107 = vpop.f32.mrb[0].mxu0
    %v5108 = vadd.f32 %v4987, %v5107
    %v5109 = vpop.f32.mrb[0].mxu0
    %v5110 = vadd.f32 %v4989, %v5109
    %5111 = vmatprep.mubr.f32.mxu0 0.0
    %v5112 = vand.u32 %v1082, 4294901760
    %5113 = vmatmul.mubr.f32.gmra.mrb[0].mxu0 %v5112
    %v5114 = vpop.f32.mrb[0].mxu0
    %v5115 = vadd.f32 %v4996, %v5114
    %v5116 = vpop.f32.mrb[0].mxu0
    %v5117 = vadd.f32 %v4998, %v5116
    %5118 = vmatprep.mubr.f32.mxu0 0.0
    %v5119 = vand.u32 %v1085, 4294901760
    %5120 = vmatmul.mubr.f32.gmra.mrb[0].mxu0 %v5119
    %v5121 = vpop.f32.mrb[0].mxu0
    %v5122 = vadd.f32 %v5005, %v5121
    %v5123 = vpop.f32.mrb[0].mxu0
    %v5124 = vadd.f32 %v5007, %v5123
    %5125 = vdwg.mxu0
    %v5126 = vand.u32 %v993, 4294901760
    %5127 = vmatprep.subr.mxu0 %v5126
    %v5128 = vand.u32 %v992, 4294901760
    %5129 = vmatpush1.msra.mxu0 %v5128
    %v5130 = vand.u32 %v1009, 4294901760
    %5131 = vmatprep.subr.mxu0 %v5130
    %v5132 = vand.u32 %v1008, 4294901760
    %5133 = vmatpush1.msra.mxu0 %v5132
    %v5134 = vand.u32 %v1025, 4294901760
    %5135 = vmatprep.subr.mxu0 %v5134
    %v5136 = vand.u32 %v1024, 4294901760
    %5137 = vmatpush1.msra.mxu0 %v5136
    %v5138 = vand.u32 %v1041, 4294901760
    %5139 = vmatprep.subr.mxu0 %v5138
    %v5140 = vand.u32 %v1040, 4294901760
    %5141 = vmatpush1.msra.mxu0 %v5140
    %5142 = vmatprep.subr.mxu0 0.0
    %5143 = vmatpush1.msra.mxu0 0.0
    %5144 = vmatprep.subr.mxu0 0.0
    %5145 = vmatpush1.msra.mxu0 0.0
    %5146 = vmatprep.subr.mxu0 0.0
    %5147 = vmatpush1.msra.mxu0 0.0
    %5148 = vmatprep.subr.mxu0 0.0
    %5149 = vmatpush1.msra.mxu0 0.0
    %5150 = vmatprep.subr.mxu0 0.0
    %5151 = vmatpush1.msra.mxu0 0.0
    %5152 = vmatprep.subr.mxu0 0.0
    %5153 = vmatpush1.msra.mxu0 0.0
    %5154 = vmatprep.subr.mxu0 0.0
    %5155 = vmatpush1.msra.mxu0 0.0
    %5156 = vmatprep.subr.mxu0 0.0
    %5157 = vmatpush1.msra.mxu0 0.0
    %5158 = vmatprep.subr.mxu0 0.0
    %5159 = vmatpush1.msra.mxu0 0.0
    %5160 = vmatprep.subr.mxu0 0.0
    %5161 = vmatpush1.msra.mxu0 0.0
    %5162 = vmatprep.subr.mxu0 0.0
    %5163 = vmatpush1.msra.mxu0 0.0
    %5164 = vmatprep.subr.mxu0 0.0
    %5165 = vmatpush1.msra.mxu0 0.0
    %5166 = vmatprep.subr.mxu0 0.0
    %5167 = vmatpush1.msra.mxu0 0.0
    %5168 = vmatprep.subr.mxu0 0.0
    %5169 = vmatpush1.msra.mxu0 0.0
    %5170 = vmatprep.subr.mxu0 0.0
    %5171 = vmatpush1.msra.mxu0 0.0
    %5172 = vmatprep.subr.mxu0 0.0
    %5173 = vmatpush1.msra.mxu0 0.0
    %5174 = vmatprep.subr.mxu0 0.0
    %5175 = vmatpush1.msra.mxu0 0.0
    %5176 = vmatprep.subr.mxu0 0.0
    %5177 = vmatpush1.msra.mxu0 0.0
    %5178 = vmatprep.subr.mxu0 0.0
    %5179 = vmatpush1.msra.mxu0 0.0
    %5180 = vmatprep.subr.mxu0 0.0
    %5181 = vmatpush1.msra.mxu0 0.0
    %5182 = vmatprep.subr.mxu0 0.0
    %5183 = vmatpush1.msra.mxu0 0.0
    %5184 = vmatprep.subr.mxu0 0.0
    %5185 = vmatpush1.msra.mxu0 0.0
    %5186 = vmatprep.subr.mxu0 0.0
    %5187 = vmatpush1.msra.mxu0 0.0
    %5188 = vmatprep.subr.mxu0 0.0
    %5189 = vmatpush1.msra.mxu0 0.0
    %5190 = vmatprep.subr.mxu0 0.0
    %5191 = vmatpush1.msra.mxu0 0.0
    %5192 = vmatprep.subr.mxu0 0.0
    %5193 = vmatpush1.msra.mxu0 0.0
    %5194 = vmatprep.subr.mxu0 0.0
    %5195 = vmatpush1.msra.mxu0 0.0
    %5196 = vmatprep.subr.mxu0 0.0
    %5197 = vmatpush1.msra.mxu0 0.0
    %5198 = vmatprep.mubr.f32.mxu0 0.0
    %v5199 = vand.u32 %v1076, 4294901760
    %5200 = vmatmul.mubr.f32.gmra.mrb[0].mxu0 %v5199
    %v5201 = vpop.f32.mrb[0].mxu0
    %v5202 = vadd.f32 %v5101, %v5201
    %v5203 = vpop.f32.mrb[0].mxu0
    %v5204 = vadd.f32 %v5103, %v5203
    %5205 = vmatprep.mubr.f32.mxu0 0.0
    %v5206 = vand.u32 %v1079, 4294901760
    %5207 = vmatmul.mubr.f32.gmra.mrb[0].mxu0 %v5206
    %v5208 = vpop.f32.mrb[0].mxu0
    %v5209 = vadd.f32 %v5108, %v5208
    %v5210 = vpop.f32.mrb[0].mxu0
    %v5211 = vadd.f32 %v5110, %v5210
    %5212 = vmatprep.mubr.f32.mxu0 0.0
    %v5213 = vand.u32 %v1082, 4294901760
    %5214 = vmatmul.mubr.f32.gmra.mrb[0].mxu0 %v5213
    %v5215 = vpop.f32.mrb[0].mxu0
    %v5216 = vadd.f32 %v5115, %v5215
    %v5217 = vpop.f32.mrb[0].mxu0
    %v5218 = vadd.f32 %v5117, %v5217
    %5219 = vmatprep.mubr.f32.mxu0 0.0
    %v5220 = vand.u32 %v1085, 4294901760
    %5221 = vmatmul.mubr.f32.gmra.mrb[0].mxu0 %v5220
    %v5222 = vpop.f32.mrb[0].mxu0
    %v5223 = vadd.f32 %v5122, %v5222
    %v5224 = vpop.f32.mrb[0].mxu0
    %v5225 = vadd.f32 %v5124, %v5224
    %5226 = vdwg.mxu0
    %v5227 = vand.u32 %v995, 4294901760
    %5228 = vmatprep.subr.mxu0 %v5227
    %v5229 = vand.u32 %v994, 4294901760
    %5230 = vmatpush1.msra.mxu0 %v5229
    %v5231 = vand.u32 %v1011, 4294901760
    %5232 = vmatprep.subr.mxu0 %v5231
    %v5233 = vand.u32 %v1010, 4294901760
    %5234 = vmatpush1.msra.mxu0 %v5233
    %v5235 = vand.u32 %v1027, 4294901760
    %5236 = vmatprep.subr.mxu0 %v5235
    %v5237 = vand.u32 %v1026, 4294901760
    %5238 = vmatpush1.msra.mxu0 %v5237
    %v5239 = vand.u32 %v1043, 4294901760
    %5240 = vmatprep.subr.mxu0 %v5239
    %v5241 = vand.u32 %v1042, 4294901760
    %5242 = vmatpush1.msra.mxu0 %v5241
    %5243 = vmatprep.subr.mxu0 0.0
    %5244 = vmatpush1.msra.mxu0 0.0
    %5245 = vmatprep.subr.mxu0 0.0
    %5246 = vmatpush1.msra.mxu0 0.0
    %5247 = vmatprep.subr.mxu0 0.0
    %5248 = vmatpush1.msra.mxu0 0.0
    %5249 = vmatprep.subr.mxu0 0.0
    %5250 = vmatpush1.msra.mxu0 0.0
    %5251 = vmatprep.subr.mxu0 0.0
    %5252 = vmatpush1.msra.mxu0 0.0
    %5253 = vmatprep.subr.mxu0 0.0
    %5254 = vmatpush1.msra.mxu0 0.0
    %5255 = vmatprep.subr.mxu0 0.0
    %5256 = vmatpush1.msra.mxu0 0.0
    %5257 = vmatprep.subr.mxu0 0.0
    %5258 = vmatpush1.msra.mxu0 0.0
    %5259 = vmatprep.subr.mxu0 0.0
    %5260 = vmatpush1.msra.mxu0 0.0
    %5261 = vmatprep.subr.mxu0 0.0
    %5262 = vmatpush1.msra.mxu0 0.0
    %5263 = vmatprep.subr.mxu0 0.0
    %5264 = vmatpush1.msra.mxu0 0.0
    %5265 = vmatprep.subr.mxu0 0.0
    %5266 = vmatpush1.msra.mxu0 0.0
    %5267 = vmatprep.subr.mxu0 0.0
    %5268 = vmatpush1.msra.mxu0 0.0
    %5269 = vmatprep.subr.mxu0 0.0
    %5270 = vmatpush1.msra.mxu0 0.0
    %5271 = vmatprep.subr.mxu0 0.0
    %5272 = vmatpush1.msra.mxu0 0.0
    %5273 = vmatprep.subr.mxu0 0.0
    %5274 = vmatpush1.msra.mxu0 0.0
    %5275 = vmatprep.subr.mxu0 0.0
    %5276 = vmatpush1.msra.mxu0 0.0
    %5277 = vmatprep.subr.mxu0 0.0
    %5278 = vmatpush1.msra.mxu0 0.0
    %5279 = vmatprep.subr.mxu0 0.0
    %5280 = vmatpush1.msra.mxu0 0.0
    %5281 = vmatprep.subr.mxu0 0.0
    %5282 = vmatpush1.msra.mxu0 0.0
    %5283 = vmatprep.subr.mxu0 0.0
    %5284 = vmatpush1.msra.mxu0 0.0
    %5285 = vmatprep.subr.mxu0 0.0
    %5286 = vmatpush1.msra.mxu0 0.0
    %5287 = vmatprep.subr.mxu0 0.0
    %5288 = vmatpush1.msra.mxu0 0.0
    %5289 = vmatprep.subr.mxu0 0.0
    %5290 = vmatpush1.msra.mxu0 0.0
    %5291 = vmatprep.subr.mxu0 0.0
    %5292 = vmatpush1.msra.mxu0 0.0
    %5293 = vmatprep.subr.mxu0 0.0
    %5294 = vmatpush1.msra.mxu0 0.0
    %5295 = vmatprep.subr.mxu0 0.0
    %5296 = vmatpush1.msra.mxu0 0.0
    %5297 = vmatprep.subr.mxu0 0.0
    %5298 = vmatpush1.msra.mxu0 0.0
    %5299 = vmatprep.mubr.f32.mxu0 0.0
    %v5300 = vand.u32 %v1076, 4294901760
    %v5301 = vsub.f32 %v1076, %v5300
    %v5302 = vand.u32 %v5301, 4294901760
    %v5303 = vsub.f32 %v5301, %v5302
    %v5304 = vand.u32 %v5303, 4294901760
    %5305 = vmatmul.mubr.f32.gmra.mrb[0].mxu0 %v5304
    %v5306 = vpop.f32.mrb[0].mxu0
    %v5307 = vadd.f32 %v1057, %v5306
    %v5308 = vpop.f32.mrb[0].mxu0
    %v5309 = vadd.f32 %v1057, %v5308
    %5310 = vmatprep.mubr.f32.mxu0 0.0
    %v5311 = vand.u32 %v1079, 4294901760
    %v5312 = vsub.f32 %v1079, %v5311
    %v5313 = vand.u32 %v5312, 4294901760
    %v5314 = vsub.f32 %v5312, %v5313
    %v5315 = vand.u32 %v5314, 4294901760
    %5316 = vmatmul.mubr.f32.gmra.mrb[0].mxu0 %v5315
    %v5317 = vpop.f32.mrb[0].mxu0
    %v5318 = vadd.f32 %v1062, %v5317
    %v5319 = vpop.f32.mrb[0].mxu0
    %v5320 = vadd.f32 %v1062, %v5319
    %5321 = vmatprep.mubr.f32.mxu0 0.0
    %v5322 = vand.u32 %v1082, 4294901760
    %v5323 = vsub.f32 %v1082, %v5322
    %v5324 = vand.u32 %v5323, 4294901760
    %v5325 = vsub.f32 %v5323, %v5324
    %v5326 = vand.u32 %v5325, 4294901760
    %5327 = vmatmul.mubr.f32.gmra.mrb[0].mxu0 %v5326
    %v5328 = vpop.f32.mrb[0].mxu0
    %v5329 = vadd.f32 %v1067, %v5328
    %v5330 = vpop.f32.mrb[0].mxu0
    %v5331 = vadd.f32 %v1067, %v5330
    %5332 = vmatprep.mubr.f32.mxu0 0.0
    %v5333 = vand.u32 %v1085, 4294901760
    %v5334 = vsub.f32 %v1085, %v5333
    %v5335 = vand.u32 %v5334, 4294901760
    %v5336 = vsub.f32 %v5334, %v5335
    %v5337 = vand.u32 %v5336, 4294901760
    %5338 = vmatmul.mubr.f32.gmra.mrb[0].mxu0 %v5337
    %v5339 = vpop.f32.mrb[0].mxu0
    %v5340 = vadd.f32 %v1072, %v5339
    %v5341 = vpop.f32.mrb[0].mxu0
    %v5342 = vadd.f32 %v1072, %v5341
    %5343 = vdwg.mxu0
    %v5344 = vand.u32 %v995, 4294901760
    %v5345 = vsub.f32 %v995, %v5344
    %v5346 = vand.u32 %v5345, 4294901760
    %v5347 = vsub.f32 %v5345, %v5346
    %v5348 = vand.u32 %v5347, 4294901760
    %5349 = vmatprep.subr.mxu0 %v5348
    %v5350 = vand.u32 %v994, 4294901760
    %v5351 = vsub.f32 %v994, %v5350
    %v5352 = vand.u32 %v5351, 4294901760
    %v5353 = vsub.f32 %v5351, %v5352
    %v5354 = vand.u32 %v5353, 4294901760
    %5355 = vmatpush1.msra.mxu0 %v5354
    %v5356 = vand.u32 %v1011, 4294901760
    %v5357 = vsub.f32 %v1011, %v5356
    %v5358 = vand.u32 %v5357, 4294901760
    %v5359 = vsub.f32 %v5357, %v5358
    %v5360 = vand.u32 %v5359, 4294901760
    %5361 = vmatprep.subr.mxu0 %v5360
    %v5362 = vand.u32 %v1010, 4294901760
    %v5363 = vsub.f32 %v1010, %v5362
    %v5364 = vand.u32 %v5363, 4294901760
    %v5365 = vsub.f32 %v5363, %v5364
    %v5366 = vand.u32 %v5365, 4294901760
    %5367 = vmatpush1.msra.mxu0 %v5366
    %v5368 = vand.u32 %v1027, 4294901760
    %v5369 = vsub.f32 %v1027, %v5368
    %v5370 = vand.u32 %v5369, 4294901760
    %v5371 = vsub.f32 %v5369, %v5370
    %v5372 = vand.u32 %v5371, 4294901760
    %5373 = vmatprep.subr.mxu0 %v5372
    %v5374 = vand.u32 %v1026, 4294901760
    %v5375 = vsub.f32 %v1026, %v5374
    %v5376 = vand.u32 %v5375, 4294901760
    %v5377 = vsub.f32 %v5375, %v5376
    %v5378 = vand.u32 %v5377, 4294901760
    %5379 = vmatpush1.msra.mxu0 %v5378
    %v5380 = vand.u32 %v1043, 4294901760
    %v5381 = vsub.f32 %v1043, %v5380
    %v5382 = vand.u32 %v5381, 4294901760
    %v5383 = vsub.f32 %v5381, %v5382
    %v5384 = vand.u32 %v5383, 4294901760
    %5385 = vmatprep.subr.mxu0 %v5384
    %v5386 = vand.u32 %v1042, 4294901760
    %v5387 = vsub.f32 %v1042, %v5386
    %v5388 = vand.u32 %v5387, 4294901760
    %v5389 = vsub.f32 %v5387, %v5388
    %v5390 = vand.u32 %v5389, 4294901760
    %5391 = vmatpush1.msra.mxu0 %v5390
    %5392 = vmatprep.subr.mxu0 0.0
    %5393 = vmatpush1.msra.mxu0 0.0
    %5394 = vmatprep.subr.mxu0 0.0
    %5395 = vmatpush1.msra.mxu0 0.0
    %5396 = vmatprep.subr.mxu0 0.0
    %5397 = vmatpush1.msra.mxu0 0.0
    %5398 = vmatprep.subr.mxu0 0.0
    %5399 = vmatpush1.msra.mxu0 0.0
    %5400 = vmatprep.subr.mxu0 0.0
    %5401 = vmatpush1.msra.mxu0 0.0
    %5402 = vmatprep.subr.mxu0 0.0
    %5403 = vmatpush1.msra.mxu0 0.0
    %5404 = vmatprep.subr.mxu0 0.0
    %5405 = vmatpush1.msra.mxu0 0.0
    %5406 = vmatprep.subr.mxu0 0.0
    %5407 = vmatpush1.msra.mxu0 0.0
    %5408 = vmatprep.subr.mxu0 0.0
    %5409 = vmatpush1.msra.mxu0 0.0
    %5410 = vmatprep.subr.mxu0 0.0
    %5411 = vmatpush1.msra.mxu0 0.0
    %5412 = vmatprep.subr.mxu0 0.0
    %5413 = vmatpush1.msra.mxu0 0.0
    %5414 = vmatprep.subr.mxu0 0.0
    %5415 = vmatpush1.msra.mxu0 0.0
    %5416 = vmatprep.subr.mxu0 0.0
    %5417 = vmatpush1.msra.mxu0 0.0
    %5418 = vmatprep.subr.mxu0 0.0
    %5419 = vmatpush1.msra.mxu0 0.0
    %5420 = vmatprep.subr.mxu0 0.0
    %5421 = vmatpush1.msra.mxu0 0.0
    %5422 = vmatprep.subr.mxu0 0.0
    %5423 = vmatpush1.msra.mxu0 0.0
    %5424 = vmatprep.subr.mxu0 0.0
    %5425 = vmatpush1.msra.mxu0 0.0
    %5426 = vmatprep.subr.mxu0 0.0
    %5427 = vmatpush1.msra.mxu0 0.0
    %5428 = vmatprep.subr.mxu0 0.0
    %5429 = vmatpush1.msra.mxu0 0.0
    %5430 = vmatprep.subr.mxu0 0.0
    %5431 = vmatpush1.msra.mxu0 0.0
    %5432 = vmatprep.subr.mxu0 0.0
    %5433 = vmatpush1.msra.mxu0 0.0
    %5434 = vmatprep.subr.mxu0 0.0
    %5435 = vmatpush1.msra.mxu0 0.0
    %5436 = vmatprep.subr.mxu0 0.0
    %5437 = vmatpush1.msra.mxu0 0.0
    %5438 = vmatprep.subr.mxu0 0.0
    %5439 = vmatpush1.msra.mxu0 0.0
    %5440 = vmatprep.subr.mxu0 0.0
    %5441 = vmatpush1.msra.mxu0 0.0
    %5442 = vmatprep.subr.mxu0 0.0
    %5443 = vmatpush1.msra.mxu0 0.0
    %5444 = vmatprep.subr.mxu0 0.0
    %5445 = vmatpush1.msra.mxu0 0.0
    %5446 = vmatprep.subr.mxu0 0.0
    %5447 = vmatpush1.msra.mxu0 0.0
    %5448 = vmatprep.mubr.f32.mxu0 0.0
    %v5449 = vand.u32 %v1076, 4294901760
    %5450 = vmatmul.mubr.f32.gmra.mrb[0].mxu0 %v5449
    %v5451 = vpop.f32.mrb[0].mxu0
    %v5452 = vadd.f32 %v5307, %v5451
    %v5453 = vpop.f32.mrb[0].mxu0
    %v5454 = vadd.f32 %v5309, %v5453
    %5455 = vmatprep.mubr.f32.mxu0 0.0
    %v5456 = vand.u32 %v1079, 4294901760
    %5457 = vmatmul.mubr.f32.gmra.mrb[0].mxu0 %v5456
    %v5458 = vpop.f32.mrb[0].mxu0
    %v5459 = vadd.f32 %v5318, %v5458
    %v5460 = vpop.f32.mrb[0].mxu0
    %v5461 = vadd.f32 %v5320, %v5460
    %5462 = vmatprep.mubr.f32.mxu0 0.0
    %v5463 = vand.u32 %v1082, 4294901760
    %5464 = vmatmul.mubr.f32.gmra.mrb[0].mxu0 %v5463
    %v5465 = vpop.f32.mrb[0].mxu0
    %v5466 = vadd.f32 %v5329, %v5465
    %v5467 = vpop.f32.mrb[0].mxu0
    %v5468 = vadd.f32 %v5331, %v5467
    %5469 = vmatprep.mubr.f32.mxu0 0.0
    %v5470 = vand.u32 %v1085, 4294901760
    %5471 = vmatmul.mubr.f32.gmra.mrb[0].mxu0 %v5470
    %v5472 = vpop.f32.mrb[0].mxu0
    %v5473 = vadd.f32 %v5340, %v5472
    %v5474 = vpop.f32.mrb[0].mxu0
    %v5475 = vadd.f32 %v5342, %v5474
    %5476 = vdwg.mxu0
    %v5477 = vand.u32 %v995, 4294901760
    %v5478 = vsub.f32 %v995, %v5477
    %5479 = vmatprep.subr.mxu0 %v5478
    %v5480 = vand.u32 %v994, 4294901760
    %v5481 = vsub.f32 %v994, %v5480
    %5482 = vmatpush1.msra.mxu0 %v5481
    %v5483 = vand.u32 %v1011, 4294901760
    %v5484 = vsub.f32 %v1011, %v5483
    %5485 = vmatprep.subr.mxu0 %v5484
    %v5486 = vand.u32 %v1010, 4294901760
    %v5487 = vsub.f32 %v1010, %v5486
    %5488 = vmatpush1.msra.mxu0 %v5487
    %v5489 = vand.u32 %v1027, 4294901760
    %v5490 = vsub.f32 %v1027, %v5489
    %5491 = vmatprep.subr.mxu0 %v5490
    %v5492 = vand.u32 %v1026, 4294901760
    %v5493 = vsub.f32 %v1026, %v5492
    %5494 = vmatpush1.msra.mxu0 %v5493
    %v5495 = vand.u32 %v1043, 4294901760
    %v5496 = vsub.f32 %v1043, %v5495
    %5497 = vmatprep.subr.mxu0 %v5496
    %v5498 = vand.u32 %v1042, 4294901760
    %v5499 = vsub.f32 %v1042, %v5498
    %5500 = vmatpush1.msra.mxu0 %v5499
    %5501 = vmatprep.subr.mxu0 0.0
    %5502 = vmatpush1.msra.mxu0 0.0
    %5503 = vmatprep.subr.mxu0 0.0
    %5504 = vmatpush1.msra.mxu0 0.0
    %5505 = vmatprep.subr.mxu0 0.0
    %5506 = vmatpush1.msra.mxu0 0.0
    %5507 = vmatprep.subr.mxu0 0.0
    %5508 = vmatpush1.msra.mxu0 0.0
    %5509 = vmatprep.subr.mxu0 0.0
    %5510 = vmatpush1.msra.mxu0 0.0
    %5511 = vmatprep.subr.mxu0 0.0
    %5512 = vmatpush1.msra.mxu0 0.0
    %5513 = vmatprep.subr.mxu0 0.0
    %5514 = vmatpush1.msra.mxu0 0.0
    %5515 = vmatprep.subr.mxu0 0.0
    %5516 = vmatpush1.msra.mxu0 0.0
    %5517 = vmatprep.subr.mxu0 0.0
    %5518 = vmatpush1.msra.mxu0 0.0
    %5519 = vmatprep.subr.mxu0 0.0
    %5520 = vmatpush1.msra.mxu0 0.0
    %5521 = vmatprep.subr.mxu0 0.0
    %5522 = vmatpush1.msra.mxu0 0.0
    %5523 = vmatprep.subr.mxu0 0.0
    %5524 = vmatpush1.msra.mxu0 0.0
    %5525 = vmatprep.subr.mxu0 0.0
    %5526 = vmatpush1.msra.mxu0 0.0
    %5527 = vmatprep.subr.mxu0 0.0
    %5528 = vmatpush1.msra.mxu0 0.0
    %5529 = vmatprep.subr.mxu0 0.0
    %5530 = vmatpush1.msra.mxu0 0.0
    %5531 = vmatprep.subr.mxu0 0.0
    %5532 = vmatpush1.msra.mxu0 0.0
    %5533 = vmatprep.subr.mxu0 0.0
    %5534 = vmatpush1.msra.mxu0 0.0
    %5535 = vmatprep.subr.mxu0 0.0
    %5536 = vmatpush1.msra.mxu0 0.0
    %5537 = vmatprep.subr.mxu0 0.0
    %5538 = vmatpush1.msra.mxu0 0.0
    %5539 = vmatprep.subr.mxu0 0.0
    %5540 = vmatpush1.msra.mxu0 0.0
    %5541 = vmatprep.subr.mxu0 0.0
    %5542 = vmatpush1.msra.mxu0 0.0
    %5543 = vmatprep.subr.mxu0 0.0
    %5544 = vmatpush1.msra.mxu0 0.0
    %5545 = vmatprep.subr.mxu0 0.0
    %5546 = vmatpush1.msra.mxu0 0.0
    %5547 = vmatprep.subr.mxu0 0.0
    %5548 = vmatpush1.msra.mxu0 0.0
    %5549 = vmatprep.subr.mxu0 0.0
    %5550 = vmatpush1.msra.mxu0 0.0
    %5551 = vmatprep.subr.mxu0 0.0
    %5552 = vmatpush1.msra.mxu0 0.0
    %5553 = vmatprep.subr.mxu0 0.0
    %5554 = vmatpush1.msra.mxu0 0.0
    %5555 = vmatprep.subr.mxu0 0.0
    %5556 = vmatpush1.msra.mxu0 0.0
    %5557 = vmatprep.mubr.f32.mxu0 0.0
    %v5558 = vand.u32 %v1076, 4294901760
    %v5559 = vsub.f32 %v1076, %v5558
    %5560 = vmatmul.mubr.f32.gmra.mrb[0].mxu0 %v5559
    %v5561 = vpop.f32.mrb[0].mxu0
    %v5562 = vadd.f32 %v5452, %v5561
    %v5563 = vpop.f32.mrb[0].mxu0
    %v5564 = vadd.f32 %v5454, %v5563
    %5565 = vmatprep.mubr.f32.mxu0 0.0
    %v5566 = vand.u32 %v1079, 4294901760
    %v5567 = vsub.f32 %v1079, %v5566
    %5568 = vmatmul.mubr.f32.gmra.mrb[0].mxu0 %v5567
    %v5569 = vpop.f32.mrb[0].mxu0
    %v5570 = vadd.f32 %v5459, %v5569
    %v5571 = vpop.f32.mrb[0].mxu0
    %v5572 = vadd.f32 %v5461, %v5571
    %5573 = vmatprep.mubr.f32.mxu0 0.0
    %v5574 = vand.u32 %v1082, 4294901760
    %v5575 = vsub.f32 %v1082, %v5574
    %5576 = vmatmul.mubr.f32.gmra.mrb[0].mxu0 %v5575
    %v5577 = vpop.f32.mrb[0].mxu0
    %v5578 = vadd.f32 %v5466, %v5577
    %v5579 = vpop.f32.mrb[0].mxu0
    %v5580 = vadd.f32 %v5468, %v5579
    %5581 = vmatprep.mubr.f32.mxu0 0.0
    %v5582 = vand.u32 %v1085, 4294901760
    %v5583 = vsub.f32 %v1085, %v5582
    %5584 = vmatmul.mubr.f32.gmra.mrb[0].mxu0 %v5583
    %v5585 = vpop.f32.mrb[0].mxu0
    %v5586 = vadd.f32 %v5473, %v5585
    %v5587 = vpop.f32.mrb[0].mxu0
    %v5588 = vadd.f32 %v5475, %v5587
    %5589 = vdwg.mxu0
    %v5590 = vand.u32 %v995, 4294901760
    %5591 = vmatprep.subr.mxu0 %v5590
    %v5592 = vand.u32 %v994, 4294901760
    %5593 = vmatpush1.msra.mxu0 %v5592
    %v5594 = vand.u32 %v1011, 4294901760
    %5595 = vmatprep.subr.mxu0 %v5594
    %v5596 = vand.u32 %v1010, 4294901760
    %5597 = vmatpush1.msra.mxu0 %v5596
    %v5598 = vand.u32 %v1027, 4294901760
    %5599 = vmatprep.subr.mxu0 %v5598
    %v5600 = vand.u32 %v1026, 4294901760
    %5601 = vmatpush1.msra.mxu0 %v5600
    %v5602 = vand.u32 %v1043, 4294901760
    %5603 = vmatprep.subr.mxu0 %v5602
    %v5604 = vand.u32 %v1042, 4294901760
    %5605 = vmatpush1.msra.mxu0 %v5604
    %5606 = vmatprep.subr.mxu0 0.0
    %5607 = vmatpush1.msra.mxu0 0.0
    %5608 = vmatprep.subr.mxu0 0.0
    %5609 = vmatpush1.msra.mxu0 0.0
    %5610 = vmatprep.subr.mxu0 0.0
    %5611 = vmatpush1.msra.mxu0 0.0
    %5612 = vmatprep.subr.mxu0 0.0
    %5613 = vmatpush1.msra.mxu0 0.0
    %5614 = vmatprep.subr.mxu0 0.0
    %5615 = vmatpush1.msra.mxu0 0.0
    %5616 = vmatprep.subr.mxu0 0.0
    %5617 = vmatpush1.msra.mxu0 0.0
    %5618 = vmatprep.subr.mxu0 0.0
    %5619 = vmatpush1.msra.mxu0 0.0
    %5620 = vmatprep.subr.mxu0 0.0
    %5621 = vmatpush1.msra.mxu0 0.0
    %5622 = vmatprep.subr.mxu0 0.0
    %5623 = vmatpush1.msra.mxu0 0.0
    %5624 = vmatprep.subr.mxu0 0.0
    %5625 = vmatpush1.msra.mxu0 0.0
    %5626 = vmatprep.subr.mxu0 0.0
    %5627 = vmatpush1.msra.mxu0 0.0
    %5628 = vmatprep.subr.mxu0 0.0
    %5629 = vmatpush1.msra.mxu0 0.0
    %5630 = vmatprep.subr.mxu0 0.0
    %5631 = vmatpush1.msra.mxu0 0.0
    %5632 = vmatprep.subr.mxu0 0.0
    %5633 = vmatpush1.msra.mxu0 0.0
    %5634 = vmatprep.subr.mxu0 0.0
    %5635 = vmatpush1.msra.mxu0 0.0
    %5636 = vmatprep.subr.mxu0 0.0
    %5637 = vmatpush1.msra.mxu0 0.0
    %5638 = vmatprep.subr.mxu0 0.0
    %5639 = vmatpush1.msra.mxu0 0.0
    %5640 = vmatprep.subr.mxu0 0.0
    %5641 = vmatpush1.msra.mxu0 0.0
    %5642 = vmatprep.subr.mxu0 0.0
    %5643 = vmatpush1.msra.mxu0 0.0
    %5644 = vmatprep.subr.mxu0 0.0
    %5645 = vmatpush1.msra.mxu0 0.0
    %5646 = vmatprep.subr.mxu0 0.0
    %5647 = vmatpush1.msra.mxu0 0.0
    %5648 = vmatprep.subr.mxu0 0.0
    %5649 = vmatpush1.msra.mxu0 0.0
    %5650 = vmatprep.subr.mxu0 0.0
    %5651 = vmatpush1.msra.mxu0 0.0
    %5652 = vmatprep.subr.mxu0 0.0
    %5653 = vmatpush1.msra.mxu0 0.0
    %5654 = vmatprep.subr.mxu0 0.0
    %5655 = vmatpush1.msra.mxu0 0.0
    %5656 = vmatprep.subr.mxu0 0.0
    %5657 = vmatpush1.msra.mxu0 0.0
    %5658 = vmatprep.subr.mxu0 0.0
    %5659 = vmatpush1.msra.mxu0 0.0
    %5660 = vmatprep.subr.mxu0 0.0
    %5661 = vmatpush1.msra.mxu0 0.0
    %5662 = vmatprep.mubr.f32.mxu0 0.0
    %v5663 = vand.u32 %v1076, 4294901760
    %v5664 = vsub.f32 %v1076, %v5663
    %v5665 = vand.u32 %v5664, 4294901760
    %5666 = vmatmul.mubr.f32.gmra.mrb[0].mxu0 %v5665
    %v5667 = vpop.f32.mrb[0].mxu0
    %v5668 = vadd.f32 %v5562, %v5667
    %v5669 = vpop.f32.mrb[0].mxu0
    %v5670 = vadd.f32 %v5564, %v5669
    %5671 = vmatprep.mubr.f32.mxu0 0.0
    %v5672 = vand.u32 %v1079, 4294901760
    %v5673 = vsub.f32 %v1079, %v5672
    %v5674 = vand.u32 %v5673, 4294901760
    %5675 = vmatmul.mubr.f32.gmra.mrb[0].mxu0 %v5674
    %v5676 = vpop.f32.mrb[0].mxu0
    %v5677 = vadd.f32 %v5570, %v5676
    %v5678 = vpop.f32.mrb[0].mxu0
    %v5679 = vadd.f32 %v5572, %v5678
    %5680 = vmatprep.mubr.f32.mxu0 0.0
    %v5681 = vand.u32 %v1082, 4294901760
    %v5682 = vsub.f32 %v1082, %v5681
    %v5683 = vand.u32 %v5682, 4294901760
    %5684 = vmatmul.mubr.f32.gmra.mrb[0].mxu0 %v5683
    %v5685 = vpop.f32.mrb[0].mxu0
    %v5686 = vadd.f32 %v5578, %v5685
    %v5687 = vpop.f32.mrb[0].mxu0
    %v5688 = vadd.f32 %v5580, %v5687
    %5689 = vmatprep.mubr.f32.mxu0 0.0
    %v5690 = vand.u32 %v1085, 4294901760
    %v5691 = vsub.f32 %v1085, %v5690
    %v5692 = vand.u32 %v5691, 4294901760
    %5693 = vmatmul.mubr.f32.gmra.mrb[0].mxu0 %v5692
    %v5694 = vpop.f32.mrb[0].mxu0
    %v5695 = vadd.f32 %v5586, %v5694
    %v5696 = vpop.f32.mrb[0].mxu0
    %v5697 = vadd.f32 %v5588, %v5696
    %5698 = vdwg.mxu0
    %v5699 = vand.u32 %v995, 4294901760
    %v5700 = vsub.f32 %v995, %v5699
    %v5701 = vand.u32 %v5700, 4294901760
    %5702 = vmatprep.subr.mxu0 %v5701
    %v5703 = vand.u32 %v994, 4294901760
    %v5704 = vsub.f32 %v994, %v5703
    %v5705 = vand.u32 %v5704, 4294901760
    %5706 = vmatpush1.msra.mxu0 %v5705
    %v5707 = vand.u32 %v1011, 4294901760
    %v5708 = vsub.f32 %v1011, %v5707
    %v5709 = vand.u32 %v5708, 4294901760
    %5710 = vmatprep.subr.mxu0 %v5709
    %v5711 = vand.u32 %v1010, 4294901760
    %v5712 = vsub.f32 %v1010, %v5711
    %v5713 = vand.u32 %v5712, 4294901760
    %5714 = vmatpush1.msra.mxu0 %v5713
    %v5715 = vand.u32 %v1027, 4294901760
    %v5716 = vsub.f32 %v1027, %v5715
    %v5717 = vand.u32 %v5716, 4294901760
    %5718 = vmatprep.subr.mxu0 %v5717
    %v5719 = vand.u32 %v1026, 4294901760
    %v5720 = vsub.f32 %v1026, %v5719
    %v5721 = vand.u32 %v5720, 4294901760
    %5722 = vmatpush1.msra.mxu0 %v5721
    %v5723 = vand.u32 %v1043, 4294901760
    %v5724 = vsub.f32 %v1043, %v5723
    %v5725 = vand.u32 %v5724, 4294901760
    %5726 = vmatprep.subr.mxu0 %v5725
    %v5727 = vand.u32 %v1042, 4294901760
    %v5728 = vsub.f32 %v1042, %v5727
    %v5729 = vand.u32 %v5728, 4294901760
    %5730 = vmatpush1.msra.mxu0 %v5729
    %5731 = vmatprep.subr.mxu0 0.0
    %5732 = vmatpush1.msra.mxu0 0.0
    %5733 = vmatprep.subr.mxu0 0.0
    %5734 = vmatpush1.msra.mxu0 0.0
    %5735 = vmatprep.subr.mxu0 0.0
    %5736 = vmatpush1.msra.mxu0 0.0
    %5737 = vmatprep.subr.mxu0 0.0
    %5738 = vmatpush1.msra.mxu0 0.0
    %5739 = vmatprep.subr.mxu0 0.0
    %5740 = vmatpush1.msra.mxu0 0.0
    %5741 = vmatprep.subr.mxu0 0.0
    %5742 = vmatpush1.msra.mxu0 0.0
    %5743 = vmatprep.subr.mxu0 0.0
    %5744 = vmatpush1.msra.mxu0 0.0
    %5745 = vmatprep.subr.mxu0 0.0
    %5746 = vmatpush1.msra.mxu0 0.0
    %5747 = vmatprep.subr.mxu0 0.0
    %5748 = vmatpush1.msra.mxu0 0.0
    %5749 = vmatprep.subr.mxu0 0.0
    %5750 = vmatpush1.msra.mxu0 0.0
    %5751 = vmatprep.subr.mxu0 0.0
    %5752 = vmatpush1.msra.mxu0 0.0
    %5753 = vmatprep.subr.mxu0 0.0
    %5754 = vmatpush1.msra.mxu0 0.0
    %5755 = vmatprep.subr.mxu0 0.0
    %5756 = vmatpush1.msra.mxu0 0.0
    %5757 = vmatprep.subr.mxu0 0.0
    %5758 = vmatpush1.msra.mxu0 0.0
    %5759 = vmatprep.subr.mxu0 0.0
    %5760 = vmatpush1.msra.mxu0 0.0
    %5761 = vmatprep.subr.mxu0 0.0
    %5762 = vmatpush1.msra.mxu0 0.0
    %5763 = vmatprep.subr.mxu0 0.0
    %5764 = vmatpush1.msra.mxu0 0.0
    %5765 = vmatprep.subr.mxu0 0.0
    %5766 = vmatpush1.msra.mxu0 0.0
    %5767 = vmatprep.subr.mxu0 0.0
    %5768 = vmatpush1.msra.mxu0 0.0
    %5769 = vmatprep.subr.mxu0 0.0
    %5770 = vmatpush1.msra.mxu0 0.0
    %5771 = vmatprep.subr.mxu0 0.0
    %5772 = vmatpush1.msra.mxu0 0.0
    %5773 = vmatprep.subr.mxu0 0.0
    %5774 = vmatpush1.msra.mxu0 0.0
    %5775 = vmatprep.subr.mxu0 0.0
    %5776 = vmatpush1.msra.mxu0 0.0
    %5777 = vmatprep.subr.mxu0 0.0
    %5778 = vmatpush1.msra.mxu0 0.0
    %5779 = vmatprep.subr.mxu0 0.0
    %5780 = vmatpush1.msra.mxu0 0.0
    %5781 = vmatprep.subr.mxu0 0.0
    %5782 = vmatpush1.msra.mxu0 0.0
    %5783 = vmatprep.subr.mxu0 0.0
    %5784 = vmatpush1.msra.mxu0 0.0
    %5785 = vmatprep.subr.mxu0 0.0
    %5786 = vmatpush1.msra.mxu0 0.0
    %5787 = vmatprep.mubr.f32.mxu0 0.0
    %v5788 = vand.u32 %v1076, 4294901760
    %5789 = vmatmul.mubr.f32.gmra.mrb[0].mxu0 %v5788
    %v5790 = vpop.f32.mrb[0].mxu0
    %v5791 = vadd.f32 %v5668, %v5790
    %v5792 = vpop.f32.mrb[0].mxu0
    %v5793 = vadd.f32 %v5670, %v5792
    %5794 = vmatprep.mubr.f32.mxu0 0.0
    %v5795 = vand.u32 %v1079, 4294901760
    %5796 = vmatmul.mubr.f32.gmra.mrb[0].mxu0 %v5795
    %v5797 = vpop.f32.mrb[0].mxu0
    %v5798 = vadd.f32 %v5677, %v5797
    %v5799 = vpop.f32.mrb[0].mxu0
    %v5800 = vadd.f32 %v5679, %v5799
    %5801 = vmatprep.mubr.f32.mxu0 0.0
    %v5802 = vand.u32 %v1082, 4294901760
    %5803 = vmatmul.mubr.f32.gmra.mrb[0].mxu0 %v5802
    %v5804 = vpop.f32.mrb[0].mxu0
    %v5805 = vadd.f32 %v5686, %v5804
    %v5806 = vpop.f32.mrb[0].mxu0
    %v5807 = vadd.f32 %v5688, %v5806
    %5808 = vmatprep.mubr.f32.mxu0 0.0
    %v5809 = vand.u32 %v1085, 4294901760
    %5810 = vmatmul.mubr.f32.gmra.mrb[0].mxu0 %v5809
    %v5811 = vpop.f32.mrb[0].mxu0
    %v5812 = vadd.f32 %v5695, %v5811
    %v5813 = vpop.f32.mrb[0].mxu0
    %v5814 = vadd.f32 %v5697, %v5813
    %5815 = vdwg.mxu0
    %v5816 = vand.u32 %v995, 4294901760
    %5817 = vmatprep.subr.mxu0 %v5816
    %v5818 = vand.u32 %v994, 4294901760
    %5819 = vmatpush1.msra.mxu0 %v5818
    %v5820 = vand.u32 %v1011, 4294901760
    %5821 = vmatprep.subr.mxu0 %v5820
    %v5822 = vand.u32 %v1010, 4294901760
    %5823 = vmatpush1.msra.mxu0 %v5822
    %v5824 = vand.u32 %v1027, 4294901760
    %5825 = vmatprep.subr.mxu0 %v5824
    %v5826 = vand.u32 %v1026, 4294901760
    %5827 = vmatpush1.msra.mxu0 %v5826
    %v5828 = vand.u32 %v1043, 4294901760
    %5829 = vmatprep.subr.mxu0 %v5828
    %v5830 = vand.u32 %v1042, 4294901760
    %5831 = vmatpush1.msra.mxu0 %v5830
    %5832 = vmatprep.subr.mxu0 0.0
    %5833 = vmatpush1.msra.mxu0 0.0
    %5834 = vmatprep.subr.mxu0 0.0
    %5835 = vmatpush1.msra.mxu0 0.0
    %5836 = vmatprep.subr.mxu0 0.0
    %5837 = vmatpush1.msra.mxu0 0.0
    %5838 = vmatprep.subr.mxu0 0.0
    %5839 = vmatpush1.msra.mxu0 0.0
    %5840 = vmatprep.subr.mxu0 0.0
    %5841 = vmatpush1.msra.mxu0 0.0
    %5842 = vmatprep.subr.mxu0 0.0
    %5843 = vmatpush1.msra.mxu0 0.0
    %5844 = vmatprep.subr.mxu0 0.0
    %5845 = vmatpush1.msra.mxu0 0.0
    %5846 = vmatprep.subr.mxu0 0.0
    %5847 = vmatpush1.msra.mxu0 0.0
    %5848 = vmatprep.subr.mxu0 0.0
    %5849 = vmatpush1.msra.mxu0 0.0
    %5850 = vmatprep.subr.mxu0 0.0
    %5851 = vmatpush1.msra.mxu0 0.0
    %5852 = vmatprep.subr.mxu0 0.0
    %5853 = vmatpush1.msra.mxu0 0.0
    %5854 = vmatprep.subr.mxu0 0.0
    %5855 = vmatpush1.msra.mxu0 0.0
    %5856 = vmatprep.subr.mxu0 0.0
    %5857 = vmatpush1.msra.mxu0 0.0
    %5858 = vmatprep.subr.mxu0 0.0
    %5859 = vmatpush1.msra.mxu0 0.0
    %5860 = vmatprep.subr.mxu0 0.0
    %5861 = vmatpush1.msra.mxu0 0.0
    %5862 = vmatprep.subr.mxu0 0.0
    %5863 = vmatpush1.msra.mxu0 0.0
    %5864 = vmatprep.subr.mxu0 0.0
    %5865 = vmatpush1.msra.mxu0 0.0
    %5866 = vmatprep.subr.mxu0 0.0
    %5867 = vmatpush1.msra.mxu0 0.0
    %5868 = vmatprep.subr.mxu0 0.0
    %5869 = vmatpush1.msra.mxu0 0.0
    %5870 = vmatprep.subr.mxu0 0.0
    %5871 = vmatpush1.msra.mxu0 0.0
    %5872 = vmatprep.subr.mxu0 0.0
    %5873 = vmatpush1.msra.mxu0 0.0
    %5874 = vmatprep.subr.mxu0 0.0
    %5875 = vmatpush1.msra.mxu0 0.0
    %5876 = vmatprep.subr.mxu0 0.0
    %5877 = vmatpush1.msra.mxu0 0.0
    %5878 = vmatprep.subr.mxu0 0.0
    %5879 = vmatpush1.msra.mxu0 0.0
    %5880 = vmatprep.subr.mxu0 0.0
    %5881 = vmatpush1.msra.mxu0 0.0
    %5882 = vmatprep.subr.mxu0 0.0
    %5883 = vmatpush1.msra.mxu0 0.0
    %5884 = vmatprep.subr.mxu0 0.0
    %5885 = vmatpush1.msra.mxu0 0.0
    %5886 = vmatprep.subr.mxu0 0.0
    %5887 = vmatpush1.msra.mxu0 0.0
    %5888 = vmatprep.mubr.f32.mxu0 0.0
    %v5889 = vand.u32 %v1076, 4294901760
    %5890 = vmatmul.mubr.f32.gmra.mrb[0].mxu0 %v5889
    %v5891 = vpop.f32.mrb[0].mxu0
    %v5892 = vadd.f32 %v5791, %v5891
    %v5893 = vpop.f32.mrb[0].mxu0
    %v5894 = vadd.f32 %v5793, %v5893
    %5895 = vmatprep.mubr.f32.mxu0 0.0
    %v5896 = vand.u32 %v1079, 4294901760
    %5897 = vmatmul.mubr.f32.gmra.mrb[0].mxu0 %v5896
    %v5898 = vpop.f32.mrb[0].mxu0
    %v5899 = vadd.f32 %v5798, %v5898
    %v5900 = vpop.f32.mrb[0].mxu0
    %v5901 = vadd.f32 %v5800, %v5900
    %5902 = vmatprep.mubr.f32.mxu0 0.0
    %v5903 = vand.u32 %v1082, 4294901760
    %5904 = vmatmul.mubr.f32.gmra.mrb[0].mxu0 %v5903
    %v5905 = vpop.f32.mrb[0].mxu0
    %v5906 = vadd.f32 %v5805, %v5905
    %v5907 = vpop.f32.mrb[0].mxu0
    %v5908 = vadd.f32 %v5807, %v5907
    %5909 = vmatprep.mubr.f32.mxu0 0.0
    %v5910 = vand.u32 %v1085, 4294901760
    %5911 = vmatmul.mubr.f32.gmra.mrb[0].mxu0 %v5910
    %v5912 = vpop.f32.mrb[0].mxu0
    %v5913 = vadd.f32 %v5812, %v5912
    %v5914 = vpop.f32.mrb[0].mxu0
    %v5915 = vadd.f32 %v5814, %v5914
    %5916 = vdwg.mxu0
    %v5917 = vand.u32 %v997, 4294901760
    %5918 = vmatprep.subr.mxu0 %v5917
    %v5919 = vand.u32 %v996, 4294901760
    %5920 = vmatpush1.msra.mxu0 %v5919
    %v5921 = vand.u32 %v1013, 4294901760
    %5922 = vmatprep.subr.mxu0 %v5921
    %v5923 = vand.u32 %v1012, 4294901760
    %5924 = vmatpush1.msra.mxu0 %v5923
    %v5925 = vand.u32 %v1029, 4294901760
    %5926 = vmatprep.subr.mxu0 %v5925
    %v5927 = vand.u32 %v1028, 4294901760
    %5928 = vmatpush1.msra.mxu0 %v5927
    %v5929 = vand.u32 %v1045, 4294901760
    %5930 = vmatprep.subr.mxu0 %v5929
    %v5931 = vand.u32 %v1044, 4294901760
    %5932 = vmatpush1.msra.mxu0 %v5931
    %5933 = vmatprep.subr.mxu0 0.0
    %5934 = vmatpush1.msra.mxu0 0.0
    %5935 = vmatprep.subr.mxu0 0.0
    %5936 = vmatpush1.msra.mxu0 0.0
    %5937 = vmatprep.subr.mxu0 0.0
    %5938 = vmatpush1.msra.mxu0 0.0
    %5939 = vmatprep.subr.mxu0 0.0
    %5940 = vmatpush1.msra.mxu0 0.0
    %5941 = vmatprep.subr.mxu0 0.0
    %5942 = vmatpush1.msra.mxu0 0.0
    %5943 = vmatprep.subr.mxu0 0.0
    %5944 = vmatpush1.msra.mxu0 0.0
    %5945 = vmatprep.subr.mxu0 0.0
    %5946 = vmatpush1.msra.mxu0 0.0
    %5947 = vmatprep.subr.mxu0 0.0
    %5948 = vmatpush1.msra.mxu0 0.0
    %5949 = vmatprep.subr.mxu0 0.0
    %5950 = vmatpush1.msra.mxu0 0.0
    %5951 = vmatprep.subr.mxu0 0.0
    %5952 = vmatpush1.msra.mxu0 0.0
    %5953 = vmatprep.subr.mxu0 0.0
    %5954 = vmatpush1.msra.mxu0 0.0
    %5955 = vmatprep.subr.mxu0 0.0
    %5956 = vmatpush1.msra.mxu0 0.0
    %5957 = vmatprep.subr.mxu0 0.0
    %5958 = vmatpush1.msra.mxu0 0.0
    %5959 = vmatprep.subr.mxu0 0.0
    %5960 = vmatpush1.msra.mxu0 0.0
    %5961 = vmatprep.subr.mxu0 0.0
    %5962 = vmatpush1.msra.mxu0 0.0
    %5963 = vmatprep.subr.mxu0 0.0
    %5964 = vmatpush1.msra.mxu0 0.0
    %5965 = vmatprep.subr.mxu0 0.0
    %5966 = vmatpush1.msra.mxu0 0.0
    %5967 = vmatprep.subr.mxu0 0.0
    %5968 = vmatpush1.msra.mxu0 0.0
    %5969 = vmatprep.subr.mxu0 0.0
    %5970 = vmatpush1.msra.mxu0 0.0
    %5971 = vmatprep.subr.mxu0 0.0
    %5972 = vmatpush1.msra.mxu0 0.0
    %5973 = vmatprep.subr.mxu0 0.0
    %5974 = vmatpush1.msra.mxu0 0.0
    %5975 = vmatprep.subr.mxu0 0.0
    %5976 = vmatpush1.msra.mxu0 0.0
    %5977 = vmatprep.subr.mxu0 0.0
    %5978 = vmatpush1.msra.mxu0 0.0
    %5979 = vmatprep.subr.mxu0 0.0
    %5980 = vmatpush1.msra.mxu0 0.0
    %5981 = vmatprep.subr.mxu0 0.0
    %5982 = vmatpush1.msra.mxu0 0.0
    %5983 = vmatprep.subr.mxu0 0.0
    %5984 = vmatpush1.msra.mxu0 0.0
    %5985 = vmatprep.subr.mxu0 0.0
    %5986 = vmatpush1.msra.mxu0 0.0
    %5987 = vmatprep.subr.mxu0 0.0
    %5988 = vmatpush1.msra.mxu0 0.0
    %5989 = vmatprep.mubr.f32.mxu0 0.0
    %v5990 = vand.u32 %v1076, 4294901760
    %v5991 = vsub.f32 %v1076, %v5990
    %v5992 = vand.u32 %v5991, 4294901760
    %v5993 = vsub.f32 %v5991, %v5992
    %v5994 = vand.u32 %v5993, 4294901760
    %5995 = vmatmul.mubr.f32.gmra.mrb[0].mxu0 %v5994
    %v5996 = vpop.f32.mrb[0].mxu0
    %v5997 = vadd.f32 %v1057, %v5996
    %v5998 = vpop.f32.mrb[0].mxu0
    %v5999 = vadd.f32 %v1057, %v5998
    %6000 = vmatprep.mubr.f32.mxu0 0.0
    %v6001 = vand.u32 %v1079, 4294901760
    %v6002 = vsub.f32 %v1079, %v6001
    %v6003 = vand.u32 %v6002, 4294901760
    %v6004 = vsub.f32 %v6002, %v6003
    %v6005 = vand.u32 %v6004, 4294901760
    %6006 = vmatmul.mubr.f32.gmra.mrb[0].mxu0 %v6005
    %v6007 = vpop.f32.mrb[0].mxu0
    %v6008 = vadd.f32 %v1062, %v6007
    %v6009 = vpop.f32.mrb[0].mxu0
    %v6010 = vadd.f32 %v1062, %v6009
    %6011 = vmatprep.mubr.f32.mxu0 0.0
    %v6012 = vand.u32 %v1082, 4294901760
    %v6013 = vsub.f32 %v1082, %v6012
    %v6014 = vand.u32 %v6013, 4294901760
    %v6015 = vsub.f32 %v6013, %v6014
    %v6016 = vand.u32 %v6015, 4294901760
    %6017 = vmatmul.mubr.f32.gmra.mrb[0].mxu0 %v6016
    %v6018 = vpop.f32.mrb[0].mxu0
    %v6019 = vadd.f32 %v1067, %v6018
    %v6020 = vpop.f32.mrb[0].mxu0
    %v6021 = vadd.f32 %v1067, %v6020
    %6022 = vmatprep.mubr.f32.mxu0 0.0
    %v6023 = vand.u32 %v1085, 4294901760
    %v6024 = vsub.f32 %v1085, %v6023
    %v6025 = vand.u32 %v6024, 4294901760
    %v6026 = vsub.f32 %v6024, %v6025
    %v6027 = vand.u32 %v6026, 4294901760
    %6028 = vmatmul.mubr.f32.gmra.mrb[0].mxu0 %v6027
    %v6029 = vpop.f32.mrb[0].mxu0
    %v6030 = vadd.f32 %v1072, %v6029
    %v6031 = vpop.f32.mrb[0].mxu0
    %v6032 = vadd.f32 %v1072, %v6031
    %6033 = vdwg.mxu0
    %v6034 = vand.u32 %v997, 4294901760
    %v6035 = vsub.f32 %v997, %v6034
    %v6036 = vand.u32 %v6035, 4294901760
    %v6037 = vsub.f32 %v6035, %v6036
    %v6038 = vand.u32 %v6037, 4294901760
    %6039 = vmatprep.subr.mxu0 %v6038
    %v6040 = vand.u32 %v996, 4294901760
    %v6041 = vsub.f32 %v996, %v6040
    %v6042 = vand.u32 %v6041, 4294901760
    %v6043 = vsub.f32 %v6041, %v6042
    %v6044 = vand.u32 %v6043, 4294901760
    %6045 = vmatpush1.msra.mxu0 %v6044
    %v6046 = vand.u32 %v1013, 4294901760
    %v6047 = vsub.f32 %v1013, %v6046
    %v6048 = vand.u32 %v6047, 4294901760
    %v6049 = vsub.f32 %v6047, %v6048
    %v6050 = vand.u32 %v6049, 4294901760
    %6051 = vmatprep.subr.mxu0 %v6050
    %v6052 = vand.u32 %v1012, 4294901760
    %v6053 = vsub.f32 %v1012, %v6052
    %v6054 = vand.u32 %v6053, 4294901760
    %v6055 = vsub.f32 %v6053, %v6054
    %v6056 = vand.u32 %v6055, 4294901760
    %6057 = vmatpush1.msra.mxu0 %v6056
    %v6058 = vand.u32 %v1029, 4294901760
    %v6059 = vsub.f32 %v1029, %v6058
    %v6060 = vand.u32 %v6059, 4294901760
    %v6061 = vsub.f32 %v6059, %v6060
    %v6062 = vand.u32 %v6061, 4294901760
    %6063 = vmatprep.subr.mxu0 %v6062
    %v6064 = vand.u32 %v1028, 4294901760
    %v6065 = vsub.f32 %v1028, %v6064
    %v6066 = vand.u32 %v6065, 4294901760
    %v6067 = vsub.f32 %v6065, %v6066
    %v6068 = vand.u32 %v6067, 4294901760
    %6069 = vmatpush1.msra.mxu0 %v6068
    %v6070 = vand.u32 %v1045, 4294901760
    %v6071 = vsub.f32 %v1045, %v6070
    %v6072 = vand.u32 %v6071, 4294901760
    %v6073 = vsub.f32 %v6071, %v6072
    %v6074 = vand.u32 %v6073, 4294901760
    %6075 = vmatprep.subr.mxu0 %v6074
    %v6076 = vand.u32 %v1044, 4294901760
    %v6077 = vsub.f32 %v1044, %v6076
    %v6078 = vand.u32 %v6077, 4294901760
    %v6079 = vsub.f32 %v6077, %v6078
    %v6080 = vand.u32 %v6079, 4294901760
    %6081 = vmatpush1.msra.mxu0 %v6080
    %6082 = vmatprep.subr.mxu0 0.0
    %6083 = vmatpush1.msra.mxu0 0.0
    %6084 = vmatprep.subr.mxu0 0.0
    %6085 = vmatpush1.msra.mxu0 0.0
    %6086 = vmatprep.subr.mxu0 0.0
    %6087 = vmatpush1.msra.mxu0 0.0
    %6088 = vmatprep.subr.mxu0 0.0
    %6089 = vmatpush1.msra.mxu0 0.0
    %6090 = vmatprep.subr.mxu0 0.0
    %6091 = vmatpush1.msra.mxu0 0.0
    %6092 = vmatprep.subr.mxu0 0.0
    %6093 = vmatpush1.msra.mxu0 0.0
    %6094 = vmatprep.subr.mxu0 0.0
    %6095 = vmatpush1.msra.mxu0 0.0
    %6096 = vmatprep.subr.mxu0 0.0
    %6097 = vmatpush1.msra.mxu0 0.0
    %6098 = vmatprep.subr.mxu0 0.0
    %6099 = vmatpush1.msra.mxu0 0.0
    %6100 = vmatprep.subr.mxu0 0.0
    %6101 = vmatpush1.msra.mxu0 0.0
    %6102 = vmatprep.subr.mxu0 0.0
    %6103 = vmatpush1.msra.mxu0 0.0
    %6104 = vmatprep.subr.mxu0 0.0
    %6105 = vmatpush1.msra.mxu0 0.0
    %6106 = vmatprep.subr.mxu0 0.0
    %6107 = vmatpush1.msra.mxu0 0.0
    %6108 = vmatprep.subr.mxu0 0.0
    %6109 = vmatpush1.msra.mxu0 0.0
    %6110 = vmatprep.subr.mxu0 0.0
    %6111 = vmatpush1.msra.mxu0 0.0
    %6112 = vmatprep.subr.mxu0 0.0
    %6113 = vmatpush1.msra.mxu0 0.0
    %6114 = vmatprep.subr.mxu0 0.0
    %6115 = vmatpush1.msra.mxu0 0.0
    %6116 = vmatprep.subr.mxu0 0.0
    %6117 = vmatpush1.msra.mxu0 0.0
    %6118 = vmatprep.subr.mxu0 0.0
    %6119 = vmatpush1.msra.mxu0 0.0
    %6120 = vmatprep.subr.mxu0 0.0
    %6121 = vmatpush1.msra.mxu0 0.0
    %6122 = vmatprep.subr.mxu0 0.0
    %6123 = vmatpush1.msra.mxu0 0.0
    %6124 = vmatprep.subr.mxu0 0.0
    %6125 = vmatpush1.msra.mxu0 0.0
    %6126 = vmatprep.subr.mxu0 0.0
    %6127 = vmatpush1.msra.mxu0 0.0
    %6128 = vmatprep.subr.mxu0 0.0
    %6129 = vmatpush1.msra.mxu0 0.0
    %6130 = vmatprep.subr.mxu0 0.0
    %6131 = vmatpush1.msra.mxu0 0.0
    %6132 = vmatprep.subr.mxu0 0.0
    %6133 = vmatpush1.msra.mxu0 0.0
    %6134 = vmatprep.subr.mxu0 0.0
    %6135 = vmatpush1.msra.mxu0 0.0
    %6136 = vmatprep.subr.mxu0 0.0
    %6137 = vmatpush1.msra.mxu0 0.0
    %6138 = vmatprep.mubr.f32.mxu0 0.0
    %v6139 = vand.u32 %v1076, 4294901760
    %6140 = vmatmul.mubr.f32.gmra.mrb[0].mxu0 %v6139
    %v6141 = vpop.f32.mrb[0].mxu0
    %v6142 = vadd.f32 %v5997, %v6141
    %v6143 = vpop.f32.mrb[0].mxu0
    %v6144 = vadd.f32 %v5999, %v6143
    %6145 = vmatprep.mubr.f32.mxu0 0.0
    %v6146 = vand.u32 %v1079, 4294901760
    %6147 = vmatmul.mubr.f32.gmra.mrb[0].mxu0 %v6146
    %v6148 = vpop.f32.mrb[0].mxu0
    %v6149 = vadd.f32 %v6008, %v6148
    %v6150 = vpop.f32.mrb[0].mxu0
    %v6151 = vadd.f32 %v6010, %v6150
    %6152 = vmatprep.mubr.f32.mxu0 0.0
    %v6153 = vand.u32 %v1082, 4294901760
    %6154 = vmatmul.mubr.f32.gmra.mrb[0].mxu0 %v6153
    %v6155 = vpop.f32.mrb[0].mxu0
    %v6156 = vadd.f32 %v6019, %v6155
    %v6157 = vpop.f32.mrb[0].mxu0
    %v6158 = vadd.f32 %v6021, %v6157
    %6159 = vmatprep.mubr.f32.mxu0 0.0
    %v6160 = vand.u32 %v1085, 4294901760
    %6161 = vmatmul.mubr.f32.gmra.mrb[0].mxu0 %v6160
    %v6162 = vpop.f32.mrb[0].mxu0
    %v6163 = vadd.f32 %v6030, %v6162
    %v6164 = vpop.f32.mrb[0].mxu0
    %v6165 = vadd.f32 %v6032, %v6164
    %6166 = vdwg.mxu0
    %v6167 = vand.u32 %v997, 4294901760
    %v6168 = vsub.f32 %v997, %v6167
    %6169 = vmatprep.subr.mxu0 %v6168
    %v6170 = vand.u32 %v996, 4294901760
    %v6171 = vsub.f32 %v996, %v6170
    %6172 = vmatpush1.msra.mxu0 %v6171
    %v6173 = vand.u32 %v1013, 4294901760
    %v6174 = vsub.f32 %v1013, %v6173
    %6175 = vmatprep.subr.mxu0 %v6174
    %v6176 = vand.u32 %v1012, 4294901760
    %v6177 = vsub.f32 %v1012, %v6176
    %6178 = vmatpush1.msra.mxu0 %v6177
    %v6179 = vand.u32 %v1029, 4294901760
    %v6180 = vsub.f32 %v1029, %v6179
    %6181 = vmatprep.subr.mxu0 %v6180
    %v6182 = vand.u32 %v1028, 4294901760
    %v6183 = vsub.f32 %v1028, %v6182
    %6184 = vmatpush1.msra.mxu0 %v6183
    %v6185 = vand.u32 %v1045, 4294901760
    %v6186 = vsub.f32 %v1045, %v6185
    %6187 = vmatprep.subr.mxu0 %v6186
    %v6188 = vand.u32 %v1044, 4294901760
    %v6189 = vsub.f32 %v1044, %v6188
    %6190 = vmatpush1.msra.mxu0 %v6189
    %6191 = vmatprep.subr.mxu0 0.0
    %6192 = vmatpush1.msra.mxu0 0.0
    %6193 = vmatprep.subr.mxu0 0.0
    %6194 = vmatpush1.msra.mxu0 0.0
    %6195 = vmatprep.subr.mxu0 0.0
    %6196 = vmatpush1.msra.mxu0 0.0
    %6197 = vmatprep.subr.mxu0 0.0
    %6198 = vmatpush1.msra.mxu0 0.0
    %6199 = vmatprep.subr.mxu0 0.0
    %6200 = vmatpush1.msra.mxu0 0.0
    %6201 = vmatprep.subr.mxu0 0.0
    %6202 = vmatpush1.msra.mxu0 0.0
    %6203 = vmatprep.subr.mxu0 0.0
    %6204 = vmatpush1.msra.mxu0 0.0
    %6205 = vmatprep.subr.mxu0 0.0
    %6206 = vmatpush1.msra.mxu0 0.0
    %6207 = vmatprep.subr.mxu0 0.0
    %6208 = vmatpush1.msra.mxu0 0.0
    %6209 = vmatprep.subr.mxu0 0.0
    %6210 = vmatpush1.msra.mxu0 0.0
    %6211 = vmatprep.subr.mxu0 0.0
    %6212 = vmatpush1.msra.mxu0 0.0
    %6213 = vmatprep.subr.mxu0 0.0
    %6214 = vmatpush1.msra.mxu0 0.0
    %6215 = vmatprep.subr.mxu0 0.0
    %6216 = vmatpush1.msra.mxu0 0.0
    %6217 = vmatprep.subr.mxu0 0.0
    %6218 = vmatpush1.msra.mxu0 0.0
    %6219 = vmatprep.subr.mxu0 0.0
    %6220 = vmatpush1.msra.mxu0 0.0
    %6221 = vmatprep.subr.mxu0 0.0
    %6222 = vmatpush1.msra.mxu0 0.0
    %6223 = vmatprep.subr.mxu0 0.0
    %6224 = vmatpush1.msra.mxu0 0.0
    %6225 = vmatprep.subr.mxu0 0.0
    %6226 = vmatpush1.msra.mxu0 0.0
    %6227 = vmatprep.subr.mxu0 0.0
    %6228 = vmatpush1.msra.mxu0 0.0
    %6229 = vmatprep.subr.mxu0 0.0
    %6230 = vmatpush1.msra.mxu0 0.0
    %6231 = vmatprep.subr.mxu0 0.0
    %6232 = vmatpush1.msra.mxu0 0.0
    %6233 = vmatprep.subr.mxu0 0.0
    %6234 = vmatpush1.msra.mxu0 0.0
    %6235 = vmatprep.subr.mxu0 0.0
    %6236 = vmatpush1.msra.mxu0 0.0
    %6237 = vmatprep.subr.mxu0 0.0
    %6238 = vmatpush1.msra.mxu0 0.0
    %6239 = vmatprep.subr.mxu0 0.0
    %6240 = vmatpush1.msra.mxu0 0.0
    %6241 = vmatprep.subr.mxu0 0.0
    %6242 = vmatpush1.msra.mxu0 0.0
    %6243 = vmatprep.subr.mxu0 0.0
    %6244 = vmatpush1.msra.mxu0 0.0
    %6245 = vmatprep.subr.mxu0 0.0
    %6246 = vmatpush1.msra.mxu0 0.0
    %6247 = vmatprep.mubr.f32.mxu0 0.0
    %v6248 = vand.u32 %v1076, 4294901760
    %v6249 = vsub.f32 %v1076, %v6248
    %6250 = vmatmul.mubr.f32.gmra.mrb[0].mxu0 %v6249
    %v6251 = vpop.f32.mrb[0].mxu0
    %v6252 = vadd.f32 %v6142, %v6251
    %v6253 = vpop.f32.mrb[0].mxu0
    %v6254 = vadd.f32 %v6144, %v6253
    %6255 = vmatprep.mubr.f32.mxu0 0.0
    %v6256 = vand.u32 %v1079, 4294901760
    %v6257 = vsub.f32 %v1079, %v6256
    %6258 = vmatmul.mubr.f32.gmra.mrb[0].mxu0 %v6257
    %v6259 = vpop.f32.mrb[0].mxu0
    %v6260 = vadd.f32 %v6149, %v6259
    %v6261 = vpop.f32.mrb[0].mxu0
    %v6262 = vadd.f32 %v6151, %v6261
    %6263 = vmatprep.mubr.f32.mxu0 0.0
    %v6264 = vand.u32 %v1082, 4294901760
    %v6265 = vsub.f32 %v1082, %v6264
    %6266 = vmatmul.mubr.f32.gmra.mrb[0].mxu0 %v6265
    %v6267 = vpop.f32.mrb[0].mxu0
    %v6268 = vadd.f32 %v6156, %v6267
    %v6269 = vpop.f32.mrb[0].mxu0
    %v6270 = vadd.f32 %v6158, %v6269
    %6271 = vmatprep.mubr.f32.mxu0 0.0
    %v6272 = vand.u32 %v1085, 4294901760
    %v6273 = vsub.f32 %v1085, %v6272
    %6274 = vmatmul.mubr.f32.gmra.mrb[0].mxu0 %v6273
    %v6275 = vpop.f32.mrb[0].mxu0
    %v6276 = vadd.f32 %v6163, %v6275
    %v6277 = vpop.f32.mrb[0].mxu0
    %v6278 = vadd.f32 %v6165, %v6277
    %6279 = vdwg.mxu0
    %v6280 = vand.u32 %v997, 4294901760
    %6281 = vmatprep.subr.mxu0 %v6280
    %v6282 = vand.u32 %v996, 4294901760
    %6283 = vmatpush1.msra.mxu0 %v6282
    %v6284 = vand.u32 %v1013, 4294901760
    %6285 = vmatprep.subr.mxu0 %v6284
    %v6286 = vand.u32 %v1012, 4294901760
    %6287 = vmatpush1.msra.mxu0 %v6286
    %v6288 = vand.u32 %v1029, 4294901760
    %6289 = vmatprep.subr.mxu0 %v6288
    %v6290 = vand.u32 %v1028, 4294901760
    %6291 = vmatpush1.msra.mxu0 %v6290
    %v6292 = vand.u32 %v1045, 4294901760
    %6293 = vmatprep.subr.mxu0 %v6292
    %v6294 = vand.u32 %v1044, 4294901760
    %6295 = vmatpush1.msra.mxu0 %v6294
    %6296 = vmatprep.subr.mxu0 0.0
    %6297 = vmatpush1.msra.mxu0 0.0
    %6298 = vmatprep.subr.mxu0 0.0
    %6299 = vmatpush1.msra.mxu0 0.0
    %6300 = vmatprep.subr.mxu0 0.0
    %6301 = vmatpush1.msra.mxu0 0.0
    %6302 = vmatprep.subr.mxu0 0.0
    %6303 = vmatpush1.msra.mxu0 0.0
    %6304 = vmatprep.subr.mxu0 0.0
    %6305 = vmatpush1.msra.mxu0 0.0
    %6306 = vmatprep.subr.mxu0 0.0
    %6307 = vmatpush1.msra.mxu0 0.0
    %6308 = vmatprep.subr.mxu0 0.0
    %6309 = vmatpush1.msra.mxu0 0.0
    %6310 = vmatprep.subr.mxu0 0.0
    %6311 = vmatpush1.msra.mxu0 0.0
    %6312 = vmatprep.subr.mxu0 0.0
    %6313 = vmatpush1.msra.mxu0 0.0
    %6314 = vmatprep.subr.mxu0 0.0
    %6315 = vmatpush1.msra.mxu0 0.0
    %6316 = vmatprep.subr.mxu0 0.0
    %6317 = vmatpush1.msra.mxu0 0.0
    %6318 = vmatprep.subr.mxu0 0.0
    %6319 = vmatpush1.msra.mxu0 0.0
    %6320 = vmatprep.subr.mxu0 0.0
    %6321 = vmatpush1.msra.mxu0 0.0
    %6322 = vmatprep.subr.mxu0 0.0
    %6323 = vmatpush1.msra.mxu0 0.0
    %6324 = vmatprep.subr.mxu0 0.0
    %6325 = vmatpush1.msra.mxu0 0.0
    %6326 = vmatprep.subr.mxu0 0.0
    %6327 = vmatpush1.msra.mxu0 0.0
    %6328 = vmatprep.subr.mxu0 0.0
    %6329 = vmatpush1.msra.mxu0 0.0
    %6330 = vmatprep.subr.mxu0 0.0
    %6331 = vmatpush1.msra.mxu0 0.0
    %6332 = vmatprep.subr.mxu0 0.0
    %6333 = vmatpush1.msra.mxu0 0.0
    %6334 = vmatprep.subr.mxu0 0.0
    %6335 = vmatpush1.msra.mxu0 0.0
    %6336 = vmatprep.subr.mxu0 0.0
    %6337 = vmatpush1.msra.mxu0 0.0
    %6338 = vmatprep.subr.mxu0 0.0
    %6339 = vmatpush1.msra.mxu0 0.0
    %6340 = vmatprep.subr.mxu0 0.0
    %6341 = vmatpush1.msra.mxu0 0.0
    %6342 = vmatprep.subr.mxu0 0.0
    %6343 = vmatpush1.msra.mxu0 0.0
    %6344 = vmatprep.subr.mxu0 0.0
    %6345 = vmatpush1.msra.mxu0 0.0
    %6346 = vmatprep.subr.mxu0 0.0
    %6347 = vmatpush1.msra.mxu0 0.0
    %6348 = vmatprep.subr.mxu0 0.0
    %6349 = vmatpush1.msra.mxu0 0.0
    %6350 = vmatprep.subr.mxu0 0.0
    %6351 = vmatpush1.msra.mxu0 0.0
    %6352 = vmatprep.mubr.f32.mxu0 0.0
    %v6353 = vand.u32 %v1076, 4294901760
    %v6354 = vsub.f32 %v1076, %v6353
    %v6355 = vand.u32 %v6354, 4294901760
    %6356 = vmatmul.mubr.f32.gmra.mrb[0].mxu0 %v6355
    %v6357 = vpop.f32.mrb[0].mxu0
    %v6358 = vadd.f32 %v6252, %v6357
    %v6359 = vpop.f32.mrb[0].mxu0
    %v6360 = vadd.f32 %v6254, %v6359
    %6361 = vmatprep.mubr.f32.mxu0 0.0
    %v6362 = vand.u32 %v1079, 4294901760
    %v6363 = vsub.f32 %v1079, %v6362
    %v6364 = vand.u32 %v6363, 4294901760
    %6365 = vmatmul.mubr.f32.gmra.mrb[0].mxu0 %v6364
    %v6366 = vpop.f32.mrb[0].mxu0
    %v6367 = vadd.f32 %v6260, %v6366
    %v6368 = vpop.f32.mrb[0].mxu0
    %v6369 = vadd.f32 %v6262, %v6368
    %6370 = vmatprep.mubr.f32.mxu0 0.0
    %v6371 = vand.u32 %v1082, 4294901760
    %v6372 = vsub.f32 %v1082, %v6371
    %v6373 = vand.u32 %v6372, 4294901760
    %6374 = vmatmul.mubr.f32.gmra.mrb[0].mxu0 %v6373
    %v6375 = vpop.f32.mrb[0].mxu0
    %v6376 = vadd.f32 %v6268, %v6375
    %v6377 = vpop.f32.mrb[0].mxu0
    %v6378 = vadd.f32 %v6270, %v6377
    %6379 = vmatprep.mubr.f32.mxu0 0.0
    %v6380 = vand.u32 %v1085, 4294901760
    %v6381 = vsub.f32 %v1085, %v6380
    %v6382 = vand.u32 %v6381, 4294901760
    %6383 = vmatmul.mubr.f32.gmra.mrb[0].mxu0 %v6382
    %v6384 = vpop.f32.mrb[0].mxu0
    %v6385 = vadd.f32 %v6276, %v6384
    %v6386 = vpop.f32.mrb[0].mxu0
    %v6387 = vadd.f32 %v6278, %v6386
    %6388 = vdwg.mxu0
    %v6389 = vand.u32 %v997, 4294901760
    %v6390 = vsub.f32 %v997, %v6389
    %v6391 = vand.u32 %v6390, 4294901760
    %6392 = vmatprep.subr.mxu0 %v6391
    %v6393 = vand.u32 %v996, 4294901760
    %v6394 = vsub.f32 %v996, %v6393
    %v6395 = vand.u32 %v6394, 4294901760
    %6396 = vmatpush1.msra.mxu0 %v6395
    %v6397 = vand.u32 %v1013, 4294901760
    %v6398 = vsub.f32 %v1013, %v6397
    %v6399 = vand.u32 %v6398, 4294901760
    %6400 = vmatprep.subr.mxu0 %v6399
    %v6401 = vand.u32 %v1012, 4294901760
    %v6402 = vsub.f32 %v1012, %v6401
    %v6403 = vand.u32 %v6402, 4294901760
    %6404 = vmatpush1.msra.mxu0 %v6403
    %v6405 = vand.u32 %v1029, 4294901760
    %v6406 = vsub.f32 %v1029, %v6405
    %v6407 = vand.u32 %v6406, 4294901760
    %6408 = vmatprep.subr.mxu0 %v6407
    %v6409 = vand.u32 %v1028, 4294901760
    %v6410 = vsub.f32 %v1028, %v6409
    %v6411 = vand.u32 %v6410, 4294901760
    %6412 = vmatpush1.msra.mxu0 %v6411
    %v6413 = vand.u32 %v1045, 4294901760
    %v6414 = vsub.f32 %v1045, %v6413
    %v6415 = vand.u32 %v6414, 4294901760
    %6416 = vmatprep.subr.mxu0 %v6415
    %v6417 = vand.u32 %v1044, 4294901760
    %v6418 = vsub.f32 %v1044, %v6417
    %v6419 = vand.u32 %v6418, 4294901760
    %6420 = vmatpush1.msra.mxu0 %v6419
    %6421 = vmatprep.subr.mxu0 0.0
    %6422 = vmatpush1.msra.mxu0 0.0
    %6423 = vmatprep.subr.mxu0 0.0
    %6424 = vmatpush1.msra.mxu0 0.0
    %6425 = vmatprep.subr.mxu0 0.0
    %6426 = vmatpush1.msra.mxu0 0.0
    %6427 = vmatprep.subr.mxu0 0.0
    %6428 = vmatpush1.msra.mxu0 0.0
    %6429 = vmatprep.subr.mxu0 0.0
    %6430 = vmatpush1.msra.mxu0 0.0
    %6431 = vmatprep.subr.mxu0 0.0
    %6432 = vmatpush1.msra.mxu0 0.0
    %6433 = vmatprep.subr.mxu0 0.0
    %6434 = vmatpush1.msra.mxu0 0.0
    %6435 = vmatprep.subr.mxu0 0.0
    %6436 = vmatpush1.msra.mxu0 0.0
    %6437 = vmatprep.subr.mxu0 0.0
    %6438 = vmatpush1.msra.mxu0 0.0
    %6439 = vmatprep.subr.mxu0 0.0
    %6440 = vmatpush1.msra.mxu0 0.0
    %6441 = vmatprep.subr.mxu0 0.0
    %6442 = vmatpush1.msra.mxu0 0.0
    %6443 = vmatprep.subr.mxu0 0.0
    %6444 = vmatpush1.msra.mxu0 0.0
    %6445 = vmatprep.subr.mxu0 0.0
    %6446 = vmatpush1.msra.mxu0 0.0
    %6447 = vmatprep.subr.mxu0 0.0
    %6448 = vmatpush1.msra.mxu0 0.0
    %6449 = vmatprep.subr.mxu0 0.0
    %6450 = vmatpush1.msra.mxu0 0.0
    %6451 = vmatprep.subr.mxu0 0.0
    %6452 = vmatpush1.msra.mxu0 0.0
    %6453 = vmatprep.subr.mxu0 0.0
    %6454 = vmatpush1.msra.mxu0 0.0
    %6455 = vmatprep.subr.mxu0 0.0
    %6456 = vmatpush1.msra.mxu0 0.0
    %6457 = vmatprep.subr.mxu0 0.0
    %6458 = vmatpush1.msra.mxu0 0.0
    %6459 = vmatprep.subr.mxu0 0.0
    %6460 = vmatpush1.msra.mxu0 0.0
    %6461 = vmatprep.subr.mxu0 0.0
    %6462 = vmatpush1.msra.mxu0 0.0
    %6463 = vmatprep.subr.mxu0 0.0
    %6464 = vmatpush1.msra.mxu0 0.0
    %6465 = vmatprep.subr.mxu0 0.0
    %6466 = vmatpush1.msra.mxu0 0.0
    %6467 = vmatprep.subr.mxu0 0.0
    %6468 = vmatpush1.msra.mxu0 0.0
    %6469 = vmatprep.subr.mxu0 0.0
    %6470 = vmatpush1.msra.mxu0 0.0
    %6471 = vmatprep.subr.mxu0 0.0
    %6472 = vmatpush1.msra.mxu0 0.0
    %6473 = vmatprep.subr.mxu0 0.0
    %6474 = vmatpush1.msra.mxu0 0.0
    %6475 = vmatprep.subr.mxu0 0.0
    %6476 = vmatpush1.msra.mxu0 0.0
    %6477 = vmatprep.mubr.f32.mxu0 0.0
    %v6478 = vand.u32 %v1076, 4294901760
    %6479 = vmatmul.mubr.f32.gmra.mrb[0].mxu0 %v6478
    %v6480 = vpop.f32.mrb[0].mxu0
    %v6481 = vadd.f32 %v6358, %v6480
    %v6482 = vpop.f32.mrb[0].mxu0
    %v6483 = vadd.f32 %v6360, %v6482
    %6484 = vmatprep.mubr.f32.mxu0 0.0
    %v6485 = vand.u32 %v1079, 4294901760
    %6486 = vmatmul.mubr.f32.gmra.mrb[0].mxu0 %v6485
    %v6487 = vpop.f32.mrb[0].mxu0
    %v6488 = vadd.f32 %v6367, %v6487
    %v6489 = vpop.f32.mrb[0].mxu0
    %v6490 = vadd.f32 %v6369, %v6489
    %6491 = vmatprep.mubr.f32.mxu0 0.0
    %v6492 = vand.u32 %v1082, 4294901760
    %6493 = vmatmul.mubr.f32.gmra.mrb[0].mxu0 %v6492
    %v6494 = vpop.f32.mrb[0].mxu0
    %v6495 = vadd.f32 %v6376, %v6494
    %v6496 = vpop.f32.mrb[0].mxu0
    %v6497 = vadd.f32 %v6378, %v6496
    %6498 = vmatprep.mubr.f32.mxu0 0.0
    %v6499 = vand.u32 %v1085, 4294901760
    %6500 = vmatmul.mubr.f32.gmra.mrb[0].mxu0 %v6499
    %v6501 = vpop.f32.mrb[0].mxu0
    %v6502 = vadd.f32 %v6385, %v6501
    %v6503 = vpop.f32.mrb[0].mxu0
    %v6504 = vadd.f32 %v6387, %v6503
    %6505 = vdwg.mxu0
    %v6506 = vand.u32 %v997, 4294901760
    %6507 = vmatprep.subr.mxu0 %v6506
    %v6508 = vand.u32 %v996, 4294901760
    %6509 = vmatpush1.msra.mxu0 %v6508
    %v6510 = vand.u32 %v1013, 4294901760
    %6511 = vmatprep.subr.mxu0 %v6510
    %v6512 = vand.u32 %v1012, 4294901760
    %6513 = vmatpush1.msra.mxu0 %v6512
    %v6514 = vand.u32 %v1029, 4294901760
    %6515 = vmatprep.subr.mxu0 %v6514
    %v6516 = vand.u32 %v1028, 4294901760
    %6517 = vmatpush1.msra.mxu0 %v6516
    %v6518 = vand.u32 %v1045, 4294901760
    %6519 = vmatprep.subr.mxu0 %v6518
    %v6520 = vand.u32 %v1044, 4294901760
    %6521 = vmatpush1.msra.mxu0 %v6520
    %6522 = vmatprep.subr.mxu0 0.0
    %6523 = vmatpush1.msra.mxu0 0.0
    %6524 = vmatprep.subr.mxu0 0.0
    %6525 = vmatpush1.msra.mxu0 0.0
    %6526 = vmatprep.subr.mxu0 0.0
    %6527 = vmatpush1.msra.mxu0 0.0
    %6528 = vmatprep.subr.mxu0 0.0
    %6529 = vmatpush1.msra.mxu0 0.0
    %6530 = vmatprep.subr.mxu0 0.0
    %6531 = vmatpush1.msra.mxu0 0.0
    %6532 = vmatprep.subr.mxu0 0.0
    %6533 = vmatpush1.msra.mxu0 0.0
    %6534 = vmatprep.subr.mxu0 0.0
    %6535 = vmatpush1.msra.mxu0 0.0
    %6536 = vmatprep.subr.mxu0 0.0
    %6537 = vmatpush1.msra.mxu0 0.0
    %6538 = vmatprep.subr.mxu0 0.0
    %6539 = vmatpush1.msra.mxu0 0.0
    %6540 = vmatprep.subr.mxu0 0.0
    %6541 = vmatpush1.msra.mxu0 0.0
    %6542 = vmatprep.subr.mxu0 0.0
    %6543 = vmatpush1.msra.mxu0 0.0
    %6544 = vmatprep.subr.mxu0 0.0
    %6545 = vmatpush1.msra.mxu0 0.0
    %6546 = vmatprep.subr.mxu0 0.0
    %6547 = vmatpush1.msra.mxu0 0.0
    %6548 = vmatprep.subr.mxu0 0.0
    %6549 = vmatpush1.msra.mxu0 0.0
    %6550 = vmatprep.subr.mxu0 0.0
    %6551 = vmatpush1.msra.mxu0 0.0
    %6552 = vmatprep.subr.mxu0 0.0
    %6553 = vmatpush1.msra.mxu0 0.0
    %6554 = vmatprep.subr.mxu0 0.0
    %6555 = vmatpush1.msra.mxu0 0.0
    %6556 = vmatprep.subr.mxu0 0.0
    %6557 = vmatpush1.msra.mxu0 0.0
    %6558 = vmatprep.subr.mxu0 0.0
    %6559 = vmatpush1.msra.mxu0 0.0
    %6560 = vmatprep.subr.mxu0 0.0
    %6561 = vmatpush1.msra.mxu0 0.0
    %6562 = vmatprep.subr.mxu0 0.0
    %6563 = vmatpush1.msra.mxu0 0.0
    %6564 = vmatprep.subr.mxu0 0.0
    %6565 = vmatpush1.msra.mxu0 0.0
    %6566 = vmatprep.subr.mxu0 0.0
    %6567 = vmatpush1.msra.mxu0 0.0
    %6568 = vmatprep.subr.mxu0 0.0
    %6569 = vmatpush1.msra.mxu0 0.0
    %6570 = vmatprep.subr.mxu0 0.0
    %6571 = vmatpush1.msra.mxu0 0.0
    %6572 = vmatprep.subr.mxu0 0.0
    %6573 = vmatpush1.msra.mxu0 0.0
    %6574 = vmatprep.subr.mxu0 0.0
    %6575 = vmatpush1.msra.mxu0 0.0
    %6576 = vmatprep.subr.mxu0 0.0
    %6577 = vmatpush1.msra.mxu0 0.0
    %6578 = vmatprep.mubr.f32.mxu0 0.0
    %v6579 = vand.u32 %v1076, 4294901760
    %6580 = vmatmul.mubr.f32.gmra.mrb[0].mxu0 %v6579
    %v6581 = vpop.f32.mrb[0].mxu0
    %v6582 = vadd.f32 %v6481, %v6581
    %v6583 = vpop.f32.mrb[0].mxu0
    %v6584 = vadd.f32 %v6483, %v6583
    %6585 = vmatprep.mubr.f32.mxu0 0.0
    %v6586 = vand.u32 %v1079, 4294901760
    %6587 = vmatmul.mubr.f32.gmra.mrb[0].mxu0 %v6586
    %v6588 = vpop.f32.mrb[0].mxu0
    %v6589 = vadd.f32 %v6488, %v6588
    %v6590 = vpop.f32.mrb[0].mxu0
    %v6591 = vadd.f32 %v6490, %v6590
    %6592 = vmatprep.mubr.f32.mxu0 0.0
    %v6593 = vand.u32 %v1082, 4294901760
    %6594 = vmatmul.mubr.f32.gmra.mrb[0].mxu0 %v6593
    %v6595 = vpop.f32.mrb[0].mxu0
    %v6596 = vadd.f32 %v6495, %v6595
    %v6597 = vpop.f32.mrb[0].mxu0
    %v6598 = vadd.f32 %v6497, %v6597
    %6599 = vmatprep.mubr.f32.mxu0 0.0
    %v6600 = vand.u32 %v1085, 4294901760
    %6601 = vmatmul.mubr.f32.gmra.mrb[0].mxu0 %v6600
    %v6602 = vpop.f32.mrb[0].mxu0
    %v6603 = vadd.f32 %v6502, %v6602
    %v6604 = vpop.f32.mrb[0].mxu0
    %v6605 = vadd.f32 %v6504, %v6604
    %6606 = vdwg.mxu0
    %v6607 = vmax.f32 %v1752, 0.0
    %v6608 = vmax.f32 %v1754, 0.0
    %v6609 = vmax.f32 %v2442, 0.0
    %v6610 = vmax.f32 %v2444, 0.0
    %v6611 = vmax.f32 %v3132, 0.0
    %v6612 = vmax.f32 %v3134, 0.0
    %v6613 = vmax.f32 %v3822, 0.0
    %v6614 = vmax.f32 %v3824, 0.0
    %v6615 = vmax.f32 %v4512, 0.0
    %v6616 = vmax.f32 %v4514, 0.0
    %v6617 = vmax.f32 %v5202, 0.0
    %v6618 = vmax.f32 %v5204, 0.0
    %v6619 = vmax.f32 %v5892, 0.0
    %v6620 = vmax.f32 %v5894, 0.0
    %v6621 = vmax.f32 %v6582, 0.0
    %v6622 = vmax.f32 %v6584, 0.0
    %v6623 = vmax.f32 %v1759, 0.0
    %v6624 = vmax.f32 %v1761, 0.0
    %v6625 = vmax.f32 %v2449, 0.0
    %v6626 = vmax.f32 %v2451, 0.0
    %v6627 = vmax.f32 %v3139, 0.0
    %v6628 = vmax.f32 %v3141, 0.0
    %v6629 = vmax.f32 %v3829, 0.0
    %v6630 = vmax.f32 %v3831, 0.0
    %v6631 = vmax.f32 %v4519, 0.0
    %v6632 = vmax.f32 %v4521, 0.0
    %v6633 = vmax.f32 %v5209, 0.0
    %v6634 = vmax.f32 %v5211, 0.0
    %v6635 = vmax.f32 %v5899, 0.0
    %v6636 = vmax.f32 %v5901, 0.0
    %v6637 = vmax.f32 %v6589, 0.0
    %v6638 = vmax.f32 %v6591, 0.0
    %v6639 = vmax.f32 %v1766, 0.0
    %v6640 = vmax.f32 %v1768, 0.0
    %v6641 = vmax.f32 %v2456, 0.0
    %v6642 = vmax.f32 %v2458, 0.0
    %v6643 = vmax.f32 %v3146, 0.0
    %v6644 = vmax.f32 %v3148, 0.0
    %v6645 = vmax.f32 %v3836, 0.0
    %v6646 = vmax.f32 %v3838, 0.0
    %v6647 = vmax.f32 %v4526, 0.0
    %v6648 = vmax.f32 %v4528, 0.0
    %v6649 = vmax.f32 %v5216, 0.0
    %v6650 = vmax.f32 %v5218, 0.0
    %v6651 = vmax.f32 %v5906, 0.0
    %v6652 = vmax.f32 %v5908, 0.0
    %v6653 = vmax.f32 %v6596, 0.0
    %v6654 = vmax.f32 %v6598, 0.0
    %v6655 = vmax.f32 %v1773, 0.0
    %v6656 = vmax.f32 %v1775, 0.0
    %v6657 = vmax.f32 %v2463, 0.0
    %v6658 = vmax.f32 %v2465, 0.0
    %v6659 = vmax.f32 %v3153, 0.0
    %v6660 = vmax.f32 %v3155, 0.0
    %v6661 = vmax.f32 %v3843, 0.0
    %v6662 = vmax.f32 %v3845, 0.0
    %v6663 = vmax.f32 %v4533, 0.0
    %v6664 = vmax.f32 %v4535, 0.0
    %v6665 = vmax.f32 %v5223, 0.0
    %v6666 = vmax.f32 %v5225, 0.0
    %v6667 = vmax.f32 %v5913, 0.0
    %v6668 = vmax.f32 %v5915, 0.0
    %v6669 = vmax.f32 %v6603, 0.0
    %v6670 = vmax.f32 %v6605, 0.0
    %v6671 = vld [vmem:[%s8] sm:$0xff]
    %v6672 = vld [vmem:[%s8 + $0x8] sm:$0xff]
    %v6673 = vld [vmem:[%s8 + $0x10] sm:$0xff]
    %v6674 = vld [vmem:[%s8 + $0x18] sm:$0xff]
    %v6675 = vld [vmem:[#allocation2] sm:$0x1]
    %6677 = vset.pattern.permute.xlu0 0
    %6678 = vperm.xlu0 %6677, %v6671
    %v6679 = vpop.permute.xlu0 %6678
    %6682 = vset.pattern.permute.xlu0 0
    %6683 = vperm.xlu0 %6682, %v6672
    %v6684 = vpop.permute.xlu0 %6683
    %6687 = vset.pattern.permute.xlu0 0
    %6688 = vperm.xlu0 %6687, %v6673
    %v6689 = vpop.permute.xlu0 %6688
    %6692 = vset.pattern.permute.xlu0 0
    %6693 = vperm.xlu0 %6692, %v6674
    %v6694 = vpop.permute.xlu0 %6693
    %v6696 = vmul.f32 %v6607, %v6679
    %v6697 = vmul.f32 %v6608, %v6679
    %v6698 = vmul.f32 %v6609, %v6679
    %v6699 = vmul.f32 %v6610, %v6679
    %v6700 = vmul.f32 %v6611, %v6679
    %v6701 = vmul.f32 %v6612, %v6679
    %v6702 = vmul.f32 %v6613, %v6679
    %v6703 = vmul.f32 %v6614, %v6679
    %v6704 = vmul.f32 %v6615, %v6679
    %v6705 = vmul.f32 %v6616, %v6679
    %v6706 = vmul.f32 %v6617, %v6679
    %v6707 = vmul.f32 %v6618, %v6679
    %v6708 = vmul.f32 %v6619, %v6679
    %v6709 = vmul.f32 %v6620, %v6679
    %v6710 = vmul.f32 %v6621, %v6679
    %v6711 = vmul.f32 %v6622, %v6679
    %v6712 = vmul.f32 %v6623, %v6684
    %v6713 = vmul.f32 %v6624, %v6684
    %v6714 = vmul.f32 %v6625, %v6684
    %v6715 = vmul.f32 %v6626, %v6684
    %v6716 = vmul.f32 %v6627, %v6684
    %v6717 = vmul.f32 %v6628, %v6684
    %v6718 = vmul.f32 %v6629, %v6684
    %v6719 = vmul.f32 %v6630, %v6684
    %v6720 = vmul.f32 %v6631, %v6684
    %v6721 = vmul.f32 %v6632, %v6684
    %v6722 = vmul.f32 %v6633, %v6684
    %v6723 = vmul.f32 %v6634, %v6684
    %v6724 = vmul.f32 %v6635, %v6684
    %v6725 = vmul.f32 %v6636, %v6684
    %v6726 = vmul.f32 %v6637, %v6684
    %v6727 = vmul.f32 %v6638, %v6684
    %v6728 = vmul.f32 %v6639, %v6689
    %v6729 = vmul.f32 %v6640, %v6689
    %v6730 = vmul.f32 %v6641, %v6689
    %v6731 = vmul.f32 %v6642, %v6689
    %v6732 = vmul.f32 %v6643, %v6689
    %v6733 = vmul.f32 %v6644, %v6689
    %v6734 = vmul.f32 %v6645, %v6689
    %v6735 = vmul.f32 %v6646, %v6689
    %v6736 = vmul.f32 %v6647, %v6689
    %v6737 = vmul.f32 %v6648, %v6689
    %v6738 = vmul.f32 %v6649, %v6689
    %v6739 = vmul.f32 %v6650, %v6689
    %v6740 = vmul.f32 %v6651, %v6689
    %v6741 = vmul.f32 %v6652, %v6689
    %v6742 = vmul.f32 %v6653, %v6689
    %v6743 = vmul.f32 %v6654, %v6689
    %v6744 = vmul.f32 %v6655, %v6694
    %v6745 = vmul.f32 %v6656, %v6694
    %v6746 = vmul.f32 %v6657, %v6694
    %v6747 = vmul.f32 %v6658, %v6694
    %v6748 = vmul.f32 %v6659, %v6694
    %v6749 = vmul.f32 %v6660, %v6694
    %v6750 = vmul.f32 %v6661, %v6694
    %v6751 = vmul.f32 %v6662, %v6694
    %v6752 = vmul.f32 %v6663, %v6694
    %v6753 = vmul.f32 %v6664, %v6694
    %v6754 = vmul.f32 %v6665, %v6694
    %v6755 = vmul.f32 %v6666, %v6694
    %v6756 = vmul.f32 %v6667, %v6694
    %v6757 = vmul.f32 %v6668, %v6694
    %v6758 = vmul.f32 %v6669, %v6694
    %v6759 = vmul.f32 %v6670, %v6694
    %v6760 = vadd.f32 %v6696, %v6712
    %v6761 = vadd.f32 %v6760, %v6728
    %v6762 = vadd.f32 %v6761, %v6744
    %v6763 = vrot.slane %v6762, 4
    %v6764 = vadd.f32 %v6762, %v6763
    %v6765 = vrot.slane %v6764, 2
    %v6766 = vadd.f32 %v6764, %v6765
    %v6767 = vrot.slane %v6766, 1
    %v6768 = vadd.f32 %v6766, %v6767
    %v6769 = vadd.f32 %v6697, %v6713
    %v6770 = vadd.f32 %v6769, %v6729
    %v6771 = vadd.f32 %v6770, %v6745
    %v6772 = vrot.slane %v6771, 4
    %v6773 = vadd.f32 %v6771, %v6772
    %v6774 = vrot.slane %v6773, 2
    %v6775 = vadd.f32 %v6773, %v6774
    %v6776 = vrot.slane %v6775, 1
    %v6777 = vadd.f32 %v6775, %v6776
    %v6778 = vadd.f32 %v6698, %v6714
    %v6779 = vadd.f32 %v6778, %v6730
    %v6780 = vadd.f32 %v6779, %v6746
    %v6781 = vrot.slane %v6780, 4
    %v6782 = vadd.f32 %v6780, %v6781
    %v6783 = vrot.slane %v6782, 2
    %v6784 = vadd.f32 %v6782, %v6783
    %v6785 = vrot.slane %v6784, 1
    %v6786 = vadd.f32 %v6784, %v6785
    %v6787 = vadd.f32 %v6699, %v6715
    %v6788 = vadd.f32 %v6787, %v6731
    %v6789 = vadd.f32 %v6788, %v6747
    %v6790 = vrot.slane %v6789, 4
    %v6791 = vadd.f32 %v6789, %v6790
    %v6792 = vrot.slane %v6791, 2
    %v6793 = vadd.f32 %v6791, %v6792
    %v6794 = vrot.slane %v6793, 1
    %v6795 = vadd.f32 %v6793, %v6794
    %v6796 = vadd.f32 %v6700, %v6716
    %v6797 = vadd.f32 %v6796, %v6732
    %v6798 = vadd.f32 %v6797, %v6748
    %v6799 = vrot.slane %v6798, 4
    %v6800 = vadd.f32 %v6798, %v6799
    %v6801 = vrot.slane %v6800, 2
    %v6802 = vadd.f32 %v6800, %v6801
    %v6803 = vrot.slane %v6802, 1
    %v6804 = vadd.f32 %v6802, %v6803
    %v6805 = vadd.f32 %v6701, %v6717
    %v6806 = vadd.f32 %v6805, %v6733
    %v6807 = vadd.f32 %v6806, %v6749
    %v6808 = vrot.slane %v6807, 4
    %v6809 = vadd.f32 %v6807, %v6808
    %v6810 = vrot.slane %v6809, 2
    %v6811 = vadd.f32 %v6809, %v6810
    %v6812 = vrot.slane %v6811, 1
    %v6813 = vadd.f32 %v6811, %v6812
    %v6814 = vadd.f32 %v6702, %v6718
    %v6815 = vadd.f32 %v6814, %v6734
    %v6816 = vadd.f32 %v6815, %v6750
    %v6817 = vrot.slane %v6816, 4
    %v6818 = vadd.f32 %v6816, %v6817
    %v6819 = vrot.slane %v6818, 2
    %v6820 = vadd.f32 %v6818, %v6819
    %v6821 = vrot.slane %v6820, 1
    %v6822 = vadd.f32 %v6820, %v6821
    %v6823 = vadd.f32 %v6703, %v6719
    %v6824 = vadd.f32 %v6823, %v6735
    %v6825 = vadd.f32 %v6824, %v6751
    %v6826 = vrot.slane %v6825, 4
    %v6827 = vadd.f32 %v6825, %v6826
    %v6828 = vrot.slane %v6827, 2
    %v6829 = vadd.f32 %v6827, %v6828
    %v6830 = vrot.slane %v6829, 1
    %v6831 = vadd.f32 %v6829, %v6830
    %v6832 = vadd.f32 %v6704, %v6720
    %v6833 = vadd.f32 %v6832, %v6736
    %v6834 = vadd.f32 %v6833, %v6752
    %v6835 = vrot.slane %v6834, 4
    %v6836 = vadd.f32 %v6834, %v6835
    %v6837 = vrot.slane %v6836, 2
    %v6838 = vadd.f32 %v6836, %v6837
    %v6839 = vrot.slane %v6838, 1
    %v6840 = vadd.f32 %v6838, %v6839
    %v6841 = vadd.f32 %v6705, %v6721
    %v6842 = vadd.f32 %v6841, %v6737
    %v6843 = vadd.f32 %v6842, %v6753
    %v6844 = vrot.slane %v6843, 4
    %v6845 = vadd.f32 %v6843, %v6844
    %v6846 = vrot.slane %v6845, 2
    %v6847 = vadd.f32 %v6845, %v6846
    %v6848 = vrot.slane %v6847, 1
    %v6849 = vadd.f32 %v6847, %v6848
    %v6850 = vadd.f32 %v6706, %v6722
    %v6851 = vadd.f32 %v6850, %v6738
    %v6852 = vadd.f32 %v6851, %v6754
    %v6853 = vrot.slane %v6852, 4
    %v6854 = vadd.f32 %v6852, %v6853
    %v6855 = vrot.slane %v6854, 2
    %v6856 = vadd.f32 %v6854, %v6855
    %v6857 = vrot.slane %v6856, 1
    %v6858 = vadd.f32 %v6856, %v6857
    %v6859 = vadd.f32 %v6707, %v6723
    %v6860 = vadd.f32 %v6859, %v6739
    %v6861 = vadd.f32 %v6860, %v6755
    %v6862 = vrot.slane %v6861, 4
    %v6863 = vadd.f32 %v6861, %v6862
    %v6864 = vrot.slane %v6863, 2
    %v6865 = vadd.f32 %v6863, %v6864
    %v6866 = vrot.slane %v6865, 1
    %v6867 = vadd.f32 %v6865, %v6866
    %v6868 = vadd.f32 %v6708, %v6724
    %v6869 = vadd.f32 %v6868, %v6740
    %v6870 = vadd.f32 %v6869, %v6756
    %v6871 = vrot.slane %v6870, 4
    %v6872 = vadd.f32 %v6870, %v6871
    %v6873 = vrot.slane %v6872, 2
    %v6874 = vadd.f32 %v6872, %v6873
    %v6875 = vrot.slane %v6874, 1
    %v6876 = vadd.f32 %v6874, %v6875
    %v6877 = vadd.f32 %v6709, %v6725
    %v6878 = vadd.f32 %v6877, %v6741
    %v6879 = vadd.f32 %v6878, %v6757
    %v6880 = vrot.slane %v6879, 4
    %v6881 = vadd.f32 %v6879, %v6880
    %v6882 = vrot.slane %v6881, 2
    %v6883 = vadd.f32 %v6881, %v6882
    %v6884 = vrot.slane %v6883, 1
    %v6885 = vadd.f32 %v6883, %v6884
    %v6886 = vadd.f32 %v6710, %v6726
    %v6887 = vadd.f32 %v6886, %v6742
    %v6888 = vadd.f32 %v6887, %v6758
    %v6889 = vrot.slane %v6888, 4
    %v6890 = vadd.f32 %v6888, %v6889
    %v6891 = vrot.slane %v6890, 2
    %v6892 = vadd.f32 %v6890, %v6891
    %v6893 = vrot.slane %v6892, 1
    %v6894 = vadd.f32 %v6892, %v6893
    %v6895 = vadd.f32 %v6711, %v6727
    %v6896 = vadd.f32 %v6895, %v6743
    %v6897 = vadd.f32 %v6896, %v6759
    %v6898 = vrot.slane %v6897, 4
    %v6899 = vadd.f32 %v6897, %v6898
    %v6900 = vrot.slane %v6899, 2
    %v6901 = vadd.f32 %v6899, %v6900
    %v6902 = vrot.slane %v6901, 1
    %v6903 = vadd.f32 %v6901, %v6902
    %6905 = vset.pattern.permute.xlu0 0
    %6906 = vperm.xlu0 %6905, %v6675
    %v6907 = vpop.permute.xlu0 %6906
    %v6909 = vlaneseq
    %v6910 = vshrl.u32 %v6909, 7
    %v6911 = vsub.s32 0, %v6910
    %v6912 = vrot.slane %v6907, %v6911
    %v6913 = vadd.f32 %v6768, %v6912
    %v6914 = vadd.f32 %v6777, %v6912
    %v6915 = vadd.f32 %v6786, %v6912
    %v6916 = vadd.f32 %v6795, %v6912
    %v6917 = vadd.f32 %v6804, %v6912
    %v6918 = vadd.f32 %v6813, %v6912
    %v6919 = vadd.f32 %v6822, %v6912
    %v6920 = vadd.f32 %v6831, %v6912
    %v6921 = vadd.f32 %v6840, %v6912
    %v6922 = vadd.f32 %v6849, %v6912
    %v6923 = vadd.f32 %v6858, %v6912
    %v6924 = vadd.f32 %v6867, %v6912
    %v6925 = vadd.f32 %v6876, %v6912
    %v6926 = vadd.f32 %v6885, %v6912
    %v6927 = vadd.f32 %v6894, %v6912
    %v6928 = vadd.f32 %v6903, %v6912
    %v6945 = vcombine.low %v6913, %v6914
    %v6946 = vcombine.low %v6915, %v6916
    %v6947 = vcombine.low %v6917, %v6918
    %v6948 = vcombine.low %v6919, %v6920
    %v6950 = vunpack.c.l.s4 1966171168
    %v6951 = vunpack.c.0.s8 %v6950
    %v6952 = vlaneseq
    %v6953 = vshrl.u32 %v6952, 7
    %v6954 = vsub.s32 %v6951, %v6953
    %v6955 = vrot.slane %v6945, %v6954
    %v6957 = vunpack.c.l.s4 1966171168
    %v6958 = vunpack.c.0.s8 %v6957
    %v6959 = vlaneseq
    %v6960 = vshrl.u32 %v6959, 7
    %v6961 = vsub.s32 %v6958, %v6960
    %v6962 = vrot.slane %v6946, %v6961
    %v6964 = vunpack.c.l.s4 1966171168
    %v6965 = vunpack.c.0.s8 %v6964
    %v6966 = vlaneseq
    %v6967 = vshrl.u32 %v6966, 7
    %v6968 = vsub.s32 %v6965, %v6967
    %v6969 = vrot.slane %v6947, %v6968
    %v6971 = vunpack.c.l.s4 1966171168
    %v6972 = vunpack.c.0.s8 %v6971
    %v6973 = vlaneseq
    %v6974 = vshrl.u32 %v6973, 7
    %v6975 = vsub.s32 %v6972, %v6974
    %v6976 = vrot.slane %v6948, %v6975
    %v6977 = vcombine.low %v6955, %v6962
    %v6978 = vcombine.low %v6969, %v6976
    %v6980 = vunpack.c.l.s4 1966171168
    %v6981 = vunpack.c.0.s8 %v6980
    %v6982 = vlaneseq
    %v6983 = vshrl.u32 %v6982, 7
    %v6984 = vsub.s32 %v6981, %v6983
    %v6985 = vrot.slane %v6977, %v6984
    %v6987 = vunpack.c.l.s4 1966171168
    %v6988 = vunpack.c.0.s8 %v6987
    %v6989 = vlaneseq
    %v6990 = vshrl.u32 %v6989, 7
    %v6991 = vsub.s32 %v6988, %v6990
    %v6992 = vrot.slane %v6978, %v6991
    %v6993 = vcombine.low %v6985, %v6992
    %v6994 = vcombine.low %v6921, %v6922
    %v6995 = vcombine.low %v6923, %v6924
    %v6996 = vcombine.low %v6925, %v6926
    %v6997 = vcombine.low %v6927, %v6928
    %v6999 = vunpack.c.l.s4 1966171168
    %v7000 = vunpack.c.0.s8 %v6999
    %v7001 = vlaneseq
    %v7002 = vshrl.u32 %v7001, 7
    %v7003 = vsub.s32 %v7000, %v7002
    %v7004 = vrot.slane %v6994, %v7003
    %v7006 = vunpack.c.l.s4 1966171168
    %v7007 = vunpack.c.0.s8 %v7006
    %v7008 = vlaneseq
    %v7009 = vshrl.u32 %v7008, 7
    %v7010 = vsub.s32 %v7007, %v7009
    %v7011 = vrot.slane %v6995, %v7010
    %v7013 = vunpack.c.l.s4 1966171168
    %v7014 = vunpack.c.0.s8 %v7013
    %v7015 = vlaneseq
    %v7016 = vshrl.u32 %v7015, 7
    %v7017 = vsub.s32 %v7014, %v7016
    %v7018 = vrot.slane %v6996, %v7017
    %v7020 = vunpack.c.l.s4 1966171168
    %v7021 = vunpack.c.0.s8 %v7020
    %v7022 = vlaneseq
    %v7023 = vshrl.u32 %v7022, 7
    %v7024 = vsub.s32 %v7021, %v7023
    %v7025 = vrot.slane %v6997, %v7024
    %v7026 = vcombine.low %v7004, %v7011
    %v7027 = vcombine.low %v7018, %v7025
    %v7029 = vunpack.c.l.s4 1966171168
    %v7030 = vunpack.c.0.s8 %v7029
    %v7031 = vlaneseq
    %v7032 = vshrl.u32 %v7031, 7
    %v7033 = vsub.s32 %v7030, %v7032
    %v7034 = vrot.slane %v7026, %v7033
    %v7036 = vunpack.c.l.s4 1966171168
    %v7037 = vunpack.c.0.s8 %v7036
    %v7038 = vlaneseq
    %v7039 = vshrl.u32 %v7038, 7
    %v7040 = vsub.s32 %v7037, %v7039
    %v7041 = vrot.slane %v7027, %v7040
    %v7042 = vcombine.low %v7034, %v7041
    %7045 = vst [vmem:[#allocation3] sm:$0xff] %v6993
    %7046 = vst [vmem:[#allocation3 + $0x8] sm:$0xff] %v7042
    // Predicated region
    $region42: #{tpu_custom_call.1} parent=1 // pred_check
      _
    $region43: #{tpu_custom_call.1} parent=1 // pred_check_branch
      %7048 = sbr.rel (0) target = $region45
    $region44: #{tpu_custom_call.1} parent=1 // pred_region
      %s7050 = ssub.s32 256, 256
      %7051 = vsyncadd [#allocation4], %s7050
      %s7053 = sshll.u32 [#allocation3], 4
      %s7054 = int_to_ptr.vmem [resolvable:$true] %s7053
      %7056 = dma.vmem_to_hbm [thread:$0]  %s7054, 256, %s10, [#allocation4]
    $region45: #{tpu_custom_call.1} parent=1 // pred_fallthru
      _
    // Predicated region
    $region46: #{tpu_custom_call.1} parent=1 // pred_check
      _
    $region47: #{tpu_custom_call.1} parent=1 // pred_check_branch
      %7058 = sbr.rel (0) target = $region49
    $region48: #{tpu_custom_call.1} parent=1 // pred_region
      %7059 = dma.done [#allocation4], 256
    $region49: #{tpu_custom_call.1} parent=1 // pred_fallthru
      _
    %7060 = vsyncpa [#allocation4], 1

</llo_original>
